<compile_context>
chip_gen: v7x
topology: tpu7x:2x2x1
jax: 0.10.0
libtpu: 0.0.40
codegen_flags: <defaults>
</compile_context>

<pallas_src>
import functools

import jax
import jax.numpy as jnp
from jax.experimental import pallas as pl
from jax.experimental.pallas import tpu as pltpu


MXU_DTYPE = jnp.bfloat16   # MXU operand dtype (accumulation stays f32).
                           # Use jnp.float32 for strict fp32 parity with the
                           # PyTorch module.


def _tf_blender_kernel(
    x_ref, r_ref,                       # (1,H,W,C) key frame / current ref
    ew_ref, eb_ref,                     # embed 3x3: (3,3,C,C) mxu, (1,C) f32
    wxe_ref, wx_ref, wre_ref, wr_ref,   # pre-combined 1x1 blocks, (C,4C) mxu
    b1b_ref,                            # (1,4C) f32
    b2w_ref, b2b_ref,                   # blender 3x3: (3,3,4C,2C) mxu, (1,2C)
    b3w_ref, b3b_ref,                   # blender 1x1: (2C,C) mxu, (1,C)
    o_ref,                              # (HW, C) output
    pad_ref, t1pad_ref,                 # VMEM pads: (H+2,W+2,C), (H+2,W+2,4C)
    base_ref,                           # (HW, 4C) f32 : x half of the 1x1
    m_ref, s_ref, num_ref,              # (HW, C) f32 : online softmax state
    *, H, W, C, mxu_dtype):
  f32 = jnp.float32
  HW = H * W
  C4, C2 = 4 * C, 2 * C
  n = pl.program_id(0)

  def conv3x3(src_pad_ref, w_ref, cin, cout):
    """3x3 conv as 9 accumulating whole-plane MXU dots (M = H*W)."""
    acc = jnp.zeros((HW, cout), f32)
    for dy in range(3):
      for dx in range(3):
        patch = src_pad_ref[pl.ds(dy, H), pl.ds(dx, W), :].reshape(HW, cin)
        acc = acc + jnp.dot(patch, w_ref[dy, dx], preferred_element_type=f32)
    return acc

  def l2norm(v):
    # No epsilon, matching torch `x / x.norm(p=2, dim=1, keepdim=True)`.
    return v * jax.lax.rsqrt(jnp.sum(v * v, axis=-1, keepdims=True))

  # ---------------- step 0: one-time work ----------------------------------
  @pl.when(n == 0)
  def _():
    # Zero only the 1-pixel borders of the pad scratch buffers (once).  The
    # interiors are fully overwritten every step; the borders stay zero for
    # the whole call.
    row = jnp.zeros((1, W + 2, C), mxu_dtype)
    col = jnp.zeros((H + 2, 1, C), mxu_dtype)
    pad_ref[pl.ds(0, 1), :, :] = row
    pad_ref[pl.ds(H + 1, 1), :, :] = row
    pad_ref[:, pl.ds(0, 1), :] = col
    pad_ref[:, pl.ds(W + 1, 1), :] = col

    row4 = jnp.zeros((1, W + 2, C4), mxu_dtype)
    col4 = jnp.zeros((H + 2, 1, C4), mxu_dtype)
    t1pad_ref[pl.ds(0, 1), :, :] = row4
    t1pad_ref[pl.ds(H + 1, 1), :, :] = row4
    t1pad_ref[:, pl.ds(0, 1), :] = col4
    t1pad_ref[:, pl.ds(W + 1, 1), :] = col4

    # x branch: shared 3x3 embed conv (last embed conv => no norm/act) +
    # L2 norm, then its half of the 1x1 (8C->4C) blender conv.  The 8-way
    # channel concat is eliminated algebraically; the 4 effective weights
    # were pre-combined in the wrapper.
    pad_ref[pl.ds(1, H), pl.ds(1, W), :] = x_ref[0].astype(mxu_dtype)
    xe = l2norm(conv3x3(pad_ref, ew_ref, C, C) + eb_ref[...].astype(f32))
    x_flat = x_ref[0].reshape(HW, C).astype(f32)
    base_ref[...] = (
        jnp.dot(xe.astype(mxu_dtype), wxe_ref[...], preferred_element_type=f32)
        + jnp.dot(x_flat.astype(mxu_dtype), wx_ref[...],
                  preferred_element_type=f32)
        + b1b_ref[...].astype(f32))

    # Online-softmax accumulators.
    m_ref[...] = jnp.full_like(m_ref, -jnp.inf)
    s_ref[...] = jnp.zeros_like(s_ref)
    num_ref[...] = jnp.zeros_like(num_ref)

  # ---------------- per-reference work --------------------------------------
  # stage 1: embed conv + L2 norm for this reference frame.
  pad_ref[pl.ds(1, H), pl.ds(1, W), :] = r_ref[0].astype(mxu_dtype)
  re = l2norm(conv3x3(pad_ref, ew_ref, C, C) + eb_ref[...].astype(f32))
  r_flat = r_ref[0].reshape(HW, C).astype(f32)

  # stage 2: 1x1 blender conv (8C->4C) + ReLU (ref half + resident x half).
  refp = (jnp.dot(re.astype(mxu_dtype), wre_ref[...],
                  preferred_element_type=f32)
          + jnp.dot(r_flat.astype(mxu_dtype), wr_ref[...],
                    preferred_element_type=f32))
  t1 = jnp.maximum(refp + base_ref[...], 0.0)                      # (HW, 4C)

  # stage 3: 3x3 blender conv (4C->2C) + ReLU.
  t1pad_ref[pl.ds(1, H), pl.ds(1, W), :] = (
      t1.reshape(H, W, C4).astype(mxu_dtype))
  t2 = jnp.maximum(conv3x3(t1pad_ref, b2w_ref, C4, C2)
                   + b2b_ref[...].astype(f32), 0.0)                # (HW, 2C)

  # stage 4: final 1x1 (2C->C), no activation -> softmax logits for this ref.
  t3 = (jnp.dot(t2.astype(mxu_dtype), b3w_ref[...],
                preferred_element_type=f32)
        + b3b_ref[...].astype(f32))                                # (HW, C)

  # stage 5: online softmax over the reference axis + weighted sum of ref_x.
  m_prev = m_ref[...]
  m_new = jnp.maximum(m_prev, t3)
  alpha = jnp.exp(m_prev - m_new)        # exp(-inf) == 0 on the first step
  p = jnp.exp(t3 - m_new)
  s_ref[...] = alpha * s_ref[...] + p
  num_ref[...] = alpha * num_ref[...] + r_flat * p
  m_ref[...] = m_new

  # ---------------- finalize -------------------------------------------------
  @pl.when(n == pl.num_programs(0) - 1)
  def _():
    # Exact divide (not approx reciprocal) for parity with torch's softmax.
    # NOTE: for C < 128 this store is lane-masked; production C >= 128 is
    # lane-dense as-is.
    o_ref[...] = (num_ref[...] / s_ref[...]).astype(o_ref.dtype)


def _const_spec(shape):
  zero = (0,) * len(shape)
  return pl.BlockSpec(shape, lambda n, _z=zero: _z)


def _prepare_weights(params, C, mxu_dtype):
  """Pre-combine the 8C->4C conv blocks and pre-cast all weights (wrapper)."""
  b1w = params["b1_w"]                       # (8C, 4C), input-major
  blk = [b1w[j * C:(j + 1) * C] for j in range(8)]
  # concat order: [xe, re, xe-re, x, r, x-r, re-xe, r-x]
  w_xe = (blk[0] + blk[2] - blk[6]).astype(mxu_dtype)
  w_x = (blk[3] + blk[5] - blk[7]).astype(mxu_dtype)
  w_re = (blk[1] - blk[2] + blk[6]).astype(mxu_dtype)
  w_r = (blk[4] - blk[5] + blk[7]).astype(mxu_dtype)
  f32 = jnp.float32
  return dict(
      embed_w=params["embed_w"].astype(mxu_dtype),
      embed_b=params["embed_b"].astype(f32),
      w_xe=w_xe, w_x=w_x, w_re=w_re, w_r=w_r,
      b1_b=params["b1_b"].astype(f32),
      b2_w=params["b2_w"].astype(mxu_dtype),
      b2_b=params["b2_b"].astype(f32),
      b3_w=params["b3_w"].astype(mxu_dtype),
      b3_b=params["b3_b"].astype(f32),
  )


def _vmem_limit_bytes(H, W, C, mxu_dtype):
  """Rough per-step footprint (lane padding + 2x headroom), capped for v7x."""
  HW = H * W
  mxu_b = jnp.dtype(mxu_dtype).itemsize
  f32_b = 4

  def lane(c):
    return max(c, 128)

  blocks = 3 * H * W * lane(C) * f32_b                    # x + 2x-buffered ref
  weights = (9 * C * lane(C) + 4 * C * lane(4 * C)
             + 9 * 4 * C * lane(2 * C) + 2 * C * lane(C)) * mxu_b
  scratch = ((H + 2) * (W + 2) * (lane(C) + lane(4 * C)) * mxu_b
             + HW * lane(4 * C) * f32_b + 3 * HW * lane(C) * f32_b
             + HW * lane(C) * f32_b)                      # output block
  temps = HW * (2 * lane(4 * C) + 2 * lane(2 * C) + 4 * lane(C)) * f32_b
  est = blocks + weights + scratch + temps
  return int(min(max(2 * est, 16 << 20), 64 << 20))


def tf_blender_aggregator(x_nchw, ref_x_nchw, params, *, mxu_dtype=MXU_DTYPE):
  # NCHW (PyTorch interface) -> NHWC (TPU lanes = channels).
  x = jnp.transpose(x_nchw, (0, 2, 3, 1))            # (1, H, W, C)
  ref_x = jnp.transpose(ref_x_nchw, (0, 2, 3, 1))    # (N, H, W, C)
  N, H, W, C = ref_x.shape
  HW = H * W

  prep = _prepare_weights(params, C, mxu_dtype)
  kern = functools.partial(_tf_blender_kernel,
                           H=H, W=W, C=C, mxu_dtype=mxu_dtype)

  out = pl.pallas_call(
      kern,
      out_shape=jax.ShapeDtypeStruct((HW, C), x.dtype),
      grid=(N,),                                      # one step per reference
      in_specs=[
          _const_spec((1, H, W, C)),                            # x (resident)
          pl.BlockSpec((1, H, W, C), lambda n: (n, 0, 0, 0)),   # ref_x stream
          _const_spec((3, 3, C, C)),                            # embed_w
          _const_spec((1, C)),                                  # embed_b
          _const_spec((C, 4 * C)),                              # w_xe
          _const_spec((C, 4 * C)),                              # w_x
          _const_spec((C, 4 * C)),                              # w_re
          _const_spec((C, 4 * C)),                              # w_r
          _const_spec((1, 4 * C)),                              # b1_b
          _const_spec((3, 3, 4 * C, 2 * C)),                    # b2_w
          _const_spec((1, 2 * C)),                              # b2_b
          _const_spec((2 * C, C)),                              # b3_w
          _const_spec((1, C)),                                  # b3_b
      ],
      out_specs=_const_spec((HW, C)),
      scratch_shapes=[
          pltpu.VMEM((H + 2, W + 2, C), mxu_dtype),        # embed pad (x/ref)
          pltpu.VMEM((H + 2, W + 2, 4 * C), mxu_dtype),    # blender 3x3 pad
          pltpu.VMEM((HW, 4 * C), jnp.float32),            # x-branch "base"
          pltpu.VMEM((HW, C), jnp.float32),                # online softmax m
          pltpu.VMEM((HW, C), jnp.float32),                # online softmax s
          pltpu.VMEM((HW, C), jnp.float32),                # online softmax num
      ],
      compiler_params=pltpu.CompilerParams(
          # The ref axis carries the softmax reduction -> "arbitrary".
          dimension_semantics=("arbitrary",),
          vmem_limit_bytes=_vmem_limit_bytes(H, W, C, mxu_dtype)),
  )(x, ref_x,
    prep["embed_w"], prep["embed_b"],
    prep["w_xe"], prep["w_x"], prep["w_re"], prep["w_r"], prep["b1_b"],
    prep["b2_w"], prep["b2_b"], prep["b3_w"], prep["b3_b"])

  agg = out.reshape(1, H, W, C)
  return jnp.transpose(agg, (0, 3, 1, 2))              # (1, C, H, W)


# ----------------------- pure-JAX reference (validation) ---------------------
def tf_blender_reference(x_nchw, ref_x_nchw, params):
  hp = jax.lax.Precision.HIGHEST
  x = jnp.transpose(x_nchw, (0, 2, 3, 1)).astype(jnp.float32)
  r = jnp.transpose(ref_x_nchw, (0, 2, 3, 1)).astype(jnp.float32)
  N, H, W, C = r.shape

  def conv3x3(inp, w, b):
    p = jnp.pad(inp, ((0, 0), (1, 1), (1, 1), (0, 0)))
    acc = jnp.zeros(inp.shape[:3] + (w.shape[-1],), jnp.float32)
    for dy in range(3):
      for dx in range(3):
        acc = acc + jnp.einsum('bhwc,cd->bhwd', p[:, dy:dy + H, dx:dx + W, :],
                               w[dy, dx], precision=hp)
    return acc + b.reshape(1, 1, 1, -1)

  def l2norm(v):
    return v / jnp.sqrt(jnp.sum(v * v, axis=-1, keepdims=True))

  xe = l2norm(conv3x3(x, params['embed_w'], params['embed_b']))
  re = l2norm(conv3x3(r, params['embed_w'], params['embed_b']))
  xe_b = jnp.broadcast_to(xe, r.shape)
  x_b = jnp.broadcast_to(x, r.shape)
  feat = jnp.concatenate(
      [xe_b, re, xe_b - re, x_b, r, x_b - r, re - xe_b, r - x_b], axis=-1)
  t1 = jax.nn.relu(jnp.einsum('bhwc,cd->bhwd', feat, params['b1_w'],
                              precision=hp)
                   + params['b1_b'].reshape(1, 1, 1, -1))
  t2 = jax.nn.relu(conv3x3(t1, params['b2_w'], params['b2_b']))
  t3 = (jnp.einsum('bhwc,cd->bhwd', t2, params['b3_w'], precision=hp)
        + params['b3_b'].reshape(1, 1, 1, -1))
  wts = jax.nn.softmax(t3, axis=0)
  agg = jnp.sum(r * wts, axis=0, keepdims=True)
  return jnp.transpose(agg, (0, 3, 1, 2))


def init_params(key, C):
  # deterministic synthetic parameters (ConvModule with norm_cfg=None -> bias)
  ks = jax.random.split(key, 8)
  s = 0.05
  return dict(
      embed_w=s * jax.random.normal(ks[0], (3, 3, C, C), jnp.float32),
      embed_b=s * jax.random.normal(ks[1], (1, C), jnp.float32),
      b1_w=s * jax.random.normal(ks[2], (8 * C, 4 * C), jnp.float32),
      b1_b=s * jax.random.normal(ks[3], (1, 4 * C), jnp.float32),
      b2_w=s * jax.random.normal(ks[4], (3, 3, 4 * C, 2 * C), jnp.float32),
      b2_b=s * jax.random.normal(ks[5], (1, 2 * C), jnp.float32),
      b3_w=s * jax.random.normal(ks[6], (2 * C, C), jnp.float32),
      b3_b=s * jax.random.normal(ks[7], (1, C), jnp.float32),
  )


if __name__ == "__main__":
  key = jax.random.PRNGKey(0)
  k_x, k_ref, k_par = jax.random.split(key, 3)

  C, H, W, N = 16, 8, 8, 4                              # small synthetic shapes
  x = jax.random.normal(k_x, (1, C, H, W), jnp.float32)       # NCHW, like torch
  ref_x = jax.random.normal(k_ref, (N, C, H, W), jnp.float32)
  params = init_params(k_par, C)

  # 1) f32-operand run: parity check against the pure-JAX reference (also
  #    validates the algebraic elimination of the 8C concat).
  fwd_f32 = jax.jit(functools.partial(tf_blender_aggregator,
                                      mxu_dtype=jnp.float32))
  out_f32 = jax.block_until_ready(fwd_f32(x, ref_x, params))
  ref_out = jax.block_until_ready(jax.jit(tf_blender_reference)(x, ref_x,
                                                                params))
  assert out_f32.shape == (1, C, H, W), out_f32.shape
  max_err = float(jnp.max(jnp.abs(out_f32 - ref_out)))
  assert max_err < 5e-2, f"max abs err vs reference: {max_err}"

  # 2) default bf16-operand run (fast path).
  fwd = jax.jit(tf_blender_aggregator)
  out = jax.block_until_ready(fwd(x, ref_x, params))
  assert out.shape == (1, C, H, W), out.shape
  assert bool(jnp.all(jnp.isfinite(out)))
  print("KERNEL_OK")
</pallas_src>

<mosaic_0001>
module attributes {stable_mosaic.version = 11 : i64} {
  func.func @_tf_blender_kernel(%arg0: i32, %arg1: memref<1x8x8x16xf32, #tpu.memory_space<vmem>>, %arg2: memref<1x8x8x16xf32, #tpu.memory_space<vmem>>, %arg3: memref<3x3x16x16xf32, #tpu.memory_space<vmem>>, %arg4: memref<1x16xf32, #tpu.memory_space<vmem>>, %arg5: memref<16x64xf32, #tpu.memory_space<vmem>>, %arg6: memref<16x64xf32, #tpu.memory_space<vmem>>, %arg7: memref<16x64xf32, #tpu.memory_space<vmem>>, %arg8: memref<16x64xf32, #tpu.memory_space<vmem>>, %arg9: memref<1x64xf32, #tpu.memory_space<vmem>>, %arg10: memref<3x3x64x32xf32, #tpu.memory_space<vmem>>, %arg11: memref<1x32xf32, #tpu.memory_space<vmem>>, %arg12: memref<32x16xf32, #tpu.memory_space<vmem>>, %arg13: memref<1x16xf32, #tpu.memory_space<vmem>>, %arg14: memref<64x16xf32, #tpu.memory_space<vmem>>, %arg15: memref<10x10x16xf32, #tpu.memory_space<vmem>>, %arg16: memref<10x10x64xf32, #tpu.memory_space<vmem>>, %arg17: memref<64x64xf32, #tpu.memory_space<vmem>>, %arg18: memref<64x16xf32, #tpu.memory_space<vmem>>, %arg19: memref<64x16xf32, #tpu.memory_space<vmem>>, %arg20: memref<64x16xf32, #tpu.memory_space<vmem>>) attributes {dimension_semantics = [#tpu.dimension_semantics<arbitrary>], iteration_bounds = array<i64: 4>, scalar_prefetch = 0 : i64, scratch_operands = 6 : i64, tpu.core_type = #tpu.core_type<tc>, window_params = [{pipeline_mode = #tpu.pipeline_mode<synchronous>, transform_indices = @transform_0, window_bounds = array<i64: 1, 8, 8, 16>}, {transform_indices = @transform_1, window_bounds = array<i64: 1, 8, 8, 16>}, {pipeline_mode = #tpu.pipeline_mode<synchronous>, transform_indices = @transform_2, window_bounds = array<i64: 3, 3, 16, 16>}, {pipeline_mode = #tpu.pipeline_mode<synchronous>, transform_indices = @transform_3, window_bounds = array<i64: 1, 16>}, {pipeline_mode = #tpu.pipeline_mode<synchronous>, transform_indices = @transform_4, window_bounds = array<i64: 16, 64>}, {pipeline_mode = #tpu.pipeline_mode<synchronous>, transform_indices = @transform_5, window_bounds = array<i64: 16, 64>}, {pipeline_mode = #tpu.pipeline_mode<synchronous>, transform_indices = @transform_6, window_bounds = array<i64: 16, 64>}, {pipeline_mode = #tpu.pipeline_mode<synchronous>, transform_indices = @transform_7, window_bounds = array<i64: 16, 64>}, {pipeline_mode = #tpu.pipeline_mode<synchronous>, transform_indices = @transform_8, window_bounds = array<i64: 1, 64>}, {pipeline_mode = #tpu.pipeline_mode<synchronous>, transform_indices = @transform_9, window_bounds = array<i64: 3, 3, 64, 32>}, {pipeline_mode = #tpu.pipeline_mode<synchronous>, transform_indices = @transform_10, window_bounds = array<i64: 1, 32>}, {pipeline_mode = #tpu.pipeline_mode<synchronous>, transform_indices = @transform_11, window_bounds = array<i64: 32, 16>}, {pipeline_mode = #tpu.pipeline_mode<synchronous>, transform_indices = @transform_12, window_bounds = array<i64: 1, 16>}, {pipeline_mode = #tpu.pipeline_mode<synchronous>, transform_indices = @transform_13, window_bounds = array<i64: 64, 16>}]} {
    %c0_i32 = arith.constant 0 : i32
    %0 = arith.cmpi eq, %arg0, %c0_i32 : i32
    %1 = arith.extui %0 : i1 to i32
    %c0_i32_0 = arith.constant 0 : i32
    %2 = arith.cmpi ne, %1, %c0_i32_0 : i32
    scf.if %2 {
      %cst_190 = arith.constant 0.000000e+00 : f32
      %168 = vector.broadcast %cst_190 : f32 to vector<1x10x16xf32>
      %cst_191 = arith.constant 0.000000e+00 : f32
      %169 = vector.broadcast %cst_191 : f32 to vector<10x1x16xf32>
      %c0_192 = arith.constant 0 : index
      %c0_193 = arith.constant 0 : index
      %c0_194 = arith.constant 0 : index
      %170 = vector.load %arg15[%c0_192, %c0_193, %c0_194] : memref<10x10x16xf32, #tpu.memory_space<vmem>>, vector<1x10x16xf32>
      tpu.vector_store %arg15[%c0_192, %c0_193, %c0_194], %168 {strides = array<i32>} : memref<10x10x16xf32, #tpu.memory_space<vmem>>, vector<1x10x16xf32>,
      %c9 = arith.constant 9 : index
      %c0_195 = arith.constant 0 : index
      %c0_196 = arith.constant 0 : index
      %171 = vector.load %arg15[%c9, %c0_195, %c0_196] : memref<10x10x16xf32, #tpu.memory_space<vmem>>, vector<1x10x16xf32>
      tpu.vector_store %arg15[%c9, %c0_195, %c0_196], %168 {strides = array<i32>} : memref<10x10x16xf32, #tpu.memory_space<vmem>>, vector<1x10x16xf32>,
      %c0_197 = arith.constant 0 : index
      %c0_198 = arith.constant 0 : index
      %c0_199 = arith.constant 0 : index
      %172 = vector.load %arg15[%c0_197, %c0_198, %c0_199] : memref<10x10x16xf32, #tpu.memory_space<vmem>>, vector<10x1x16xf32>
      tpu.vector_store %arg15[%c0_197, %c0_198, %c0_199], %169 {strides = array<i32>} : memref<10x10x16xf32, #tpu.memory_space<vmem>>, vector<10x1x16xf32>,
      %c0_200 = arith.constant 0 : index
      %c9_201 = arith.constant 9 : index
      %c0_202 = arith.constant 0 : index
      %173 = vector.load %arg15[%c0_200, %c9_201, %c0_202] : memref<10x10x16xf32, #tpu.memory_space<vmem>>, vector<10x1x16xf32>
      tpu.vector_store %arg15[%c0_200, %c9_201, %c0_202], %169 {strides = array<i32>} : memref<10x10x16xf32, #tpu.memory_space<vmem>>, vector<10x1x16xf32>,
      %cst_203 = arith.constant 0.000000e+00 : f32
      %174 = vector.broadcast %cst_203 : f32 to vector<1x10x64xf32>
      %cst_204 = arith.constant 0.000000e+00 : f32
      %175 = vector.broadcast %cst_204 : f32 to vector<10x1x64xf32>
      %c0_205 = arith.constant 0 : index
      %c0_206 = arith.constant 0 : index
      %c0_207 = arith.constant 0 : index
      %176 = vector.load %arg16[%c0_205, %c0_206, %c0_207] : memref<10x10x64xf32, #tpu.memory_space<vmem>>, vector<1x10x64xf32>
      tpu.vector_store %arg16[%c0_205, %c0_206, %c0_207], %174 {strides = array<i32>} : memref<10x10x64xf32, #tpu.memory_space<vmem>>, vector<1x10x64xf32>,
      %c9_208 = arith.constant 9 : index
      %c0_209 = arith.constant 0 : index
      %c0_210 = arith.constant 0 : index
      %177 = vector.load %arg16[%c9_208, %c0_209, %c0_210] : memref<10x10x64xf32, #tpu.memory_space<vmem>>, vector<1x10x64xf32>
      tpu.vector_store %arg16[%c9_208, %c0_209, %c0_210], %174 {strides = array<i32>} : memref<10x10x64xf32, #tpu.memory_space<vmem>>, vector<1x10x64xf32>,
      %c0_211 = arith.constant 0 : index
      %c0_212 = arith.constant 0 : index
      %c0_213 = arith.constant 0 : index
      %178 = vector.load %arg16[%c0_211, %c0_212, %c0_213] : memref<10x10x64xf32, #tpu.memory_space<vmem>>, vector<10x1x64xf32>
      tpu.vector_store %arg16[%c0_211, %c0_212, %c0_213], %175 {strides = array<i32>} : memref<10x10x64xf32, #tpu.memory_space<vmem>>, vector<10x1x64xf32>,
      %c0_214 = arith.constant 0 : index
      %c9_215 = arith.constant 9 : index
      %c0_216 = arith.constant 0 : index
      %179 = vector.load %arg16[%c0_214, %c9_215, %c0_216] : memref<10x10x64xf32, #tpu.memory_space<vmem>>, vector<10x1x64xf32>
      tpu.vector_store %arg16[%c0_214, %c9_215, %c0_216], %175 {strides = array<i32>} : memref<10x10x64xf32, #tpu.memory_space<vmem>>, vector<10x1x64xf32>,
      %c0_217 = arith.constant 0 : index
      %c0_218 = arith.constant 0 : index
      %c0_219 = arith.constant 0 : index
      %c0_220 = arith.constant 0 : index
      %180 = vector.load %arg1[%c0_217, %c0_218, %c0_219, %c0_220] : memref<1x8x8x16xf32, #tpu.memory_space<vmem>>, vector<1x8x8x16xf32>
      %181 = vector.shape_cast %180 : vector<1x8x8x16xf32> to vector<8x8x16xf32>
      %c1_221 = arith.constant 1 : index
      %c1_222 = arith.constant 1 : index
      %c0_223 = arith.constant 0 : index
      %182 = vector.load %arg15[%c1_221, %c1_222, %c0_223] : memref<10x10x16xf32, #tpu.memory_space<vmem>>, vector<8x8x16xf32>
      tpu.vector_store %arg15[%c1_221, %c1_222, %c0_223], %181 {strides = array<i32>} : memref<10x10x16xf32, #tpu.memory_space<vmem>>, vector<8x8x16xf32>,
      %cst_224 = arith.constant 0.000000e+00 : f32
      %183 = vector.broadcast %cst_224 : f32 to vector<64x16xf32>
      %c0_225 = arith.constant 0 : index
      %c0_226 = arith.constant 0 : index
      %c0_227 = arith.constant 0 : index
      %184 = vector.load %arg15[%c0_225, %c0_226, %c0_227] : memref<10x10x16xf32, #tpu.memory_space<vmem>>, vector<8x8x16xf32>
      %185 = vector.shape_cast %184 : vector<8x8x16xf32> to vector<64x16xf32>
      %c0_228 = arith.constant 0 : index
      %c0_229 = arith.constant 0 : index
      %c0_230 = arith.constant 0 : index
      %c0_231 = arith.constant 0 : index
      %186 = vector.load %arg3[%c0_228, %c0_229, %c0_230, %c0_231] : memref<3x3x16x16xf32, #tpu.memory_space<vmem>>, vector<1x1x16x16xf32>
      %187 = vector.shape_cast %186 : vector<1x1x16x16xf32> to vector<16x16xf32>
      %cst_232 = arith.constant dense<0.000000e+00> : vector<64x16xf32>
      %188 = tpu.matmul %185, %187, %cst_232 {dimension_numbers = #tpu.dot_dimension_numbers<[1], [0], [0], [1], [0, 0, 1, 1], [], []>} : vector<64x16xf32>, vector<16x16xf32>, vector<64x16xf32> -> vector<64x16xf32>
      %189 = arith.addf %183, %188 : vector<64x16xf32>
      %c0_233 = arith.constant 0 : index
      %c1_234 = arith.constant 1 : index
      %c0_235 = arith.constant 0 : index
      %190 = vector.load %arg15[%c0_233, %c1_234, %c0_235] : memref<10x10x16xf32, #tpu.memory_space<vmem>>, vector<8x8x16xf32>
      %191 = vector.shape_cast %190 : vector<8x8x16xf32> to vector<64x16xf32>
      %c0_236 = arith.constant 0 : index
      %c1_237 = arith.constant 1 : index
      %c0_238 = arith.constant 0 : index
      %c0_239 = arith.constant 0 : index
      %192 = vector.load %arg3[%c0_236, %c1_237, %c0_238, %c0_239] : memref<3x3x16x16xf32, #tpu.memory_space<vmem>>, vector<1x1x16x16xf32>
      %193 = vector.shape_cast %192 : vector<1x1x16x16xf32> to vector<16x16xf32>
      %cst_240 = arith.constant dense<0.000000e+00> : vector<64x16xf32>
      %194 = tpu.matmul %191, %193, %cst_240 {dimension_numbers = #tpu.dot_dimension_numbers<[1], [0], [0], [1], [0, 0, 1, 1], [], []>} : vector<64x16xf32>, vector<16x16xf32>, vector<64x16xf32> -> vector<64x16xf32>
      %195 = arith.addf %189, %194 : vector<64x16xf32>
      %c0_241 = arith.constant 0 : index
      %c2_242 = arith.constant 2 : index
      %c0_243 = arith.constant 0 : index
      %196 = vector.load %arg15[%c0_241, %c2_242, %c0_243] : memref<10x10x16xf32, #tpu.memory_space<vmem>>, vector<8x8x16xf32>
      %197 = vector.shape_cast %196 : vector<8x8x16xf32> to vector<64x16xf32>
      %c0_244 = arith.constant 0 : index
      %c2_245 = arith.constant 2 : index
      %c0_246 = arith.constant 0 : index
      %c0_247 = arith.constant 0 : index
      %198 = vector.load %arg3[%c0_244, %c2_245, %c0_246, %c0_247] : memref<3x3x16x16xf32, #tpu.memory_space<vmem>>, vector<1x1x16x16xf32>
      %199 = vector.shape_cast %198 : vector<1x1x16x16xf32> to vector<16x16xf32>
      %cst_248 = arith.constant dense<0.000000e+00> : vector<64x16xf32>
      %200 = tpu.matmul %197, %199, %cst_248 {dimension_numbers = #tpu.dot_dimension_numbers<[1], [0], [0], [1], [0, 0, 1, 1], [], []>} : vector<64x16xf32>, vector<16x16xf32>, vector<64x16xf32> -> vector<64x16xf32>
      %201 = arith.addf %195, %200 : vector<64x16xf32>
      %c1_249 = arith.constant 1 : index
      %c0_250 = arith.constant 0 : index
      %c0_251 = arith.constant 0 : index
      %202 = vector.load %arg15[%c1_249, %c0_250, %c0_251] : memref<10x10x16xf32, #tpu.memory_space<vmem>>, vector<8x8x16xf32>
      %203 = vector.shape_cast %202 : vector<8x8x16xf32> to vector<64x16xf32>
      %c1_252 = arith.constant 1 : index
      %c0_253 = arith.constant 0 : index
      %c0_254 = arith.constant 0 : index
      %c0_255 = arith.constant 0 : index
      %204 = vector.load %arg3[%c1_252, %c0_253, %c0_254, %c0_255] : memref<3x3x16x16xf32, #tpu.memory_space<vmem>>, vector<1x1x16x16xf32>
      %205 = vector.shape_cast %204 : vector<1x1x16x16xf32> to vector<16x16xf32>
      %cst_256 = arith.constant dense<0.000000e+00> : vector<64x16xf32>
      %206 = tpu.matmul %203, %205, %cst_256 {dimension_numbers = #tpu.dot_dimension_numbers<[1], [0], [0], [1], [0, 0, 1, 1], [], []>} : vector<64x16xf32>, vector<16x16xf32>, vector<64x16xf32> -> vector<64x16xf32>
      %207 = arith.addf %201, %206 : vector<64x16xf32>
      %c1_257 = arith.constant 1 : index
      %c1_258 = arith.constant 1 : index
      %c0_259 = arith.constant 0 : index
      %208 = vector.load %arg15[%c1_257, %c1_258, %c0_259] : memref<10x10x16xf32, #tpu.memory_space<vmem>>, vector<8x8x16xf32>
      %209 = vector.shape_cast %208 : vector<8x8x16xf32> to vector<64x16xf32>
      %c1_260 = arith.constant 1 : index
      %c1_261 = arith.constant 1 : index
      %c0_262 = arith.constant 0 : index
      %c0_263 = arith.constant 0 : index
      %210 = vector.load %arg3[%c1_260, %c1_261, %c0_262, %c0_263] : memref<3x3x16x16xf32, #tpu.memory_space<vmem>>, vector<1x1x16x16xf32>
      %211 = vector.shape_cast %210 : vector<1x1x16x16xf32> to vector<16x16xf32>
      %cst_264 = arith.constant dense<0.000000e+00> : vector<64x16xf32>
      %212 = tpu.matmul %209, %211, %cst_264 {dimension_numbers = #tpu.dot_dimension_numbers<[1], [0], [0], [1], [0, 0, 1, 1], [], []>} : vector<64x16xf32>, vector<16x16xf32>, vector<64x16xf32> -> vector<64x16xf32>
      %213 = arith.addf %207, %212 : vector<64x16xf32>
      %c1_265 = arith.constant 1 : index
      %c2_266 = arith.constant 2 : index
      %c0_267 = arith.constant 0 : index
      %214 = vector.load %arg15[%c1_265, %c2_266, %c0_267] : memref<10x10x16xf32, #tpu.memory_space<vmem>>, vector<8x8x16xf32>
      %215 = vector.shape_cast %214 : vector<8x8x16xf32> to vector<64x16xf32>
      %c1_268 = arith.constant 1 : index
      %c2_269 = arith.constant 2 : index
      %c0_270 = arith.constant 0 : index
      %c0_271 = arith.constant 0 : index
      %216 = vector.load %arg3[%c1_268, %c2_269, %c0_270, %c0_271] : memref<3x3x16x16xf32, #tpu.memory_space<vmem>>, vector<1x1x16x16xf32>
      %217 = vector.shape_cast %216 : vector<1x1x16x16xf32> to vector<16x16xf32>
      %cst_272 = arith.constant dense<0.000000e+00> : vector<64x16xf32>
      %218 = tpu.matmul %215, %217, %cst_272 {dimension_numbers = #tpu.dot_dimension_numbers<[1], [0], [0], [1], [0, 0, 1, 1], [], []>} : vector<64x16xf32>, vector<16x16xf32>, vector<64x16xf32> -> vector<64x16xf32>
      %219 = arith.addf %213, %218 : vector<64x16xf32>
      %c2_273 = arith.constant 2 : index
      %c0_274 = arith.constant 0 : index
      %c0_275 = arith.constant 0 : index
      %220 = vector.load %arg15[%c2_273, %c0_274, %c0_275] : memref<10x10x16xf32, #tpu.memory_space<vmem>>, vector<8x8x16xf32>
      %221 = vector.shape_cast %220 : vector<8x8x16xf32> to vector<64x16xf32>
      %c2_276 = arith.constant 2 : index
      %c0_277 = arith.constant 0 : index
      %c0_278 = arith.constant 0 : index
      %c0_279 = arith.constant 0 : index
      %222 = vector.load %arg3[%c2_276, %c0_277, %c0_278, %c0_279] : memref<3x3x16x16xf32, #tpu.memory_space<vmem>>, vector<1x1x16x16xf32>
      %223 = vector.shape_cast %222 : vector<1x1x16x16xf32> to vector<16x16xf32>
      %cst_280 = arith.constant dense<0.000000e+00> : vector<64x16xf32>
      %224 = tpu.matmul %221, %223, %cst_280 {dimension_numbers = #tpu.dot_dimension_numbers<[1], [0], [0], [1], [0, 0, 1, 1], [], []>} : vector<64x16xf32>, vector<16x16xf32>, vector<64x16xf32> -> vector<64x16xf32>
      %225 = arith.addf %219, %224 : vector<64x16xf32>
      %c2_281 = arith.constant 2 : index
      %c1_282 = arith.constant 1 : index
      %c0_283 = arith.constant 0 : index
      %226 = vector.load %arg15[%c2_281, %c1_282, %c0_283] : memref<10x10x16xf32, #tpu.memory_space<vmem>>, vector<8x8x16xf32>
      %227 = vector.shape_cast %226 : vector<8x8x16xf32> to vector<64x16xf32>
      %c2_284 = arith.constant 2 : index
      %c1_285 = arith.constant 1 : index
      %c0_286 = arith.constant 0 : index
      %c0_287 = arith.constant 0 : index
      %228 = vector.load %arg3[%c2_284, %c1_285, %c0_286, %c0_287] : memref<3x3x16x16xf32, #tpu.memory_space<vmem>>, vector<1x1x16x16xf32>
      %229 = vector.shape_cast %228 : vector<1x1x16x16xf32> to vector<16x16xf32>
      %cst_288 = arith.constant dense<0.000000e+00> : vector<64x16xf32>
      %230 = tpu.matmul %227, %229, %cst_288 {dimension_numbers = #tpu.dot_dimension_numbers<[1], [0], [0], [1], [0, 0, 1, 1], [], []>} : vector<64x16xf32>, vector<16x16xf32>, vector<64x16xf32> -> vector<64x16xf32>
      %231 = arith.addf %225, %230 : vector<64x16xf32>
      %c2_289 = arith.constant 2 : index
      %c2_290 = arith.constant 2 : index
      %c0_291 = arith.constant 0 : index
      %232 = vector.load %arg15[%c2_289, %c2_290, %c0_291] : memref<10x10x16xf32, #tpu.memory_space<vmem>>, vector<8x8x16xf32>
      %233 = vector.shape_cast %232 : vector<8x8x16xf32> to vector<64x16xf32>
      %c2_292 = arith.constant 2 : index
      %c2_293 = arith.constant 2 : index
      %c0_294 = arith.constant 0 : index
      %c0_295 = arith.constant 0 : index
      %234 = vector.load %arg3[%c2_292, %c2_293, %c0_294, %c0_295] : memref<3x3x16x16xf32, #tpu.memory_space<vmem>>, vector<1x1x16x16xf32>
      %235 = vector.shape_cast %234 : vector<1x1x16x16xf32> to vector<16x16xf32>
      %cst_296 = arith.constant dense<0.000000e+00> : vector<64x16xf32>
      %236 = tpu.matmul %233, %235, %cst_296 {dimension_numbers = #tpu.dot_dimension_numbers<[1], [0], [0], [1], [0, 0, 1, 1], [], []>} : vector<64x16xf32>, vector<16x16xf32>, vector<64x16xf32> -> vector<64x16xf32>
      %237 = arith.addf %231, %236 : vector<64x16xf32>
      %c0_297 = arith.constant 0 : index
      %c0_298 = arith.constant 0 : index
      %238 = vector.load %arg4[%c0_297, %c0_298] : memref<1x16xf32, #tpu.memory_space<vmem>>, vector<1x16xf32>
      %239 = vector.broadcast %238 : vector<1x16xf32> to vector<64x16xf32>
      %240 = arith.addf %237, %239 : vector<64x16xf32>
      %241 = arith.mulf %240, %240 : vector<64x16xf32>
      %cst_299 = arith.constant dense<0.000000e+00> : vector<64xf32>
      %242 = vector.multi_reduction <add>, %241, %cst_299 [1] : vector<64x16xf32> to vector<64xf32>
      %243 = vector.shape_cast %242 : vector<64xf32> to vector<64x1xf32>
      %244 = math.rsqrt %243 : vector<64x1xf32>
      %245 = vector.broadcast %244 : vector<64x1xf32> to vector<64x16xf32>
      %246 = arith.mulf %240, %245 : vector<64x16xf32>
      %c0_300 = arith.constant 0 : index
      %c0_301 = arith.constant 0 : index
      %c0_302 = arith.constant 0 : index
      %c0_303 = arith.constant 0 : index
      %247 = vector.load %arg1[%c0_300, %c0_301, %c0_302, %c0_303] : memref<1x8x8x16xf32, #tpu.memory_space<vmem>>, vector<1x8x8x16xf32>
      %248 = vector.shape_cast %247 : vector<1x8x8x16xf32> to vector<8x8x16xf32>
      %249 = vector.shape_cast %248 : vector<8x8x16xf32> to vector<64x16xf32>
      %c0_304 = arith.constant 0 : index
      %c0_305 = arith.constant 0 : index
      %250 = vector.load %arg5[%c0_304, %c0_305] : memref<16x64xf32, #tpu.memory_space<vmem>>, vector<16x64xf32>
      %cst_306 = arith.constant dense<0.000000e+00> : vector<64x64xf32>
      %251 = tpu.matmul %246, %250, %cst_306 {dimension_numbers = #tpu.dot_dimension_numbers<[1], [0], [0], [1], [0, 0, 1, 1], [], []>} : vector<64x16xf32>, vector<16x64xf32>, vector<64x64xf32> -> vector<64x64xf32>
      %c0_307 = arith.constant 0 : index
      %c0_308 = arith.constant 0 : index
      %252 = vector.load %arg6[%c0_307, %c0_308] : memref<16x64xf32, #tpu.memory_space<vmem>>, vector<16x64xf32>
      %cst_309 = arith.constant dense<0.000000e+00> : vector<64x64xf32>
      %253 = tpu.matmul %249, %252, %cst_309 {dimension_numbers = #tpu.dot_dimension_numbers<[1], [0], [0], [1], [0, 0, 1, 1], [], []>} : vector<64x16xf32>, vector<16x64xf32>, vector<64x64xf32> -> vector<64x64xf32>
      %254 = arith.addf %251, %253 : vector<64x64xf32>
      %c0_310 = arith.constant 0 : index
      %c0_311 = arith.constant 0 : index
      %255 = vector.load %arg9[%c0_310, %c0_311] : memref<1x64xf32, #tpu.memory_space<vmem>>, vector<1x64xf32>
      %256 = vector.broadcast %255 : vector<1x64xf32> to vector<64x64xf32>
      %257 = arith.addf %254, %256 : vector<64x64xf32>
      %c0_312 = arith.constant 0 : index
      %c0_313 = arith.constant 0 : index
      %258 = vector.load %arg17[%c0_312, %c0_313] : memref<64x64xf32, #tpu.memory_space<vmem>>, vector<64x64xf32>
      tpu.vector_store %arg17[%c0_312, %c0_313], %257 {strides = array<i32>} : memref<64x64xf32, #tpu.memory_space<vmem>>, vector<64x64xf32>,
      %cst_314 = arith.constant 0xFF800000 : f32
      %259 = vector.broadcast %cst_314 : f32 to vector<64x16xf32>
      %c0_315 = arith.constant 0 : index
      %c0_316 = arith.constant 0 : index
      %260 = vector.load %arg18[%c0_315, %c0_316] : memref<64x16xf32, #tpu.memory_space<vmem>>, vector<64x16xf32>
      tpu.vector_store %arg18[%c0_315, %c0_316], %259 {strides = array<i32>} : memref<64x16xf32, #tpu.memory_space<vmem>>, vector<64x16xf32>,
      %cst_317 = arith.constant 0.000000e+00 : f32
      %261 = vector.broadcast %cst_317 : f32 to vector<64x16xf32>
      %c0_318 = arith.constant 0 : index
      %c0_319 = arith.constant 0 : index
      %262 = vector.load %arg19[%c0_318, %c0_319] : memref<64x16xf32, #tpu.memory_space<vmem>>, vector<64x16xf32>
      tpu.vector_store %arg19[%c0_318, %c0_319], %261 {strides = array<i32>} : memref<64x16xf32, #tpu.memory_space<vmem>>, vector<64x16xf32>,
      %cst_320 = arith.constant 0.000000e+00 : f32
      %263 = vector.broadcast %cst_320 : f32 to vector<64x16xf32>
      %c0_321 = arith.constant 0 : index
      %c0_322 = arith.constant 0 : index
      %264 = vector.load %arg20[%c0_321, %c0_322] : memref<64x16xf32, #tpu.memory_space<vmem>>, vector<64x16xf32>
      tpu.vector_store %arg20[%c0_321, %c0_322], %263 {strides = array<i32>} : memref<64x16xf32, #tpu.memory_space<vmem>>, vector<64x16xf32>,
    } else {
    }
    %c0 = arith.constant 0 : index
    %c0_1 = arith.constant 0 : index
    %c0_2 = arith.constant 0 : index
    %c0_3 = arith.constant 0 : index
    %3 = vector.load %arg2[%c0, %c0_1, %c0_2, %c0_3] : memref<1x8x8x16xf32, #tpu.memory_space<vmem>>, vector<1x8x8x16xf32>
    %4 = vector.shape_cast %3 : vector<1x8x8x16xf32> to vector<8x8x16xf32>
    %c1 = arith.constant 1 : index
    %c1_4 = arith.constant 1 : index
    %c0_5 = arith.constant 0 : index
    %5 = vector.load %arg15[%c1, %c1_4, %c0_5] : memref<10x10x16xf32, #tpu.memory_space<vmem>>, vector<8x8x16xf32>
    tpu.vector_store %arg15[%c1, %c1_4, %c0_5], %4 {strides = array<i32>} : memref<10x10x16xf32, #tpu.memory_space<vmem>>, vector<8x8x16xf32>,
    %cst = arith.constant 0.000000e+00 : f32
    %6 = vector.broadcast %cst : f32 to vector<64x16xf32>
    %c0_6 = arith.constant 0 : index
    %c0_7 = arith.constant 0 : index
    %c0_8 = arith.constant 0 : index
    %7 = vector.load %arg15[%c0_6, %c0_7, %c0_8] : memref<10x10x16xf32, #tpu.memory_space<vmem>>, vector<8x8x16xf32>
    %8 = vector.shape_cast %7 : vector<8x8x16xf32> to vector<64x16xf32>
    %c0_9 = arith.constant 0 : index
    %c0_10 = arith.constant 0 : index
    %c0_11 = arith.constant 0 : index
    %c0_12 = arith.constant 0 : index
    %9 = vector.load %arg3[%c0_9, %c0_10, %c0_11, %c0_12] : memref<3x3x16x16xf32, #tpu.memory_space<vmem>>, vector<1x1x16x16xf32>
    %10 = vector.shape_cast %9 : vector<1x1x16x16xf32> to vector<16x16xf32>
    %cst_13 = arith.constant dense<0.000000e+00> : vector<64x16xf32>
    %11 = tpu.matmul %8, %10, %cst_13 {dimension_numbers = #tpu.dot_dimension_numbers<[1], [0], [0], [1], [0, 0, 1, 1], [], []>} : vector<64x16xf32>, vector<16x16xf32>, vector<64x16xf32> -> vector<64x16xf32>
    %12 = arith.addf %6, %11 : vector<64x16xf32>
    %c0_14 = arith.constant 0 : index
    %c1_15 = arith.constant 1 : index
    %c0_16 = arith.constant 0 : index
    %13 = vector.load %arg15[%c0_14, %c1_15, %c0_16] : memref<10x10x16xf32, #tpu.memory_space<vmem>>, vector<8x8x16xf32>
    %14 = vector.shape_cast %13 : vector<8x8x16xf32> to vector<64x16xf32>
    %c0_17 = arith.constant 0 : index
    %c1_18 = arith.constant 1 : index
    %c0_19 = arith.constant 0 : index
    %c0_20 = arith.constant 0 : index
    %15 = vector.load %arg3[%c0_17, %c1_18, %c0_19, %c0_20] : memref<3x3x16x16xf32, #tpu.memory_space<vmem>>, vector<1x1x16x16xf32>
    %16 = vector.shape_cast %15 : vector<1x1x16x16xf32> to vector<16x16xf32>
    %cst_21 = arith.constant dense<0.000000e+00> : vector<64x16xf32>
    %17 = tpu.matmul %14, %16, %cst_21 {dimension_numbers = #tpu.dot_dimension_numbers<[1], [0], [0], [1], [0, 0, 1, 1], [], []>} : vector<64x16xf32>, vector<16x16xf32>, vector<64x16xf32> -> vector<64x16xf32>
    %18 = arith.addf %12, %17 : vector<64x16xf32>
    %c0_22 = arith.constant 0 : index
    %c2 = arith.constant 2 : index
    %c0_23 = arith.constant 0 : index
    %19 = vector.load %arg15[%c0_22, %c2, %c0_23] : memref<10x10x16xf32, #tpu.memory_space<vmem>>, vector<8x8x16xf32>
    %20 = vector.shape_cast %19 : vector<8x8x16xf32> to vector<64x16xf32>
    %c0_24 = arith.constant 0 : index
    %c2_25 = arith.constant 2 : index
    %c0_26 = arith.constant 0 : index
    %c0_27 = arith.constant 0 : index
    %21 = vector.load %arg3[%c0_24, %c2_25, %c0_26, %c0_27] : memref<3x3x16x16xf32, #tpu.memory_space<vmem>>, vector<1x1x16x16xf32>
    %22 = vector.shape_cast %21 : vector<1x1x16x16xf32> to vector<16x16xf32>
    %cst_28 = arith.constant dense<0.000000e+00> : vector<64x16xf32>
    %23 = tpu.matmul %20, %22, %cst_28 {dimension_numbers = #tpu.dot_dimension_numbers<[1], [0], [0], [1], [0, 0, 1, 1], [], []>} : vector<64x16xf32>, vector<16x16xf32>, vector<64x16xf32> -> vector<64x16xf32>
    %24 = arith.addf %18, %23 : vector<64x16xf32>
    %c1_29 = arith.constant 1 : index
    %c0_30 = arith.constant 0 : index
    %c0_31 = arith.constant 0 : index
    %25 = vector.load %arg15[%c1_29, %c0_30, %c0_31] : memref<10x10x16xf32, #tpu.memory_space<vmem>>, vector<8x8x16xf32>
    %26 = vector.shape_cast %25 : vector<8x8x16xf32> to vector<64x16xf32>
    %c1_32 = arith.constant 1 : index
    %c0_33 = arith.constant 0 : index
    %c0_34 = arith.constant 0 : index
    %c0_35 = arith.constant 0 : index
    %27 = vector.load %arg3[%c1_32, %c0_33, %c0_34, %c0_35] : memref<3x3x16x16xf32, #tpu.memory_space<vmem>>, vector<1x1x16x16xf32>
    %28 = vector.shape_cast %27 : vector<1x1x16x16xf32> to vector<16x16xf32>
    %cst_36 = arith.constant dense<0.000000e+00> : vector<64x16xf32>
    %29 = tpu.matmul %26, %28, %cst_36 {dimension_numbers = #tpu.dot_dimension_numbers<[1], [0], [0], [1], [0, 0, 1, 1], [], []>} : vector<64x16xf32>, vector<16x16xf32>, vector<64x16xf32> -> vector<64x16xf32>
    %30 = arith.addf %24, %29 : vector<64x16xf32>
    %c1_37 = arith.constant 1 : index
    %c1_38 = arith.constant 1 : index
    %c0_39 = arith.constant 0 : index
    %31 = vector.load %arg15[%c1_37, %c1_38, %c0_39] : memref<10x10x16xf32, #tpu.memory_space<vmem>>, vector<8x8x16xf32>
    %32 = vector.shape_cast %31 : vector<8x8x16xf32> to vector<64x16xf32>
    %c1_40 = arith.constant 1 : index
    %c1_41 = arith.constant 1 : index
    %c0_42 = arith.constant 0 : index
    %c0_43 = arith.constant 0 : index
    %33 = vector.load %arg3[%c1_40, %c1_41, %c0_42, %c0_43] : memref<3x3x16x16xf32, #tpu.memory_space<vmem>>, vector<1x1x16x16xf32>
    %34 = vector.shape_cast %33 : vector<1x1x16x16xf32> to vector<16x16xf32>
    %cst_44 = arith.constant dense<0.000000e+00> : vector<64x16xf32>
    %35 = tpu.matmul %32, %34, %cst_44 {dimension_numbers = #tpu.dot_dimension_numbers<[1], [0], [0], [1], [0, 0, 1, 1], [], []>} : vector<64x16xf32>, vector<16x16xf32>, vector<64x16xf32> -> vector<64x16xf32>
    %36 = arith.addf %30, %35 : vector<64x16xf32>
    %c1_45 = arith.constant 1 : index
    %c2_46 = arith.constant 2 : index
    %c0_47 = arith.constant 0 : index
    %37 = vector.load %arg15[%c1_45, %c2_46, %c0_47] : memref<10x10x16xf32, #tpu.memory_space<vmem>>, vector<8x8x16xf32>
    %38 = vector.shape_cast %37 : vector<8x8x16xf32> to vector<64x16xf32>
    %c1_48 = arith.constant 1 : index
    %c2_49 = arith.constant 2 : index
    %c0_50 = arith.constant 0 : index
    %c0_51 = arith.constant 0 : index
    %39 = vector.load %arg3[%c1_48, %c2_49, %c0_50, %c0_51] : memref<3x3x16x16xf32, #tpu.memory_space<vmem>>, vector<1x1x16x16xf32>
    %40 = vector.shape_cast %39 : vector<1x1x16x16xf32> to vector<16x16xf32>
    %cst_52 = arith.constant dense<0.000000e+00> : vector<64x16xf32>
    %41 = tpu.matmul %38, %40, %cst_52 {dimension_numbers = #tpu.dot_dimension_numbers<[1], [0], [0], [1], [0, 0, 1, 1], [], []>} : vector<64x16xf32>, vector<16x16xf32>, vector<64x16xf32> -> vector<64x16xf32>
    %42 = arith.addf %36, %41 : vector<64x16xf32>
    %c2_53 = arith.constant 2 : index
    %c0_54 = arith.constant 0 : index
    %c0_55 = arith.constant 0 : index
    %43 = vector.load %arg15[%c2_53, %c0_54, %c0_55] : memref<10x10x16xf32, #tpu.memory_space<vmem>>, vector<8x8x16xf32>
    %44 = vector.shape_cast %43 : vector<8x8x16xf32> to vector<64x16xf32>
    %c2_56 = arith.constant 2 : index
    %c0_57 = arith.constant 0 : index
    %c0_58 = arith.constant 0 : index
    %c0_59 = arith.constant 0 : index
    %45 = vector.load %arg3[%c2_56, %c0_57, %c0_58, %c0_59] : memref<3x3x16x16xf32, #tpu.memory_space<vmem>>, vector<1x1x16x16xf32>
    %46 = vector.shape_cast %45 : vector<1x1x16x16xf32> to vector<16x16xf32>
    %cst_60 = arith.constant dense<0.000000e+00> : vector<64x16xf32>
    %47 = tpu.matmul %44, %46, %cst_60 {dimension_numbers = #tpu.dot_dimension_numbers<[1], [0], [0], [1], [0, 0, 1, 1], [], []>} : vector<64x16xf32>, vector<16x16xf32>, vector<64x16xf32> -> vector<64x16xf32>
    %48 = arith.addf %42, %47 : vector<64x16xf32>
    %c2_61 = arith.constant 2 : index
    %c1_62 = arith.constant 1 : index
    %c0_63 = arith.constant 0 : index
    %49 = vector.load %arg15[%c2_61, %c1_62, %c0_63] : memref<10x10x16xf32, #tpu.memory_space<vmem>>, vector<8x8x16xf32>
    %50 = vector.shape_cast %49 : vector<8x8x16xf32> to vector<64x16xf32>
    %c2_64 = arith.constant 2 : index
    %c1_65 = arith.constant 1 : index
    %c0_66 = arith.constant 0 : index
    %c0_67 = arith.constant 0 : index
    %51 = vector.load %arg3[%c2_64, %c1_65, %c0_66, %c0_67] : memref<3x3x16x16xf32, #tpu.memory_space<vmem>>, vector<1x1x16x16xf32>
    %52 = vector.shape_cast %51 : vector<1x1x16x16xf32> to vector<16x16xf32>
    %cst_68 = arith.constant dense<0.000000e+00> : vector<64x16xf32>
    %53 = tpu.matmul %50, %52, %cst_68 {dimension_numbers = #tpu.dot_dimension_numbers<[1], [0], [0], [1], [0, 0, 1, 1], [], []>} : vector<64x16xf32>, vector<16x16xf32>, vector<64x16xf32> -> vector<64x16xf32>
    %54 = arith.addf %48, %53 : vector<64x16xf32>
    %c2_69 = arith.constant 2 : index
    %c2_70 = arith.constant 2 : index
    %c0_71 = arith.constant 0 : index
    %55 = vector.load %arg15[%c2_69, %c2_70, %c0_71] : memref<10x10x16xf32, #tpu.memory_space<vmem>>, vector<8x8x16xf32>
    %56 = vector.shape_cast %55 : vector<8x8x16xf32> to vector<64x16xf32>
    %c2_72 = arith.constant 2 : index
    %c2_73 = arith.constant 2 : index
    %c0_74 = arith.constant 0 : index
    %c0_75 = arith.constant 0 : index
    %57 = vector.load %arg3[%c2_72, %c2_73, %c0_74, %c0_75] : memref<3x3x16x16xf32, #tpu.memory_space<vmem>>, vector<1x1x16x16xf32>
    %58 = vector.shape_cast %57 : vector<1x1x16x16xf32> to vector<16x16xf32>
    %cst_76 = arith.constant dense<0.000000e+00> : vector<64x16xf32>
    %59 = tpu.matmul %56, %58, %cst_76 {dimension_numbers = #tpu.dot_dimension_numbers<[1], [0], [0], [1], [0, 0, 1, 1], [], []>} : vector<64x16xf32>, vector<16x16xf32>, vector<64x16xf32> -> vector<64x16xf32>
    %60 = arith.addf %54, %59 : vector<64x16xf32>
    %c0_77 = arith.constant 0 : index
    %c0_78 = arith.constant 0 : index
    %61 = vector.load %arg4[%c0_77, %c0_78] : memref<1x16xf32, #tpu.memory_space<vmem>>, vector<1x16xf32>
    %62 = vector.broadcast %61 : vector<1x16xf32> to vector<64x16xf32>
    %63 = arith.addf %60, %62 : vector<64x16xf32>
    %64 = arith.mulf %63, %63 : vector<64x16xf32>
    %cst_79 = arith.constant dense<0.000000e+00> : vector<64xf32>
    %65 = vector.multi_reduction <add>, %64, %cst_79 [1] : vector<64x16xf32> to vector<64xf32>
    %66 = vector.shape_cast %65 : vector<64xf32> to vector<64x1xf32>
    %67 = math.rsqrt %66 : vector<64x1xf32>
    %68 = vector.broadcast %67 : vector<64x1xf32> to vector<64x16xf32>
    %69 = arith.mulf %63, %68 : vector<64x16xf32>
    %c0_80 = arith.constant 0 : index
    %c0_81 = arith.constant 0 : index
    %c0_82 = arith.constant 0 : index
    %c0_83 = arith.constant 0 : index
    %70 = vector.load %arg2[%c0_80, %c0_81, %c0_82, %c0_83] : memref<1x8x8x16xf32, #tpu.memory_space<vmem>>, vector<1x8x8x16xf32>
    %71 = vector.shape_cast %70 : vector<1x8x8x16xf32> to vector<8x8x16xf32>
    %72 = vector.shape_cast %71 : vector<8x8x16xf32> to vector<64x16xf32>
    %c0_84 = arith.constant 0 : index
    %c0_85 = arith.constant 0 : index
    %73 = vector.load %arg7[%c0_84, %c0_85] : memref<16x64xf32, #tpu.memory_space<vmem>>, vector<16x64xf32>
    %cst_86 = arith.constant dense<0.000000e+00> : vector<64x64xf32>
    %74 = tpu.matmul %69, %73, %cst_86 {dimension_numbers = #tpu.dot_dimension_numbers<[1], [0], [0], [1], [0, 0, 1, 1], [], []>} : vector<64x16xf32>, vector<16x64xf32>, vector<64x64xf32> -> vector<64x64xf32>
    %c0_87 = arith.constant 0 : index
    %c0_88 = arith.constant 0 : index
    %75 = vector.load %arg8[%c0_87, %c0_88] : memref<16x64xf32, #tpu.memory_space<vmem>>, vector<16x64xf32>
    %cst_89 = arith.constant dense<0.000000e+00> : vector<64x64xf32>
    %76 = tpu.matmul %72, %75, %cst_89 {dimension_numbers = #tpu.dot_dimension_numbers<[1], [0], [0], [1], [0, 0, 1, 1], [], []>} : vector<64x16xf32>, vector<16x64xf32>, vector<64x64xf32> -> vector<64x64xf32>
    %77 = arith.addf %74, %76 : vector<64x64xf32>
    %c0_90 = arith.constant 0 : index
    %c0_91 = arith.constant 0 : index
    %78 = vector.load %arg17[%c0_90, %c0_91] : memref<64x64xf32, #tpu.memory_space<vmem>>, vector<64x64xf32>
    %79 = arith.addf %77, %78 : vector<64x64xf32>
    %cst_92 = arith.constant 0.000000e+00 : f32
    %80 = vector.broadcast %cst_92 : f32 to vector<64x64xf32>
    %81 = arith.maximumf %79, %80 : vector<64x64xf32>
    %82 = vector.shape_cast %81 : vector<64x64xf32> to vector<8x8x64xf32>
    %c1_93 = arith.constant 1 : index
    %c1_94 = arith.constant 1 : index
    %c0_95 = arith.constant 0 : index
    %83 = vector.load %arg16[%c1_93, %c1_94, %c0_95] : memref<10x10x64xf32, #tpu.memory_space<vmem>>, vector<8x8x64xf32>
    tpu.vector_store %arg16[%c1_93, %c1_94, %c0_95], %82 {strides = array<i32>} : memref<10x10x64xf32, #tpu.memory_space<vmem>>, vector<8x8x64xf32>,
    %cst_96 = arith.constant 0.000000e+00 : f32
    %84 = vector.broadcast %cst_96 : f32 to vector<64x32xf32>
    %c0_97 = arith.constant 0 : index
    %c0_98 = arith.constant 0 : index
    %c0_99 = arith.constant 0 : index
    %85 = vector.load %arg16[%c0_97, %c0_98, %c0_99] : memref<10x10x64xf32, #tpu.memory_space<vmem>>, vector<8x8x64xf32>
    %86 = vector.shape_cast %85 : vector<8x8x64xf32> to vector<64x64xf32>
    %c0_100 = arith.constant 0 : index
    %c0_101 = arith.constant 0 : index
    %c0_102 = arith.constant 0 : index
    %c0_103 = arith.constant 0 : index
    %87 = vector.load %arg10[%c0_100, %c0_101, %c0_102, %c0_103] : memref<3x3x64x32xf32, #tpu.memory_space<vmem>>, vector<1x1x64x32xf32>
    %88 = vector.shape_cast %87 : vector<1x1x64x32xf32> to vector<64x32xf32>
    %cst_104 = arith.constant dense<0.000000e+00> : vector<64x32xf32>
    %89 = tpu.matmul %86, %88, %cst_104 {dimension_numbers = #tpu.dot_dimension_numbers<[1], [0], [0], [1], [0, 0, 1, 1], [], []>} : vector<64x64xf32>, vector<64x32xf32>, vector<64x32xf32> -> vector<64x32xf32>
    %90 = arith.addf %84, %89 : vector<64x32xf32>
    %c0_105 = arith.constant 0 : index
    %c1_106 = arith.constant 1 : index
    %c0_107 = arith.constant 0 : index
    %91 = vector.load %arg16[%c0_105, %c1_106, %c0_107] : memref<10x10x64xf32, #tpu.memory_space<vmem>>, vector<8x8x64xf32>
    %92 = vector.shape_cast %91 : vector<8x8x64xf32> to vector<64x64xf32>
    %c0_108 = arith.constant 0 : index
    %c1_109 = arith.constant 1 : index
    %c0_110 = arith.constant 0 : index
    %c0_111 = arith.constant 0 : index
    %93 = vector.load %arg10[%c0_108, %c1_109, %c0_110, %c0_111] : memref<3x3x64x32xf32, #tpu.memory_space<vmem>>, vector<1x1x64x32xf32>
    %94 = vector.shape_cast %93 : vector<1x1x64x32xf32> to vector<64x32xf32>
    %cst_112 = arith.constant dense<0.000000e+00> : vector<64x32xf32>
    %95 = tpu.matmul %92, %94, %cst_112 {dimension_numbers = #tpu.dot_dimension_numbers<[1], [0], [0], [1], [0, 0, 1, 1], [], []>} : vector<64x64xf32>, vector<64x32xf32>, vector<64x32xf32> -> vector<64x32xf32>
    %96 = arith.addf %90, %95 : vector<64x32xf32>
    %c0_113 = arith.constant 0 : index
    %c2_114 = arith.constant 2 : index
    %c0_115 = arith.constant 0 : index
    %97 = vector.load %arg16[%c0_113, %c2_114, %c0_115] : memref<10x10x64xf32, #tpu.memory_space<vmem>>, vector<8x8x64xf32>
    %98 = vector.shape_cast %97 : vector<8x8x64xf32> to vector<64x64xf32>
    %c0_116 = arith.constant 0 : index
    %c2_117 = arith.constant 2 : index
    %c0_118 = arith.constant 0 : index
    %c0_119 = arith.constant 0 : index
    %99 = vector.load %arg10[%c0_116, %c2_117, %c0_118, %c0_119] : memref<3x3x64x32xf32, #tpu.memory_space<vmem>>, vector<1x1x64x32xf32>
    %100 = vector.shape_cast %99 : vector<1x1x64x32xf32> to vector<64x32xf32>
    %cst_120 = arith.constant dense<0.000000e+00> : vector<64x32xf32>
    %101 = tpu.matmul %98, %100, %cst_120 {dimension_numbers = #tpu.dot_dimension_numbers<[1], [0], [0], [1], [0, 0, 1, 1], [], []>} : vector<64x64xf32>, vector<64x32xf32>, vector<64x32xf32> -> vector<64x32xf32>
    %102 = arith.addf %96, %101 : vector<64x32xf32>
    %c1_121 = arith.constant 1 : index
    %c0_122 = arith.constant 0 : index
    %c0_123 = arith.constant 0 : index
    %103 = vector.load %arg16[%c1_121, %c0_122, %c0_123] : memref<10x10x64xf32, #tpu.memory_space<vmem>>, vector<8x8x64xf32>
    %104 = vector.shape_cast %103 : vector<8x8x64xf32> to vector<64x64xf32>
    %c1_124 = arith.constant 1 : index
    %c0_125 = arith.constant 0 : index
    %c0_126 = arith.constant 0 : index
    %c0_127 = arith.constant 0 : index
    %105 = vector.load %arg10[%c1_124, %c0_125, %c0_126, %c0_127] : memref<3x3x64x32xf32, #tpu.memory_space<vmem>>, vector<1x1x64x32xf32>
    %106 = vector.shape_cast %105 : vector<1x1x64x32xf32> to vector<64x32xf32>
    %cst_128 = arith.constant dense<0.000000e+00> : vector<64x32xf32>
    %107 = tpu.matmul %104, %106, %cst_128 {dimension_numbers = #tpu.dot_dimension_numbers<[1], [0], [0], [1], [0, 0, 1, 1], [], []>} : vector<64x64xf32>, vector<64x32xf32>, vector<64x32xf32> -> vector<64x32xf32>
    %108 = arith.addf %102, %107 : vector<64x32xf32>
    %c1_129 = arith.constant 1 : index
    %c1_130 = arith.constant 1 : index
    %c0_131 = arith.constant 0 : index
    %109 = vector.load %arg16[%c1_129, %c1_130, %c0_131] : memref<10x10x64xf32, #tpu.memory_space<vmem>>, vector<8x8x64xf32>
    %110 = vector.shape_cast %109 : vector<8x8x64xf32> to vector<64x64xf32>
    %c1_132 = arith.constant 1 : index
    %c1_133 = arith.constant 1 : index
    %c0_134 = arith.constant 0 : index
    %c0_135 = arith.constant 0 : index
    %111 = vector.load %arg10[%c1_132, %c1_133, %c0_134, %c0_135] : memref<3x3x64x32xf32, #tpu.memory_space<vmem>>, vector<1x1x64x32xf32>
    %112 = vector.shape_cast %111 : vector<1x1x64x32xf32> to vector<64x32xf32>
    %cst_136 = arith.constant dense<0.000000e+00> : vector<64x32xf32>
    %113 = tpu.matmul %110, %112, %cst_136 {dimension_numbers = #tpu.dot_dimension_numbers<[1], [0], [0], [1], [0, 0, 1, 1], [], []>} : vector<64x64xf32>, vector<64x32xf32>, vector<64x32xf32> -> vector<64x32xf32>
    %114 = arith.addf %108, %113 : vector<64x32xf32>
    %c1_137 = arith.constant 1 : index
    %c2_138 = arith.constant 2 : index
    %c0_139 = arith.constant 0 : index
    %115 = vector.load %arg16[%c1_137, %c2_138, %c0_139] : memref<10x10x64xf32, #tpu.memory_space<vmem>>, vector<8x8x64xf32>
    %116 = vector.shape_cast %115 : vector<8x8x64xf32> to vector<64x64xf32>
    %c1_140 = arith.constant 1 : index
    %c2_141 = arith.constant 2 : index
    %c0_142 = arith.constant 0 : index
    %c0_143 = arith.constant 0 : index
    %117 = vector.load %arg10[%c1_140, %c2_141, %c0_142, %c0_143] : memref<3x3x64x32xf32, #tpu.memory_space<vmem>>, vector<1x1x64x32xf32>
    %118 = vector.shape_cast %117 : vector<1x1x64x32xf32> to vector<64x32xf32>
    %cst_144 = arith.constant dense<0.000000e+00> : vector<64x32xf32>
    %119 = tpu.matmul %116, %118, %cst_144 {dimension_numbers = #tpu.dot_dimension_numbers<[1], [0], [0], [1], [0, 0, 1, 1], [], []>} : vector<64x64xf32>, vector<64x32xf32>, vector<64x32xf32> -> vector<64x32xf32>
    %120 = arith.addf %114, %119 : vector<64x32xf32>
    %c2_145 = arith.constant 2 : index
    %c0_146 = arith.constant 0 : index
    %c0_147 = arith.constant 0 : index
    %121 = vector.load %arg16[%c2_145, %c0_146, %c0_147] : memref<10x10x64xf32, #tpu.memory_space<vmem>>, vector<8x8x64xf32>
    %122 = vector.shape_cast %121 : vector<8x8x64xf32> to vector<64x64xf32>
    %c2_148 = arith.constant 2 : index
    %c0_149 = arith.constant 0 : index
    %c0_150 = arith.constant 0 : index
    %c0_151 = arith.constant 0 : index
    %123 = vector.load %arg10[%c2_148, %c0_149, %c0_150, %c0_151] : memref<3x3x64x32xf32, #tpu.memory_space<vmem>>, vector<1x1x64x32xf32>
    %124 = vector.shape_cast %123 : vector<1x1x64x32xf32> to vector<64x32xf32>
    %cst_152 = arith.constant dense<0.000000e+00> : vector<64x32xf32>
    %125 = tpu.matmul %122, %124, %cst_152 {dimension_numbers = #tpu.dot_dimension_numbers<[1], [0], [0], [1], [0, 0, 1, 1], [], []>} : vector<64x64xf32>, vector<64x32xf32>, vector<64x32xf32> -> vector<64x32xf32>
    %126 = arith.addf %120, %125 : vector<64x32xf32>
    %c2_153 = arith.constant 2 : index
    %c1_154 = arith.constant 1 : index
    %c0_155 = arith.constant 0 : index
    %127 = vector.load %arg16[%c2_153, %c1_154, %c0_155] : memref<10x10x64xf32, #tpu.memory_space<vmem>>, vector<8x8x64xf32>
    %128 = vector.shape_cast %127 : vector<8x8x64xf32> to vector<64x64xf32>
    %c2_156 = arith.constant 2 : index
    %c1_157 = arith.constant 1 : index
    %c0_158 = arith.constant 0 : index
    %c0_159 = arith.constant 0 : index
    %129 = vector.load %arg10[%c2_156, %c1_157, %c0_158, %c0_159] : memref<3x3x64x32xf32, #tpu.memory_space<vmem>>, vector<1x1x64x32xf32>
    %130 = vector.shape_cast %129 : vector<1x1x64x32xf32> to vector<64x32xf32>
    %cst_160 = arith.constant dense<0.000000e+00> : vector<64x32xf32>
    %131 = tpu.matmul %128, %130, %cst_160 {dimension_numbers = #tpu.dot_dimension_numbers<[1], [0], [0], [1], [0, 0, 1, 1], [], []>} : vector<64x64xf32>, vector<64x32xf32>, vector<64x32xf32> -> vector<64x32xf32>
    %132 = arith.addf %126, %131 : vector<64x32xf32>
    %c2_161 = arith.constant 2 : index
    %c2_162 = arith.constant 2 : index
    %c0_163 = arith.constant 0 : index
    %133 = vector.load %arg16[%c2_161, %c2_162, %c0_163] : memref<10x10x64xf32, #tpu.memory_space<vmem>>, vector<8x8x64xf32>
    %134 = vector.shape_cast %133 : vector<8x8x64xf32> to vector<64x64xf32>
    %c2_164 = arith.constant 2 : index
    %c2_165 = arith.constant 2 : index
    %c0_166 = arith.constant 0 : index
    %c0_167 = arith.constant 0 : index
    %135 = vector.load %arg10[%c2_164, %c2_165, %c0_166, %c0_167] : memref<3x3x64x32xf32, #tpu.memory_space<vmem>>, vector<1x1x64x32xf32>
    %136 = vector.shape_cast %135 : vector<1x1x64x32xf32> to vector<64x32xf32>
    %cst_168 = arith.constant dense<0.000000e+00> : vector<64x32xf32>
    %137 = tpu.matmul %134, %136, %cst_168 {dimension_numbers = #tpu.dot_dimension_numbers<[1], [0], [0], [1], [0, 0, 1, 1], [], []>} : vector<64x64xf32>, vector<64x32xf32>, vector<64x32xf32> -> vector<64x32xf32>
    %138 = arith.addf %132, %137 : vector<64x32xf32>
    %c0_169 = arith.constant 0 : index
    %c0_170 = arith.constant 0 : index
    %139 = vector.load %arg11[%c0_169, %c0_170] : memref<1x32xf32, #tpu.memory_space<vmem>>, vector<1x32xf32>
    %140 = vector.broadcast %139 : vector<1x32xf32> to vector<64x32xf32>
    %141 = arith.addf %138, %140 : vector<64x32xf32>
    %cst_171 = arith.constant 0.000000e+00 : f32
    %142 = vector.broadcast %cst_171 : f32 to vector<64x32xf32>
    %143 = arith.maximumf %141, %142 : vector<64x32xf32>
    %c0_172 = arith.constant 0 : index
    %c0_173 = arith.constant 0 : index
    %144 = vector.load %arg12[%c0_172, %c0_173] : memref<32x16xf32, #tpu.memory_space<vmem>>, vector<32x16xf32>
    %cst_174 = arith.constant dense<0.000000e+00> : vector<64x16xf32>
    %145 = tpu.matmul %143, %144, %cst_174 {dimension_numbers = #tpu.dot_dimension_numbers<[1], [0], [0], [1], [0, 0, 1, 1], [], []>} : vector<64x32xf32>, vector<32x16xf32>, vector<64x16xf32> -> vector<64x16xf32>
    %c0_175 = arith.constant 0 : index
    %c0_176 = arith.constant 0 : index
    %146 = vector.load %arg13[%c0_175, %c0_176] : memref<1x16xf32, #tpu.memory_space<vmem>>, vector<1x16xf32>
    %147 = vector.broadcast %146 : vector<1x16xf32> to vector<64x16xf32>
    %148 = arith.addf %145, %147 : vector<64x16xf32>
    %c0_177 = arith.constant 0 : index
    %c0_178 = arith.constant 0 : index
    %149 = vector.load %arg18[%c0_177, %c0_178] : memref<64x16xf32, #tpu.memory_space<vmem>>, vector<64x16xf32>
    %150 = arith.maximumf %149, %148 : vector<64x16xf32>
    %151 = arith.subf %149, %150 : vector<64x16xf32>
    %152 = math.exp %151 : vector<64x16xf32>
    %153 = arith.subf %148, %150 : vector<64x16xf32>
    %154 = math.exp %153 : vector<64x16xf32>
    %c0_179 = arith.constant 0 : index
    %c0_180 = arith.constant 0 : index
    %155 = vector.load %arg19[%c0_179, %c0_180] : memref<64x16xf32, #tpu.memory_space<vmem>>, vector<64x16xf32>
    %156 = arith.mulf %152, %155 : vector<64x16xf32>
    %157 = arith.addf %156, %154 : vector<64x16xf32>
    %c0_181 = arith.constant 0 : index
    %c0_182 = arith.constant 0 : index
    %158 = vector.load %arg19[%c0_181, %c0_182] : memref<64x16xf32, #tpu.memory_space<vmem>>, vector<64x16xf32>
    tpu.vector_store %arg19[%c0_181, %c0_182], %157 {strides = array<i32>} : memref<64x16xf32, #tpu.memory_space<vmem>>, vector<64x16xf32>,
    %c0_183 = arith.constant 0 : index
    %c0_184 = arith.constant 0 : index
    %159 = vector.load %arg20[%c0_183, %c0_184] : memref<64x16xf32, #tpu.memory_space<vmem>>, vector<64x16xf32>
    %160 = arith.mulf %152, %159 : vector<64x16xf32>
    %161 = arith.mulf %72, %154 : vector<64x16xf32>
    %162 = arith.addf %160, %161 : vector<64x16xf32>
    %c0_185 = arith.constant 0 : index
    %c0_186 = arith.constant 0 : index
    %163 = vector.load %arg20[%c0_185, %c0_186] : memref<64x16xf32, #tpu.memory_space<vmem>>, vector<64x16xf32>
    tpu.vector_store %arg20[%c0_185, %c0_186], %162 {strides = array<i32>} : memref<64x16xf32, #tpu.memory_space<vmem>>, vector<64x16xf32>,
    %c0_187 = arith.constant 0 : index
    %c0_188 = arith.constant 0 : index
    %164 = vector.load %arg18[%c0_187, %c0_188] : memref<64x16xf32, #tpu.memory_space<vmem>>, vector<64x16xf32>
    tpu.vector_store %arg18[%c0_187, %c0_188], %150 {strides = array<i32>} : memref<64x16xf32, #tpu.memory_space<vmem>>, vector<64x16xf32>,
    %c3_i32 = arith.constant 3 : i32
    %165 = arith.cmpi eq, %arg0, %c3_i32 : i32
    %166 = arith.extui %165 : i1 to i32
    %c0_i32_189 = arith.constant 0 : i32
    %167 = arith.cmpi ne, %166, %c0_i32_189 : i32
    scf.if %167 {
      %c0_190 = arith.constant 0 : index
      %c0_191 = arith.constant 0 : index
      %168 = vector.load %arg20[%c0_190, %c0_191] : memref<64x16xf32, #tpu.memory_space<vmem>>, vector<64x16xf32>
      %c0_192 = arith.constant 0 : index
      %c0_193 = arith.constant 0 : index
      %169 = vector.load %arg19[%c0_192, %c0_193] : memref<64x16xf32, #tpu.memory_space<vmem>>, vector<64x16xf32>
      %170 = arith.divf %168, %169 : vector<64x16xf32>
      %c0_194 = arith.constant 0 : index
      %c0_195 = arith.constant 0 : index
      %171 = vector.load %arg14[%c0_194, %c0_195] : memref<64x16xf32, #tpu.memory_space<vmem>>, vector<64x16xf32>
      tpu.vector_store %arg14[%c0_194, %c0_195], %170 {strides = array<i32>} : memref<64x16xf32, #tpu.memory_space<vmem>>, vector<64x16xf32>,
    } else {
    }
    return
  }
  func.func @transform_0(%arg0: i32) -> (i32, i32, i32, i32) {
    %c0_i32 = arith.constant 0 : i32
    %c0_i32_0 = arith.constant 0 : i32
    %c0_i32_1 = arith.constant 0 : i32
    %c0_i32_2 = arith.constant 0 : i32
    %c0_i32_3 = arith.constant 0 : i32
    return %c0_i32, %c0_i32_0, %c0_i32_1, %c0_i32_2 : i32, i32, i32, i32
  }
  func.func @transform_1(%arg0: i32) -> (i32, i32, i32, i32) {
    %c0_i32 = arith.constant 0 : i32
    %c0_i32_0 = arith.constant 0 : i32
    %c0_i32_1 = arith.constant 0 : i32
    %c0_i32_2 = arith.constant 0 : i32
    return %arg0, %c0_i32, %c0_i32_0, %c0_i32_1 : i32, i32, i32, i32
  }
  func.func @transform_2(%arg0: i32) -> (i32, i32, i32, i32) {
    %c0_i32 = arith.constant 0 : i32
    %c0_i32_0 = arith.constant 0 : i32
    %c0_i32_1 = arith.constant 0 : i32
    %c0_i32_2 = arith.constant 0 : i32
    %c0_i32_3 = arith.constant 0 : i32
    return %c0_i32, %c0_i32_0, %c0_i32_1, %c0_i32_2 : i32, i32, i32, i32
  }
  func.func @transform_3(%arg0: i32) -> (i32, i32) {
    %c0_i32 = arith.constant 0 : i32
    %c0_i32_0 = arith.constant 0 : i32
    %c0_i32_1 = arith.constant 0 : i32
    return %c0_i32, %c0_i32_0 : i32, i32
  }
  func.func @transform_4(%arg0: i32) -> (i32, i32) {
    %c0_i32 = arith.constant 0 : i32
    %c0_i32_0 = arith.constant 0 : i32
    %c0_i32_1 = arith.constant 0 : i32
    return %c0_i32, %c0_i32_0 : i32, i32
  }
  func.func @transform_5(%arg0: i32) -> (i32, i32) {
    %c0_i32 = arith.constant 0 : i32
    %c0_i32_0 = arith.constant 0 : i32
    %c0_i32_1 = arith.constant 0 : i32
    return %c0_i32, %c0_i32_0 : i32, i32
  }
  func.func @transform_6(%arg0: i32) -> (i32, i32) {
    %c0_i32 = arith.constant 0 : i32
    %c0_i32_0 = arith.constant 0 : i32
    %c0_i32_1 = arith.constant 0 : i32
    return %c0_i32, %c0_i32_0 : i32, i32
  }
  func.func @transform_7(%arg0: i32) -> (i32, i32) {
    %c0_i32 = arith.constant 0 : i32
    %c0_i32_0 = arith.constant 0 : i32
    %c0_i32_1 = arith.constant 0 : i32
    return %c0_i32, %c0_i32_0 : i32, i32
  }
  func.func @transform_8(%arg0: i32) -> (i32, i32) {
    %c0_i32 = arith.constant 0 : i32
    %c0_i32_0 = arith.constant 0 : i32
    %c0_i32_1 = arith.constant 0 : i32
    return %c0_i32, %c0_i32_0 : i32, i32
  }
  func.func @transform_9(%arg0: i32) -> (i32, i32, i32, i32) {
    %c0_i32 = arith.constant 0 : i32
    %c0_i32_0 = arith.constant 0 : i32
    %c0_i32_1 = arith.constant 0 : i32
    %c0_i32_2 = arith.constant 0 : i32
    %c0_i32_3 = arith.constant 0 : i32
    return %c0_i32, %c0_i32_0, %c0_i32_1, %c0_i32_2 : i32, i32, i32, i32
  }
  func.func @transform_10(%arg0: i32) -> (i32, i32) {
    %c0_i32 = arith.constant 0 : i32
    %c0_i32_0 = arith.constant 0 : i32
    %c0_i32_1 = arith.constant 0 : i32
    return %c0_i32, %c0_i32_0 : i32, i32
  }
  func.func @transform_11(%arg0: i32) -> (i32, i32) {
    %c0_i32 = arith.constant 0 : i32
    %c0_i32_0 = arith.constant 0 : i32
    %c0_i32_1 = arith.constant 0 : i32
    return %c0_i32, %c0_i32_0 : i32, i32
  }
  func.func @transform_12(%arg0: i32) -> (i32, i32) {
    %c0_i32 = arith.constant 0 : i32
    %c0_i32_0 = arith.constant 0 : i32
    %c0_i32_1 = arith.constant 0 : i32
    return %c0_i32, %c0_i32_0 : i32, i32
  }
  func.func @transform_13(%arg0: i32) -> (i32, i32) {
    %c0_i32 = arith.constant 0 : i32
    %c0_i32_0 = arith.constant 0 : i32
    %c0_i32_1 = arith.constant 0 : i32
    return %c0_i32, %c0_i32_0 : i32, i32
  }
}

</mosaic_0001>

<llo_original>
// kernel: tf_blender_aggregator.1
$region0: #{tf_blender_aggregator.1}
  #allocation0 [shape = 'u32[]', space=smem, size = 0x4, offset = 0x4, fixed_abs, tag = 'smem constant byte address 0x4 - core index']
  #allocation1 [shape = 'u32[144,128]{1,0:T(1,128)}', space=vmem, size = 0x12000, scoped, tag = 'internal scratch']
  #allocation2 [shape = 'f32[10,10,16]{2,1,0:T(8,128)}', space=vmem, size = 0x14000, scoped, tag = 'scratch operand']
  #allocation3 [shape = 'f32[10,10,64]{2,1,0:T(8,128)}', space=vmem, size = 0x14000, scoped, tag = 'scratch operand']
  #allocation4 [shape = 'f32[64,64]{1,0:T(8,128)}', space=vmem, size = 0x8000, scoped, tag = 'scratch operand']
  #allocation5 [shape = 'f32[64,16]{1,0:T(8,128)}', space=vmem, size = 0x8000, scoped, tag = 'scratch operand']
  #allocation6 [shape = 'f32[64,16]{1,0:T(8,128)}', space=vmem, size = 0x8000, scoped, tag = 'scratch operand']
  #allocation7 [shape = 'f32[64,16]{1,0:T(8,128)}', space=vmem, size = 0x8000, scoped, tag = 'scratch operand']
  %s0 = inlined_call_operand.vmem [shape: f32[1,8,8,16], index: 0, kind: input, shape index: {}]
  %s1 = inlined_call_operand.vmem [shape: f32[4,8,8,16], index: 1, kind: input, shape index: {}]
  %s2 = inlined_call_operand.vmem [shape: f32[3,3,16,16], index: 2, kind: input, shape index: {}]
  %s3 = inlined_call_operand.vmem [shape: f32[1,16], index: 3, kind: input, shape index: {}]
  %s4 = inlined_call_operand.vmem [shape: f32[16,64], index: 4, kind: input, shape index: {}]
  %s5 = inlined_call_operand.vmem [shape: f32[16,64], index: 5, kind: input, shape index: {}]
  %s6 = inlined_call_operand.vmem [shape: f32[16,64], index: 6, kind: input, shape index: {}]
  %s7 = inlined_call_operand.vmem [shape: f32[16,64], index: 7, kind: input, shape index: {}]
  %s8 = inlined_call_operand.vmem [shape: f32[1,64], index: 8, kind: input, shape index: {}]
  %s9 = inlined_call_operand.vmem [shape: f32[3,3,64,32], index: 9, kind: input, shape index: {}]
  %s10 = inlined_call_operand.vmem [shape: f32[1,32], index: 10, kind: input, shape index: {}]
  %s11 = inlined_call_operand.vmem [shape: f32[32,16], index: 11, kind: input, shape index: {}]
  %s12 = inlined_call_operand.vmem [shape: f32[1,16], index: 12, kind: input, shape index: {}]
  %s13 = inlined_call_operand.hbm [shape: f32[64,16], index: 13, kind: output, shape index: {}]
  %s14 = sld [smem:[#allocation0]]
  $region93: #{tf_blender_aggregator.1} parent=0
    _
  %s16 = ssub.s32 1, %s14
  %s17 = scalar_select 0, %s16, %s14
  $region1: #{tf_blender_aggregator.1} parent=0
    #allocation8 [shape = 'u8[32768]{0}', space=vmem, size = 0x8000, scoped, tag = 'output window, operand 0, single buffered']
    #allocation9 [shape = 's32[2]{0}', space=sflag, size = 0x8, scoped, tag = 'scoped memory for tf_blender_aggregator.1']
    %18 = vsyncpa [#allocation9], 0
    loop: start=0, step=1, limit=6
    $region2: #{tf_blender_aggregator.1} parent=1 // loop_pre_header
      _
    $region3: #{tf_blender_aggregator.1} parent=1 // loop_header
      %s20 = sphi 0, %s24
      %p21 = scmp.ge.s32.totalorder %s20, 6
      %s28 = sphi 0, %s28
      %s30 = sphi 0, %s28
      %s31 = sphi 0, %s30
      %s45 = sphi 0, %s31
      %s51 = sphi 0, %s53
      %s54 = sphi 0, %s51
      %s55 = sphi 0, %s54
      %s71 = sphi 0, %s55
      %s75 = sphi 0, %s75
      %s77 = sphi 0, %s75
      %s78 = sphi 0, %s77
      %s92 = sphi 0, %s78
      %s96 = sphi 0, %s96
      %s98 = sphi 0, %s96
      %s99 = sphi 0, %s98
      %s113 = sphi 0, %s99
      %s117 = sphi 0, %s117
      %s119 = sphi 0, %s117
      %s120 = sphi 0, %s119
      %s134 = sphi 0, %s120
      %s138 = sphi 0, %s138
      %s140 = sphi 0, %s138
      %s141 = sphi 0, %s140
      %s155 = sphi 0, %s141
      %s159 = sphi 0, %s159
      %s161 = sphi 0, %s159
      %s162 = sphi 0, %s161
      %s176 = sphi 0, %s162
      %s180 = sphi 0, %s180
      %s182 = sphi 0, %s180
      %s183 = sphi 0, %s182
      %s197 = sphi 0, %s183
      %s201 = sphi 0, %s201
      %s203 = sphi 0, %s201
      %s204 = sphi 0, %s203
      %s218 = sphi 0, %s204
      %s222 = sphi 0, %s222
      %s224 = sphi 0, %s222
      %s225 = sphi 0, %s224
      %s239 = sphi 0, %s225
      %s243 = sphi 0, %s243
      %s245 = sphi 0, %s243
      %s246 = sphi 0, %s245
      %s260 = sphi 0, %s246
      %s264 = sphi 0, %s264
      %s266 = sphi 0, %s264
      %s267 = sphi 0, %s266
      %s281 = sphi 0, %s267
      %s285 = sphi 0, %s285
      %s287 = sphi 0, %s285
      %s288 = sphi 0, %s287
      %s302 = sphi 0, %s288
      %s306 = sphi 0, %s306
      %s308 = sphi 0, %s306
      %s309 = sphi 0, %s308
      %s323 = sphi 0, %s309
    $region4: #{tf_blender_aggregator.1} parent=1 // loop_header_branch
      %23 = sbr.rel (%p21) target = $region8
    $region5: #{tf_blender_aggregator.1} parent=1 // loop_body
      %s25 = ssub.s32 %s20, 1
      %s26 = ssub.s32 %s20, 2
      %s27 = sadd.s32 %s20, 1
      %s29 = sadd.s32 %s28, 1
      %p32 = scmp.eq.s32.totalorder %s20, 3
      %p33 = scmp.ne.s32.totalorder %s28, %s30
      %p34 = scmp.eq.s32.totalorder %s20, 0
      %p35 = por %p33, %p34
      %p36 = scmp.ne.s32.totalorder %s28, %s30
      %p37 = scmp.eq.s32.totalorder %s25, 3
      %p38 = por %p36, %p37
      %p39 = scmp.ne.s32.totalorder %s30, %s31
      %p40 = scmp.eq.s32.totalorder %s25, 0
      %p41 = por %p39, %p40
      %p42 = scmp.ne.s32.totalorder %s30, %s31
      %p43 = scmp.eq.s32.totalorder %s26, 3
      %p44 = por %p42, %p43
      %p46 = scmp.ne.s32.totalorder %s31, %s45
      %p47 = scmp.eq.s32.totalorder %s26, 0
      %p48 = por %p46, %p47
      %s49 = ssub.s32 %s20, %s27
      %p50 = scmp.eq.s32.totalorder %s49, 0
      %s52 = sadd.s32 %s51, 1
      %s53 = scalar_select %p50, %s51, %s52
      %p56 = pneg %p50
      %p57 = scmp.eq.s32.totalorder %s20, 3
      %p58 = por %p56, %p57
      %p59 = scmp.ne.s32.totalorder %s51, %s54
      %p60 = scmp.eq.s32.totalorder %s20, 0
      %p61 = por %p59, %p60
      %p62 = scmp.ne.s32.totalorder %s51, %s54
      %p63 = scmp.eq.s32.totalorder %s25, 3
      %p64 = por %p62, %p63
      %p65 = scmp.ne.s32.totalorder %s54, %s55
      %p66 = scmp.eq.s32.totalorder %s25, 0
      %p67 = por %p65, %p66
      %p68 = scmp.ne.s32.totalorder %s54, %s55
      %p69 = scmp.eq.s32.totalorder %s26, 3
      %p70 = por %p68, %p69
      %p72 = scmp.ne.s32.totalorder %s55, %s71
      %p73 = scmp.eq.s32.totalorder %s26, 0
      %p74 = por %p72, %p73
      %s76 = sadd.s32 %s75, 1
      %p79 = scmp.eq.s32.totalorder %s20, 3
      %p80 = scmp.ne.s32.totalorder %s75, %s77
      %p81 = scmp.eq.s32.totalorder %s20, 0
      %p82 = por %p80, %p81
      %p83 = scmp.ne.s32.totalorder %s75, %s77
      %p84 = scmp.eq.s32.totalorder %s25, 3
      %p85 = por %p83, %p84
      %p86 = scmp.ne.s32.totalorder %s77, %s78
      %p87 = scmp.eq.s32.totalorder %s25, 0
      %p88 = por %p86, %p87
      %p89 = scmp.ne.s32.totalorder %s77, %s78
      %p90 = scmp.eq.s32.totalorder %s26, 3
      %p91 = por %p89, %p90
      %p93 = scmp.ne.s32.totalorder %s78, %s92
      %p94 = scmp.eq.s32.totalorder %s26, 0
      %p95 = por %p93, %p94
      %s97 = sadd.s32 %s96, 1
      %p100 = scmp.eq.s32.totalorder %s20, 3
      %p101 = scmp.ne.s32.totalorder %s96, %s98
      %p102 = scmp.eq.s32.totalorder %s20, 0
      %p103 = por %p101, %p102
      %p104 = scmp.ne.s32.totalorder %s96, %s98
      %p105 = scmp.eq.s32.totalorder %s25, 3
      %p106 = por %p104, %p105
      %p107 = scmp.ne.s32.totalorder %s98, %s99
      %p108 = scmp.eq.s32.totalorder %s25, 0
      %p109 = por %p107, %p108
      %p110 = scmp.ne.s32.totalorder %s98, %s99
      %p111 = scmp.eq.s32.totalorder %s26, 3
      %p112 = por %p110, %p111
      %p114 = scmp.ne.s32.totalorder %s99, %s113
      %p115 = scmp.eq.s32.totalorder %s26, 0
      %p116 = por %p114, %p115
      %s118 = sadd.s32 %s117, 1
      %p121 = scmp.eq.s32.totalorder %s20, 3
      %p122 = scmp.ne.s32.totalorder %s117, %s119
      %p123 = scmp.eq.s32.totalorder %s20, 0
      %p124 = por %p122, %p123
      %p125 = scmp.ne.s32.totalorder %s117, %s119
      %p126 = scmp.eq.s32.totalorder %s25, 3
      %p127 = por %p125, %p126
      %p128 = scmp.ne.s32.totalorder %s119, %s120
      %p129 = scmp.eq.s32.totalorder %s25, 0
      %p130 = por %p128, %p129
      %p131 = scmp.ne.s32.totalorder %s119, %s120
      %p132 = scmp.eq.s32.totalorder %s26, 3
      %p133 = por %p131, %p132
      %p135 = scmp.ne.s32.totalorder %s120, %s134
      %p136 = scmp.eq.s32.totalorder %s26, 0
      %p137 = por %p135, %p136
      %s139 = sadd.s32 %s138, 1
      %p142 = scmp.eq.s32.totalorder %s20, 3
      %p143 = scmp.ne.s32.totalorder %s138, %s140
      %p144 = scmp.eq.s32.totalorder %s20, 0
      %p145 = por %p143, %p144
      %p146 = scmp.ne.s32.totalorder %s138, %s140
      %p147 = scmp.eq.s32.totalorder %s25, 3
      %p148 = por %p146, %p147
      %p149 = scmp.ne.s32.totalorder %s140, %s141
      %p150 = scmp.eq.s32.totalorder %s25, 0
      %p151 = por %p149, %p150
      %p152 = scmp.ne.s32.totalorder %s140, %s141
      %p153 = scmp.eq.s32.totalorder %s26, 3
      %p154 = por %p152, %p153
      %p156 = scmp.ne.s32.totalorder %s141, %s155
      %p157 = scmp.eq.s32.totalorder %s26, 0
      %p158 = por %p156, %p157
      %s160 = sadd.s32 %s159, 1
      %p163 = scmp.eq.s32.totalorder %s20, 3
      %p164 = scmp.ne.s32.totalorder %s159, %s161
      %p165 = scmp.eq.s32.totalorder %s20, 0
      %p166 = por %p164, %p165
      %p167 = scmp.ne.s32.totalorder %s159, %s161
      %p168 = scmp.eq.s32.totalorder %s25, 3
      %p169 = por %p167, %p168
      %p170 = scmp.ne.s32.totalorder %s161, %s162
      %p171 = scmp.eq.s32.totalorder %s25, 0
      %p172 = por %p170, %p171
      %p173 = scmp.ne.s32.totalorder %s161, %s162
      %p174 = scmp.eq.s32.totalorder %s26, 3
      %p175 = por %p173, %p174
      %p177 = scmp.ne.s32.totalorder %s162, %s176
      %p178 = scmp.eq.s32.totalorder %s26, 0
      %p179 = por %p177, %p178
      %s181 = sadd.s32 %s180, 1
      %p184 = scmp.eq.s32.totalorder %s20, 3
      %p185 = scmp.ne.s32.totalorder %s180, %s182
      %p186 = scmp.eq.s32.totalorder %s20, 0
      %p187 = por %p185, %p186
      %p188 = scmp.ne.s32.totalorder %s180, %s182
      %p189 = scmp.eq.s32.totalorder %s25, 3
      %p190 = por %p188, %p189
      %p191 = scmp.ne.s32.totalorder %s182, %s183
      %p192 = scmp.eq.s32.totalorder %s25, 0
      %p193 = por %p191, %p192
      %p194 = scmp.ne.s32.totalorder %s182, %s183
      %p195 = scmp.eq.s32.totalorder %s26, 3
      %p196 = por %p194, %p195
      %p198 = scmp.ne.s32.totalorder %s183, %s197
      %p199 = scmp.eq.s32.totalorder %s26, 0
      %p200 = por %p198, %p199
      %s202 = sadd.s32 %s201, 1
      %p205 = scmp.eq.s32.totalorder %s20, 3
      %p206 = scmp.ne.s32.totalorder %s201, %s203
      %p207 = scmp.eq.s32.totalorder %s20, 0
      %p208 = por %p206, %p207
      %p209 = scmp.ne.s32.totalorder %s201, %s203
      %p210 = scmp.eq.s32.totalorder %s25, 3
      %p211 = por %p209, %p210
      %p212 = scmp.ne.s32.totalorder %s203, %s204
      %p213 = scmp.eq.s32.totalorder %s25, 0
      %p214 = por %p212, %p213
      %p215 = scmp.ne.s32.totalorder %s203, %s204
      %p216 = scmp.eq.s32.totalorder %s26, 3
      %p217 = por %p215, %p216
      %p219 = scmp.ne.s32.totalorder %s204, %s218
      %p220 = scmp.eq.s32.totalorder %s26, 0
      %p221 = por %p219, %p220
      %s223 = sadd.s32 %s222, 1
      %p226 = scmp.eq.s32.totalorder %s20, 3
      %p227 = scmp.ne.s32.totalorder %s222, %s224
      %p228 = scmp.eq.s32.totalorder %s20, 0
      %p229 = por %p227, %p228
      %p230 = scmp.ne.s32.totalorder %s222, %s224
      %p231 = scmp.eq.s32.totalorder %s25, 3
      %p232 = por %p230, %p231
      %p233 = scmp.ne.s32.totalorder %s224, %s225
      %p234 = scmp.eq.s32.totalorder %s25, 0
      %p235 = por %p233, %p234
      %p236 = scmp.ne.s32.totalorder %s224, %s225
      %p237 = scmp.eq.s32.totalorder %s26, 3
      %p238 = por %p236, %p237
      %p240 = scmp.ne.s32.totalorder %s225, %s239
      %p241 = scmp.eq.s32.totalorder %s26, 0
      %p242 = por %p240, %p241
      %s244 = sadd.s32 %s243, 1
      %p247 = scmp.eq.s32.totalorder %s20, 3
      %p248 = scmp.ne.s32.totalorder %s243, %s245
      %p249 = scmp.eq.s32.totalorder %s20, 0
      %p250 = por %p248, %p249
      %p251 = scmp.ne.s32.totalorder %s243, %s245
      %p252 = scmp.eq.s32.totalorder %s25, 3
      %p253 = por %p251, %p252
      %p254 = scmp.ne.s32.totalorder %s245, %s246
      %p255 = scmp.eq.s32.totalorder %s25, 0
      %p256 = por %p254, %p255
      %p257 = scmp.ne.s32.totalorder %s245, %s246
      %p258 = scmp.eq.s32.totalorder %s26, 3
      %p259 = por %p257, %p258
      %p261 = scmp.ne.s32.totalorder %s246, %s260
      %p262 = scmp.eq.s32.totalorder %s26, 0
      %p263 = por %p261, %p262
      %s265 = sadd.s32 %s264, 1
      %p268 = scmp.eq.s32.totalorder %s20, 3
      %p269 = scmp.ne.s32.totalorder %s264, %s266
      %p270 = scmp.eq.s32.totalorder %s20, 0
      %p271 = por %p269, %p270
      %p272 = scmp.ne.s32.totalorder %s264, %s266
      %p273 = scmp.eq.s32.totalorder %s25, 3
      %p274 = por %p272, %p273
      %p275 = scmp.ne.s32.totalorder %s266, %s267
      %p276 = scmp.eq.s32.totalorder %s25, 0
      %p277 = por %p275, %p276
      %p278 = scmp.ne.s32.totalorder %s266, %s267
      %p279 = scmp.eq.s32.totalorder %s26, 3
      %p280 = por %p278, %p279
      %p282 = scmp.ne.s32.totalorder %s267, %s281
      %p283 = scmp.eq.s32.totalorder %s26, 0
      %p284 = por %p282, %p283
      %s286 = sadd.s32 %s285, 1
      %p289 = scmp.eq.s32.totalorder %s20, 3
      %p290 = scmp.ne.s32.totalorder %s285, %s287
      %p291 = scmp.eq.s32.totalorder %s20, 0
      %p292 = por %p290, %p291
      %p293 = scmp.ne.s32.totalorder %s285, %s287
      %p294 = scmp.eq.s32.totalorder %s25, 3
      %p295 = por %p293, %p294
      %p296 = scmp.ne.s32.totalorder %s287, %s288
      %p297 = scmp.eq.s32.totalorder %s25, 0
      %p298 = por %p296, %p297
      %p299 = scmp.ne.s32.totalorder %s287, %s288
      %p300 = scmp.eq.s32.totalorder %s26, 3
      %p301 = por %p299, %p300
      %p303 = scmp.ne.s32.totalorder %s288, %s302
      %p304 = scmp.eq.s32.totalorder %s26, 0
      %p305 = por %p303, %p304
      %s307 = sadd.s32 %s306, 1
      %p310 = scmp.eq.s32.totalorder %s20, 3
      %p311 = scmp.ne.s32.totalorder %s306, %s308
      %p312 = scmp.eq.s32.totalorder %s20, 0
      %p313 = por %p311, %p312
      %p314 = scmp.ne.s32.totalorder %s306, %s308
      %p315 = scmp.eq.s32.totalorder %s25, 3
      %p316 = por %p314, %p315
      %p317 = scmp.ne.s32.totalorder %s308, %s309
      %p318 = scmp.eq.s32.totalorder %s25, 0
      %p319 = por %p317, %p318
      %p320 = scmp.ne.s32.totalorder %s308, %s309
      %p321 = scmp.eq.s32.totalorder %s26, 3
      %p322 = por %p320, %p321
      %p324 = scmp.ne.s32.totalorder %s309, %s323
      %p325 = scmp.eq.s32.totalorder %s26, 0
      %p326 = por %p324, %p325
      %p327 = scmp.le.s32.totalorder 1, %s20
      %p328 = scmp.lt.s32.totalorder %s20, 5
      %p329 = pnand %p327, %p328
      %p330 = pneg %p329
      // Predicated region
      $region9: #{tf_blender_aggregator.1} parent=5 // pred_check
        _
      $region10: #{tf_blender_aggregator.1} parent=5 // pred_check_branch
        %332 = sbr.rel (%p329) target = $region12
      $region11: #{tf_blender_aggregator.1} parent=5 // pred_region
        %s333 = ssub.s32 %s20, 1
        // Predicated region
        $region13: #{tf_blender_aggregator.1} parent=11 // pred_check
          %p334 = pneg %p41
        $region14: #{tf_blender_aggregator.1} parent=11 // pred_check_branch
          %336 = sbr.rel (%p334) target = $region16
        $region15: #{tf_blender_aggregator.1} parent=11 // pred_region
          _
        $region16: #{tf_blender_aggregator.1} parent=11 // pred_fallthru
          _
        // Predicated region
        $region17: #{tf_blender_aggregator.1} parent=11 // pred_check
          %p337 = pneg %p88
        $region18: #{tf_blender_aggregator.1} parent=11 // pred_check_branch
          %339 = sbr.rel (%p337) target = $region20
        $region19: #{tf_blender_aggregator.1} parent=11 // pred_region
          _
        $region20: #{tf_blender_aggregator.1} parent=11 // pred_fallthru
          _
        // Predicated region
        $region21: #{tf_blender_aggregator.1} parent=11 // pred_check
          %p340 = pneg %p109
        $region22: #{tf_blender_aggregator.1} parent=11 // pred_check_branch
          %342 = sbr.rel (%p340) target = $region24
        $region23: #{tf_blender_aggregator.1} parent=11 // pred_region
          _
        $region24: #{tf_blender_aggregator.1} parent=11 // pred_fallthru
          _
        // Predicated region
        $region25: #{tf_blender_aggregator.1} parent=11 // pred_check
          %p343 = pneg %p130
        $region26: #{tf_blender_aggregator.1} parent=11 // pred_check_branch
          %345 = sbr.rel (%p343) target = $region28
        $region27: #{tf_blender_aggregator.1} parent=11 // pred_region
          _
        $region28: #{tf_blender_aggregator.1} parent=11 // pred_fallthru
          _
        // Predicated region
        $region29: #{tf_blender_aggregator.1} parent=11 // pred_check
          %p346 = pneg %p151
        $region30: #{tf_blender_aggregator.1} parent=11 // pred_check_branch
          %348 = sbr.rel (%p346) target = $region32
        $region31: #{tf_blender_aggregator.1} parent=11 // pred_region
          _
        $region32: #{tf_blender_aggregator.1} parent=11 // pred_fallthru
          _
        // Predicated region
        $region33: #{tf_blender_aggregator.1} parent=11 // pred_check
          %p349 = pneg %p172
        $region34: #{tf_blender_aggregator.1} parent=11 // pred_check_branch
          %351 = sbr.rel (%p349) target = $region36
        $region35: #{tf_blender_aggregator.1} parent=11 // pred_region
          _
        $region36: #{tf_blender_aggregator.1} parent=11 // pred_fallthru
          _
        // Predicated region
        $region37: #{tf_blender_aggregator.1} parent=11 // pred_check
          %p352 = pneg %p193
        $region38: #{tf_blender_aggregator.1} parent=11 // pred_check_branch
          %354 = sbr.rel (%p352) target = $region40
        $region39: #{tf_blender_aggregator.1} parent=11 // pred_region
          _
        $region40: #{tf_blender_aggregator.1} parent=11 // pred_fallthru
          _
        // Predicated region
        $region41: #{tf_blender_aggregator.1} parent=11 // pred_check
          %p355 = pneg %p214
        $region42: #{tf_blender_aggregator.1} parent=11 // pred_check_branch
          %357 = sbr.rel (%p355) target = $region44
        $region43: #{tf_blender_aggregator.1} parent=11 // pred_region
          _
        $region44: #{tf_blender_aggregator.1} parent=11 // pred_fallthru
          _
        // Predicated region
        $region45: #{tf_blender_aggregator.1} parent=11 // pred_check
          %p358 = pneg %p235
        $region46: #{tf_blender_aggregator.1} parent=11 // pred_check_branch
          %360 = sbr.rel (%p358) target = $region48
        $region47: #{tf_blender_aggregator.1} parent=11 // pred_region
          _
        $region48: #{tf_blender_aggregator.1} parent=11 // pred_fallthru
          _
        // Predicated region
        $region49: #{tf_blender_aggregator.1} parent=11 // pred_check
          %p361 = pneg %p256
        $region50: #{tf_blender_aggregator.1} parent=11 // pred_check_branch
          %363 = sbr.rel (%p361) target = $region52
        $region51: #{tf_blender_aggregator.1} parent=11 // pred_region
          _
        $region52: #{tf_blender_aggregator.1} parent=11 // pred_fallthru
          _
        // Predicated region
        $region53: #{tf_blender_aggregator.1} parent=11 // pred_check
          %p364 = pneg %p277
        $region54: #{tf_blender_aggregator.1} parent=11 // pred_check_branch
          %366 = sbr.rel (%p364) target = $region56
        $region55: #{tf_blender_aggregator.1} parent=11 // pred_region
          _
        $region56: #{tf_blender_aggregator.1} parent=11 // pred_fallthru
          _
        // Predicated region
        $region57: #{tf_blender_aggregator.1} parent=11 // pred_check
          %p367 = pneg %p298
        $region58: #{tf_blender_aggregator.1} parent=11 // pred_check_branch
          %369 = sbr.rel (%p367) target = $region60
        $region59: #{tf_blender_aggregator.1} parent=11 // pred_region
          _
        $region60: #{tf_blender_aggregator.1} parent=11 // pred_fallthru
          _
      $region12: #{tf_blender_aggregator.1} parent=5 // pred_fallthru
        _
      %p370 = scmp.lt.s32.totalorder %s20, 4
      // Predicated region
      $region61: #{tf_blender_aggregator.1} parent=5 // pred_check
        %p371 = pneg %p370
      $region62: #{tf_blender_aggregator.1} parent=5 // pred_check_branch
        %373 = sbr.rel (%p371) target = $region64
      $region63: #{tf_blender_aggregator.1} parent=5 // pred_region
        // Predicated region
        $region65: #{tf_blender_aggregator.1} parent=63 // pred_check
          %p374 = pneg %p61
        $region66: #{tf_blender_aggregator.1} parent=63 // pred_check_branch
          %376 = sbr.rel (%p374) target = $region68
        $region67: #{tf_blender_aggregator.1} parent=63 // pred_region
          %p377 = scmp.lt.s32.totalorder %s20, 3
          %s378 = scalar_select %p377, %s20, 3
          %s379 = smul.addr %s378, 8
          %s380 = smul.addr %s379, 8
          %s381 = scalar_lea.vmem %s1, %s380
        $region68: #{tf_blender_aggregator.1} parent=63 // pred_fallthru
          _
      $region64: #{tf_blender_aggregator.1} parent=5 // pred_fallthru
        _
      %p382 = scmp.le.s32.totalorder 1, %s20
      %p383 = scmp.lt.s32.totalorder %s20, 5
      %p384 = pnand %p382, %p383
      %p385 = pneg %p384
      // Predicated region
      $region69: #{tf_blender_aggregator.1} parent=5 // pred_check
        _
      $region70: #{tf_blender_aggregator.1} parent=5 // pred_check_branch
        %387 = sbr.rel (%p384) target = $region72
      $region71: #{tf_blender_aggregator.1} parent=5 // pred_region
        %s388 = ssub.s32 %s20, 1
        %p389 = pneg %p41
        %p390 = pneg %p38
        %p391 = scmp.lt.s32.totalorder %s25, 3
        %s392 = scalar_select %p391, %s25, 3
        %s393 = smul.addr %s392, 8
        %s394 = smul.addr %s393, 8
        %s395 = scalar_lea.vmem %s1, %s394
        %p396 = pneg %p67
        %p397 = pneg %p64
        %p398 = pneg %p88
        %p399 = pneg %p85
        %p400 = pneg %p109
        %p401 = pneg %p106
        %p402 = pneg %p130
        %p403 = pneg %p127
        %p404 = pneg %p151
        %p405 = pneg %p148
        %p406 = pneg %p172
        %p407 = pneg %p169
        %p408 = pneg %p193
        %p409 = pneg %p190
        %p410 = pneg %p214
        %p411 = pneg %p211
        %p412 = pneg %p235
        %p413 = pneg %p232
        %p414 = pneg %p256
        %p415 = pneg %p253
        %p416 = pneg %p277
        %p417 = pneg %p274
        %p418 = pneg %p298
        %p419 = pneg %p295
        %p420 = pneg %p319
        %p421 = pneg %p316
        %p422 = scmp.lt.s32.totalorder %s25, 3
        %s423 = scalar_select %p422, %s25, 3
        %s424 = smul.addr %s423, 8
        %s425 = smul.addr %s424, 8
        %s426 = scalar_lea.vmem %s1, %s425
        %p427 = scmp.eq.s32.totalorder %s25, 0
        // Predicated region
        $region73: #{tf_blender_aggregator.1} parent=71 // pred_check
          %p428 = pneg %p427
        $region74: #{tf_blender_aggregator.1} parent=71 // pred_check_branch
          %430 = sbr.rel (%p428) target = $region76
        $region75: #{tf_blender_aggregator.1} parent=71 // pred_region
          %vm431 = vcmask 130048
          %432 = vst.msk [vmem:[#allocation2] sm:$0xff] %vm431, 0.0
          %vm433 = vcmask 123904
          %434 = vst.msk [vmem:[#allocation2 + $0x8] sm:$0x3] %vm433, 0.0
          %s435 = scalar_lea.vmem [#allocation2], 144
          %436 = vst.msk [vmem:[%s435] sm:$0xff] %vm431, 0.0
          %437 = vst.msk [vmem:[%s435 + $0x8] sm:$0x3] %vm433, 0.0
          %vm438 = vcmask 122880
          %439 = vst.msk [vmem:[#allocation2] sm:$0x1] %vm438, 0.0
          %440 = vst.msk [vmem:[#allocation2 + $0x10] sm:$0x1] %vm438, 0.0
          %441 = vst.msk [vmem:[#allocation2 + $0x20] sm:$0x1] %vm438, 0.0
          %442 = vst.msk [vmem:[#allocation2 + $0x30] sm:$0x1] %vm438, 0.0
          %443 = vst.msk [vmem:[#allocation2 + $0x40] sm:$0x1] %vm438, 0.0
          %444 = vst.msk [vmem:[#allocation2 + $0x50] sm:$0x1] %vm438, 0.0
          %445 = vst.msk [vmem:[#allocation2 + $0x60] sm:$0x1] %vm438, 0.0
          %446 = vst.msk [vmem:[#allocation2 + $0x70] sm:$0x1] %vm438, 0.0
          %447 = vst.msk [vmem:[#allocation2 + $0x80] sm:$0x1] %vm438, 0.0
          %448 = vst.msk [vmem:[#allocation2 + $0x90] sm:$0x1] %vm438, 0.0
          %449 = vst.msk [vmem:[#allocation2 + $0x9] sm:$0x1] %vm438, 0.0
          %450 = vst.msk [vmem:[#allocation2 + $0x19] sm:$0x1] %vm438, 0.0
          %451 = vst.msk [vmem:[#allocation2 + $0x29] sm:$0x1] %vm438, 0.0
          %452 = vst.msk [vmem:[#allocation2 + $0x39] sm:$0x1] %vm438, 0.0
          %453 = vst.msk [vmem:[#allocation2 + $0x49] sm:$0x1] %vm438, 0.0
          %454 = vst.msk [vmem:[#allocation2 + $0x59] sm:$0x1] %vm438, 0.0
          %455 = vst.msk [vmem:[#allocation2 + $0x69] sm:$0x1] %vm438, 0.0
          %456 = vst.msk [vmem:[#allocation2 + $0x79] sm:$0x1] %vm438, 0.0
          %457 = vst.msk [vmem:[#allocation2 + $0x89] sm:$0x1] %vm438, 0.0
          %458 = vst.msk [vmem:[#allocation2 + $0x99] sm:$0x1] %vm438, 0.0
          %vm459 = vcmask 523264
          %460 = vst.msk [vmem:[#allocation3] sm:$0xff] %vm459, 0.0
          %vm461 = vcmask 517120
          %462 = vst.msk [vmem:[#allocation3 + $0x8] sm:$0x3] %vm461, 0.0
          %s463 = scalar_lea.vmem [#allocation3], 144
          %464 = vst.msk [vmem:[%s463] sm:$0xff] %vm459, 0.0
          %465 = vst.msk [vmem:[%s463 + $0x8] sm:$0x3] %vm461, 0.0
          %vm466 = vcmask 516096
          %467 = vst.msk [vmem:[#allocation3] sm:$0x1] %vm466, 0.0
          %468 = vst.msk [vmem:[#allocation3 + $0x10] sm:$0x1] %vm466, 0.0
          %469 = vst.msk [vmem:[#allocation3 + $0x20] sm:$0x1] %vm466, 0.0
          %470 = vst.msk [vmem:[#allocation3 + $0x30] sm:$0x1] %vm466, 0.0
          %471 = vst.msk [vmem:[#allocation3 + $0x40] sm:$0x1] %vm466, 0.0
          %472 = vst.msk [vmem:[#allocation3 + $0x50] sm:$0x1] %vm466, 0.0
          %473 = vst.msk [vmem:[#allocation3 + $0x60] sm:$0x1] %vm466, 0.0
          %474 = vst.msk [vmem:[#allocation3 + $0x70] sm:$0x1] %vm466, 0.0
          %475 = vst.msk [vmem:[#allocation3 + $0x80] sm:$0x1] %vm466, 0.0
          %476 = vst.msk [vmem:[#allocation3 + $0x90] sm:$0x1] %vm466, 0.0
          %477 = vst.msk [vmem:[#allocation3 + $0x9] sm:$0x1] %vm466, 0.0
          %478 = vst.msk [vmem:[#allocation3 + $0x19] sm:$0x1] %vm466, 0.0
          %479 = vst.msk [vmem:[#allocation3 + $0x29] sm:$0x1] %vm466, 0.0
          %480 = vst.msk [vmem:[#allocation3 + $0x39] sm:$0x1] %vm466, 0.0
          %481 = vst.msk [vmem:[#allocation3 + $0x49] sm:$0x1] %vm466, 0.0
          %482 = vst.msk [vmem:[#allocation3 + $0x59] sm:$0x1] %vm466, 0.0
          %483 = vst.msk [vmem:[#allocation3 + $0x69] sm:$0x1] %vm466, 0.0
          %484 = vst.msk [vmem:[#allocation3 + $0x79] sm:$0x1] %vm466, 0.0
          %485 = vst.msk [vmem:[#allocation3 + $0x89] sm:$0x1] %vm466, 0.0
          %486 = vst.msk [vmem:[#allocation3 + $0x99] sm:$0x1] %vm466, 0.0
          %v487 = vld [vmem:[%s0] sm:$0xff]
          %v488 = vld [vmem:[%s0 + $0x8] sm:$0xff]
          %v489 = vld [vmem:[%s0 + $0x10] sm:$0xff]
          %v490 = vld [vmem:[%s0 + $0x18] sm:$0xff]
          %v491 = vld [vmem:[%s0 + $0x20] sm:$0xff]
          %v492 = vld [vmem:[%s0 + $0x28] sm:$0xff]
          %v493 = vld [vmem:[%s0 + $0x30] sm:$0xff]
          %v494 = vld [vmem:[%s0 + $0x38] sm:$0xff]
          %s495 = scalar_lea.vmem [#allocation2], 16
          %496 = vst.msk [vmem:[%s495 + $0x1] sm:$0xff] %vm431, %v487
          %497 = vst.msk [vmem:[%s495 + $0x11] sm:$0xff] %vm431, %v488
          %498 = vst.msk [vmem:[%s495 + $0x21] sm:$0xff] %vm431, %v489
          %499 = vst.msk [vmem:[%s495 + $0x31] sm:$0xff] %vm431, %v490
          %500 = vst.msk [vmem:[%s495 + $0x41] sm:$0xff] %vm431, %v491
          %501 = vst.msk [vmem:[%s495 + $0x51] sm:$0xff] %vm431, %v492
          %502 = vst.msk [vmem:[%s495 + $0x61] sm:$0xff] %vm431, %v493
          %503 = vst.msk [vmem:[%s495 + $0x71] sm:$0xff] %vm431, %v494
          %v504 = vld [vmem:[#allocation2] sm:$0xff]
          %v505 = vld [vmem:[#allocation2 + $0x10] sm:$0xff]
          %v506 = vld [vmem:[#allocation2 + $0x20] sm:$0xff]
          %v507 = vld [vmem:[#allocation2 + $0x30] sm:$0xff]
          %v508 = vld [vmem:[#allocation2 + $0x40] sm:$0xff]
          %v509 = vld [vmem:[#allocation2 + $0x50] sm:$0xff]
          %v510 = vld [vmem:[#allocation2 + $0x60] sm:$0xff]
          %v511 = vld [vmem:[#allocation2 + $0x70] sm:$0xff]
          %v512 = vld [vmem:[%s2] sm:$0xff]
          %v513 = vld [vmem:[%s2 + $0x8] sm:$0xff]
          %v514 = vld [vmem:[#allocation2 + $0x1] sm:$0xff]
          %v515 = vld [vmem:[#allocation2 + $0x11] sm:$0xff]
          %v516 = vld [vmem:[#allocation2 + $0x21] sm:$0xff]
          %v517 = vld [vmem:[#allocation2 + $0x31] sm:$0xff]
          %v518 = vld [vmem:[#allocation2 + $0x41] sm:$0xff]
          %v519 = vld [vmem:[#allocation2 + $0x51] sm:$0xff]
          %v520 = vld [vmem:[#allocation2 + $0x61] sm:$0xff]
          %v521 = vld [vmem:[#allocation2 + $0x71] sm:$0xff]
          %s522 = scalar_lea.vmem %s2, 16
          %v523 = vld [vmem:[%s522] sm:$0xff]
          %v524 = vld [vmem:[%s522 + $0x8] sm:$0xff]
          %v526 = vsel %vm431, %v514, 0
          %v529 = vsel %vm431, %v515, 0
          %v532 = vsel %vm431, %v516, 0
          %v535 = vsel %vm431, %v517, 0
          %v538 = vsel %vm431, %v518, 0
          %v541 = vsel %vm431, %v519, 0
          %v544 = vsel %vm431, %v520, 0
          %v547 = vsel %vm431, %v521, 0
          %549 = vmatprep.subr.mxu0 0.0
          %550 = vmatpush1.msra.mxu0 %v523
          %551 = vmatprep.subr.mxu0 0.0
          %552 = vmatpush1.msra.mxu0 %v524
          %553 = vmatprep.subr.mxu0 0.0
          %554 = vmatpush1.msra.mxu0 0.0
          %555 = vmatprep.subr.mxu0 0.0
          %556 = vmatpush1.msra.mxu0 0.0
          %557 = vmatprep.subr.mxu0 0.0
          %558 = vmatpush1.msra.mxu0 0.0
          %559 = vmatprep.subr.mxu0 0.0
          %560 = vmatpush1.msra.mxu0 0.0
          %561 = vmatprep.subr.mxu0 0.0
          %562 = vmatpush1.msra.mxu0 0.0
          %563 = vmatprep.subr.mxu0 0.0
          %564 = vmatpush1.msra.mxu0 0.0
          %565 = vmatprep.subr.mxu0 0.0
          %566 = vmatpush1.msra.mxu0 0.0
          %567 = vmatprep.subr.mxu0 0.0
          %568 = vmatpush1.msra.mxu0 0.0
          %569 = vmatprep.subr.mxu0 0.0
          %570 = vmatpush1.msra.mxu0 0.0
          %571 = vmatprep.subr.mxu0 0.0
          %572 = vmatpush1.msra.mxu0 0.0
          %573 = vmatprep.subr.mxu0 0.0
          %574 = vmatpush1.msra.mxu0 0.0
          %575 = vmatprep.subr.mxu0 0.0
          %576 = vmatpush1.msra.mxu0 0.0
          %577 = vmatprep.subr.mxu0 0.0
          %578 = vmatpush1.msra.mxu0 0.0
          %579 = vmatprep.subr.mxu0 0.0
          %580 = vmatpush1.msra.mxu0 0.0
          %581 = vmatprep.subr.mxu0 0.0
          %582 = vmatpush1.msra.mxu0 0.0
          %583 = vmatprep.subr.mxu0 0.0
          %584 = vmatpush1.msra.mxu0 0.0
          %585 = vmatprep.subr.mxu0 0.0
          %586 = vmatpush1.msra.mxu0 0.0
          %587 = vmatprep.subr.mxu0 0.0
          %588 = vmatpush1.msra.mxu0 0.0
          %589 = vmatprep.subr.mxu0 0.0
          %590 = vmatpush1.msra.mxu0 0.0
          %591 = vmatprep.subr.mxu0 0.0
          %592 = vmatpush1.msra.mxu0 0.0
          %593 = vmatprep.subr.mxu0 0.0
          %594 = vmatpush1.msra.mxu0 0.0
          %595 = vmatprep.subr.mxu0 0.0
          %596 = vmatpush1.msra.mxu0 0.0
          %597 = vmatprep.subr.mxu0 0.0
          %598 = vmatpush1.msra.mxu0 0.0
          %599 = vmatprep.subr.mxu0 0.0
          %600 = vmatpush1.msra.mxu0 0.0
          %601 = vmatprep.subr.mxu0 0.0
          %602 = vmatpush1.msra.mxu0 0.0
          %603 = vmatprep.subr.mxu0 0.0
          %604 = vmatpush1.msra.mxu0 0.0
          %605 = vmatprep.subr.mxu0 0.0
          %606 = vmatpush1.msra.mxu0 0.0
          %607 = vmatprep.subr.mxu0 0.0
          %608 = vmatpush1.msra.mxu0 0.0
          %609 = vmatprep.subr.mxu0 0.0
          %610 = vmatpush1.msra.mxu0 0.0
          %611 = vmatprep.subr.mxu0 0.0
          %612 = vmatpush1.msra.mxu0 0.0
          %613 = vmatprep.mubr.f32.mxu0 0.0
          %614 = vmatmul.mubr.f32.gmra.mrb[0].mxu0 %v526
          %v615 = vpop.f32.mrb[0].mxu0
          %v616 = vadd.f32 0.0, %v615
          %v617 = vpop.f32.mrb[0].mxu0
          %618 = vmatprep.mubr.f32.mxu0 0.0
          %619 = vmatmul.mubr.f32.gmra.mrb[0].mxu0 %v529
          %v620 = vpop.f32.mrb[0].mxu0
          %v621 = vadd.f32 0.0, %v620
          %v622 = vpop.f32.mrb[0].mxu0
          %623 = vmatprep.mubr.f32.mxu0 0.0
          %624 = vmatmul.mubr.f32.gmra.mrb[0].mxu0 %v532
          %v625 = vpop.f32.mrb[0].mxu0
          %v626 = vadd.f32 0.0, %v625
          %v627 = vpop.f32.mrb[0].mxu0
          %628 = vmatprep.mubr.f32.mxu0 0.0
          %629 = vmatmul.mubr.f32.gmra.mrb[0].mxu0 %v535
          %v630 = vpop.f32.mrb[0].mxu0
          %v631 = vadd.f32 0.0, %v630
          %v632 = vpop.f32.mrb[0].mxu0
          %633 = vmatprep.mubr.f32.mxu0 0.0
          %634 = vmatmul.mubr.f32.gmra.mrb[0].mxu0 %v538
          %v635 = vpop.f32.mrb[0].mxu0
          %v636 = vadd.f32 0.0, %v635
          %v637 = vpop.f32.mrb[0].mxu0
          %638 = vmatprep.mubr.f32.mxu0 0.0
          %639 = vmatmul.mubr.f32.gmra.mrb[0].mxu0 %v541
          %v640 = vpop.f32.mrb[0].mxu0
          %v641 = vadd.f32 0.0, %v640
          %v642 = vpop.f32.mrb[0].mxu0
          %643 = vmatprep.mubr.f32.mxu0 0.0
          %644 = vmatmul.mubr.f32.gmra.mrb[0].mxu0 %v544
          %v645 = vpop.f32.mrb[0].mxu0
          %v646 = vadd.f32 0.0, %v645
          %v647 = vpop.f32.mrb[0].mxu0
          %648 = vmatprep.mubr.f32.mxu0 0.0
          %649 = vmatmul.mubr.f32.gmra.mrb[0].mxu0 %v547
          %v650 = vpop.f32.mrb[0].mxu0
          %v651 = vadd.f32 0.0, %v650
          %v652 = vpop.f32.mrb[0].mxu0
          %653 = vdwg.mxu0
          %v655 = vsel %vm431, %v504, 0
          %v658 = vsel %vm431, %v505, 0
          %v661 = vsel %vm431, %v506, 0
          %v664 = vsel %vm431, %v507, 0
          %v667 = vsel %vm431, %v508, 0
          %v670 = vsel %vm431, %v509, 0
          %v673 = vsel %vm431, %v510, 0
          %v676 = vsel %vm431, %v511, 0
          %678 = vmatprep.subr.mxu0 0.0
          %679 = vmatpush1.msra.mxu0 %v512
          %680 = vmatprep.subr.mxu0 0.0
          %681 = vmatpush1.msra.mxu0 %v513
          %682 = vmatprep.subr.mxu0 0.0
          %683 = vmatpush1.msra.mxu0 0.0
          %684 = vmatprep.subr.mxu0 0.0
          %685 = vmatpush1.msra.mxu0 0.0
          %686 = vmatprep.subr.mxu0 0.0
          %687 = vmatpush1.msra.mxu0 0.0
          %688 = vmatprep.subr.mxu0 0.0
          %689 = vmatpush1.msra.mxu0 0.0
          %690 = vmatprep.subr.mxu0 0.0
          %691 = vmatpush1.msra.mxu0 0.0
          %692 = vmatprep.subr.mxu0 0.0
          %693 = vmatpush1.msra.mxu0 0.0
          %694 = vmatprep.subr.mxu0 0.0
          %695 = vmatpush1.msra.mxu0 0.0
          %696 = vmatprep.subr.mxu0 0.0
          %697 = vmatpush1.msra.mxu0 0.0
          %698 = vmatprep.subr.mxu0 0.0
          %699 = vmatpush1.msra.mxu0 0.0
          %700 = vmatprep.subr.mxu0 0.0
          %701 = vmatpush1.msra.mxu0 0.0
          %702 = vmatprep.subr.mxu0 0.0
          %703 = vmatpush1.msra.mxu0 0.0
          %704 = vmatprep.subr.mxu0 0.0
          %705 = vmatpush1.msra.mxu0 0.0
          %706 = vmatprep.subr.mxu0 0.0
          %707 = vmatpush1.msra.mxu0 0.0
          %708 = vmatprep.subr.mxu0 0.0
          %709 = vmatpush1.msra.mxu0 0.0
          %710 = vmatprep.subr.mxu0 0.0
          %711 = vmatpush1.msra.mxu0 0.0
          %712 = vmatprep.subr.mxu0 0.0
          %713 = vmatpush1.msra.mxu0 0.0
          %714 = vmatprep.subr.mxu0 0.0
          %715 = vmatpush1.msra.mxu0 0.0
          %716 = vmatprep.subr.mxu0 0.0
          %717 = vmatpush1.msra.mxu0 0.0
          %718 = vmatprep.subr.mxu0 0.0
          %719 = vmatpush1.msra.mxu0 0.0
          %720 = vmatprep.subr.mxu0 0.0
          %721 = vmatpush1.msra.mxu0 0.0
          %722 = vmatprep.subr.mxu0 0.0
          %723 = vmatpush1.msra.mxu0 0.0
          %724 = vmatprep.subr.mxu0 0.0
          %725 = vmatpush1.msra.mxu0 0.0
          %726 = vmatprep.subr.mxu0 0.0
          %727 = vmatpush1.msra.mxu0 0.0
          %728 = vmatprep.subr.mxu0 0.0
          %729 = vmatpush1.msra.mxu0 0.0
          %730 = vmatprep.subr.mxu0 0.0
          %731 = vmatpush1.msra.mxu0 0.0
          %732 = vmatprep.subr.mxu0 0.0
          %733 = vmatpush1.msra.mxu0 0.0
          %734 = vmatprep.subr.mxu0 0.0
          %735 = vmatpush1.msra.mxu0 0.0
          %736 = vmatprep.subr.mxu0 0.0
          %737 = vmatpush1.msra.mxu0 0.0
          %738 = vmatprep.subr.mxu0 0.0
          %739 = vmatpush1.msra.mxu0 0.0
          %740 = vmatprep.subr.mxu0 0.0
          %741 = vmatpush1.msra.mxu0 0.0
          %742 = vmatprep.mubr.f32.mxu0 0.0
          %743 = vmatmul.mubr.f32.gmra.mrb[0].mxu0 %v655
          %v744 = vpop.f32.mrb[0].mxu0
          %v745 = vadd.f32 %v616, %v744
          %v746 = vpop.f32.mrb[0].mxu0
          %747 = vmatprep.mubr.f32.mxu0 0.0
          %748 = vmatmul.mubr.f32.gmra.mrb[0].mxu0 %v658
          %v749 = vpop.f32.mrb[0].mxu0
          %v750 = vadd.f32 %v621, %v749
          %v751 = vpop.f32.mrb[0].mxu0
          %752 = vmatprep.mubr.f32.mxu0 0.0
          %753 = vmatmul.mubr.f32.gmra.mrb[0].mxu0 %v661
          %v754 = vpop.f32.mrb[0].mxu0
          %v755 = vadd.f32 %v626, %v754
          %v756 = vpop.f32.mrb[0].mxu0
          %757 = vmatprep.mubr.f32.mxu0 0.0
          %758 = vmatmul.mubr.f32.gmra.mrb[0].mxu0 %v664
          %v759 = vpop.f32.mrb[0].mxu0
          %v760 = vadd.f32 %v631, %v759
          %v761 = vpop.f32.mrb[0].mxu0
          %762 = vmatprep.mubr.f32.mxu0 0.0
          %763 = vmatmul.mubr.f32.gmra.mrb[0].mxu0 %v667
          %v764 = vpop.f32.mrb[0].mxu0
          %v765 = vadd.f32 %v636, %v764
          %v766 = vpop.f32.mrb[0].mxu0
          %767 = vmatprep.mubr.f32.mxu0 0.0
          %768 = vmatmul.mubr.f32.gmra.mrb[0].mxu0 %v670
          %v769 = vpop.f32.mrb[0].mxu0
          %v770 = vadd.f32 %v641, %v769
          %v771 = vpop.f32.mrb[0].mxu0
          %772 = vmatprep.mubr.f32.mxu0 0.0
          %773 = vmatmul.mubr.f32.gmra.mrb[0].mxu0 %v673
          %v774 = vpop.f32.mrb[0].mxu0
          %v775 = vadd.f32 %v646, %v774
          %v776 = vpop.f32.mrb[0].mxu0
          %777 = vmatprep.mubr.f32.mxu0 0.0
          %778 = vmatmul.mubr.f32.gmra.mrb[0].mxu0 %v676
          %v779 = vpop.f32.mrb[0].mxu0
          %v780 = vadd.f32 %v651, %v779
          %v781 = vpop.f32.mrb[0].mxu0
          %782 = vdwg.mxu0
          %v783 = vld [vmem:[#allocation2 + $0x2] sm:$0xff]
          %v784 = vld [vmem:[#allocation2 + $0x12] sm:$0xff]
          %v785 = vld [vmem:[#allocation2 + $0x22] sm:$0xff]
          %v786 = vld [vmem:[#allocation2 + $0x32] sm:$0xff]
          %v787 = vld [vmem:[#allocation2 + $0x42] sm:$0xff]
          %v788 = vld [vmem:[#allocation2 + $0x52] sm:$0xff]
          %v789 = vld [vmem:[#allocation2 + $0x62] sm:$0xff]
          %v790 = vld [vmem:[#allocation2 + $0x72] sm:$0xff]
          %s791 = scalar_lea.vmem %s2, 32
          %v792 = vld [vmem:[%s791] sm:$0xff]
          %v793 = vld [vmem:[%s791 + $0x8] sm:$0xff]
          %v795 = vsel %vm431, %v783, 0
          %v798 = vsel %vm431, %v784, 0
          %v801 = vsel %vm431, %v785, 0
          %v804 = vsel %vm431, %v786, 0
          %v807 = vsel %vm431, %v787, 0
          %v810 = vsel %vm431, %v788, 0
          %v813 = vsel %vm431, %v789, 0
          %v816 = vsel %vm431, %v790, 0
          %818 = vmatprep.subr.mxu0 0.0
          %819 = vmatpush1.msra.mxu0 %v792
          %820 = vmatprep.subr.mxu0 0.0
          %821 = vmatpush1.msra.mxu0 %v793
          %822 = vmatprep.subr.mxu0 0.0
          %823 = vmatpush1.msra.mxu0 0.0
          %824 = vmatprep.subr.mxu0 0.0
          %825 = vmatpush1.msra.mxu0 0.0
          %826 = vmatprep.subr.mxu0 0.0
          %827 = vmatpush1.msra.mxu0 0.0
          %828 = vmatprep.subr.mxu0 0.0
          %829 = vmatpush1.msra.mxu0 0.0
          %830 = vmatprep.subr.mxu0 0.0
          %831 = vmatpush1.msra.mxu0 0.0
          %832 = vmatprep.subr.mxu0 0.0
          %833 = vmatpush1.msra.mxu0 0.0
          %834 = vmatprep.subr.mxu0 0.0
          %835 = vmatpush1.msra.mxu0 0.0
          %836 = vmatprep.subr.mxu0 0.0
          %837 = vmatpush1.msra.mxu0 0.0
          %838 = vmatprep.subr.mxu0 0.0
          %839 = vmatpush1.msra.mxu0 0.0
          %840 = vmatprep.subr.mxu0 0.0
          %841 = vmatpush1.msra.mxu0 0.0
          %842 = vmatprep.subr.mxu0 0.0
          %843 = vmatpush1.msra.mxu0 0.0
          %844 = vmatprep.subr.mxu0 0.0
          %845 = vmatpush1.msra.mxu0 0.0
          %846 = vmatprep.subr.mxu0 0.0
          %847 = vmatpush1.msra.mxu0 0.0
          %848 = vmatprep.subr.mxu0 0.0
          %849 = vmatpush1.msra.mxu0 0.0
          %850 = vmatprep.subr.mxu0 0.0
          %851 = vmatpush1.msra.mxu0 0.0
          %852 = vmatprep.subr.mxu0 0.0
          %853 = vmatpush1.msra.mxu0 0.0
          %854 = vmatprep.subr.mxu0 0.0
          %855 = vmatpush1.msra.mxu0 0.0
          %856 = vmatprep.subr.mxu0 0.0
          %857 = vmatpush1.msra.mxu0 0.0
          %858 = vmatprep.subr.mxu0 0.0
          %859 = vmatpush1.msra.mxu0 0.0
          %860 = vmatprep.subr.mxu0 0.0
          %861 = vmatpush1.msra.mxu0 0.0
          %862 = vmatprep.subr.mxu0 0.0
          %863 = vmatpush1.msra.mxu0 0.0
          %864 = vmatprep.subr.mxu0 0.0
          %865 = vmatpush1.msra.mxu0 0.0
          %866 = vmatprep.subr.mxu0 0.0
          %867 = vmatpush1.msra.mxu0 0.0
          %868 = vmatprep.subr.mxu0 0.0
          %869 = vmatpush1.msra.mxu0 0.0
          %870 = vmatprep.subr.mxu0 0.0
          %871 = vmatpush1.msra.mxu0 0.0
          %872 = vmatprep.subr.mxu0 0.0
          %873 = vmatpush1.msra.mxu0 0.0
          %874 = vmatprep.subr.mxu0 0.0
          %875 = vmatpush1.msra.mxu0 0.0
          %876 = vmatprep.subr.mxu0 0.0
          %877 = vmatpush1.msra.mxu0 0.0
          %878 = vmatprep.subr.mxu0 0.0
          %879 = vmatpush1.msra.mxu0 0.0
          %880 = vmatprep.subr.mxu0 0.0
          %881 = vmatpush1.msra.mxu0 0.0
          %882 = vmatprep.mubr.f32.mxu0 0.0
          %883 = vmatmul.mubr.f32.gmra.mrb[0].mxu0 %v795
          %v884 = vpop.f32.mrb[0].mxu0
          %v885 = vadd.f32 0.0, %v884
          %v886 = vpop.f32.mrb[0].mxu0
          %887 = vmatprep.mubr.f32.mxu0 0.0
          %888 = vmatmul.mubr.f32.gmra.mrb[0].mxu0 %v798
          %v889 = vpop.f32.mrb[0].mxu0
          %v890 = vadd.f32 0.0, %v889
          %v891 = vpop.f32.mrb[0].mxu0
          %892 = vmatprep.mubr.f32.mxu0 0.0
          %893 = vmatmul.mubr.f32.gmra.mrb[0].mxu0 %v801
          %v894 = vpop.f32.mrb[0].mxu0
          %v895 = vadd.f32 0.0, %v894
          %v896 = vpop.f32.mrb[0].mxu0
          %897 = vmatprep.mubr.f32.mxu0 0.0
          %898 = vmatmul.mubr.f32.gmra.mrb[0].mxu0 %v804
          %v899 = vpop.f32.mrb[0].mxu0
          %v900 = vadd.f32 0.0, %v899
          %v901 = vpop.f32.mrb[0].mxu0
          %902 = vmatprep.mubr.f32.mxu0 0.0
          %903 = vmatmul.mubr.f32.gmra.mrb[0].mxu0 %v807
          %v904 = vpop.f32.mrb[0].mxu0
          %v905 = vadd.f32 0.0, %v904
          %v906 = vpop.f32.mrb[0].mxu0
          %907 = vmatprep.mubr.f32.mxu0 0.0
          %908 = vmatmul.mubr.f32.gmra.mrb[0].mxu0 %v810
          %v909 = vpop.f32.mrb[0].mxu0
          %v910 = vadd.f32 0.0, %v909
          %v911 = vpop.f32.mrb[0].mxu0
          %912 = vmatprep.mubr.f32.mxu0 0.0
          %913 = vmatmul.mubr.f32.gmra.mrb[0].mxu0 %v813
          %v914 = vpop.f32.mrb[0].mxu0
          %v915 = vadd.f32 0.0, %v914
          %v916 = vpop.f32.mrb[0].mxu0
          %917 = vmatprep.mubr.f32.mxu0 0.0
          %918 = vmatmul.mubr.f32.gmra.mrb[0].mxu0 %v816
          %v919 = vpop.f32.mrb[0].mxu0
          %v920 = vadd.f32 0.0, %v919
          %v921 = vpop.f32.mrb[0].mxu0
          %922 = vdwg.mxu0
          %v923 = vadd.f32 %v745, %v885
          %v924 = vadd.f32 %v750, %v890
          %v925 = vadd.f32 %v755, %v895
          %v926 = vadd.f32 %v760, %v900
          %v927 = vadd.f32 %v765, %v905
          %v928 = vadd.f32 %v770, %v910
          %v929 = vadd.f32 %v775, %v915
          %v930 = vadd.f32 %v780, %v920
          %v931 = vld [vmem:[%s495] sm:$0xff]
          %v932 = vld [vmem:[%s495 + $0x10] sm:$0xff]
          %v933 = vld [vmem:[%s495 + $0x20] sm:$0xff]
          %v934 = vld [vmem:[%s495 + $0x30] sm:$0xff]
          %v935 = vld [vmem:[%s495 + $0x40] sm:$0xff]
          %v936 = vld [vmem:[%s495 + $0x50] sm:$0xff]
          %v937 = vld [vmem:[%s495 + $0x60] sm:$0xff]
          %v938 = vld [vmem:[%s495 + $0x70] sm:$0xff]
          %s939 = scalar_lea.vmem %s2, 48
          %v940 = vld [vmem:[%s939] sm:$0xff]
          %v941 = vld [vmem:[%s939 + $0x8] sm:$0xff]
          %v943 = vsel %vm431, %v931, 0
          %v946 = vsel %vm431, %v932, 0
          %v949 = vsel %vm431, %v933, 0
          %v952 = vsel %vm431, %v934, 0
          %v955 = vsel %vm431, %v935, 0
          %v958 = vsel %vm431, %v936, 0
          %v961 = vsel %vm431, %v937, 0
          %v964 = vsel %vm431, %v938, 0
          %966 = vmatprep.subr.mxu0 0.0
          %967 = vmatpush1.msra.mxu0 %v940
          %968 = vmatprep.subr.mxu0 0.0
          %969 = vmatpush1.msra.mxu0 %v941
          %970 = vmatprep.subr.mxu0 0.0
          %971 = vmatpush1.msra.mxu0 0.0
          %972 = vmatprep.subr.mxu0 0.0
          %973 = vmatpush1.msra.mxu0 0.0
          %974 = vmatprep.subr.mxu0 0.0
          %975 = vmatpush1.msra.mxu0 0.0
          %976 = vmatprep.subr.mxu0 0.0
          %977 = vmatpush1.msra.mxu0 0.0
          %978 = vmatprep.subr.mxu0 0.0
          %979 = vmatpush1.msra.mxu0 0.0
          %980 = vmatprep.subr.mxu0 0.0
          %981 = vmatpush1.msra.mxu0 0.0
          %982 = vmatprep.subr.mxu0 0.0
          %983 = vmatpush1.msra.mxu0 0.0
          %984 = vmatprep.subr.mxu0 0.0
          %985 = vmatpush1.msra.mxu0 0.0
          %986 = vmatprep.subr.mxu0 0.0
          %987 = vmatpush1.msra.mxu0 0.0
          %988 = vmatprep.subr.mxu0 0.0
          %989 = vmatpush1.msra.mxu0 0.0
          %990 = vmatprep.subr.mxu0 0.0
          %991 = vmatpush1.msra.mxu0 0.0
          %992 = vmatprep.subr.mxu0 0.0
          %993 = vmatpush1.msra.mxu0 0.0
          %994 = vmatprep.subr.mxu0 0.0
          %995 = vmatpush1.msra.mxu0 0.0
          %996 = vmatprep.subr.mxu0 0.0
          %997 = vmatpush1.msra.mxu0 0.0
          %998 = vmatprep.subr.mxu0 0.0
          %999 = vmatpush1.msra.mxu0 0.0
          %1000 = vmatprep.subr.mxu0 0.0
          %1001 = vmatpush1.msra.mxu0 0.0
          %1002 = vmatprep.subr.mxu0 0.0
          %1003 = vmatpush1.msra.mxu0 0.0
          %1004 = vmatprep.subr.mxu0 0.0
          %1005 = vmatpush1.msra.mxu0 0.0
          %1006 = vmatprep.subr.mxu0 0.0
          %1007 = vmatpush1.msra.mxu0 0.0
          %1008 = vmatprep.subr.mxu0 0.0
          %1009 = vmatpush1.msra.mxu0 0.0
          %1010 = vmatprep.subr.mxu0 0.0
          %1011 = vmatpush1.msra.mxu0 0.0
          %1012 = vmatprep.subr.mxu0 0.0
          %1013 = vmatpush1.msra.mxu0 0.0
          %1014 = vmatprep.subr.mxu0 0.0
          %1015 = vmatpush1.msra.mxu0 0.0
          %1016 = vmatprep.subr.mxu0 0.0
          %1017 = vmatpush1.msra.mxu0 0.0
          %1018 = vmatprep.subr.mxu0 0.0
          %1019 = vmatpush1.msra.mxu0 0.0
          %1020 = vmatprep.subr.mxu0 0.0
          %1021 = vmatpush1.msra.mxu0 0.0
          %1022 = vmatprep.subr.mxu0 0.0
          %1023 = vmatpush1.msra.mxu0 0.0
          %1024 = vmatprep.subr.mxu0 0.0
          %1025 = vmatpush1.msra.mxu0 0.0
          %1026 = vmatprep.subr.mxu0 0.0
          %1027 = vmatpush1.msra.mxu0 0.0
          %1028 = vmatprep.subr.mxu0 0.0
          %1029 = vmatpush1.msra.mxu0 0.0
          %1030 = vmatprep.mubr.f32.mxu0 0.0
          %1031 = vmatmul.mubr.f32.gmra.mrb[0].mxu0 %v943
          %v1032 = vpop.f32.mrb[0].mxu0
          %v1033 = vadd.f32 0.0, %v1032
          %v1034 = vpop.f32.mrb[0].mxu0
          %1035 = vmatprep.mubr.f32.mxu0 0.0
          %1036 = vmatmul.mubr.f32.gmra.mrb[0].mxu0 %v946
          %v1037 = vpop.f32.mrb[0].mxu0
          %v1038 = vadd.f32 0.0, %v1037
          %v1039 = vpop.f32.mrb[0].mxu0
          %1040 = vmatprep.mubr.f32.mxu0 0.0
          %1041 = vmatmul.mubr.f32.gmra.mrb[0].mxu0 %v949
          %v1042 = vpop.f32.mrb[0].mxu0
          %v1043 = vadd.f32 0.0, %v1042
          %v1044 = vpop.f32.mrb[0].mxu0
          %1045 = vmatprep.mubr.f32.mxu0 0.0
          %1046 = vmatmul.mubr.f32.gmra.mrb[0].mxu0 %v952
          %v1047 = vpop.f32.mrb[0].mxu0
          %v1048 = vadd.f32 0.0, %v1047
          %v1049 = vpop.f32.mrb[0].mxu0
          %1050 = vmatprep.mubr.f32.mxu0 0.0
          %1051 = vmatmul.mubr.f32.gmra.mrb[0].mxu0 %v955
          %v1052 = vpop.f32.mrb[0].mxu0
          %v1053 = vadd.f32 0.0, %v1052
          %v1054 = vpop.f32.mrb[0].mxu0
          %1055 = vmatprep.mubr.f32.mxu0 0.0
          %1056 = vmatmul.mubr.f32.gmra.mrb[0].mxu0 %v958
          %v1057 = vpop.f32.mrb[0].mxu0
          %v1058 = vadd.f32 0.0, %v1057
          %v1059 = vpop.f32.mrb[0].mxu0
          %1060 = vmatprep.mubr.f32.mxu0 0.0
          %1061 = vmatmul.mubr.f32.gmra.mrb[0].mxu0 %v961
          %v1062 = vpop.f32.mrb[0].mxu0
          %v1063 = vadd.f32 0.0, %v1062
          %v1064 = vpop.f32.mrb[0].mxu0
          %1065 = vmatprep.mubr.f32.mxu0 0.0
          %1066 = vmatmul.mubr.f32.gmra.mrb[0].mxu0 %v964
          %v1067 = vpop.f32.mrb[0].mxu0
          %v1068 = vadd.f32 0.0, %v1067
          %v1069 = vpop.f32.mrb[0].mxu0
          %1070 = vdwg.mxu0
          %v1071 = vadd.f32 %v923, %v1033
          %v1072 = vadd.f32 %v924, %v1038
          %v1073 = vadd.f32 %v925, %v1043
          %v1074 = vadd.f32 %v926, %v1048
          %v1075 = vadd.f32 %v927, %v1053
          %v1076 = vadd.f32 %v928, %v1058
          %v1077 = vadd.f32 %v929, %v1063
          %v1078 = vadd.f32 %v930, %v1068
          %v1079 = vld [vmem:[%s495 + $0x1] sm:$0xff]
          %v1080 = vld [vmem:[%s495 + $0x11] sm:$0xff]
          %v1081 = vld [vmem:[%s495 + $0x21] sm:$0xff]
          %v1082 = vld [vmem:[%s495 + $0x31] sm:$0xff]
          %v1083 = vld [vmem:[%s495 + $0x41] sm:$0xff]
          %v1084 = vld [vmem:[%s495 + $0x51] sm:$0xff]
          %v1085 = vld [vmem:[%s495 + $0x61] sm:$0xff]
          %v1086 = vld [vmem:[%s495 + $0x71] sm:$0xff]
          %s1087 = scalar_lea.vmem %s2, 64
          %v1088 = vld [vmem:[%s1087] sm:$0xff]
          %v1089 = vld [vmem:[%s1087 + $0x8] sm:$0xff]
          %v1091 = vsel %vm431, %v1079, 0
          %v1094 = vsel %vm431, %v1080, 0
          %v1097 = vsel %vm431, %v1081, 0
          %v1100 = vsel %vm431, %v1082, 0
          %v1103 = vsel %vm431, %v1083, 0
          %v1106 = vsel %vm431, %v1084, 0
          %v1109 = vsel %vm431, %v1085, 0
          %v1112 = vsel %vm431, %v1086, 0
          %1114 = vmatprep.subr.mxu0 0.0
          %1115 = vmatpush1.msra.mxu0 %v1088
          %1116 = vmatprep.subr.mxu0 0.0
          %1117 = vmatpush1.msra.mxu0 %v1089
          %1118 = vmatprep.subr.mxu0 0.0
          %1119 = vmatpush1.msra.mxu0 0.0
          %1120 = vmatprep.subr.mxu0 0.0
          %1121 = vmatpush1.msra.mxu0 0.0
          %1122 = vmatprep.subr.mxu0 0.0
          %1123 = vmatpush1.msra.mxu0 0.0
          %1124 = vmatprep.subr.mxu0 0.0
          %1125 = vmatpush1.msra.mxu0 0.0
          %1126 = vmatprep.subr.mxu0 0.0
          %1127 = vmatpush1.msra.mxu0 0.0
          %1128 = vmatprep.subr.mxu0 0.0
          %1129 = vmatpush1.msra.mxu0 0.0
          %1130 = vmatprep.subr.mxu0 0.0
          %1131 = vmatpush1.msra.mxu0 0.0
          %1132 = vmatprep.subr.mxu0 0.0
          %1133 = vmatpush1.msra.mxu0 0.0
          %1134 = vmatprep.subr.mxu0 0.0
          %1135 = vmatpush1.msra.mxu0 0.0
          %1136 = vmatprep.subr.mxu0 0.0
          %1137 = vmatpush1.msra.mxu0 0.0
          %1138 = vmatprep.subr.mxu0 0.0
          %1139 = vmatpush1.msra.mxu0 0.0
          %1140 = vmatprep.subr.mxu0 0.0
          %1141 = vmatpush1.msra.mxu0 0.0
          %1142 = vmatprep.subr.mxu0 0.0
          %1143 = vmatpush1.msra.mxu0 0.0
          %1144 = vmatprep.subr.mxu0 0.0
          %1145 = vmatpush1.msra.mxu0 0.0
          %1146 = vmatprep.subr.mxu0 0.0
          %1147 = vmatpush1.msra.mxu0 0.0
          %1148 = vmatprep.subr.mxu0 0.0
          %1149 = vmatpush1.msra.mxu0 0.0
          %1150 = vmatprep.subr.mxu0 0.0
          %1151 = vmatpush1.msra.mxu0 0.0
          %1152 = vmatprep.subr.mxu0 0.0
          %1153 = vmatpush1.msra.mxu0 0.0
          %1154 = vmatprep.subr.mxu0 0.0
          %1155 = vmatpush1.msra.mxu0 0.0
          %1156 = vmatprep.subr.mxu0 0.0
          %1157 = vmatpush1.msra.mxu0 0.0
          %1158 = vmatprep.subr.mxu0 0.0
          %1159 = vmatpush1.msra.mxu0 0.0
          %1160 = vmatprep.subr.mxu0 0.0
          %1161 = vmatpush1.msra.mxu0 0.0
          %1162 = vmatprep.subr.mxu0 0.0
          %1163 = vmatpush1.msra.mxu0 0.0
          %1164 = vmatprep.subr.mxu0 0.0
          %1165 = vmatpush1.msra.mxu0 0.0
          %1166 = vmatprep.subr.mxu0 0.0
          %1167 = vmatpush1.msra.mxu0 0.0
          %1168 = vmatprep.subr.mxu0 0.0
          %1169 = vmatpush1.msra.mxu0 0.0
          %1170 = vmatprep.subr.mxu0 0.0
          %1171 = vmatpush1.msra.mxu0 0.0
          %1172 = vmatprep.subr.mxu0 0.0
          %1173 = vmatpush1.msra.mxu0 0.0
          %1174 = vmatprep.subr.mxu0 0.0
          %1175 = vmatpush1.msra.mxu0 0.0
          %1176 = vmatprep.subr.mxu0 0.0
          %1177 = vmatpush1.msra.mxu0 0.0
          %1178 = vmatprep.mubr.f32.mxu0 0.0
          %1179 = vmatmul.mubr.f32.gmra.mrb[0].mxu0 %v1091
          %v1180 = vpop.f32.mrb[0].mxu0
          %v1181 = vadd.f32 0.0, %v1180
          %v1182 = vpop.f32.mrb[0].mxu0
          %1183 = vmatprep.mubr.f32.mxu0 0.0
          %1184 = vmatmul.mubr.f32.gmra.mrb[0].mxu0 %v1094
          %v1185 = vpop.f32.mrb[0].mxu0
          %v1186 = vadd.f32 0.0, %v1185
          %v1187 = vpop.f32.mrb[0].mxu0
          %1188 = vmatprep.mubr.f32.mxu0 0.0
          %1189 = vmatmul.mubr.f32.gmra.mrb[0].mxu0 %v1097
          %v1190 = vpop.f32.mrb[0].mxu0
          %v1191 = vadd.f32 0.0, %v1190
          %v1192 = vpop.f32.mrb[0].mxu0
          %1193 = vmatprep.mubr.f32.mxu0 0.0
          %1194 = vmatmul.mubr.f32.gmra.mrb[0].mxu0 %v1100
          %v1195 = vpop.f32.mrb[0].mxu0
          %v1196 = vadd.f32 0.0, %v1195
          %v1197 = vpop.f32.mrb[0].mxu0
          %1198 = vmatprep.mubr.f32.mxu0 0.0
          %1199 = vmatmul.mubr.f32.gmra.mrb[0].mxu0 %v1103
          %v1200 = vpop.f32.mrb[0].mxu0
          %v1201 = vadd.f32 0.0, %v1200
          %v1202 = vpop.f32.mrb[0].mxu0
          %1203 = vmatprep.mubr.f32.mxu0 0.0
          %1204 = vmatmul.mubr.f32.gmra.mrb[0].mxu0 %v1106
          %v1205 = vpop.f32.mrb[0].mxu0
          %v1206 = vadd.f32 0.0, %v1205
          %v1207 = vpop.f32.mrb[0].mxu0
          %1208 = vmatprep.mubr.f32.mxu0 0.0
          %1209 = vmatmul.mubr.f32.gmra.mrb[0].mxu0 %v1109
          %v1210 = vpop.f32.mrb[0].mxu0
          %v1211 = vadd.f32 0.0, %v1210
          %v1212 = vpop.f32.mrb[0].mxu0
          %1213 = vmatprep.mubr.f32.mxu0 0.0
          %1214 = vmatmul.mubr.f32.gmra.mrb[0].mxu0 %v1112
          %v1215 = vpop.f32.mrb[0].mxu0
          %v1216 = vadd.f32 0.0, %v1215
          %v1217 = vpop.f32.mrb[0].mxu0
          %1218 = vdwg.mxu0
          %v1219 = vadd.f32 %v1071, %v1181
          %v1220 = vadd.f32 %v1072, %v1186
          %v1221 = vadd.f32 %v1073, %v1191
          %v1222 = vadd.f32 %v1074, %v1196
          %v1223 = vadd.f32 %v1075, %v1201
          %v1224 = vadd.f32 %v1076, %v1206
          %v1225 = vadd.f32 %v1077, %v1211
          %v1226 = vadd.f32 %v1078, %v1216
          %v1227 = vld [vmem:[%s495 + $0x2] sm:$0xff]
          %v1228 = vld [vmem:[%s495 + $0x12] sm:$0xff]
          %v1229 = vld [vmem:[%s495 + $0x22] sm:$0xff]
          %v1230 = vld [vmem:[%s495 + $0x32] sm:$0xff]
          %v1231 = vld [vmem:[%s495 + $0x42] sm:$0xff]
          %v1232 = vld [vmem:[%s495 + $0x52] sm:$0xff]
          %v1233 = vld [vmem:[%s495 + $0x62] sm:$0xff]
          %v1234 = vld [vmem:[%s495 + $0x72] sm:$0xff]
          %s1235 = scalar_lea.vmem %s2, 80
          %v1236 = vld [vmem:[%s1235] sm:$0xff]
          %v1237 = vld [vmem:[%s1235 + $0x8] sm:$0xff]
          %v1239 = vsel %vm431, %v1227, 0
          %v1242 = vsel %vm431, %v1228, 0
          %v1245 = vsel %vm431, %v1229, 0
          %v1248 = vsel %vm431, %v1230, 0
          %v1251 = vsel %vm431, %v1231, 0
          %v1254 = vsel %vm431, %v1232, 0
          %v1257 = vsel %vm431, %v1233, 0
          %v1260 = vsel %vm431, %v1234, 0
          %1262 = vmatprep.subr.mxu0 0.0
          %1263 = vmatpush1.msra.mxu0 %v1236
          %1264 = vmatprep.subr.mxu0 0.0
          %1265 = vmatpush1.msra.mxu0 %v1237
          %1266 = vmatprep.subr.mxu0 0.0
          %1267 = vmatpush1.msra.mxu0 0.0
          %1268 = vmatprep.subr.mxu0 0.0
          %1269 = vmatpush1.msra.mxu0 0.0
          %1270 = vmatprep.subr.mxu0 0.0
          %1271 = vmatpush1.msra.mxu0 0.0
          %1272 = vmatprep.subr.mxu0 0.0
          %1273 = vmatpush1.msra.mxu0 0.0
          %1274 = vmatprep.subr.mxu0 0.0
          %1275 = vmatpush1.msra.mxu0 0.0
          %1276 = vmatprep.subr.mxu0 0.0
          %1277 = vmatpush1.msra.mxu0 0.0
          %1278 = vmatprep.subr.mxu0 0.0
          %1279 = vmatpush1.msra.mxu0 0.0
          %1280 = vmatprep.subr.mxu0 0.0
          %1281 = vmatpush1.msra.mxu0 0.0
          %1282 = vmatprep.subr.mxu0 0.0
          %1283 = vmatpush1.msra.mxu0 0.0
          %1284 = vmatprep.subr.mxu0 0.0
          %1285 = vmatpush1.msra.mxu0 0.0
          %1286 = vmatprep.subr.mxu0 0.0
          %1287 = vmatpush1.msra.mxu0 0.0
          %1288 = vmatprep.subr.mxu0 0.0
          %1289 = vmatpush1.msra.mxu0 0.0
          %1290 = vmatprep.subr.mxu0 0.0
          %1291 = vmatpush1.msra.mxu0 0.0
          %1292 = vmatprep.subr.mxu0 0.0
          %1293 = vmatpush1.msra.mxu0 0.0
          %1294 = vmatprep.subr.mxu0 0.0
          %1295 = vmatpush1.msra.mxu0 0.0
          %1296 = vmatprep.subr.mxu0 0.0
          %1297 = vmatpush1.msra.mxu0 0.0
          %1298 = vmatprep.subr.mxu0 0.0
          %1299 = vmatpush1.msra.mxu0 0.0
          %1300 = vmatprep.subr.mxu0 0.0
          %1301 = vmatpush1.msra.mxu0 0.0
          %1302 = vmatprep.subr.mxu0 0.0
          %1303 = vmatpush1.msra.mxu0 0.0
          %1304 = vmatprep.subr.mxu0 0.0
          %1305 = vmatpush1.msra.mxu0 0.0
          %1306 = vmatprep.subr.mxu0 0.0
          %1307 = vmatpush1.msra.mxu0 0.0
          %1308 = vmatprep.subr.mxu0 0.0
          %1309 = vmatpush1.msra.mxu0 0.0
          %1310 = vmatprep.subr.mxu0 0.0
          %1311 = vmatpush1.msra.mxu0 0.0
          %1312 = vmatprep.subr.mxu0 0.0
          %1313 = vmatpush1.msra.mxu0 0.0
          %1314 = vmatprep.subr.mxu0 0.0
          %1315 = vmatpush1.msra.mxu0 0.0
          %1316 = vmatprep.subr.mxu0 0.0
          %1317 = vmatpush1.msra.mxu0 0.0
          %1318 = vmatprep.subr.mxu0 0.0
          %1319 = vmatpush1.msra.mxu0 0.0
          %1320 = vmatprep.subr.mxu0 0.0
          %1321 = vmatpush1.msra.mxu0 0.0
          %1322 = vmatprep.subr.mxu0 0.0
          %1323 = vmatpush1.msra.mxu0 0.0
          %1324 = vmatprep.subr.mxu0 0.0
          %1325 = vmatpush1.msra.mxu0 0.0
          %1326 = vmatprep.mubr.f32.mxu0 0.0
          %1327 = vmatmul.mubr.f32.gmra.mrb[0].mxu0 %v1239
          %v1328 = vpop.f32.mrb[0].mxu0
          %v1329 = vadd.f32 0.0, %v1328
          %v1330 = vpop.f32.mrb[0].mxu0
          %1331 = vmatprep.mubr.f32.mxu0 0.0
          %1332 = vmatmul.mubr.f32.gmra.mrb[0].mxu0 %v1242
          %v1333 = vpop.f32.mrb[0].mxu0
          %v1334 = vadd.f32 0.0, %v1333
          %v1335 = vpop.f32.mrb[0].mxu0
          %1336 = vmatprep.mubr.f32.mxu0 0.0
          %1337 = vmatmul.mubr.f32.gmra.mrb[0].mxu0 %v1245
          %v1338 = vpop.f32.mrb[0].mxu0
          %v1339 = vadd.f32 0.0, %v1338
          %v1340 = vpop.f32.mrb[0].mxu0
          %1341 = vmatprep.mubr.f32.mxu0 0.0
          %1342 = vmatmul.mubr.f32.gmra.mrb[0].mxu0 %v1248
          %v1343 = vpop.f32.mrb[0].mxu0
          %v1344 = vadd.f32 0.0, %v1343
          %v1345 = vpop.f32.mrb[0].mxu0
          %1346 = vmatprep.mubr.f32.mxu0 0.0
          %1347 = vmatmul.mubr.f32.gmra.mrb[0].mxu0 %v1251
          %v1348 = vpop.f32.mrb[0].mxu0
          %v1349 = vadd.f32 0.0, %v1348
          %v1350 = vpop.f32.mrb[0].mxu0
          %1351 = vmatprep.mubr.f32.mxu0 0.0
          %1352 = vmatmul.mubr.f32.gmra.mrb[0].mxu0 %v1254
          %v1353 = vpop.f32.mrb[0].mxu0
          %v1354 = vadd.f32 0.0, %v1353
          %v1355 = vpop.f32.mrb[0].mxu0
          %1356 = vmatprep.mubr.f32.mxu0 0.0
          %1357 = vmatmul.mubr.f32.gmra.mrb[0].mxu0 %v1257
          %v1358 = vpop.f32.mrb[0].mxu0
          %v1359 = vadd.f32 0.0, %v1358
          %v1360 = vpop.f32.mrb[0].mxu0
          %1361 = vmatprep.mubr.f32.mxu0 0.0
          %1362 = vmatmul.mubr.f32.gmra.mrb[0].mxu0 %v1260
          %v1363 = vpop.f32.mrb[0].mxu0
          %v1364 = vadd.f32 0.0, %v1363
          %v1365 = vpop.f32.mrb[0].mxu0
          %1366 = vdwg.mxu0
          %v1367 = vadd.f32 %v1219, %v1329
          %v1368 = vadd.f32 %v1220, %v1334
          %v1369 = vadd.f32 %v1221, %v1339
          %v1370 = vadd.f32 %v1222, %v1344
          %v1371 = vadd.f32 %v1223, %v1349
          %v1372 = vadd.f32 %v1224, %v1354
          %v1373 = vadd.f32 %v1225, %v1359
          %v1374 = vadd.f32 %v1226, %v1364
          %s1375 = scalar_lea.vmem [#allocation2], 32
          %v1376 = vld [vmem:[%s1375] sm:$0xff]
          %v1377 = vld [vmem:[%s1375 + $0x10] sm:$0xff]
          %v1378 = vld [vmem:[%s1375 + $0x20] sm:$0xff]
          %v1379 = vld [vmem:[%s1375 + $0x30] sm:$0xff]
          %v1380 = vld [vmem:[%s1375 + $0x40] sm:$0xff]
          %v1381 = vld [vmem:[%s1375 + $0x50] sm:$0xff]
          %v1382 = vld [vmem:[%s1375 + $0x60] sm:$0xff]
          %v1383 = vld [vmem:[%s1375 + $0x70] sm:$0xff]
          %s1384 = scalar_lea.vmem %s2, 96
          %v1385 = vld [vmem:[%s1384] sm:$0xff]
          %v1386 = vld [vmem:[%s1384 + $0x8] sm:$0xff]
          %v1388 = vsel %vm431, %v1376, 0
          %v1391 = vsel %vm431, %v1377, 0
          %v1394 = vsel %vm431, %v1378, 0
          %v1397 = vsel %vm431, %v1379, 0
          %v1400 = vsel %vm431, %v1380, 0
          %v1403 = vsel %vm431, %v1381, 0
          %v1406 = vsel %vm431, %v1382, 0
          %v1409 = vsel %vm431, %v1383, 0
          %1411 = vmatprep.subr.mxu0 0.0
          %1412 = vmatpush1.msra.mxu0 %v1385
          %1413 = vmatprep.subr.mxu0 0.0
          %1414 = vmatpush1.msra.mxu0 %v1386
          %1415 = vmatprep.subr.mxu0 0.0
          %1416 = vmatpush1.msra.mxu0 0.0
          %1417 = vmatprep.subr.mxu0 0.0
          %1418 = vmatpush1.msra.mxu0 0.0
          %1419 = vmatprep.subr.mxu0 0.0
          %1420 = vmatpush1.msra.mxu0 0.0
          %1421 = vmatprep.subr.mxu0 0.0
          %1422 = vmatpush1.msra.mxu0 0.0
          %1423 = vmatprep.subr.mxu0 0.0
          %1424 = vmatpush1.msra.mxu0 0.0
          %1425 = vmatprep.subr.mxu0 0.0
          %1426 = vmatpush1.msra.mxu0 0.0
          %1427 = vmatprep.subr.mxu0 0.0
          %1428 = vmatpush1.msra.mxu0 0.0
          %1429 = vmatprep.subr.mxu0 0.0
          %1430 = vmatpush1.msra.mxu0 0.0
          %1431 = vmatprep.subr.mxu0 0.0
          %1432 = vmatpush1.msra.mxu0 0.0
          %1433 = vmatprep.subr.mxu0 0.0
          %1434 = vmatpush1.msra.mxu0 0.0
          %1435 = vmatprep.subr.mxu0 0.0
          %1436 = vmatpush1.msra.mxu0 0.0
          %1437 = vmatprep.subr.mxu0 0.0
          %1438 = vmatpush1.msra.mxu0 0.0
          %1439 = vmatprep.subr.mxu0 0.0
          %1440 = vmatpush1.msra.mxu0 0.0
          %1441 = vmatprep.subr.mxu0 0.0
          %1442 = vmatpush1.msra.mxu0 0.0
          %1443 = vmatprep.subr.mxu0 0.0
          %1444 = vmatpush1.msra.mxu0 0.0
          %1445 = vmatprep.subr.mxu0 0.0
          %1446 = vmatpush1.msra.mxu0 0.0
          %1447 = vmatprep.subr.mxu0 0.0
          %1448 = vmatpush1.msra.mxu0 0.0
          %1449 = vmatprep.subr.mxu0 0.0
          %1450 = vmatpush1.msra.mxu0 0.0
          %1451 = vmatprep.subr.mxu0 0.0
          %1452 = vmatpush1.msra.mxu0 0.0
          %1453 = vmatprep.subr.mxu0 0.0
          %1454 = vmatpush1.msra.mxu0 0.0
          %1455 = vmatprep.subr.mxu0 0.0
          %1456 = vmatpush1.msra.mxu0 0.0
          %1457 = vmatprep.subr.mxu0 0.0
          %1458 = vmatpush1.msra.mxu0 0.0
          %1459 = vmatprep.subr.mxu0 0.0
          %1460 = vmatpush1.msra.mxu0 0.0
          %1461 = vmatprep.subr.mxu0 0.0
          %1462 = vmatpush1.msra.mxu0 0.0
          %1463 = vmatprep.subr.mxu0 0.0
          %1464 = vmatpush1.msra.mxu0 0.0
          %1465 = vmatprep.subr.mxu0 0.0
          %1466 = vmatpush1.msra.mxu0 0.0
          %1467 = vmatprep.subr.mxu0 0.0
          %1468 = vmatpush1.msra.mxu0 0.0
          %1469 = vmatprep.subr.mxu0 0.0
          %1470 = vmatpush1.msra.mxu0 0.0
          %1471 = vmatprep.subr.mxu0 0.0
          %1472 = vmatpush1.msra.mxu0 0.0
          %1473 = vmatprep.subr.mxu0 0.0
          %1474 = vmatpush1.msra.mxu0 0.0
          %1475 = vmatprep.mubr.f32.mxu0 0.0
          %1476 = vmatmul.mubr.f32.gmra.mrb[0].mxu0 %v1388
          %v1477 = vpop.f32.mrb[0].mxu0
          %v1478 = vadd.f32 0.0, %v1477
          %v1479 = vpop.f32.mrb[0].mxu0
          %1480 = vmatprep.mubr.f32.mxu0 0.0
          %1481 = vmatmul.mubr.f32.gmra.mrb[0].mxu0 %v1391
          %v1482 = vpop.f32.mrb[0].mxu0
          %v1483 = vadd.f32 0.0, %v1482
          %v1484 = vpop.f32.mrb[0].mxu0
          %1485 = vmatprep.mubr.f32.mxu0 0.0
          %1486 = vmatmul.mubr.f32.gmra.mrb[0].mxu0 %v1394
          %v1487 = vpop.f32.mrb[0].mxu0
          %v1488 = vadd.f32 0.0, %v1487
          %v1489 = vpop.f32.mrb[0].mxu0
          %1490 = vmatprep.mubr.f32.mxu0 0.0
          %1491 = vmatmul.mubr.f32.gmra.mrb[0].mxu0 %v1397
          %v1492 = vpop.f32.mrb[0].mxu0
          %v1493 = vadd.f32 0.0, %v1492
          %v1494 = vpop.f32.mrb[0].mxu0
          %1495 = vmatprep.mubr.f32.mxu0 0.0
          %1496 = vmatmul.mubr.f32.gmra.mrb[0].mxu0 %v1400
          %v1497 = vpop.f32.mrb[0].mxu0
          %v1498 = vadd.f32 0.0, %v1497
          %v1499 = vpop.f32.mrb[0].mxu0
          %1500 = vmatprep.mubr.f32.mxu0 0.0
          %1501 = vmatmul.mubr.f32.gmra.mrb[0].mxu0 %v1403
          %v1502 = vpop.f32.mrb[0].mxu0
          %v1503 = vadd.f32 0.0, %v1502
          %v1504 = vpop.f32.mrb[0].mxu0
          %1505 = vmatprep.mubr.f32.mxu0 0.0
          %1506 = vmatmul.mubr.f32.gmra.mrb[0].mxu0 %v1406
          %v1507 = vpop.f32.mrb[0].mxu0
          %v1508 = vadd.f32 0.0, %v1507
          %v1509 = vpop.f32.mrb[0].mxu0
          %1510 = vmatprep.mubr.f32.mxu0 0.0
          %1511 = vmatmul.mubr.f32.gmra.mrb[0].mxu0 %v1409
          %v1512 = vpop.f32.mrb[0].mxu0
          %v1513 = vadd.f32 0.0, %v1512
          %v1514 = vpop.f32.mrb[0].mxu0
          %1515 = vdwg.mxu0
          %v1516 = vadd.f32 %v1367, %v1478
          %v1517 = vadd.f32 %v1368, %v1483
          %v1518 = vadd.f32 %v1369, %v1488
          %v1519 = vadd.f32 %v1370, %v1493
          %v1520 = vadd.f32 %v1371, %v1498
          %v1521 = vadd.f32 %v1372, %v1503
          %v1522 = vadd.f32 %v1373, %v1508
          %v1523 = vadd.f32 %v1374, %v1513
          %v1524 = vld [vmem:[%s1375 + $0x1] sm:$0xff]
          %v1525 = vld [vmem:[%s1375 + $0x11] sm:$0xff]
          %v1526 = vld [vmem:[%s1375 + $0x21] sm:$0xff]
          %v1527 = vld [vmem:[%s1375 + $0x31] sm:$0xff]
          %v1528 = vld [vmem:[%s1375 + $0x41] sm:$0xff]
          %v1529 = vld [vmem:[%s1375 + $0x51] sm:$0xff]
          %v1530 = vld [vmem:[%s1375 + $0x61] sm:$0xff]
          %v1531 = vld [vmem:[%s1375 + $0x71] sm:$0xff]
          %s1532 = scalar_lea.vmem %s2, 112
          %v1533 = vld [vmem:[%s1532] sm:$0xff]
          %v1534 = vld [vmem:[%s1532 + $0x8] sm:$0xff]
          %v1536 = vsel %vm431, %v1524, 0
          %v1539 = vsel %vm431, %v1525, 0
          %v1542 = vsel %vm431, %v1526, 0
          %v1545 = vsel %vm431, %v1527, 0
          %v1548 = vsel %vm431, %v1528, 0
          %v1551 = vsel %vm431, %v1529, 0
          %v1554 = vsel %vm431, %v1530, 0
          %v1557 = vsel %vm431, %v1531, 0
          %1559 = vmatprep.subr.mxu0 0.0
          %1560 = vmatpush1.msra.mxu0 %v1533
          %1561 = vmatprep.subr.mxu0 0.0
          %1562 = vmatpush1.msra.mxu0 %v1534
          %1563 = vmatprep.subr.mxu0 0.0
          %1564 = vmatpush1.msra.mxu0 0.0
          %1565 = vmatprep.subr.mxu0 0.0
          %1566 = vmatpush1.msra.mxu0 0.0
          %1567 = vmatprep.subr.mxu0 0.0
          %1568 = vmatpush1.msra.mxu0 0.0
          %1569 = vmatprep.subr.mxu0 0.0
          %1570 = vmatpush1.msra.mxu0 0.0
          %1571 = vmatprep.subr.mxu0 0.0
          %1572 = vmatpush1.msra.mxu0 0.0
          %1573 = vmatprep.subr.mxu0 0.0
          %1574 = vmatpush1.msra.mxu0 0.0
          %1575 = vmatprep.subr.mxu0 0.0
          %1576 = vmatpush1.msra.mxu0 0.0
          %1577 = vmatprep.subr.mxu0 0.0
          %1578 = vmatpush1.msra.mxu0 0.0
          %1579 = vmatprep.subr.mxu0 0.0
          %1580 = vmatpush1.msra.mxu0 0.0
          %1581 = vmatprep.subr.mxu0 0.0
          %1582 = vmatpush1.msra.mxu0 0.0
          %1583 = vmatprep.subr.mxu0 0.0
          %1584 = vmatpush1.msra.mxu0 0.0
          %1585 = vmatprep.subr.mxu0 0.0
          %1586 = vmatpush1.msra.mxu0 0.0
          %1587 = vmatprep.subr.mxu0 0.0
          %1588 = vmatpush1.msra.mxu0 0.0
          %1589 = vmatprep.subr.mxu0 0.0
          %1590 = vmatpush1.msra.mxu0 0.0
          %1591 = vmatprep.subr.mxu0 0.0
          %1592 = vmatpush1.msra.mxu0 0.0
          %1593 = vmatprep.subr.mxu0 0.0
          %1594 = vmatpush1.msra.mxu0 0.0
          %1595 = vmatprep.subr.mxu0 0.0
          %1596 = vmatpush1.msra.mxu0 0.0
          %1597 = vmatprep.subr.mxu0 0.0
          %1598 = vmatpush1.msra.mxu0 0.0
          %1599 = vmatprep.subr.mxu0 0.0
          %1600 = vmatpush1.msra.mxu0 0.0
          %1601 = vmatprep.subr.mxu0 0.0
          %1602 = vmatpush1.msra.mxu0 0.0
          %1603 = vmatprep.subr.mxu0 0.0
          %1604 = vmatpush1.msra.mxu0 0.0
          %1605 = vmatprep.subr.mxu0 0.0
          %1606 = vmatpush1.msra.mxu0 0.0
          %1607 = vmatprep.subr.mxu0 0.0
          %1608 = vmatpush1.msra.mxu0 0.0
          %1609 = vmatprep.subr.mxu0 0.0
          %1610 = vmatpush1.msra.mxu0 0.0
          %1611 = vmatprep.subr.mxu0 0.0
          %1612 = vmatpush1.msra.mxu0 0.0
          %1613 = vmatprep.subr.mxu0 0.0
          %1614 = vmatpush1.msra.mxu0 0.0
          %1615 = vmatprep.subr.mxu0 0.0
          %1616 = vmatpush1.msra.mxu0 0.0
          %1617 = vmatprep.subr.mxu0 0.0
          %1618 = vmatpush1.msra.mxu0 0.0
          %1619 = vmatprep.subr.mxu0 0.0
          %1620 = vmatpush1.msra.mxu0 0.0
          %1621 = vmatprep.subr.mxu0 0.0
          %1622 = vmatpush1.msra.mxu0 0.0
          %1623 = vmatprep.mubr.f32.mxu0 0.0
          %1624 = vmatmul.mubr.f32.gmra.mrb[0].mxu0 %v1536
          %v1625 = vpop.f32.mrb[0].mxu0
          %v1626 = vadd.f32 0.0, %v1625
          %v1627 = vpop.f32.mrb[0].mxu0
          %1628 = vmatprep.mubr.f32.mxu0 0.0
          %1629 = vmatmul.mubr.f32.gmra.mrb[0].mxu0 %v1539
          %v1630 = vpop.f32.mrb[0].mxu0
          %v1631 = vadd.f32 0.0, %v1630
          %v1632 = vpop.f32.mrb[0].mxu0
          %1633 = vmatprep.mubr.f32.mxu0 0.0
          %1634 = vmatmul.mubr.f32.gmra.mrb[0].mxu0 %v1542
          %v1635 = vpop.f32.mrb[0].mxu0
          %v1636 = vadd.f32 0.0, %v1635
          %v1637 = vpop.f32.mrb[0].mxu0
          %1638 = vmatprep.mubr.f32.mxu0 0.0
          %1639 = vmatmul.mubr.f32.gmra.mrb[0].mxu0 %v1545
          %v1640 = vpop.f32.mrb[0].mxu0
          %v1641 = vadd.f32 0.0, %v1640
          %v1642 = vpop.f32.mrb[0].mxu0
          %1643 = vmatprep.mubr.f32.mxu0 0.0
          %1644 = vmatmul.mubr.f32.gmra.mrb[0].mxu0 %v1548
          %v1645 = vpop.f32.mrb[0].mxu0
          %v1646 = vadd.f32 0.0, %v1645
          %v1647 = vpop.f32.mrb[0].mxu0
          %1648 = vmatprep.mubr.f32.mxu0 0.0
          %1649 = vmatmul.mubr.f32.gmra.mrb[0].mxu0 %v1551
          %v1650 = vpop.f32.mrb[0].mxu0
          %v1651 = vadd.f32 0.0, %v1650
          %v1652 = vpop.f32.mrb[0].mxu0
          %1653 = vmatprep.mubr.f32.mxu0 0.0
          %1654 = vmatmul.mubr.f32.gmra.mrb[0].mxu0 %v1554
          %v1655 = vpop.f32.mrb[0].mxu0
          %v1656 = vadd.f32 0.0, %v1655
          %v1657 = vpop.f32.mrb[0].mxu0
          %1658 = vmatprep.mubr.f32.mxu0 0.0
          %1659 = vmatmul.mubr.f32.gmra.mrb[0].mxu0 %v1557
          %v1660 = vpop.f32.mrb[0].mxu0
          %v1661 = vadd.f32 0.0, %v1660
          %v1662 = vpop.f32.mrb[0].mxu0
          %1663 = vdwg.mxu0
          %v1664 = vadd.f32 %v1516, %v1626
          %v1665 = vadd.f32 %v1517, %v1631
          %v1666 = vadd.f32 %v1518, %v1636
          %v1667 = vadd.f32 %v1519, %v1641
          %v1668 = vadd.f32 %v1520, %v1646
          %v1669 = vadd.f32 %v1521, %v1651
          %v1670 = vadd.f32 %v1522, %v1656
          %v1671 = vadd.f32 %v1523, %v1661
          %v1672 = vld [vmem:[%s1375 + $0x2] sm:$0xff]
          %v1673 = vld [vmem:[%s1375 + $0x12] sm:$0xff]
          %v1674 = vld [vmem:[%s1375 + $0x22] sm:$0xff]
          %v1675 = vld [vmem:[%s1375 + $0x32] sm:$0xff]
          %v1676 = vld [vmem:[%s1375 + $0x42] sm:$0xff]
          %v1677 = vld [vmem:[%s1375 + $0x52] sm:$0xff]
          %v1678 = vld [vmem:[%s1375 + $0x62] sm:$0xff]
          %v1679 = vld [vmem:[%s1375 + $0x72] sm:$0xff]
          %s1680 = scalar_lea.vmem %s2, 128
          %v1681 = vld [vmem:[%s1680] sm:$0xff]
          %v1682 = vld [vmem:[%s1680 + $0x8] sm:$0xff]
          %v1684 = vsel %vm431, %v1672, 0
          %v1687 = vsel %vm431, %v1673, 0
          %v1690 = vsel %vm431, %v1674, 0
          %v1693 = vsel %vm431, %v1675, 0
          %v1696 = vsel %vm431, %v1676, 0
          %v1699 = vsel %vm431, %v1677, 0
          %v1702 = vsel %vm431, %v1678, 0
          %v1705 = vsel %vm431, %v1679, 0
          %1707 = vmatprep.subr.mxu0 0.0
          %1708 = vmatpush1.msra.mxu0 %v1681
          %1709 = vmatprep.subr.mxu0 0.0
          %1710 = vmatpush1.msra.mxu0 %v1682
          %1711 = vmatprep.subr.mxu0 0.0
          %1712 = vmatpush1.msra.mxu0 0.0
          %1713 = vmatprep.subr.mxu0 0.0
          %1714 = vmatpush1.msra.mxu0 0.0
          %1715 = vmatprep.subr.mxu0 0.0
          %1716 = vmatpush1.msra.mxu0 0.0
          %1717 = vmatprep.subr.mxu0 0.0
          %1718 = vmatpush1.msra.mxu0 0.0
          %1719 = vmatprep.subr.mxu0 0.0
          %1720 = vmatpush1.msra.mxu0 0.0
          %1721 = vmatprep.subr.mxu0 0.0
          %1722 = vmatpush1.msra.mxu0 0.0
          %1723 = vmatprep.subr.mxu0 0.0
          %1724 = vmatpush1.msra.mxu0 0.0
          %1725 = vmatprep.subr.mxu0 0.0
          %1726 = vmatpush1.msra.mxu0 0.0
          %1727 = vmatprep.subr.mxu0 0.0
          %1728 = vmatpush1.msra.mxu0 0.0
          %1729 = vmatprep.subr.mxu0 0.0
          %1730 = vmatpush1.msra.mxu0 0.0
          %1731 = vmatprep.subr.mxu0 0.0
          %1732 = vmatpush1.msra.mxu0 0.0
          %1733 = vmatprep.subr.mxu0 0.0
          %1734 = vmatpush1.msra.mxu0 0.0
          %1735 = vmatprep.subr.mxu0 0.0
          %1736 = vmatpush1.msra.mxu0 0.0
          %1737 = vmatprep.subr.mxu0 0.0
          %1738 = vmatpush1.msra.mxu0 0.0
          %1739 = vmatprep.subr.mxu0 0.0
          %1740 = vmatpush1.msra.mxu0 0.0
          %1741 = vmatprep.subr.mxu0 0.0
          %1742 = vmatpush1.msra.mxu0 0.0
          %1743 = vmatprep.subr.mxu0 0.0
          %1744 = vmatpush1.msra.mxu0 0.0
          %1745 = vmatprep.subr.mxu0 0.0
          %1746 = vmatpush1.msra.mxu0 0.0
          %1747 = vmatprep.subr.mxu0 0.0
          %1748 = vmatpush1.msra.mxu0 0.0
          %1749 = vmatprep.subr.mxu0 0.0
          %1750 = vmatpush1.msra.mxu0 0.0
          %1751 = vmatprep.subr.mxu0 0.0
          %1752 = vmatpush1.msra.mxu0 0.0
          %1753 = vmatprep.subr.mxu0 0.0
          %1754 = vmatpush1.msra.mxu0 0.0
          %1755 = vmatprep.subr.mxu0 0.0
          %1756 = vmatpush1.msra.mxu0 0.0
          %1757 = vmatprep.subr.mxu0 0.0
          %1758 = vmatpush1.msra.mxu0 0.0
          %1759 = vmatprep.subr.mxu0 0.0
          %1760 = vmatpush1.msra.mxu0 0.0
          %1761 = vmatprep.subr.mxu0 0.0
          %1762 = vmatpush1.msra.mxu0 0.0
          %1763 = vmatprep.subr.mxu0 0.0
          %1764 = vmatpush1.msra.mxu0 0.0
          %1765 = vmatprep.subr.mxu0 0.0
          %1766 = vmatpush1.msra.mxu0 0.0
          %1767 = vmatprep.subr.mxu0 0.0
          %1768 = vmatpush1.msra.mxu0 0.0
          %1769 = vmatprep.subr.mxu0 0.0
          %1770 = vmatpush1.msra.mxu0 0.0
          %1771 = vmatprep.mubr.f32.mxu0 0.0
          %1772 = vmatmul.mubr.f32.gmra.mrb[0].mxu0 %v1684
          %v1773 = vpop.f32.mrb[0].mxu0
          %v1774 = vadd.f32 0.0, %v1773
          %v1775 = vpop.f32.mrb[0].mxu0
          %1776 = vmatprep.mubr.f32.mxu0 0.0
          %1777 = vmatmul.mubr.f32.gmra.mrb[0].mxu0 %v1687
          %v1778 = vpop.f32.mrb[0].mxu0
          %v1779 = vadd.f32 0.0, %v1778
          %v1780 = vpop.f32.mrb[0].mxu0
          %1781 = vmatprep.mubr.f32.mxu0 0.0
          %1782 = vmatmul.mubr.f32.gmra.mrb[0].mxu0 %v1690
          %v1783 = vpop.f32.mrb[0].mxu0
          %v1784 = vadd.f32 0.0, %v1783
          %v1785 = vpop.f32.mrb[0].mxu0
          %1786 = vmatprep.mubr.f32.mxu0 0.0
          %1787 = vmatmul.mubr.f32.gmra.mrb[0].mxu0 %v1693
          %v1788 = vpop.f32.mrb[0].mxu0
          %v1789 = vadd.f32 0.0, %v1788
          %v1790 = vpop.f32.mrb[0].mxu0
          %1791 = vmatprep.mubr.f32.mxu0 0.0
          %1792 = vmatmul.mubr.f32.gmra.mrb[0].mxu0 %v1696
          %v1793 = vpop.f32.mrb[0].mxu0
          %v1794 = vadd.f32 0.0, %v1793
          %v1795 = vpop.f32.mrb[0].mxu0
          %1796 = vmatprep.mubr.f32.mxu0 0.0
          %1797 = vmatmul.mubr.f32.gmra.mrb[0].mxu0 %v1699
          %v1798 = vpop.f32.mrb[0].mxu0
          %v1799 = vadd.f32 0.0, %v1798
          %v1800 = vpop.f32.mrb[0].mxu0
          %1801 = vmatprep.mubr.f32.mxu0 0.0
          %1802 = vmatmul.mubr.f32.gmra.mrb[0].mxu0 %v1702
          %v1803 = vpop.f32.mrb[0].mxu0
          %v1804 = vadd.f32 0.0, %v1803
          %v1805 = vpop.f32.mrb[0].mxu0
          %1806 = vmatprep.mubr.f32.mxu0 0.0
          %1807 = vmatmul.mubr.f32.gmra.mrb[0].mxu0 %v1705
          %v1808 = vpop.f32.mrb[0].mxu0
          %v1809 = vadd.f32 0.0, %v1808
          %v1810 = vpop.f32.mrb[0].mxu0
          %1811 = vdwg.mxu0
          %v1812 = vadd.f32 %v1664, %v1774
          %v1813 = vadd.f32 %v1665, %v1779
          %v1814 = vadd.f32 %v1666, %v1784
          %v1815 = vadd.f32 %v1667, %v1789
          %v1816 = vadd.f32 %v1668, %v1794
          %v1817 = vadd.f32 %v1669, %v1799
          %v1818 = vadd.f32 %v1670, %v1804
          %v1819 = vadd.f32 %v1671, %v1809
          %v1820 = vld [vmem:[%s3] sm:$0x1]
          %v1822 = vlaneseq
          %v1823 = vshrl.u32 %v1822, 7
          %v1824 = vsub.s32 0, %v1823
          %v1825 = vrot.slane %v1820, %v1824
          %v1827 = vadd.f32 %v1812, %v1825
          %v1828 = vadd.f32 %v1813, %v1825
          %v1829 = vadd.f32 %v1814, %v1825
          %v1830 = vadd.f32 %v1815, %v1825
          %v1831 = vadd.f32 %v1816, %v1825
          %v1832 = vadd.f32 %v1817, %v1825
          %v1833 = vadd.f32 %v1818, %v1825
          %v1834 = vadd.f32 %v1819, %v1825
          %v1835 = vmul.f32 %v1827, %v1827
          %v1836 = vmul.f32 %v1828, %v1828
          %v1837 = vmul.f32 %v1829, %v1829
          %v1838 = vmul.f32 %v1830, %v1830
          %v1839 = vmul.f32 %v1831, %v1831
          %v1840 = vmul.f32 %v1832, %v1832
          %v1841 = vmul.f32 %v1833, %v1833
          %v1842 = vmul.f32 %v1834, %v1834
          %v1843 = vsel %vm431, %v1835, 0.0
          %1844 = vadd.xlane.f32.xlu0 %v1843
          %v1845 = vpop.xlane.xlu0 %1844
          %v1846 = vsel %vm431, %v1836, 0.0
          %1847 = vadd.xlane.f32.xlu0 %v1846
          %v1848 = vpop.xlane.xlu0 %1847
          %v1849 = vsel %vm431, %v1837, 0.0
          %1850 = vadd.xlane.f32.xlu0 %v1849
          %v1851 = vpop.xlane.xlu0 %1850
          %v1852 = vsel %vm431, %v1838, 0.0
          %1853 = vadd.xlane.f32.xlu0 %v1852
          %v1854 = vpop.xlane.xlu0 %1853
          %v1855 = vsel %vm431, %v1839, 0.0
          %1856 = vadd.xlane.f32.xlu0 %v1855
          %v1857 = vpop.xlane.xlu0 %1856
          %v1858 = vsel %vm431, %v1840, 0.0
          %1859 = vadd.xlane.f32.xlu0 %v1858
          %v1860 = vpop.xlane.xlu0 %1859
          %v1861 = vsel %vm431, %v1841, 0.0
          %1862 = vadd.xlane.f32.xlu0 %v1861
          %v1863 = vpop.xlane.xlu0 %1862
          %v1864 = vsel %vm431, %v1842, 0.0
          %1865 = vadd.xlane.f32.xlu0 %v1864
          %v1866 = vpop.xlane.xlu0 %1865
          %v1867 = vrsqrt.pop %v1845
          %v1868 = vrsqrt.pop %v1848
          %v1869 = vrsqrt.pop %v1851
          %v1870 = vrsqrt.pop %v1854
          %v1871 = vrsqrt.pop %v1857
          %v1872 = vrsqrt.pop %v1860
          %v1873 = vrsqrt.pop %v1863
          %v1874 = vrsqrt.pop %v1866
          %v1875 = vmul.f32 %v1827, %v1867
          %v1876 = vmul.f32 %v1828, %v1868
          %v1877 = vmul.f32 %v1829, %v1869
          %v1878 = vmul.f32 %v1830, %v1870
          %v1879 = vmul.f32 %v1831, %v1871
          %v1880 = vmul.f32 %v1832, %v1872
          %v1881 = vmul.f32 %v1833, %v1873
          %v1882 = vmul.f32 %v1834, %v1874
          %v1883 = vld [vmem:[%s0] sm:$0xff]
          %v1884 = vld [vmem:[%s0 + $0x8] sm:$0xff]
          %v1885 = vld [vmem:[%s0 + $0x10] sm:$0xff]
          %v1886 = vld [vmem:[%s0 + $0x18] sm:$0xff]
          %v1887 = vld [vmem:[%s0 + $0x20] sm:$0xff]
          %v1888 = vld [vmem:[%s0 + $0x28] sm:$0xff]
          %v1889 = vld [vmem:[%s0 + $0x30] sm:$0xff]
          %v1890 = vld [vmem:[%s0 + $0x38] sm:$0xff]
          %v1891 = vld [vmem:[%s4] sm:$0xff]
          %v1892 = vld [vmem:[%s4 + $0x8] sm:$0xff]
          %v1893 = vld [vmem:[%s5] sm:$0xff]
          %v1894 = vld [vmem:[%s5 + $0x8] sm:$0xff]
          %v1896 = vsel %vm431, %v1883, 0
          %v1899 = vsel %vm431, %v1884, 0
          %v1902 = vsel %vm431, %v1885, 0
          %v1905 = vsel %vm431, %v1886, 0
          %v1908 = vsel %vm431, %v1887, 0
          %v1911 = vsel %vm431, %v1888, 0
          %v1914 = vsel %vm431, %v1889, 0
          %v1917 = vsel %vm431, %v1890, 0
          %1919 = vmatprep.subr.mxu0 0.0
          %1920 = vmatpush1.msra.mxu0 %v1893
          %1921 = vmatprep.subr.mxu0 0.0
          %1922 = vmatpush1.msra.mxu0 %v1894
          %1923 = vmatprep.subr.mxu0 0.0
          %1924 = vmatpush1.msra.mxu0 0.0
          %1925 = vmatprep.subr.mxu0 0.0
          %1926 = vmatpush1.msra.mxu0 0.0
          %1927 = vmatprep.subr.mxu0 0.0
          %1928 = vmatpush1.msra.mxu0 0.0
          %1929 = vmatprep.subr.mxu0 0.0
          %1930 = vmatpush1.msra.mxu0 0.0
          %1931 = vmatprep.subr.mxu0 0.0
          %1932 = vmatpush1.msra.mxu0 0.0
          %1933 = vmatprep.subr.mxu0 0.0
          %1934 = vmatpush1.msra.mxu0 0.0
          %1935 = vmatprep.subr.mxu0 0.0
          %1936 = vmatpush1.msra.mxu0 0.0
          %1937 = vmatprep.subr.mxu0 0.0
          %1938 = vmatpush1.msra.mxu0 0.0
          %1939 = vmatprep.subr.mxu0 0.0
          %1940 = vmatpush1.msra.mxu0 0.0
          %1941 = vmatprep.subr.mxu0 0.0
          %1942 = vmatpush1.msra.mxu0 0.0
          %1943 = vmatprep.subr.mxu0 0.0
          %1944 = vmatpush1.msra.mxu0 0.0
          %1945 = vmatprep.subr.mxu0 0.0
          %1946 = vmatpush1.msra.mxu0 0.0
          %1947 = vmatprep.subr.mxu0 0.0
          %1948 = vmatpush1.msra.mxu0 0.0
          %1949 = vmatprep.subr.mxu0 0.0
          %1950 = vmatpush1.msra.mxu0 0.0
          %1951 = vmatprep.subr.mxu0 0.0
          %1952 = vmatpush1.msra.mxu0 0.0
          %1953 = vmatprep.subr.mxu0 0.0
          %1954 = vmatpush1.msra.mxu0 0.0
          %1955 = vmatprep.subr.mxu0 0.0
          %1956 = vmatpush1.msra.mxu0 0.0
          %1957 = vmatprep.subr.mxu0 0.0
          %1958 = vmatpush1.msra.mxu0 0.0
          %1959 = vmatprep.subr.mxu0 0.0
          %1960 = vmatpush1.msra.mxu0 0.0
          %1961 = vmatprep.subr.mxu0 0.0
          %1962 = vmatpush1.msra.mxu0 0.0
          %1963 = vmatprep.subr.mxu0 0.0
          %1964 = vmatpush1.msra.mxu0 0.0
          %1965 = vmatprep.subr.mxu0 0.0
          %1966 = vmatpush1.msra.mxu0 0.0
          %1967 = vmatprep.subr.mxu0 0.0
          %1968 = vmatpush1.msra.mxu0 0.0
          %1969 = vmatprep.subr.mxu0 0.0
          %1970 = vmatpush1.msra.mxu0 0.0
          %1971 = vmatprep.subr.mxu0 0.0
          %1972 = vmatpush1.msra.mxu0 0.0
          %1973 = vmatprep.subr.mxu0 0.0
          %1974 = vmatpush1.msra.mxu0 0.0
          %1975 = vmatprep.subr.mxu0 0.0
          %1976 = vmatpush1.msra.mxu0 0.0
          %1977 = vmatprep.subr.mxu0 0.0
          %1978 = vmatpush1.msra.mxu0 0.0
          %1979 = vmatprep.subr.mxu0 0.0
          %1980 = vmatpush1.msra.mxu0 0.0
          %1981 = vmatprep.subr.mxu0 0.0
          %1982 = vmatpush1.msra.mxu0 0.0
          %1983 = vmatprep.mubr.f32.mxu0 0.0
          %1984 = vmatmul.mubr.f32.gmra.mrb[0].mxu0 %v1896
          %v1985 = vpop.f32.mrb[0].mxu0
          %v1986 = vadd.f32 0.0, %v1985
          %v1987 = vpop.f32.mrb[0].mxu0
          %1988 = vmatprep.mubr.f32.mxu0 0.0
          %1989 = vmatmul.mubr.f32.gmra.mrb[0].mxu0 %v1899
          %v1990 = vpop.f32.mrb[0].mxu0
          %v1991 = vadd.f32 0.0, %v1990
          %v1992 = vpop.f32.mrb[0].mxu0
          %1993 = vmatprep.mubr.f32.mxu0 0.0
          %1994 = vmatmul.mubr.f32.gmra.mrb[0].mxu0 %v1902
          %v1995 = vpop.f32.mrb[0].mxu0
          %v1996 = vadd.f32 0.0, %v1995
          %v1997 = vpop.f32.mrb[0].mxu0
          %1998 = vmatprep.mubr.f32.mxu0 0.0
          %1999 = vmatmul.mubr.f32.gmra.mrb[0].mxu0 %v1905
          %v2000 = vpop.f32.mrb[0].mxu0
          %v2001 = vadd.f32 0.0, %v2000
          %v2002 = vpop.f32.mrb[0].mxu0
          %2003 = vmatprep.mubr.f32.mxu0 0.0
          %2004 = vmatmul.mubr.f32.gmra.mrb[0].mxu0 %v1908
          %v2005 = vpop.f32.mrb[0].mxu0
          %v2006 = vadd.f32 0.0, %v2005
          %v2007 = vpop.f32.mrb[0].mxu0
          %2008 = vmatprep.mubr.f32.mxu0 0.0
          %2009 = vmatmul.mubr.f32.gmra.mrb[0].mxu0 %v1911
          %v2010 = vpop.f32.mrb[0].mxu0
          %v2011 = vadd.f32 0.0, %v2010
          %v2012 = vpop.f32.mrb[0].mxu0
          %2013 = vmatprep.mubr.f32.mxu0 0.0
          %2014 = vmatmul.mubr.f32.gmra.mrb[0].mxu0 %v1914
          %v2015 = vpop.f32.mrb[0].mxu0
          %v2016 = vadd.f32 0.0, %v2015
          %v2017 = vpop.f32.mrb[0].mxu0
          %2018 = vmatprep.mubr.f32.mxu0 0.0
          %2019 = vmatmul.mubr.f32.gmra.mrb[0].mxu0 %v1917
          %v2020 = vpop.f32.mrb[0].mxu0
          %v2021 = vadd.f32 0.0, %v2020
          %v2022 = vpop.f32.mrb[0].mxu0
          %2023 = vdwg.mxu0
          %v2025 = vsel %vm431, %v1875, 0
          %v2028 = vsel %vm431, %v1876, 0
          %v2031 = vsel %vm431, %v1877, 0
          %v2034 = vsel %vm431, %v1878, 0
          %v2037 = vsel %vm431, %v1879, 0
          %v2040 = vsel %vm431, %v1880, 0
          %v2043 = vsel %vm431, %v1881, 0
          %v2046 = vsel %vm431, %v1882, 0
          %2048 = vmatprep.subr.mxu0 0.0
          %2049 = vmatpush1.msra.mxu0 %v1891
          %2050 = vmatprep.subr.mxu0 0.0
          %2051 = vmatpush1.msra.mxu0 %v1892
          %2052 = vmatprep.subr.mxu0 0.0
          %2053 = vmatpush1.msra.mxu0 0.0
          %2054 = vmatprep.subr.mxu0 0.0
          %2055 = vmatpush1.msra.mxu0 0.0
          %2056 = vmatprep.subr.mxu0 0.0
          %2057 = vmatpush1.msra.mxu0 0.0
          %2058 = vmatprep.subr.mxu0 0.0
          %2059 = vmatpush1.msra.mxu0 0.0
          %2060 = vmatprep.subr.mxu0 0.0
          %2061 = vmatpush1.msra.mxu0 0.0
          %2062 = vmatprep.subr.mxu0 0.0
          %2063 = vmatpush1.msra.mxu0 0.0
          %2064 = vmatprep.subr.mxu0 0.0
          %2065 = vmatpush1.msra.mxu0 0.0
          %2066 = vmatprep.subr.mxu0 0.0
          %2067 = vmatpush1.msra.mxu0 0.0
          %2068 = vmatprep.subr.mxu0 0.0
          %2069 = vmatpush1.msra.mxu0 0.0
          %2070 = vmatprep.subr.mxu0 0.0
          %2071 = vmatpush1.msra.mxu0 0.0
          %2072 = vmatprep.subr.mxu0 0.0
          %2073 = vmatpush1.msra.mxu0 0.0
          %2074 = vmatprep.subr.mxu0 0.0
          %2075 = vmatpush1.msra.mxu0 0.0
          %2076 = vmatprep.subr.mxu0 0.0
          %2077 = vmatpush1.msra.mxu0 0.0
          %2078 = vmatprep.subr.mxu0 0.0
          %2079 = vmatpush1.msra.mxu0 0.0
          %2080 = vmatprep.subr.mxu0 0.0
          %2081 = vmatpush1.msra.mxu0 0.0
          %2082 = vmatprep.subr.mxu0 0.0
          %2083 = vmatpush1.msra.mxu0 0.0
          %2084 = vmatprep.subr.mxu0 0.0
          %2085 = vmatpush1.msra.mxu0 0.0
          %2086 = vmatprep.subr.mxu0 0.0
          %2087 = vmatpush1.msra.mxu0 0.0
          %2088 = vmatprep.subr.mxu0 0.0
          %2089 = vmatpush1.msra.mxu0 0.0
          %2090 = vmatprep.subr.mxu0 0.0
          %2091 = vmatpush1.msra.mxu0 0.0
          %2092 = vmatprep.subr.mxu0 0.0
          %2093 = vmatpush1.msra.mxu0 0.0
          %2094 = vmatprep.subr.mxu0 0.0
          %2095 = vmatpush1.msra.mxu0 0.0
          %2096 = vmatprep.subr.mxu0 0.0
          %2097 = vmatpush1.msra.mxu0 0.0
          %2098 = vmatprep.subr.mxu0 0.0
          %2099 = vmatpush1.msra.mxu0 0.0
          %2100 = vmatprep.subr.mxu0 0.0
          %2101 = vmatpush1.msra.mxu0 0.0
          %2102 = vmatprep.subr.mxu0 0.0
          %2103 = vmatpush1.msra.mxu0 0.0
          %2104 = vmatprep.subr.mxu0 0.0
          %2105 = vmatpush1.msra.mxu0 0.0
          %2106 = vmatprep.subr.mxu0 0.0
          %2107 = vmatpush1.msra.mxu0 0.0
          %2108 = vmatprep.subr.mxu0 0.0
          %2109 = vmatpush1.msra.mxu0 0.0
          %2110 = vmatprep.subr.mxu0 0.0
          %2111 = vmatpush1.msra.mxu0 0.0
          %2112 = vmatprep.mubr.f32.mxu0 0.0
          %2113 = vmatmul.mubr.f32.gmra.mrb[0].mxu0 %v2025
          %v2114 = vpop.f32.mrb[0].mxu0
          %v2115 = vadd.f32 %v1986, %v2114
          %v2116 = vpop.f32.mrb[0].mxu0
          %2117 = vmatprep.mubr.f32.mxu0 0.0
          %2118 = vmatmul.mubr.f32.gmra.mrb[0].mxu0 %v2028
          %v2119 = vpop.f32.mrb[0].mxu0
          %v2120 = vadd.f32 %v1991, %v2119
          %v2121 = vpop.f32.mrb[0].mxu0
          %2122 = vmatprep.mubr.f32.mxu0 0.0
          %2123 = vmatmul.mubr.f32.gmra.mrb[0].mxu0 %v2031
          %v2124 = vpop.f32.mrb[0].mxu0
          %v2125 = vadd.f32 %v1996, %v2124
          %v2126 = vpop.f32.mrb[0].mxu0
          %2127 = vmatprep.mubr.f32.mxu0 0.0
          %2128 = vmatmul.mubr.f32.gmra.mrb[0].mxu0 %v2034
          %v2129 = vpop.f32.mrb[0].mxu0
          %v2130 = vadd.f32 %v2001, %v2129
          %v2131 = vpop.f32.mrb[0].mxu0
          %2132 = vmatprep.mubr.f32.mxu0 0.0
          %2133 = vmatmul.mubr.f32.gmra.mrb[0].mxu0 %v2037
          %v2134 = vpop.f32.mrb[0].mxu0
          %v2135 = vadd.f32 %v2006, %v2134
          %v2136 = vpop.f32.mrb[0].mxu0
          %2137 = vmatprep.mubr.f32.mxu0 0.0
          %2138 = vmatmul.mubr.f32.gmra.mrb[0].mxu0 %v2040
          %v2139 = vpop.f32.mrb[0].mxu0
          %v2140 = vadd.f32 %v2011, %v2139
          %v2141 = vpop.f32.mrb[0].mxu0
          %2142 = vmatprep.mubr.f32.mxu0 0.0
          %2143 = vmatmul.mubr.f32.gmra.mrb[0].mxu0 %v2043
          %v2144 = vpop.f32.mrb[0].mxu0
          %v2145 = vadd.f32 %v2016, %v2144
          %v2146 = vpop.f32.mrb[0].mxu0
          %2147 = vmatprep.mubr.f32.mxu0 0.0
          %2148 = vmatmul.mubr.f32.gmra.mrb[0].mxu0 %v2046
          %v2149 = vpop.f32.mrb[0].mxu0
          %v2150 = vadd.f32 %v2021, %v2149
          %v2151 = vpop.f32.mrb[0].mxu0
          %2152 = vdwg.mxu0
          %v2153 = vld [vmem:[%s8] sm:$0x1]
          %v2155 = vlaneseq
          %v2156 = vshrl.u32 %v2155, 7
          %v2157 = vsub.s32 0, %v2156
          %v2158 = vrot.slane %v2153, %v2157
          %v2160 = vadd.f32 %v2115, %v2158
          %v2161 = vadd.f32 %v2120, %v2158
          %v2162 = vadd.f32 %v2125, %v2158
          %v2163 = vadd.f32 %v2130, %v2158
          %v2164 = vadd.f32 %v2135, %v2158
          %v2165 = vadd.f32 %v2140, %v2158
          %v2166 = vadd.f32 %v2145, %v2158
          %v2167 = vadd.f32 %v2150, %v2158
          %2168 = vst.msk [vmem:[#allocation4] sm:$0xff] %vm459, %v2160
          %2169 = vst.msk [vmem:[#allocation4 + $0x8] sm:$0xff] %vm459, %v2161
          %2170 = vst.msk [vmem:[#allocation4 + $0x10] sm:$0xff] %vm459, %v2162
          %2171 = vst.msk [vmem:[#allocation4 + $0x18] sm:$0xff] %vm459, %v2163
          %2172 = vst.msk [vmem:[#allocation4 + $0x20] sm:$0xff] %vm459, %v2164
          %2173 = vst.msk [vmem:[#allocation4 + $0x28] sm:$0xff] %vm459, %v2165
          %2174 = vst.msk [vmem:[#allocation4 + $0x30] sm:$0xff] %vm459, %v2166
          %2175 = vst.msk [vmem:[#allocation4 + $0x38] sm:$0xff] %vm459, %v2167
          %2176 = vst.msk [vmem:[#allocation5] sm:$0xff] %vm431, -inf
          %2177 = vst.msk [vmem:[#allocation5 + $0x8] sm:$0xff] %vm431, -inf
          %2178 = vst.msk [vmem:[#allocation5 + $0x10] sm:$0xff] %vm431, -inf
          %2179 = vst.msk [vmem:[#allocation5 + $0x18] sm:$0xff] %vm431, -inf
          %2180 = vst.msk [vmem:[#allocation5 + $0x20] sm:$0xff] %vm431, -inf
          %2181 = vst.msk [vmem:[#allocation5 + $0x28] sm:$0xff] %vm431, -inf
          %2182 = vst.msk [vmem:[#allocation5 + $0x30] sm:$0xff] %vm431, -inf
          %2183 = vst.msk [vmem:[#allocation5 + $0x38] sm:$0xff] %vm431, -inf
          %2184 = vst.msk [vmem:[#allocation6] sm:$0xff] %vm431, 0.0
          %2185 = vst.msk [vmem:[#allocation6 + $0x8] sm:$0xff] %vm431, 0.0
          %2186 = vst.msk [vmem:[#allocation6 + $0x10] sm:$0xff] %vm431, 0.0
          %2187 = vst.msk [vmem:[#allocation6 + $0x18] sm:$0xff] %vm431, 0.0
          %2188 = vst.msk [vmem:[#allocation6 + $0x20] sm:$0xff] %vm431, 0.0
          %2189 = vst.msk [vmem:[#allocation6 + $0x28] sm:$0xff] %vm431, 0.0
          %2190 = vst.msk [vmem:[#allocation6 + $0x30] sm:$0xff] %vm431, 0.0
          %2191 = vst.msk [vmem:[#allocation6 + $0x38] sm:$0xff] %vm431, 0.0
          %2192 = vst.msk [vmem:[#allocation7] sm:$0xff] %vm431, 0.0
          %2193 = vst.msk [vmem:[#allocation7 + $0x8] sm:$0xff] %vm431, 0.0
          %2194 = vst.msk [vmem:[#allocation7 + $0x10] sm:$0xff] %vm431, 0.0
          %2195 = vst.msk [vmem:[#allocation7 + $0x18] sm:$0xff] %vm431, 0.0
          %2196 = vst.msk [vmem:[#allocation7 + $0x20] sm:$0xff] %vm431, 0.0
          %2197 = vst.msk [vmem:[#allocation7 + $0x28] sm:$0xff] %vm431, 0.0
          %2198 = vst.msk [vmem:[#allocation7 + $0x30] sm:$0xff] %vm431, 0.0
          %2199 = vst.msk [vmem:[#allocation7 + $0x38] sm:$0xff] %vm431, 0.0
        $region76: #{tf_blender_aggregator.1} parent=71 // pred_fallthru
          _
        %v2200 = vld [vmem:[%s426] sm:$0xff]
        %v2201 = vld [vmem:[%s426 + $0x8] sm:$0xff]
        %v2202 = vld [vmem:[%s426 + $0x10] sm:$0xff]
        %v2203 = vld [vmem:[%s426 + $0x18] sm:$0xff]
        %v2204 = vld [vmem:[%s426 + $0x20] sm:$0xff]
        %v2205 = vld [vmem:[%s426 + $0x28] sm:$0xff]
        %v2206 = vld [vmem:[%s426 + $0x30] sm:$0xff]
        %v2207 = vld [vmem:[%s426 + $0x38] sm:$0xff]
        %s2208 = scalar_lea.vmem [#allocation2], 16
        %vm2209 = vcmask 130048
        %2210 = vst.msk [vmem:[%s2208 + $0x1] sm:$0xff] %vm2209, %v2200
        %2211 = vst.msk [vmem:[%s2208 + $0x11] sm:$0xff] %vm2209, %v2201
        %2212 = vst.msk [vmem:[%s2208 + $0x21] sm:$0xff] %vm2209, %v2202
        %2213 = vst.msk [vmem:[%s2208 + $0x31] sm:$0xff] %vm2209, %v2203
        %2214 = vst.msk [vmem:[%s2208 + $0x41] sm:$0xff] %vm2209, %v2204
        %2215 = vst.msk [vmem:[%s2208 + $0x51] sm:$0xff] %vm2209, %v2205
        %2216 = vst.msk [vmem:[%s2208 + $0x61] sm:$0xff] %vm2209, %v2206
        %2217 = vst.msk [vmem:[%s2208 + $0x71] sm:$0xff] %vm2209, %v2207
        %v2218 = vld [vmem:[#allocation2] sm:$0xff]
        %v2219 = vld [vmem:[#allocation2 + $0x10] sm:$0xff]
        %v2220 = vld [vmem:[#allocation2 + $0x20] sm:$0xff]
        %v2221 = vld [vmem:[#allocation2 + $0x30] sm:$0xff]
        %v2222 = vld [vmem:[#allocation2 + $0x40] sm:$0xff]
        %v2223 = vld [vmem:[#allocation2 + $0x50] sm:$0xff]
        %v2224 = vld [vmem:[#allocation2 + $0x60] sm:$0xff]
        %v2225 = vld [vmem:[#allocation2 + $0x70] sm:$0xff]
        %v2226 = vld [vmem:[%s2] sm:$0xff]
        %v2227 = vld [vmem:[%s2 + $0x8] sm:$0xff]
        %v2228 = vld [vmem:[#allocation2 + $0x1] sm:$0xff]
        %v2229 = vld [vmem:[#allocation2 + $0x11] sm:$0xff]
        %v2230 = vld [vmem:[#allocation2 + $0x21] sm:$0xff]
        %v2231 = vld [vmem:[#allocation2 + $0x31] sm:$0xff]
        %v2232 = vld [vmem:[#allocation2 + $0x41] sm:$0xff]
        %v2233 = vld [vmem:[#allocation2 + $0x51] sm:$0xff]
        %v2234 = vld [vmem:[#allocation2 + $0x61] sm:$0xff]
        %v2235 = vld [vmem:[#allocation2 + $0x71] sm:$0xff]
        %s2236 = scalar_lea.vmem %s2, 16
        %v2237 = vld [vmem:[%s2236] sm:$0xff]
        %v2238 = vld [vmem:[%s2236 + $0x8] sm:$0xff]
        %v2240 = vsel %vm2209, %v2228, 0
        %v2243 = vsel %vm2209, %v2229, 0
        %v2246 = vsel %vm2209, %v2230, 0
        %v2249 = vsel %vm2209, %v2231, 0
        %v2252 = vsel %vm2209, %v2232, 0
        %v2255 = vsel %vm2209, %v2233, 0
        %v2258 = vsel %vm2209, %v2234, 0
        %v2261 = vsel %vm2209, %v2235, 0
        %2263 = vmatprep.subr.mxu0 0.0
        %2264 = vmatpush1.msra.mxu0 %v2237
        %2265 = vmatprep.subr.mxu0 0.0
        %2266 = vmatpush1.msra.mxu0 %v2238
        %2267 = vmatprep.subr.mxu0 0.0
        %2268 = vmatpush1.msra.mxu0 0.0
        %2269 = vmatprep.subr.mxu0 0.0
        %2270 = vmatpush1.msra.mxu0 0.0
        %2271 = vmatprep.subr.mxu0 0.0
        %2272 = vmatpush1.msra.mxu0 0.0
        %2273 = vmatprep.subr.mxu0 0.0
        %2274 = vmatpush1.msra.mxu0 0.0
        %2275 = vmatprep.subr.mxu0 0.0
        %2276 = vmatpush1.msra.mxu0 0.0
        %2277 = vmatprep.subr.mxu0 0.0
        %2278 = vmatpush1.msra.mxu0 0.0
        %2279 = vmatprep.subr.mxu0 0.0
        %2280 = vmatpush1.msra.mxu0 0.0
        %2281 = vmatprep.subr.mxu0 0.0
        %2282 = vmatpush1.msra.mxu0 0.0
        %2283 = vmatprep.subr.mxu0 0.0
        %2284 = vmatpush1.msra.mxu0 0.0
        %2285 = vmatprep.subr.mxu0 0.0
        %2286 = vmatpush1.msra.mxu0 0.0
        %2287 = vmatprep.subr.mxu0 0.0
        %2288 = vmatpush1.msra.mxu0 0.0
        %2289 = vmatprep.subr.mxu0 0.0
        %2290 = vmatpush1.msra.mxu0 0.0
        %2291 = vmatprep.subr.mxu0 0.0
        %2292 = vmatpush1.msra.mxu0 0.0
        %2293 = vmatprep.subr.mxu0 0.0
        %2294 = vmatpush1.msra.mxu0 0.0
        %2295 = vmatprep.subr.mxu0 0.0
        %2296 = vmatpush1.msra.mxu0 0.0
        %2297 = vmatprep.subr.mxu0 0.0
        %2298 = vmatpush1.msra.mxu0 0.0
        %2299 = vmatprep.subr.mxu0 0.0
        %2300 = vmatpush1.msra.mxu0 0.0
        %2301 = vmatprep.subr.mxu0 0.0
        %2302 = vmatpush1.msra.mxu0 0.0
        %2303 = vmatprep.subr.mxu0 0.0
        %2304 = vmatpush1.msra.mxu0 0.0
        %2305 = vmatprep.subr.mxu0 0.0
        %2306 = vmatpush1.msra.mxu0 0.0
        %2307 = vmatprep.subr.mxu0 0.0
        %2308 = vmatpush1.msra.mxu0 0.0
        %2309 = vmatprep.subr.mxu0 0.0
        %2310 = vmatpush1.msra.mxu0 0.0
        %2311 = vmatprep.subr.mxu0 0.0
        %2312 = vmatpush1.msra.mxu0 0.0
        %2313 = vmatprep.subr.mxu0 0.0
        %2314 = vmatpush1.msra.mxu0 0.0
        %2315 = vmatprep.subr.mxu0 0.0
        %2316 = vmatpush1.msra.mxu0 0.0
        %2317 = vmatprep.subr.mxu0 0.0
        %2318 = vmatpush1.msra.mxu0 0.0
        %2319 = vmatprep.subr.mxu0 0.0
        %2320 = vmatpush1.msra.mxu0 0.0
        %2321 = vmatprep.subr.mxu0 0.0
        %2322 = vmatpush1.msra.mxu0 0.0
        %2323 = vmatprep.subr.mxu0 0.0
        %2324 = vmatpush1.msra.mxu0 0.0
        %2325 = vmatprep.subr.mxu0 0.0
        %2326 = vmatpush1.msra.mxu0 0.0
        %2327 = vmatprep.mubr.f32.mxu0 0.0
        %2328 = vmatmul.mubr.f32.gmra.mrb[0].mxu0 %v2240
        %v2329 = vpop.f32.mrb[0].mxu0
        %v2330 = vadd.f32 0.0, %v2329
        %v2331 = vpop.f32.mrb[0].mxu0
        %2332 = vmatprep.mubr.f32.mxu0 0.0
        %2333 = vmatmul.mubr.f32.gmra.mrb[0].mxu0 %v2243
        %v2334 = vpop.f32.mrb[0].mxu0
        %v2335 = vadd.f32 0.0, %v2334
        %v2336 = vpop.f32.mrb[0].mxu0
        %2337 = vmatprep.mubr.f32.mxu0 0.0
        %2338 = vmatmul.mubr.f32.gmra.mrb[0].mxu0 %v2246
        %v2339 = vpop.f32.mrb[0].mxu0
        %v2340 = vadd.f32 0.0, %v2339
        %v2341 = vpop.f32.mrb[0].mxu0
        %2342 = vmatprep.mubr.f32.mxu0 0.0
        %2343 = vmatmul.mubr.f32.gmra.mrb[0].mxu0 %v2249
        %v2344 = vpop.f32.mrb[0].mxu0
        %v2345 = vadd.f32 0.0, %v2344
        %v2346 = vpop.f32.mrb[0].mxu0
        %2347 = vmatprep.mubr.f32.mxu0 0.0
        %2348 = vmatmul.mubr.f32.gmra.mrb[0].mxu0 %v2252
        %v2349 = vpop.f32.mrb[0].mxu0
        %v2350 = vadd.f32 0.0, %v2349
        %v2351 = vpop.f32.mrb[0].mxu0
        %2352 = vmatprep.mubr.f32.mxu0 0.0
        %2353 = vmatmul.mubr.f32.gmra.mrb[0].mxu0 %v2255
        %v2354 = vpop.f32.mrb[0].mxu0
        %v2355 = vadd.f32 0.0, %v2354
        %v2356 = vpop.f32.mrb[0].mxu0
        %2357 = vmatprep.mubr.f32.mxu0 0.0
        %2358 = vmatmul.mubr.f32.gmra.mrb[0].mxu0 %v2258
        %v2359 = vpop.f32.mrb[0].mxu0
        %v2360 = vadd.f32 0.0, %v2359
        %v2361 = vpop.f32.mrb[0].mxu0
        %2362 = vmatprep.mubr.f32.mxu0 0.0
        %2363 = vmatmul.mubr.f32.gmra.mrb[0].mxu0 %v2261
        %v2364 = vpop.f32.mrb[0].mxu0
        %v2365 = vadd.f32 0.0, %v2364
        %v2366 = vpop.f32.mrb[0].mxu0
        %2367 = vdwg.mxu0
        %v2369 = vsel %vm2209, %v2218, 0
        %v2372 = vsel %vm2209, %v2219, 0
        %v2375 = vsel %vm2209, %v2220, 0
        %v2378 = vsel %vm2209, %v2221, 0
        %v2381 = vsel %vm2209, %v2222, 0
        %v2384 = vsel %vm2209, %v2223, 0
        %v2387 = vsel %vm2209, %v2224, 0
        %v2390 = vsel %vm2209, %v2225, 0
        %2392 = vmatprep.subr.mxu0 0.0
        %2393 = vmatpush1.msra.mxu0 %v2226
        %2394 = vmatprep.subr.mxu0 0.0
        %2395 = vmatpush1.msra.mxu0 %v2227
        %2396 = vmatprep.subr.mxu0 0.0
        %2397 = vmatpush1.msra.mxu0 0.0
        %2398 = vmatprep.subr.mxu0 0.0
        %2399 = vmatpush1.msra.mxu0 0.0
        %2400 = vmatprep.subr.mxu0 0.0
        %2401 = vmatpush1.msra.mxu0 0.0
        %2402 = vmatprep.subr.mxu0 0.0
        %2403 = vmatpush1.msra.mxu0 0.0
        %2404 = vmatprep.subr.mxu0 0.0
        %2405 = vmatpush1.msra.mxu0 0.0
        %2406 = vmatprep.subr.mxu0 0.0
        %2407 = vmatpush1.msra.mxu0 0.0
        %2408 = vmatprep.subr.mxu0 0.0
        %2409 = vmatpush1.msra.mxu0 0.0
        %2410 = vmatprep.subr.mxu0 0.0
        %2411 = vmatpush1.msra.mxu0 0.0
        %2412 = vmatprep.subr.mxu0 0.0
        %2413 = vmatpush1.msra.mxu0 0.0
        %2414 = vmatprep.subr.mxu0 0.0
        %2415 = vmatpush1.msra.mxu0 0.0
        %2416 = vmatprep.subr.mxu0 0.0
        %2417 = vmatpush1.msra.mxu0 0.0
        %2418 = vmatprep.subr.mxu0 0.0
        %2419 = vmatpush1.msra.mxu0 0.0
        %2420 = vmatprep.subr.mxu0 0.0
        %2421 = vmatpush1.msra.mxu0 0.0
        %2422 = vmatprep.subr.mxu0 0.0
        %2423 = vmatpush1.msra.mxu0 0.0
        %2424 = vmatprep.subr.mxu0 0.0
        %2425 = vmatpush1.msra.mxu0 0.0
        %2426 = vmatprep.subr.mxu0 0.0
        %2427 = vmatpush1.msra.mxu0 0.0
        %2428 = vmatprep.subr.mxu0 0.0
        %2429 = vmatpush1.msra.mxu0 0.0
        %2430 = vmatprep.subr.mxu0 0.0
        %2431 = vmatpush1.msra.mxu0 0.0
        %2432 = vmatprep.subr.mxu0 0.0
        %2433 = vmatpush1.msra.mxu0 0.0
        %2434 = vmatprep.subr.mxu0 0.0
        %2435 = vmatpush1.msra.mxu0 0.0
        %2436 = vmatprep.subr.mxu0 0.0
        %2437 = vmatpush1.msra.mxu0 0.0
        %2438 = vmatprep.subr.mxu0 0.0
        %2439 = vmatpush1.msra.mxu0 0.0
        %2440 = vmatprep.subr.mxu0 0.0
        %2441 = vmatpush1.msra.mxu0 0.0
        %2442 = vmatprep.subr.mxu0 0.0
        %2443 = vmatpush1.msra.mxu0 0.0
        %2444 = vmatprep.subr.mxu0 0.0
        %2445 = vmatpush1.msra.mxu0 0.0
        %2446 = vmatprep.subr.mxu0 0.0
        %2447 = vmatpush1.msra.mxu0 0.0
        %2448 = vmatprep.subr.mxu0 0.0
        %2449 = vmatpush1.msra.mxu0 0.0
        %2450 = vmatprep.subr.mxu0 0.0
        %2451 = vmatpush1.msra.mxu0 0.0
        %2452 = vmatprep.subr.mxu0 0.0
        %2453 = vmatpush1.msra.mxu0 0.0
        %2454 = vmatprep.subr.mxu0 0.0
        %2455 = vmatpush1.msra.mxu0 0.0
        %2456 = vmatprep.mubr.f32.mxu0 0.0
        %2457 = vmatmul.mubr.f32.gmra.mrb[0].mxu0 %v2369
        %v2458 = vpop.f32.mrb[0].mxu0
        %v2459 = vadd.f32 %v2330, %v2458
        %v2460 = vpop.f32.mrb[0].mxu0
        %2461 = vmatprep.mubr.f32.mxu0 0.0
        %2462 = vmatmul.mubr.f32.gmra.mrb[0].mxu0 %v2372
        %v2463 = vpop.f32.mrb[0].mxu0
        %v2464 = vadd.f32 %v2335, %v2463
        %v2465 = vpop.f32.mrb[0].mxu0
        %2466 = vmatprep.mubr.f32.mxu0 0.0
        %2467 = vmatmul.mubr.f32.gmra.mrb[0].mxu0 %v2375
        %v2468 = vpop.f32.mrb[0].mxu0
        %v2469 = vadd.f32 %v2340, %v2468
        %v2470 = vpop.f32.mrb[0].mxu0
        %2471 = vmatprep.mubr.f32.mxu0 0.0
        %2472 = vmatmul.mubr.f32.gmra.mrb[0].mxu0 %v2378
        %v2473 = vpop.f32.mrb[0].mxu0
        %v2474 = vadd.f32 %v2345, %v2473
        %v2475 = vpop.f32.mrb[0].mxu0
        %2476 = vmatprep.mubr.f32.mxu0 0.0
        %2477 = vmatmul.mubr.f32.gmra.mrb[0].mxu0 %v2381
        %v2478 = vpop.f32.mrb[0].mxu0
        %v2479 = vadd.f32 %v2350, %v2478
        %v2480 = vpop.f32.mrb[0].mxu0
        %2481 = vmatprep.mubr.f32.mxu0 0.0
        %2482 = vmatmul.mubr.f32.gmra.mrb[0].mxu0 %v2384
        %v2483 = vpop.f32.mrb[0].mxu0
        %v2484 = vadd.f32 %v2355, %v2483
        %v2485 = vpop.f32.mrb[0].mxu0
        %2486 = vmatprep.mubr.f32.mxu0 0.0
        %2487 = vmatmul.mubr.f32.gmra.mrb[0].mxu0 %v2387
        %v2488 = vpop.f32.mrb[0].mxu0
        %v2489 = vadd.f32 %v2360, %v2488
        %v2490 = vpop.f32.mrb[0].mxu0
        %2491 = vmatprep.mubr.f32.mxu0 0.0
        %2492 = vmatmul.mubr.f32.gmra.mrb[0].mxu0 %v2390
        %v2493 = vpop.f32.mrb[0].mxu0
        %v2494 = vadd.f32 %v2365, %v2493
        %v2495 = vpop.f32.mrb[0].mxu0
        %2496 = vdwg.mxu0
        %v2497 = vld [vmem:[#allocation2 + $0x2] sm:$0xff]
        %v2498 = vld [vmem:[#allocation2 + $0x12] sm:$0xff]
        %v2499 = vld [vmem:[#allocation2 + $0x22] sm:$0xff]
        %v2500 = vld [vmem:[#allocation2 + $0x32] sm:$0xff]
        %v2501 = vld [vmem:[#allocation2 + $0x42] sm:$0xff]
        %v2502 = vld [vmem:[#allocation2 + $0x52] sm:$0xff]
        %v2503 = vld [vmem:[#allocation2 + $0x62] sm:$0xff]
        %v2504 = vld [vmem:[#allocation2 + $0x72] sm:$0xff]
        %s2505 = scalar_lea.vmem %s2, 32
        %v2506 = vld [vmem:[%s2505] sm:$0xff]
        %v2507 = vld [vmem:[%s2505 + $0x8] sm:$0xff]
        %v2509 = vsel %vm2209, %v2497, 0
        %v2512 = vsel %vm2209, %v2498, 0
        %v2515 = vsel %vm2209, %v2499, 0
        %v2518 = vsel %vm2209, %v2500, 0
        %v2521 = vsel %vm2209, %v2501, 0
        %v2524 = vsel %vm2209, %v2502, 0
        %v2527 = vsel %vm2209, %v2503, 0
        %v2530 = vsel %vm2209, %v2504, 0
        %2532 = vmatprep.subr.mxu0 0.0
        %2533 = vmatpush1.msra.mxu0 %v2506
        %2534 = vmatprep.subr.mxu0 0.0
        %2535 = vmatpush1.msra.mxu0 %v2507
        %2536 = vmatprep.subr.mxu0 0.0
        %2537 = vmatpush1.msra.mxu0 0.0
        %2538 = vmatprep.subr.mxu0 0.0
        %2539 = vmatpush1.msra.mxu0 0.0
        %2540 = vmatprep.subr.mxu0 0.0
        %2541 = vmatpush1.msra.mxu0 0.0
        %2542 = vmatprep.subr.mxu0 0.0
        %2543 = vmatpush1.msra.mxu0 0.0
        %2544 = vmatprep.subr.mxu0 0.0
        %2545 = vmatpush1.msra.mxu0 0.0
        %2546 = vmatprep.subr.mxu0 0.0
        %2547 = vmatpush1.msra.mxu0 0.0
        %2548 = vmatprep.subr.mxu0 0.0
        %2549 = vmatpush1.msra.mxu0 0.0
        %2550 = vmatprep.subr.mxu0 0.0
        %2551 = vmatpush1.msra.mxu0 0.0
        %2552 = vmatprep.subr.mxu0 0.0
        %2553 = vmatpush1.msra.mxu0 0.0
        %2554 = vmatprep.subr.mxu0 0.0
        %2555 = vmatpush1.msra.mxu0 0.0
        %2556 = vmatprep.subr.mxu0 0.0
        %2557 = vmatpush1.msra.mxu0 0.0
        %2558 = vmatprep.subr.mxu0 0.0
        %2559 = vmatpush1.msra.mxu0 0.0
        %2560 = vmatprep.subr.mxu0 0.0
        %2561 = vmatpush1.msra.mxu0 0.0
        %2562 = vmatprep.subr.mxu0 0.0
        %2563 = vmatpush1.msra.mxu0 0.0
        %2564 = vmatprep.subr.mxu0 0.0
        %2565 = vmatpush1.msra.mxu0 0.0
        %2566 = vmatprep.subr.mxu0 0.0
        %2567 = vmatpush1.msra.mxu0 0.0
        %2568 = vmatprep.subr.mxu0 0.0
        %2569 = vmatpush1.msra.mxu0 0.0
        %2570 = vmatprep.subr.mxu0 0.0
        %2571 = vmatpush1.msra.mxu0 0.0
        %2572 = vmatprep.subr.mxu0 0.0
        %2573 = vmatpush1.msra.mxu0 0.0
        %2574 = vmatprep.subr.mxu0 0.0
        %2575 = vmatpush1.msra.mxu0 0.0
        %2576 = vmatprep.subr.mxu0 0.0
        %2577 = vmatpush1.msra.mxu0 0.0
        %2578 = vmatprep.subr.mxu0 0.0
        %2579 = vmatpush1.msra.mxu0 0.0
        %2580 = vmatprep.subr.mxu0 0.0
        %2581 = vmatpush1.msra.mxu0 0.0
        %2582 = vmatprep.subr.mxu0 0.0
        %2583 = vmatpush1.msra.mxu0 0.0
        %2584 = vmatprep.subr.mxu0 0.0
        %2585 = vmatpush1.msra.mxu0 0.0
        %2586 = vmatprep.subr.mxu0 0.0
        %2587 = vmatpush1.msra.mxu0 0.0
        %2588 = vmatprep.subr.mxu0 0.0
        %2589 = vmatpush1.msra.mxu0 0.0
        %2590 = vmatprep.subr.mxu0 0.0
        %2591 = vmatpush1.msra.mxu0 0.0
        %2592 = vmatprep.subr.mxu0 0.0
        %2593 = vmatpush1.msra.mxu0 0.0
        %2594 = vmatprep.subr.mxu0 0.0
        %2595 = vmatpush1.msra.mxu0 0.0
        %2596 = vmatprep.mubr.f32.mxu0 0.0
        %2597 = vmatmul.mubr.f32.gmra.mrb[0].mxu0 %v2509
        %v2598 = vpop.f32.mrb[0].mxu0
        %v2599 = vadd.f32 0.0, %v2598
        %v2600 = vpop.f32.mrb[0].mxu0
        %2601 = vmatprep.mubr.f32.mxu0 0.0
        %2602 = vmatmul.mubr.f32.gmra.mrb[0].mxu0 %v2512
        %v2603 = vpop.f32.mrb[0].mxu0
        %v2604 = vadd.f32 0.0, %v2603
        %v2605 = vpop.f32.mrb[0].mxu0
        %2606 = vmatprep.mubr.f32.mxu0 0.0
        %2607 = vmatmul.mubr.f32.gmra.mrb[0].mxu0 %v2515
        %v2608 = vpop.f32.mrb[0].mxu0
        %v2609 = vadd.f32 0.0, %v2608
        %v2610 = vpop.f32.mrb[0].mxu0
        %2611 = vmatprep.mubr.f32.mxu0 0.0
        %2612 = vmatmul.mubr.f32.gmra.mrb[0].mxu0 %v2518
        %v2613 = vpop.f32.mrb[0].mxu0
        %v2614 = vadd.f32 0.0, %v2613
        %v2615 = vpop.f32.mrb[0].mxu0
        %2616 = vmatprep.mubr.f32.mxu0 0.0
        %2617 = vmatmul.mubr.f32.gmra.mrb[0].mxu0 %v2521
        %v2618 = vpop.f32.mrb[0].mxu0
        %v2619 = vadd.f32 0.0, %v2618
        %v2620 = vpop.f32.mrb[0].mxu0
        %2621 = vmatprep.mubr.f32.mxu0 0.0
        %2622 = vmatmul.mubr.f32.gmra.mrb[0].mxu0 %v2524
        %v2623 = vpop.f32.mrb[0].mxu0
        %v2624 = vadd.f32 0.0, %v2623
        %v2625 = vpop.f32.mrb[0].mxu0
        %2626 = vmatprep.mubr.f32.mxu0 0.0
        %2627 = vmatmul.mubr.f32.gmra.mrb[0].mxu0 %v2527
        %v2628 = vpop.f32.mrb[0].mxu0
        %v2629 = vadd.f32 0.0, %v2628
        %v2630 = vpop.f32.mrb[0].mxu0
        %2631 = vmatprep.mubr.f32.mxu0 0.0
        %2632 = vmatmul.mubr.f32.gmra.mrb[0].mxu0 %v2530
        %v2633 = vpop.f32.mrb[0].mxu0
        %v2634 = vadd.f32 0.0, %v2633
        %v2635 = vpop.f32.mrb[0].mxu0
        %2636 = vdwg.mxu0
        %v2637 = vadd.f32 %v2459, %v2599
        %v2638 = vadd.f32 %v2464, %v2604
        %v2639 = vadd.f32 %v2469, %v2609
        %v2640 = vadd.f32 %v2474, %v2614
        %v2641 = vadd.f32 %v2479, %v2619
        %v2642 = vadd.f32 %v2484, %v2624
        %v2643 = vadd.f32 %v2489, %v2629
        %v2644 = vadd.f32 %v2494, %v2634
        %v2645 = vld [vmem:[%s2208] sm:$0xff]
        %v2646 = vld [vmem:[%s2208 + $0x10] sm:$0xff]
        %v2647 = vld [vmem:[%s2208 + $0x20] sm:$0xff]
        %v2648 = vld [vmem:[%s2208 + $0x30] sm:$0xff]
        %v2649 = vld [vmem:[%s2208 + $0x40] sm:$0xff]
        %v2650 = vld [vmem:[%s2208 + $0x50] sm:$0xff]
        %v2651 = vld [vmem:[%s2208 + $0x60] sm:$0xff]
        %v2652 = vld [vmem:[%s2208 + $0x70] sm:$0xff]
        %s2653 = scalar_lea.vmem %s2, 48
        %v2654 = vld [vmem:[%s2653] sm:$0xff]
        %v2655 = vld [vmem:[%s2653 + $0x8] sm:$0xff]
        %v2657 = vsel %vm2209, %v2645, 0
        %v2660 = vsel %vm2209, %v2646, 0
        %v2663 = vsel %vm2209, %v2647, 0
        %v2666 = vsel %vm2209, %v2648, 0
        %v2669 = vsel %vm2209, %v2649, 0
        %v2672 = vsel %vm2209, %v2650, 0
        %v2675 = vsel %vm2209, %v2651, 0
        %v2678 = vsel %vm2209, %v2652, 0
        %2680 = vmatprep.subr.mxu0 0.0
        %2681 = vmatpush1.msra.mxu0 %v2654
        %2682 = vmatprep.subr.mxu0 0.0
        %2683 = vmatpush1.msra.mxu0 %v2655
        %2684 = vmatprep.subr.mxu0 0.0
        %2685 = vmatpush1.msra.mxu0 0.0
        %2686 = vmatprep.subr.mxu0 0.0
        %2687 = vmatpush1.msra.mxu0 0.0
        %2688 = vmatprep.subr.mxu0 0.0
        %2689 = vmatpush1.msra.mxu0 0.0
        %2690 = vmatprep.subr.mxu0 0.0
        %2691 = vmatpush1.msra.mxu0 0.0
        %2692 = vmatprep.subr.mxu0 0.0
        %2693 = vmatpush1.msra.mxu0 0.0
        %2694 = vmatprep.subr.mxu0 0.0
        %2695 = vmatpush1.msra.mxu0 0.0
        %2696 = vmatprep.subr.mxu0 0.0
        %2697 = vmatpush1.msra.mxu0 0.0
        %2698 = vmatprep.subr.mxu0 0.0
        %2699 = vmatpush1.msra.mxu0 0.0
        %2700 = vmatprep.subr.mxu0 0.0
        %2701 = vmatpush1.msra.mxu0 0.0
        %2702 = vmatprep.subr.mxu0 0.0
        %2703 = vmatpush1.msra.mxu0 0.0
        %2704 = vmatprep.subr.mxu0 0.0
        %2705 = vmatpush1.msra.mxu0 0.0
        %2706 = vmatprep.subr.mxu0 0.0
        %2707 = vmatpush1.msra.mxu0 0.0
        %2708 = vmatprep.subr.mxu0 0.0
        %2709 = vmatpush1.msra.mxu0 0.0
        %2710 = vmatprep.subr.mxu0 0.0
        %2711 = vmatpush1.msra.mxu0 0.0
        %2712 = vmatprep.subr.mxu0 0.0
        %2713 = vmatpush1.msra.mxu0 0.0
        %2714 = vmatprep.subr.mxu0 0.0
        %2715 = vmatpush1.msra.mxu0 0.0
        %2716 = vmatprep.subr.mxu0 0.0
        %2717 = vmatpush1.msra.mxu0 0.0
        %2718 = vmatprep.subr.mxu0 0.0
        %2719 = vmatpush1.msra.mxu0 0.0
        %2720 = vmatprep.subr.mxu0 0.0
        %2721 = vmatpush1.msra.mxu0 0.0
        %2722 = vmatprep.subr.mxu0 0.0
        %2723 = vmatpush1.msra.mxu0 0.0
        %2724 = vmatprep.subr.mxu0 0.0
        %2725 = vmatpush1.msra.mxu0 0.0
        %2726 = vmatprep.subr.mxu0 0.0
        %2727 = vmatpush1.msra.mxu0 0.0
        %2728 = vmatprep.subr.mxu0 0.0
        %2729 = vmatpush1.msra.mxu0 0.0
        %2730 = vmatprep.subr.mxu0 0.0
        %2731 = vmatpush1.msra.mxu0 0.0
        %2732 = vmatprep.subr.mxu0 0.0
        %2733 = vmatpush1.msra.mxu0 0.0
        %2734 = vmatprep.subr.mxu0 0.0
        %2735 = vmatpush1.msra.mxu0 0.0
        %2736 = vmatprep.subr.mxu0 0.0
        %2737 = vmatpush1.msra.mxu0 0.0
        %2738 = vmatprep.subr.mxu0 0.0
        %2739 = vmatpush1.msra.mxu0 0.0
        %2740 = vmatprep.subr.mxu0 0.0
        %2741 = vmatpush1.msra.mxu0 0.0
        %2742 = vmatprep.subr.mxu0 0.0
        %2743 = vmatpush1.msra.mxu0 0.0
        %2744 = vmatprep.mubr.f32.mxu0 0.0
        %2745 = vmatmul.mubr.f32.gmra.mrb[0].mxu0 %v2657
        %v2746 = vpop.f32.mrb[0].mxu0
        %v2747 = vadd.f32 0.0, %v2746
        %v2748 = vpop.f32.mrb[0].mxu0
        %2749 = vmatprep.mubr.f32.mxu0 0.0
        %2750 = vmatmul.mubr.f32.gmra.mrb[0].mxu0 %v2660
        %v2751 = vpop.f32.mrb[0].mxu0
        %v2752 = vadd.f32 0.0, %v2751
        %v2753 = vpop.f32.mrb[0].mxu0
        %2754 = vmatprep.mubr.f32.mxu0 0.0
        %2755 = vmatmul.mubr.f32.gmra.mrb[0].mxu0 %v2663
        %v2756 = vpop.f32.mrb[0].mxu0
        %v2757 = vadd.f32 0.0, %v2756
        %v2758 = vpop.f32.mrb[0].mxu0
        %2759 = vmatprep.mubr.f32.mxu0 0.0
        %2760 = vmatmul.mubr.f32.gmra.mrb[0].mxu0 %v2666
        %v2761 = vpop.f32.mrb[0].mxu0
        %v2762 = vadd.f32 0.0, %v2761
        %v2763 = vpop.f32.mrb[0].mxu0
        %2764 = vmatprep.mubr.f32.mxu0 0.0
        %2765 = vmatmul.mubr.f32.gmra.mrb[0].mxu0 %v2669
        %v2766 = vpop.f32.mrb[0].mxu0
        %v2767 = vadd.f32 0.0, %v2766
        %v2768 = vpop.f32.mrb[0].mxu0
        %2769 = vmatprep.mubr.f32.mxu0 0.0
        %2770 = vmatmul.mubr.f32.gmra.mrb[0].mxu0 %v2672
        %v2771 = vpop.f32.mrb[0].mxu0
        %v2772 = vadd.f32 0.0, %v2771
        %v2773 = vpop.f32.mrb[0].mxu0
        %2774 = vmatprep.mubr.f32.mxu0 0.0
        %2775 = vmatmul.mubr.f32.gmra.mrb[0].mxu0 %v2675
        %v2776 = vpop.f32.mrb[0].mxu0
        %v2777 = vadd.f32 0.0, %v2776
        %v2778 = vpop.f32.mrb[0].mxu0
        %2779 = vmatprep.mubr.f32.mxu0 0.0
        %2780 = vmatmul.mubr.f32.gmra.mrb[0].mxu0 %v2678
        %v2781 = vpop.f32.mrb[0].mxu0
        %v2782 = vadd.f32 0.0, %v2781
        %v2783 = vpop.f32.mrb[0].mxu0
        %2784 = vdwg.mxu0
        %v2785 = vadd.f32 %v2637, %v2747
        %v2786 = vadd.f32 %v2638, %v2752
        %v2787 = vadd.f32 %v2639, %v2757
        %v2788 = vadd.f32 %v2640, %v2762
        %v2789 = vadd.f32 %v2641, %v2767
        %v2790 = vadd.f32 %v2642, %v2772
        %v2791 = vadd.f32 %v2643, %v2777
        %v2792 = vadd.f32 %v2644, %v2782
        %v2793 = vld [vmem:[%s2208 + $0x1] sm:$0xff]
        %v2794 = vld [vmem:[%s2208 + $0x11] sm:$0xff]
        %v2795 = vld [vmem:[%s2208 + $0x21] sm:$0xff]
        %v2796 = vld [vmem:[%s2208 + $0x31] sm:$0xff]
        %v2797 = vld [vmem:[%s2208 + $0x41] sm:$0xff]
        %v2798 = vld [vmem:[%s2208 + $0x51] sm:$0xff]
        %v2799 = vld [vmem:[%s2208 + $0x61] sm:$0xff]
        %v2800 = vld [vmem:[%s2208 + $0x71] sm:$0xff]
        %s2801 = scalar_lea.vmem %s2, 64
        %v2802 = vld [vmem:[%s2801] sm:$0xff]
        %v2803 = vld [vmem:[%s2801 + $0x8] sm:$0xff]
        %v2805 = vsel %vm2209, %v2793, 0
        %v2808 = vsel %vm2209, %v2794, 0
        %v2811 = vsel %vm2209, %v2795, 0
        %v2814 = vsel %vm2209, %v2796, 0
        %v2817 = vsel %vm2209, %v2797, 0
        %v2820 = vsel %vm2209, %v2798, 0
        %v2823 = vsel %vm2209, %v2799, 0
        %v2826 = vsel %vm2209, %v2800, 0
        %2828 = vmatprep.subr.mxu0 0.0
        %2829 = vmatpush1.msra.mxu0 %v2802
        %2830 = vmatprep.subr.mxu0 0.0
        %2831 = vmatpush1.msra.mxu0 %v2803
        %2832 = vmatprep.subr.mxu0 0.0
        %2833 = vmatpush1.msra.mxu0 0.0
        %2834 = vmatprep.subr.mxu0 0.0
        %2835 = vmatpush1.msra.mxu0 0.0
        %2836 = vmatprep.subr.mxu0 0.0
        %2837 = vmatpush1.msra.mxu0 0.0
        %2838 = vmatprep.subr.mxu0 0.0
        %2839 = vmatpush1.msra.mxu0 0.0
        %2840 = vmatprep.subr.mxu0 0.0
        %2841 = vmatpush1.msra.mxu0 0.0
        %2842 = vmatprep.subr.mxu0 0.0
        %2843 = vmatpush1.msra.mxu0 0.0
        %2844 = vmatprep.subr.mxu0 0.0
        %2845 = vmatpush1.msra.mxu0 0.0
        %2846 = vmatprep.subr.mxu0 0.0
        %2847 = vmatpush1.msra.mxu0 0.0
        %2848 = vmatprep.subr.mxu0 0.0
        %2849 = vmatpush1.msra.mxu0 0.0
        %2850 = vmatprep.subr.mxu0 0.0
        %2851 = vmatpush1.msra.mxu0 0.0
        %2852 = vmatprep.subr.mxu0 0.0
        %2853 = vmatpush1.msra.mxu0 0.0
        %2854 = vmatprep.subr.mxu0 0.0
        %2855 = vmatpush1.msra.mxu0 0.0
        %2856 = vmatprep.subr.mxu0 0.0
        %2857 = vmatpush1.msra.mxu0 0.0
        %2858 = vmatprep.subr.mxu0 0.0
        %2859 = vmatpush1.msra.mxu0 0.0
        %2860 = vmatprep.subr.mxu0 0.0
        %2861 = vmatpush1.msra.mxu0 0.0
        %2862 = vmatprep.subr.mxu0 0.0
        %2863 = vmatpush1.msra.mxu0 0.0
        %2864 = vmatprep.subr.mxu0 0.0
        %2865 = vmatpush1.msra.mxu0 0.0
        %2866 = vmatprep.subr.mxu0 0.0
        %2867 = vmatpush1.msra.mxu0 0.0
        %2868 = vmatprep.subr.mxu0 0.0
        %2869 = vmatpush1.msra.mxu0 0.0
        %2870 = vmatprep.subr.mxu0 0.0
        %2871 = vmatpush1.msra.mxu0 0.0
        %2872 = vmatprep.subr.mxu0 0.0
        %2873 = vmatpush1.msra.mxu0 0.0
        %2874 = vmatprep.subr.mxu0 0.0
        %2875 = vmatpush1.msra.mxu0 0.0
        %2876 = vmatprep.subr.mxu0 0.0
        %2877 = vmatpush1.msra.mxu0 0.0
        %2878 = vmatprep.subr.mxu0 0.0
        %2879 = vmatpush1.msra.mxu0 0.0
        %2880 = vmatprep.subr.mxu0 0.0
        %2881 = vmatpush1.msra.mxu0 0.0
        %2882 = vmatprep.subr.mxu0 0.0
        %2883 = vmatpush1.msra.mxu0 0.0
        %2884 = vmatprep.subr.mxu0 0.0
        %2885 = vmatpush1.msra.mxu0 0.0
        %2886 = vmatprep.subr.mxu0 0.0
        %2887 = vmatpush1.msra.mxu0 0.0
        %2888 = vmatprep.subr.mxu0 0.0
        %2889 = vmatpush1.msra.mxu0 0.0
        %2890 = vmatprep.subr.mxu0 0.0
        %2891 = vmatpush1.msra.mxu0 0.0
        %2892 = vmatprep.mubr.f32.mxu0 0.0
        %2893 = vmatmul.mubr.f32.gmra.mrb[0].mxu0 %v2805
        %v2894 = vpop.f32.mrb[0].mxu0
        %v2895 = vadd.f32 0.0, %v2894
        %v2896 = vpop.f32.mrb[0].mxu0
        %2897 = vmatprep.mubr.f32.mxu0 0.0
        %2898 = vmatmul.mubr.f32.gmra.mrb[0].mxu0 %v2808
        %v2899 = vpop.f32.mrb[0].mxu0
        %v2900 = vadd.f32 0.0, %v2899
        %v2901 = vpop.f32.mrb[0].mxu0
        %2902 = vmatprep.mubr.f32.mxu0 0.0
        %2903 = vmatmul.mubr.f32.gmra.mrb[0].mxu0 %v2811
        %v2904 = vpop.f32.mrb[0].mxu0
        %v2905 = vadd.f32 0.0, %v2904
        %v2906 = vpop.f32.mrb[0].mxu0
        %2907 = vmatprep.mubr.f32.mxu0 0.0
        %2908 = vmatmul.mubr.f32.gmra.mrb[0].mxu0 %v2814
        %v2909 = vpop.f32.mrb[0].mxu0
        %v2910 = vadd.f32 0.0, %v2909
        %v2911 = vpop.f32.mrb[0].mxu0
        %2912 = vmatprep.mubr.f32.mxu0 0.0
        %2913 = vmatmul.mubr.f32.gmra.mrb[0].mxu0 %v2817
        %v2914 = vpop.f32.mrb[0].mxu0
        %v2915 = vadd.f32 0.0, %v2914
        %v2916 = vpop.f32.mrb[0].mxu0
        %2917 = vmatprep.mubr.f32.mxu0 0.0
        %2918 = vmatmul.mubr.f32.gmra.mrb[0].mxu0 %v2820
        %v2919 = vpop.f32.mrb[0].mxu0
        %v2920 = vadd.f32 0.0, %v2919
        %v2921 = vpop.f32.mrb[0].mxu0
        %2922 = vmatprep.mubr.f32.mxu0 0.0
        %2923 = vmatmul.mubr.f32.gmra.mrb[0].mxu0 %v2823
        %v2924 = vpop.f32.mrb[0].mxu0
        %v2925 = vadd.f32 0.0, %v2924
        %v2926 = vpop.f32.mrb[0].mxu0
        %2927 = vmatprep.mubr.f32.mxu0 0.0
        %2928 = vmatmul.mubr.f32.gmra.mrb[0].mxu0 %v2826
        %v2929 = vpop.f32.mrb[0].mxu0
        %v2930 = vadd.f32 0.0, %v2929
        %v2931 = vpop.f32.mrb[0].mxu0
        %2932 = vdwg.mxu0
        %v2933 = vadd.f32 %v2785, %v2895
        %v2934 = vadd.f32 %v2786, %v2900
        %v2935 = vadd.f32 %v2787, %v2905
        %v2936 = vadd.f32 %v2788, %v2910
        %v2937 = vadd.f32 %v2789, %v2915
        %v2938 = vadd.f32 %v2790, %v2920
        %v2939 = vadd.f32 %v2791, %v2925
        %v2940 = vadd.f32 %v2792, %v2930
        %v2941 = vld [vmem:[%s2208 + $0x2] sm:$0xff]
        %v2942 = vld [vmem:[%s2208 + $0x12] sm:$0xff]
        %v2943 = vld [vmem:[%s2208 + $0x22] sm:$0xff]
        %v2944 = vld [vmem:[%s2208 + $0x32] sm:$0xff]
        %v2945 = vld [vmem:[%s2208 + $0x42] sm:$0xff]
        %v2946 = vld [vmem:[%s2208 + $0x52] sm:$0xff]
        %v2947 = vld [vmem:[%s2208 + $0x62] sm:$0xff]
        %v2948 = vld [vmem:[%s2208 + $0x72] sm:$0xff]
        %s2949 = scalar_lea.vmem %s2, 80
        %v2950 = vld [vmem:[%s2949] sm:$0xff]
        %v2951 = vld [vmem:[%s2949 + $0x8] sm:$0xff]
        %v2953 = vsel %vm2209, %v2941, 0
        %v2956 = vsel %vm2209, %v2942, 0
        %v2959 = vsel %vm2209, %v2943, 0
        %v2962 = vsel %vm2209, %v2944, 0
        %v2965 = vsel %vm2209, %v2945, 0
        %v2968 = vsel %vm2209, %v2946, 0
        %v2971 = vsel %vm2209, %v2947, 0
        %v2974 = vsel %vm2209, %v2948, 0
        %2976 = vmatprep.subr.mxu0 0.0
        %2977 = vmatpush1.msra.mxu0 %v2950
        %2978 = vmatprep.subr.mxu0 0.0
        %2979 = vmatpush1.msra.mxu0 %v2951
        %2980 = vmatprep.subr.mxu0 0.0
        %2981 = vmatpush1.msra.mxu0 0.0
        %2982 = vmatprep.subr.mxu0 0.0
        %2983 = vmatpush1.msra.mxu0 0.0
        %2984 = vmatprep.subr.mxu0 0.0
        %2985 = vmatpush1.msra.mxu0 0.0
        %2986 = vmatprep.subr.mxu0 0.0
        %2987 = vmatpush1.msra.mxu0 0.0
        %2988 = vmatprep.subr.mxu0 0.0
        %2989 = vmatpush1.msra.mxu0 0.0
        %2990 = vmatprep.subr.mxu0 0.0
        %2991 = vmatpush1.msra.mxu0 0.0
        %2992 = vmatprep.subr.mxu0 0.0
        %2993 = vmatpush1.msra.mxu0 0.0
        %2994 = vmatprep.subr.mxu0 0.0
        %2995 = vmatpush1.msra.mxu0 0.0
        %2996 = vmatprep.subr.mxu0 0.0
        %2997 = vmatpush1.msra.mxu0 0.0
        %2998 = vmatprep.subr.mxu0 0.0
        %2999 = vmatpush1.msra.mxu0 0.0
        %3000 = vmatprep.subr.mxu0 0.0
        %3001 = vmatpush1.msra.mxu0 0.0
        %3002 = vmatprep.subr.mxu0 0.0
        %3003 = vmatpush1.msra.mxu0 0.0
        %3004 = vmatprep.subr.mxu0 0.0
        %3005 = vmatpush1.msra.mxu0 0.0
        %3006 = vmatprep.subr.mxu0 0.0
        %3007 = vmatpush1.msra.mxu0 0.0
        %3008 = vmatprep.subr.mxu0 0.0
        %3009 = vmatpush1.msra.mxu0 0.0
        %3010 = vmatprep.subr.mxu0 0.0
        %3011 = vmatpush1.msra.mxu0 0.0
        %3012 = vmatprep.subr.mxu0 0.0
        %3013 = vmatpush1.msra.mxu0 0.0
        %3014 = vmatprep.subr.mxu0 0.0
        %3015 = vmatpush1.msra.mxu0 0.0
        %3016 = vmatprep.subr.mxu0 0.0
        %3017 = vmatpush1.msra.mxu0 0.0
        %3018 = vmatprep.subr.mxu0 0.0
        %3019 = vmatpush1.msra.mxu0 0.0
        %3020 = vmatprep.subr.mxu0 0.0
        %3021 = vmatpush1.msra.mxu0 0.0
        %3022 = vmatprep.subr.mxu0 0.0
        %3023 = vmatpush1.msra.mxu0 0.0
        %3024 = vmatprep.subr.mxu0 0.0
        %3025 = vmatpush1.msra.mxu0 0.0
        %3026 = vmatprep.subr.mxu0 0.0
        %3027 = vmatpush1.msra.mxu0 0.0
        %3028 = vmatprep.subr.mxu0 0.0
        %3029 = vmatpush1.msra.mxu0 0.0
        %3030 = vmatprep.subr.mxu0 0.0
        %3031 = vmatpush1.msra.mxu0 0.0
        %3032 = vmatprep.subr.mxu0 0.0
        %3033 = vmatpush1.msra.mxu0 0.0
        %3034 = vmatprep.subr.mxu0 0.0
        %3035 = vmatpush1.msra.mxu0 0.0
        %3036 = vmatprep.subr.mxu0 0.0
        %3037 = vmatpush1.msra.mxu0 0.0
        %3038 = vmatprep.subr.mxu0 0.0
        %3039 = vmatpush1.msra.mxu0 0.0
        %3040 = vmatprep.mubr.f32.mxu0 0.0
        %3041 = vmatmul.mubr.f32.gmra.mrb[0].mxu0 %v2953
        %v3042 = vpop.f32.mrb[0].mxu0
        %v3043 = vadd.f32 0.0, %v3042
        %v3044 = vpop.f32.mrb[0].mxu0
        %3045 = vmatprep.mubr.f32.mxu0 0.0
        %3046 = vmatmul.mubr.f32.gmra.mrb[0].mxu0 %v2956
        %v3047 = vpop.f32.mrb[0].mxu0
        %v3048 = vadd.f32 0.0, %v3047
        %v3049 = vpop.f32.mrb[0].mxu0
        %3050 = vmatprep.mubr.f32.mxu0 0.0
        %3051 = vmatmul.mubr.f32.gmra.mrb[0].mxu0 %v2959
        %v3052 = vpop.f32.mrb[0].mxu0
        %v3053 = vadd.f32 0.0, %v3052
        %v3054 = vpop.f32.mrb[0].mxu0
        %3055 = vmatprep.mubr.f32.mxu0 0.0
        %3056 = vmatmul.mubr.f32.gmra.mrb[0].mxu0 %v2962
        %v3057 = vpop.f32.mrb[0].mxu0
        %v3058 = vadd.f32 0.0, %v3057
        %v3059 = vpop.f32.mrb[0].mxu0
        %3060 = vmatprep.mubr.f32.mxu0 0.0
        %3061 = vmatmul.mubr.f32.gmra.mrb[0].mxu0 %v2965
        %v3062 = vpop.f32.mrb[0].mxu0
        %v3063 = vadd.f32 0.0, %v3062
        %v3064 = vpop.f32.mrb[0].mxu0
        %3065 = vmatprep.mubr.f32.mxu0 0.0
        %3066 = vmatmul.mubr.f32.gmra.mrb[0].mxu0 %v2968
        %v3067 = vpop.f32.mrb[0].mxu0
        %v3068 = vadd.f32 0.0, %v3067
        %v3069 = vpop.f32.mrb[0].mxu0
        %3070 = vmatprep.mubr.f32.mxu0 0.0
        %3071 = vmatmul.mubr.f32.gmra.mrb[0].mxu0 %v2971
        %v3072 = vpop.f32.mrb[0].mxu0
        %v3073 = vadd.f32 0.0, %v3072
        %v3074 = vpop.f32.mrb[0].mxu0
        %3075 = vmatprep.mubr.f32.mxu0 0.0
        %3076 = vmatmul.mubr.f32.gmra.mrb[0].mxu0 %v2974
        %v3077 = vpop.f32.mrb[0].mxu0
        %v3078 = vadd.f32 0.0, %v3077
        %v3079 = vpop.f32.mrb[0].mxu0
        %3080 = vdwg.mxu0
        %v3081 = vadd.f32 %v2933, %v3043
        %v3082 = vadd.f32 %v2934, %v3048
        %v3083 = vadd.f32 %v2935, %v3053
        %v3084 = vadd.f32 %v2936, %v3058
        %v3085 = vadd.f32 %v2937, %v3063
        %v3086 = vadd.f32 %v2938, %v3068
        %v3087 = vadd.f32 %v2939, %v3073
        %v3088 = vadd.f32 %v2940, %v3078
        %s3089 = scalar_lea.vmem [#allocation2], 32
        %v3090 = vld [vmem:[%s3089] sm:$0xff]
        %v3091 = vld [vmem:[%s3089 + $0x10] sm:$0xff]
        %v3092 = vld [vmem:[%s3089 + $0x20] sm:$0xff]
        %v3093 = vld [vmem:[%s3089 + $0x30] sm:$0xff]
        %v3094 = vld [vmem:[%s3089 + $0x40] sm:$0xff]
        %v3095 = vld [vmem:[%s3089 + $0x50] sm:$0xff]
        %v3096 = vld [vmem:[%s3089 + $0x60] sm:$0xff]
        %v3097 = vld [vmem:[%s3089 + $0x70] sm:$0xff]
        %s3098 = scalar_lea.vmem %s2, 96
        %v3099 = vld [vmem:[%s3098] sm:$0xff]
        %v3100 = vld [vmem:[%s3098 + $0x8] sm:$0xff]
        %v3102 = vsel %vm2209, %v3090, 0
        %v3105 = vsel %vm2209, %v3091, 0
        %v3108 = vsel %vm2209, %v3092, 0
        %v3111 = vsel %vm2209, %v3093, 0
        %v3114 = vsel %vm2209, %v3094, 0
        %v3117 = vsel %vm2209, %v3095, 0
        %v3120 = vsel %vm2209, %v3096, 0
        %v3123 = vsel %vm2209, %v3097, 0
        %3125 = vmatprep.subr.mxu0 0.0
        %3126 = vmatpush1.msra.mxu0 %v3099
        %3127 = vmatprep.subr.mxu0 0.0
        %3128 = vmatpush1.msra.mxu0 %v3100
        %3129 = vmatprep.subr.mxu0 0.0
        %3130 = vmatpush1.msra.mxu0 0.0
        %3131 = vmatprep.subr.mxu0 0.0
        %3132 = vmatpush1.msra.mxu0 0.0
        %3133 = vmatprep.subr.mxu0 0.0
        %3134 = vmatpush1.msra.mxu0 0.0
        %3135 = vmatprep.subr.mxu0 0.0
        %3136 = vmatpush1.msra.mxu0 0.0
        %3137 = vmatprep.subr.mxu0 0.0
        %3138 = vmatpush1.msra.mxu0 0.0
        %3139 = vmatprep.subr.mxu0 0.0
        %3140 = vmatpush1.msra.mxu0 0.0
        %3141 = vmatprep.subr.mxu0 0.0
        %3142 = vmatpush1.msra.mxu0 0.0
        %3143 = vmatprep.subr.mxu0 0.0
        %3144 = vmatpush1.msra.mxu0 0.0
        %3145 = vmatprep.subr.mxu0 0.0
        %3146 = vmatpush1.msra.mxu0 0.0
        %3147 = vmatprep.subr.mxu0 0.0
        %3148 = vmatpush1.msra.mxu0 0.0
        %3149 = vmatprep.subr.mxu0 0.0
        %3150 = vmatpush1.msra.mxu0 0.0
        %3151 = vmatprep.subr.mxu0 0.0
        %3152 = vmatpush1.msra.mxu0 0.0
        %3153 = vmatprep.subr.mxu0 0.0
        %3154 = vmatpush1.msra.mxu0 0.0
        %3155 = vmatprep.subr.mxu0 0.0
        %3156 = vmatpush1.msra.mxu0 0.0
        %3157 = vmatprep.subr.mxu0 0.0
        %3158 = vmatpush1.msra.mxu0 0.0
        %3159 = vmatprep.subr.mxu0 0.0
        %3160 = vmatpush1.msra.mxu0 0.0
        %3161 = vmatprep.subr.mxu0 0.0
        %3162 = vmatpush1.msra.mxu0 0.0
        %3163 = vmatprep.subr.mxu0 0.0
        %3164 = vmatpush1.msra.mxu0 0.0
        %3165 = vmatprep.subr.mxu0 0.0
        %3166 = vmatpush1.msra.mxu0 0.0
        %3167 = vmatprep.subr.mxu0 0.0
        %3168 = vmatpush1.msra.mxu0 0.0
        %3169 = vmatprep.subr.mxu0 0.0
        %3170 = vmatpush1.msra.mxu0 0.0
        %3171 = vmatprep.subr.mxu0 0.0
        %3172 = vmatpush1.msra.mxu0 0.0
        %3173 = vmatprep.subr.mxu0 0.0
        %3174 = vmatpush1.msra.mxu0 0.0
        %3175 = vmatprep.subr.mxu0 0.0
        %3176 = vmatpush1.msra.mxu0 0.0
        %3177 = vmatprep.subr.mxu0 0.0
        %3178 = vmatpush1.msra.mxu0 0.0
        %3179 = vmatprep.subr.mxu0 0.0
        %3180 = vmatpush1.msra.mxu0 0.0
        %3181 = vmatprep.subr.mxu0 0.0
        %3182 = vmatpush1.msra.mxu0 0.0
        %3183 = vmatprep.subr.mxu0 0.0
        %3184 = vmatpush1.msra.mxu0 0.0
        %3185 = vmatprep.subr.mxu0 0.0
        %3186 = vmatpush1.msra.mxu0 0.0
        %3187 = vmatprep.subr.mxu0 0.0
        %3188 = vmatpush1.msra.mxu0 0.0
        %3189 = vmatprep.mubr.f32.mxu0 0.0
        %3190 = vmatmul.mubr.f32.gmra.mrb[0].mxu0 %v3102
        %v3191 = vpop.f32.mrb[0].mxu0
        %v3192 = vadd.f32 0.0, %v3191
        %v3193 = vpop.f32.mrb[0].mxu0
        %3194 = vmatprep.mubr.f32.mxu0 0.0
        %3195 = vmatmul.mubr.f32.gmra.mrb[0].mxu0 %v3105
        %v3196 = vpop.f32.mrb[0].mxu0
        %v3197 = vadd.f32 0.0, %v3196
        %v3198 = vpop.f32.mrb[0].mxu0
        %3199 = vmatprep.mubr.f32.mxu0 0.0
        %3200 = vmatmul.mubr.f32.gmra.mrb[0].mxu0 %v3108
        %v3201 = vpop.f32.mrb[0].mxu0
        %v3202 = vadd.f32 0.0, %v3201
        %v3203 = vpop.f32.mrb[0].mxu0
        %3204 = vmatprep.mubr.f32.mxu0 0.0
        %3205 = vmatmul.mubr.f32.gmra.mrb[0].mxu0 %v3111
        %v3206 = vpop.f32.mrb[0].mxu0
        %v3207 = vadd.f32 0.0, %v3206
        %v3208 = vpop.f32.mrb[0].mxu0
        %3209 = vmatprep.mubr.f32.mxu0 0.0
        %3210 = vmatmul.mubr.f32.gmra.mrb[0].mxu0 %v3114
        %v3211 = vpop.f32.mrb[0].mxu0
        %v3212 = vadd.f32 0.0, %v3211
        %v3213 = vpop.f32.mrb[0].mxu0
        %3214 = vmatprep.mubr.f32.mxu0 0.0
        %3215 = vmatmul.mubr.f32.gmra.mrb[0].mxu0 %v3117
        %v3216 = vpop.f32.mrb[0].mxu0
        %v3217 = vadd.f32 0.0, %v3216
        %v3218 = vpop.f32.mrb[0].mxu0
        %3219 = vmatprep.mubr.f32.mxu0 0.0
        %3220 = vmatmul.mubr.f32.gmra.mrb[0].mxu0 %v3120
        %v3221 = vpop.f32.mrb[0].mxu0
        %v3222 = vadd.f32 0.0, %v3221
        %v3223 = vpop.f32.mrb[0].mxu0
        %3224 = vmatprep.mubr.f32.mxu0 0.0
        %3225 = vmatmul.mubr.f32.gmra.mrb[0].mxu0 %v3123
        %v3226 = vpop.f32.mrb[0].mxu0
        %v3227 = vadd.f32 0.0, %v3226
        %v3228 = vpop.f32.mrb[0].mxu0
        %3229 = vdwg.mxu0
        %v3230 = vadd.f32 %v3081, %v3192
        %v3231 = vadd.f32 %v3082, %v3197
        %v3232 = vadd.f32 %v3083, %v3202
        %v3233 = vadd.f32 %v3084, %v3207
        %v3234 = vadd.f32 %v3085, %v3212
        %v3235 = vadd.f32 %v3086, %v3217
        %v3236 = vadd.f32 %v3087, %v3222
        %v3237 = vadd.f32 %v3088, %v3227
        %v3238 = vld [vmem:[%s3089 + $0x1] sm:$0xff]
        %v3239 = vld [vmem:[%s3089 + $0x11] sm:$0xff]
        %v3240 = vld [vmem:[%s3089 + $0x21] sm:$0xff]
        %v3241 = vld [vmem:[%s3089 + $0x31] sm:$0xff]
        %v3242 = vld [vmem:[%s3089 + $0x41] sm:$0xff]
        %v3243 = vld [vmem:[%s3089 + $0x51] sm:$0xff]
        %v3244 = vld [vmem:[%s3089 + $0x61] sm:$0xff]
        %v3245 = vld [vmem:[%s3089 + $0x71] sm:$0xff]
        %s3246 = scalar_lea.vmem %s2, 112
        %v3247 = vld [vmem:[%s3246] sm:$0xff]
        %v3248 = vld [vmem:[%s3246 + $0x8] sm:$0xff]
        %v3250 = vsel %vm2209, %v3238, 0
        %v3253 = vsel %vm2209, %v3239, 0
        %v3256 = vsel %vm2209, %v3240, 0
        %v3259 = vsel %vm2209, %v3241, 0
        %v3262 = vsel %vm2209, %v3242, 0
        %v3265 = vsel %vm2209, %v3243, 0
        %v3268 = vsel %vm2209, %v3244, 0
        %v3271 = vsel %vm2209, %v3245, 0
        %3273 = vmatprep.subr.mxu0 0.0
        %3274 = vmatpush1.msra.mxu0 %v3247
        %3275 = vmatprep.subr.mxu0 0.0
        %3276 = vmatpush1.msra.mxu0 %v3248
        %3277 = vmatprep.subr.mxu0 0.0
        %3278 = vmatpush1.msra.mxu0 0.0
        %3279 = vmatprep.subr.mxu0 0.0
        %3280 = vmatpush1.msra.mxu0 0.0
        %3281 = vmatprep.subr.mxu0 0.0
        %3282 = vmatpush1.msra.mxu0 0.0
        %3283 = vmatprep.subr.mxu0 0.0
        %3284 = vmatpush1.msra.mxu0 0.0
        %3285 = vmatprep.subr.mxu0 0.0
        %3286 = vmatpush1.msra.mxu0 0.0
        %3287 = vmatprep.subr.mxu0 0.0
        %3288 = vmatpush1.msra.mxu0 0.0
        %3289 = vmatprep.subr.mxu0 0.0
        %3290 = vmatpush1.msra.mxu0 0.0
        %3291 = vmatprep.subr.mxu0 0.0
        %3292 = vmatpush1.msra.mxu0 0.0
        %3293 = vmatprep.subr.mxu0 0.0
        %3294 = vmatpush1.msra.mxu0 0.0
        %3295 = vmatprep.subr.mxu0 0.0
        %3296 = vmatpush1.msra.mxu0 0.0
        %3297 = vmatprep.subr.mxu0 0.0
        %3298 = vmatpush1.msra.mxu0 0.0
        %3299 = vmatprep.subr.mxu0 0.0
        %3300 = vmatpush1.msra.mxu0 0.0
        %3301 = vmatprep.subr.mxu0 0.0
        %3302 = vmatpush1.msra.mxu0 0.0
        %3303 = vmatprep.subr.mxu0 0.0
        %3304 = vmatpush1.msra.mxu0 0.0
        %3305 = vmatprep.subr.mxu0 0.0
        %3306 = vmatpush1.msra.mxu0 0.0
        %3307 = vmatprep.subr.mxu0 0.0
        %3308 = vmatpush1.msra.mxu0 0.0
        %3309 = vmatprep.subr.mxu0 0.0
        %3310 = vmatpush1.msra.mxu0 0.0
        %3311 = vmatprep.subr.mxu0 0.0
        %3312 = vmatpush1.msra.mxu0 0.0
        %3313 = vmatprep.subr.mxu0 0.0
        %3314 = vmatpush1.msra.mxu0 0.0
        %3315 = vmatprep.subr.mxu0 0.0
        %3316 = vmatpush1.msra.mxu0 0.0
        %3317 = vmatprep.subr.mxu0 0.0
        %3318 = vmatpush1.msra.mxu0 0.0
        %3319 = vmatprep.subr.mxu0 0.0
        %3320 = vmatpush1.msra.mxu0 0.0
        %3321 = vmatprep.subr.mxu0 0.0
        %3322 = vmatpush1.msra.mxu0 0.0
        %3323 = vmatprep.subr.mxu0 0.0
        %3324 = vmatpush1.msra.mxu0 0.0
        %3325 = vmatprep.subr.mxu0 0.0
        %3326 = vmatpush1.msra.mxu0 0.0
        %3327 = vmatprep.subr.mxu0 0.0
        %3328 = vmatpush1.msra.mxu0 0.0
        %3329 = vmatprep.subr.mxu0 0.0
        %3330 = vmatpush1.msra.mxu0 0.0
        %3331 = vmatprep.subr.mxu0 0.0
        %3332 = vmatpush1.msra.mxu0 0.0
        %3333 = vmatprep.subr.mxu0 0.0
        %3334 = vmatpush1.msra.mxu0 0.0
        %3335 = vmatprep.subr.mxu0 0.0
        %3336 = vmatpush1.msra.mxu0 0.0
        %3337 = vmatprep.mubr.f32.mxu0 0.0
        %3338 = vmatmul.mubr.f32.gmra.mrb[0].mxu0 %v3250
        %v3339 = vpop.f32.mrb[0].mxu0
        %v3340 = vadd.f32 0.0, %v3339
        %v3341 = vpop.f32.mrb[0].mxu0
        %3342 = vmatprep.mubr.f32.mxu0 0.0
        %3343 = vmatmul.mubr.f32.gmra.mrb[0].mxu0 %v3253
        %v3344 = vpop.f32.mrb[0].mxu0
        %v3345 = vadd.f32 0.0, %v3344
        %v3346 = vpop.f32.mrb[0].mxu0
        %3347 = vmatprep.mubr.f32.mxu0 0.0
        %3348 = vmatmul.mubr.f32.gmra.mrb[0].mxu0 %v3256
        %v3349 = vpop.f32.mrb[0].mxu0
        %v3350 = vadd.f32 0.0, %v3349
        %v3351 = vpop.f32.mrb[0].mxu0
        %3352 = vmatprep.mubr.f32.mxu0 0.0
        %3353 = vmatmul.mubr.f32.gmra.mrb[0].mxu0 %v3259
        %v3354 = vpop.f32.mrb[0].mxu0
        %v3355 = vadd.f32 0.0, %v3354
        %v3356 = vpop.f32.mrb[0].mxu0
        %3357 = vmatprep.mubr.f32.mxu0 0.0
        %3358 = vmatmul.mubr.f32.gmra.mrb[0].mxu0 %v3262
        %v3359 = vpop.f32.mrb[0].mxu0
        %v3360 = vadd.f32 0.0, %v3359
        %v3361 = vpop.f32.mrb[0].mxu0
        %3362 = vmatprep.mubr.f32.mxu0 0.0
        %3363 = vmatmul.mubr.f32.gmra.mrb[0].mxu0 %v3265
        %v3364 = vpop.f32.mrb[0].mxu0
        %v3365 = vadd.f32 0.0, %v3364
        %v3366 = vpop.f32.mrb[0].mxu0
        %3367 = vmatprep.mubr.f32.mxu0 0.0
        %3368 = vmatmul.mubr.f32.gmra.mrb[0].mxu0 %v3268
        %v3369 = vpop.f32.mrb[0].mxu0
        %v3370 = vadd.f32 0.0, %v3369
        %v3371 = vpop.f32.mrb[0].mxu0
        %3372 = vmatprep.mubr.f32.mxu0 0.0
        %3373 = vmatmul.mubr.f32.gmra.mrb[0].mxu0 %v3271
        %v3374 = vpop.f32.mrb[0].mxu0
        %v3375 = vadd.f32 0.0, %v3374
        %v3376 = vpop.f32.mrb[0].mxu0
        %3377 = vdwg.mxu0
        %v3378 = vadd.f32 %v3230, %v3340
        %v3379 = vadd.f32 %v3231, %v3345
        %v3380 = vadd.f32 %v3232, %v3350
        %v3381 = vadd.f32 %v3233, %v3355
        %v3382 = vadd.f32 %v3234, %v3360
        %v3383 = vadd.f32 %v3235, %v3365
        %v3384 = vadd.f32 %v3236, %v3370
        %v3385 = vadd.f32 %v3237, %v3375
        %v3386 = vld [vmem:[%s3089 + $0x2] sm:$0xff]
        %v3387 = vld [vmem:[%s3089 + $0x12] sm:$0xff]
        %v3388 = vld [vmem:[%s3089 + $0x22] sm:$0xff]
        %v3389 = vld [vmem:[%s3089 + $0x32] sm:$0xff]
        %v3390 = vld [vmem:[%s3089 + $0x42] sm:$0xff]
        %v3391 = vld [vmem:[%s3089 + $0x52] sm:$0xff]
        %v3392 = vld [vmem:[%s3089 + $0x62] sm:$0xff]
        %v3393 = vld [vmem:[%s3089 + $0x72] sm:$0xff]
        %s3394 = scalar_lea.vmem %s2, 128
        %v3395 = vld [vmem:[%s3394] sm:$0xff]
        %v3396 = vld [vmem:[%s3394 + $0x8] sm:$0xff]
        %v3398 = vsel %vm2209, %v3386, 0
        %v3401 = vsel %vm2209, %v3387, 0
        %v3404 = vsel %vm2209, %v3388, 0
        %v3407 = vsel %vm2209, %v3389, 0
        %v3410 = vsel %vm2209, %v3390, 0
        %v3413 = vsel %vm2209, %v3391, 0
        %v3416 = vsel %vm2209, %v3392, 0
        %v3419 = vsel %vm2209, %v3393, 0
        %3421 = vmatprep.subr.mxu0 0.0
        %3422 = vmatpush1.msra.mxu0 %v3395
        %3423 = vmatprep.subr.mxu0 0.0
        %3424 = vmatpush1.msra.mxu0 %v3396
        %3425 = vmatprep.subr.mxu0 0.0
        %3426 = vmatpush1.msra.mxu0 0.0
        %3427 = vmatprep.subr.mxu0 0.0
        %3428 = vmatpush1.msra.mxu0 0.0
        %3429 = vmatprep.subr.mxu0 0.0
        %3430 = vmatpush1.msra.mxu0 0.0
        %3431 = vmatprep.subr.mxu0 0.0
        %3432 = vmatpush1.msra.mxu0 0.0
        %3433 = vmatprep.subr.mxu0 0.0
        %3434 = vmatpush1.msra.mxu0 0.0
        %3435 = vmatprep.subr.mxu0 0.0
        %3436 = vmatpush1.msra.mxu0 0.0
        %3437 = vmatprep.subr.mxu0 0.0
        %3438 = vmatpush1.msra.mxu0 0.0
        %3439 = vmatprep.subr.mxu0 0.0
        %3440 = vmatpush1.msra.mxu0 0.0
        %3441 = vmatprep.subr.mxu0 0.0
        %3442 = vmatpush1.msra.mxu0 0.0
        %3443 = vmatprep.subr.mxu0 0.0
        %3444 = vmatpush1.msra.mxu0 0.0
        %3445 = vmatprep.subr.mxu0 0.0
        %3446 = vmatpush1.msra.mxu0 0.0
        %3447 = vmatprep.subr.mxu0 0.0
        %3448 = vmatpush1.msra.mxu0 0.0
        %3449 = vmatprep.subr.mxu0 0.0
        %3450 = vmatpush1.msra.mxu0 0.0
        %3451 = vmatprep.subr.mxu0 0.0
        %3452 = vmatpush1.msra.mxu0 0.0
        %3453 = vmatprep.subr.mxu0 0.0
        %3454 = vmatpush1.msra.mxu0 0.0
        %3455 = vmatprep.subr.mxu0 0.0
        %3456 = vmatpush1.msra.mxu0 0.0
        %3457 = vmatprep.subr.mxu0 0.0
        %3458 = vmatpush1.msra.mxu0 0.0
        %3459 = vmatprep.subr.mxu0 0.0
        %3460 = vmatpush1.msra.mxu0 0.0
        %3461 = vmatprep.subr.mxu0 0.0
        %3462 = vmatpush1.msra.mxu0 0.0
        %3463 = vmatprep.subr.mxu0 0.0
        %3464 = vmatpush1.msra.mxu0 0.0
        %3465 = vmatprep.subr.mxu0 0.0
        %3466 = vmatpush1.msra.mxu0 0.0
        %3467 = vmatprep.subr.mxu0 0.0
        %3468 = vmatpush1.msra.mxu0 0.0
        %3469 = vmatprep.subr.mxu0 0.0
        %3470 = vmatpush1.msra.mxu0 0.0
        %3471 = vmatprep.subr.mxu0 0.0
        %3472 = vmatpush1.msra.mxu0 0.0
        %3473 = vmatprep.subr.mxu0 0.0
        %3474 = vmatpush1.msra.mxu0 0.0
        %3475 = vmatprep.subr.mxu0 0.0
        %3476 = vmatpush1.msra.mxu0 0.0
        %3477 = vmatprep.subr.mxu0 0.0
        %3478 = vmatpush1.msra.mxu0 0.0
        %3479 = vmatprep.subr.mxu0 0.0
        %3480 = vmatpush1.msra.mxu0 0.0
        %3481 = vmatprep.subr.mxu0 0.0
        %3482 = vmatpush1.msra.mxu0 0.0
        %3483 = vmatprep.subr.mxu0 0.0
        %3484 = vmatpush1.msra.mxu0 0.0
        %3485 = vmatprep.mubr.f32.mxu0 0.0
        %3486 = vmatmul.mubr.f32.gmra.mrb[0].mxu0 %v3398
        %v3487 = vpop.f32.mrb[0].mxu0
        %v3488 = vadd.f32 0.0, %v3487
        %v3489 = vpop.f32.mrb[0].mxu0
        %3490 = vmatprep.mubr.f32.mxu0 0.0
        %3491 = vmatmul.mubr.f32.gmra.mrb[0].mxu0 %v3401
        %v3492 = vpop.f32.mrb[0].mxu0
        %v3493 = vadd.f32 0.0, %v3492
        %v3494 = vpop.f32.mrb[0].mxu0
        %3495 = vmatprep.mubr.f32.mxu0 0.0
        %3496 = vmatmul.mubr.f32.gmra.mrb[0].mxu0 %v3404
        %v3497 = vpop.f32.mrb[0].mxu0
        %v3498 = vadd.f32 0.0, %v3497
        %v3499 = vpop.f32.mrb[0].mxu0
        %3500 = vmatprep.mubr.f32.mxu0 0.0
        %3501 = vmatmul.mubr.f32.gmra.mrb[0].mxu0 %v3407
        %v3502 = vpop.f32.mrb[0].mxu0
        %v3503 = vadd.f32 0.0, %v3502
        %v3504 = vpop.f32.mrb[0].mxu0
        %3505 = vmatprep.mubr.f32.mxu0 0.0
        %3506 = vmatmul.mubr.f32.gmra.mrb[0].mxu0 %v3410
        %v3507 = vpop.f32.mrb[0].mxu0
        %v3508 = vadd.f32 0.0, %v3507
        %v3509 = vpop.f32.mrb[0].mxu0
        %3510 = vmatprep.mubr.f32.mxu0 0.0
        %3511 = vmatmul.mubr.f32.gmra.mrb[0].mxu0 %v3413
        %v3512 = vpop.f32.mrb[0].mxu0
        %v3513 = vadd.f32 0.0, %v3512
        %v3514 = vpop.f32.mrb[0].mxu0
        %3515 = vmatprep.mubr.f32.mxu0 0.0
        %3516 = vmatmul.mubr.f32.gmra.mrb[0].mxu0 %v3416
        %v3517 = vpop.f32.mrb[0].mxu0
        %v3518 = vadd.f32 0.0, %v3517
        %v3519 = vpop.f32.mrb[0].mxu0
        %3520 = vmatprep.mubr.f32.mxu0 0.0
        %3521 = vmatmul.mubr.f32.gmra.mrb[0].mxu0 %v3419
        %v3522 = vpop.f32.mrb[0].mxu0
        %v3523 = vadd.f32 0.0, %v3522
        %v3524 = vpop.f32.mrb[0].mxu0
        %3525 = vdwg.mxu0
        %v3526 = vadd.f32 %v3378, %v3488
        %v3527 = vadd.f32 %v3379, %v3493
        %v3528 = vadd.f32 %v3380, %v3498
        %v3529 = vadd.f32 %v3381, %v3503
        %v3530 = vadd.f32 %v3382, %v3508
        %v3531 = vadd.f32 %v3383, %v3513
        %v3532 = vadd.f32 %v3384, %v3518
        %v3533 = vadd.f32 %v3385, %v3523
        %v3534 = vld [vmem:[%s3] sm:$0x1]
        %v3536 = vlaneseq
        %v3537 = vshrl.u32 %v3536, 7
        %v3538 = vsub.s32 0, %v3537
        %v3539 = vrot.slane %v3534, %v3538
        %v3541 = vadd.f32 %v3526, %v3539
        %v3542 = vadd.f32 %v3527, %v3539
        %v3543 = vadd.f32 %v3528, %v3539
        %v3544 = vadd.f32 %v3529, %v3539
        %v3545 = vadd.f32 %v3530, %v3539
        %v3546 = vadd.f32 %v3531, %v3539
        %v3547 = vadd.f32 %v3532, %v3539
        %v3548 = vadd.f32 %v3533, %v3539
        %v3549 = vmul.f32 %v3541, %v3541
        %v3550 = vmul.f32 %v3542, %v3542
        %v3551 = vmul.f32 %v3543, %v3543
        %v3552 = vmul.f32 %v3544, %v3544
        %v3553 = vmul.f32 %v3545, %v3545
        %v3554 = vmul.f32 %v3546, %v3546
        %v3555 = vmul.f32 %v3547, %v3547
        %v3556 = vmul.f32 %v3548, %v3548
        %v3557 = vsel %vm2209, %v3549, 0.0
        %3558 = vadd.xlane.f32.xlu0 %v3557
        %v3559 = vpop.xlane.xlu0 %3558
        %v3560 = vsel %vm2209, %v3550, 0.0
        %3561 = vadd.xlane.f32.xlu0 %v3560
        %v3562 = vpop.xlane.xlu0 %3561
        %v3563 = vsel %vm2209, %v3551, 0.0
        %3564 = vadd.xlane.f32.xlu0 %v3563
        %v3565 = vpop.xlane.xlu0 %3564
        %v3566 = vsel %vm2209, %v3552, 0.0
        %3567 = vadd.xlane.f32.xlu0 %v3566
        %v3568 = vpop.xlane.xlu0 %3567
        %v3569 = vsel %vm2209, %v3553, 0.0
        %3570 = vadd.xlane.f32.xlu0 %v3569
        %v3571 = vpop.xlane.xlu0 %3570
        %v3572 = vsel %vm2209, %v3554, 0.0
        %3573 = vadd.xlane.f32.xlu0 %v3572
        %v3574 = vpop.xlane.xlu0 %3573
        %v3575 = vsel %vm2209, %v3555, 0.0
        %3576 = vadd.xlane.f32.xlu0 %v3575
        %v3577 = vpop.xlane.xlu0 %3576
        %v3578 = vsel %vm2209, %v3556, 0.0
        %3579 = vadd.xlane.f32.xlu0 %v3578
        %v3580 = vpop.xlane.xlu0 %3579
        %v3581 = vrsqrt.pop %v3559
        %v3582 = vrsqrt.pop %v3562
        %v3583 = vrsqrt.pop %v3565
        %v3584 = vrsqrt.pop %v3568
        %v3585 = vrsqrt.pop %v3571
        %v3586 = vrsqrt.pop %v3574
        %v3587 = vrsqrt.pop %v3577
        %v3588 = vrsqrt.pop %v3580
        %v3589 = vmul.f32 %v3541, %v3581
        %v3590 = vmul.f32 %v3542, %v3582
        %v3591 = vmul.f32 %v3543, %v3583
        %v3592 = vmul.f32 %v3544, %v3584
        %v3593 = vmul.f32 %v3545, %v3585
        %v3594 = vmul.f32 %v3546, %v3586
        %v3595 = vmul.f32 %v3547, %v3587
        %v3596 = vmul.f32 %v3548, %v3588
        %v3597 = vld [vmem:[%s426] sm:$0xff]
        %v3598 = vld [vmem:[%s426 + $0x8] sm:$0xff]
        %v3599 = vld [vmem:[%s426 + $0x10] sm:$0xff]
        %v3600 = vld [vmem:[%s426 + $0x18] sm:$0xff]
        %v3601 = vld [vmem:[%s426 + $0x20] sm:$0xff]
        %v3602 = vld [vmem:[%s426 + $0x28] sm:$0xff]
        %v3603 = vld [vmem:[%s426 + $0x30] sm:$0xff]
        %v3604 = vld [vmem:[%s426 + $0x38] sm:$0xff]
        %v3605 = vld [vmem:[%s6] sm:$0xff]
        %v3606 = vld [vmem:[%s6 + $0x8] sm:$0xff]
        %v3607 = vld [vmem:[%s7] sm:$0xff]
        %v3608 = vld [vmem:[%s7 + $0x8] sm:$0xff]
        %v3610 = vsel %vm2209, %v3597, 0
        %v3613 = vsel %vm2209, %v3598, 0
        %v3616 = vsel %vm2209, %v3599, 0
        %v3619 = vsel %vm2209, %v3600, 0
        %v3622 = vsel %vm2209, %v3601, 0
        %v3625 = vsel %vm2209, %v3602, 0
        %v3628 = vsel %vm2209, %v3603, 0
        %v3631 = vsel %vm2209, %v3604, 0
        %3633 = vmatprep.subr.mxu0 0.0
        %3634 = vmatpush1.msra.mxu0 %v3607
        %3635 = vmatprep.subr.mxu0 0.0
        %3636 = vmatpush1.msra.mxu0 %v3608
        %3637 = vmatprep.subr.mxu0 0.0
        %3638 = vmatpush1.msra.mxu0 0.0
        %3639 = vmatprep.subr.mxu0 0.0
        %3640 = vmatpush1.msra.mxu0 0.0
        %3641 = vmatprep.subr.mxu0 0.0
        %3642 = vmatpush1.msra.mxu0 0.0
        %3643 = vmatprep.subr.mxu0 0.0
        %3644 = vmatpush1.msra.mxu0 0.0
        %3645 = vmatprep.subr.mxu0 0.0
        %3646 = vmatpush1.msra.mxu0 0.0
        %3647 = vmatprep.subr.mxu0 0.0
        %3648 = vmatpush1.msra.mxu0 0.0
        %3649 = vmatprep.subr.mxu0 0.0
        %3650 = vmatpush1.msra.mxu0 0.0
        %3651 = vmatprep.subr.mxu0 0.0
        %3652 = vmatpush1.msra.mxu0 0.0
        %3653 = vmatprep.subr.mxu0 0.0
        %3654 = vmatpush1.msra.mxu0 0.0
        %3655 = vmatprep.subr.mxu0 0.0
        %3656 = vmatpush1.msra.mxu0 0.0
        %3657 = vmatprep.subr.mxu0 0.0
        %3658 = vmatpush1.msra.mxu0 0.0
        %3659 = vmatprep.subr.mxu0 0.0
        %3660 = vmatpush1.msra.mxu0 0.0
        %3661 = vmatprep.subr.mxu0 0.0
        %3662 = vmatpush1.msra.mxu0 0.0
        %3663 = vmatprep.subr.mxu0 0.0
        %3664 = vmatpush1.msra.mxu0 0.0
        %3665 = vmatprep.subr.mxu0 0.0
        %3666 = vmatpush1.msra.mxu0 0.0
        %3667 = vmatprep.subr.mxu0 0.0
        %3668 = vmatpush1.msra.mxu0 0.0
        %3669 = vmatprep.subr.mxu0 0.0
        %3670 = vmatpush1.msra.mxu0 0.0
        %3671 = vmatprep.subr.mxu0 0.0
        %3672 = vmatpush1.msra.mxu0 0.0
        %3673 = vmatprep.subr.mxu0 0.0
        %3674 = vmatpush1.msra.mxu0 0.0
        %3675 = vmatprep.subr.mxu0 0.0
        %3676 = vmatpush1.msra.mxu0 0.0
        %3677 = vmatprep.subr.mxu0 0.0
        %3678 = vmatpush1.msra.mxu0 0.0
        %3679 = vmatprep.subr.mxu0 0.0
        %3680 = vmatpush1.msra.mxu0 0.0
        %3681 = vmatprep.subr.mxu0 0.0
        %3682 = vmatpush1.msra.mxu0 0.0
        %3683 = vmatprep.subr.mxu0 0.0
        %3684 = vmatpush1.msra.mxu0 0.0
        %3685 = vmatprep.subr.mxu0 0.0
        %3686 = vmatpush1.msra.mxu0 0.0
        %3687 = vmatprep.subr.mxu0 0.0
        %3688 = vmatpush1.msra.mxu0 0.0
        %3689 = vmatprep.subr.mxu0 0.0
        %3690 = vmatpush1.msra.mxu0 0.0
        %3691 = vmatprep.subr.mxu0 0.0
        %3692 = vmatpush1.msra.mxu0 0.0
        %3693 = vmatprep.subr.mxu0 0.0
        %3694 = vmatpush1.msra.mxu0 0.0
        %3695 = vmatprep.subr.mxu0 0.0
        %3696 = vmatpush1.msra.mxu0 0.0
        %3697 = vmatprep.mubr.f32.mxu0 0.0
        %3698 = vmatmul.mubr.f32.gmra.mrb[0].mxu0 %v3610
        %v3699 = vpop.f32.mrb[0].mxu0
        %v3700 = vadd.f32 0.0, %v3699
        %v3701 = vpop.f32.mrb[0].mxu0
        %3702 = vmatprep.mubr.f32.mxu0 0.0
        %3703 = vmatmul.mubr.f32.gmra.mrb[0].mxu0 %v3613
        %v3704 = vpop.f32.mrb[0].mxu0
        %v3705 = vadd.f32 0.0, %v3704
        %v3706 = vpop.f32.mrb[0].mxu0
        %3707 = vmatprep.mubr.f32.mxu0 0.0
        %3708 = vmatmul.mubr.f32.gmra.mrb[0].mxu0 %v3616
        %v3709 = vpop.f32.mrb[0].mxu0
        %v3710 = vadd.f32 0.0, %v3709
        %v3711 = vpop.f32.mrb[0].mxu0
        %3712 = vmatprep.mubr.f32.mxu0 0.0
        %3713 = vmatmul.mubr.f32.gmra.mrb[0].mxu0 %v3619
        %v3714 = vpop.f32.mrb[0].mxu0
        %v3715 = vadd.f32 0.0, %v3714
        %v3716 = vpop.f32.mrb[0].mxu0
        %3717 = vmatprep.mubr.f32.mxu0 0.0
        %3718 = vmatmul.mubr.f32.gmra.mrb[0].mxu0 %v3622
        %v3719 = vpop.f32.mrb[0].mxu0
        %v3720 = vadd.f32 0.0, %v3719
        %v3721 = vpop.f32.mrb[0].mxu0
        %3722 = vmatprep.mubr.f32.mxu0 0.0
        %3723 = vmatmul.mubr.f32.gmra.mrb[0].mxu0 %v3625
        %v3724 = vpop.f32.mrb[0].mxu0
        %v3725 = vadd.f32 0.0, %v3724
        %v3726 = vpop.f32.mrb[0].mxu0
        %3727 = vmatprep.mubr.f32.mxu0 0.0
        %3728 = vmatmul.mubr.f32.gmra.mrb[0].mxu0 %v3628
        %v3729 = vpop.f32.mrb[0].mxu0
        %v3730 = vadd.f32 0.0, %v3729
        %v3731 = vpop.f32.mrb[0].mxu0
        %3732 = vmatprep.mubr.f32.mxu0 0.0
        %3733 = vmatmul.mubr.f32.gmra.mrb[0].mxu0 %v3631
        %v3734 = vpop.f32.mrb[0].mxu0
        %v3735 = vadd.f32 0.0, %v3734
        %v3736 = vpop.f32.mrb[0].mxu0
        %3737 = vdwg.mxu0
        %v3739 = vsel %vm2209, %v3589, 0
        %v3742 = vsel %vm2209, %v3590, 0
        %v3745 = vsel %vm2209, %v3591, 0
        %v3748 = vsel %vm2209, %v3592, 0
        %v3751 = vsel %vm2209, %v3593, 0
        %v3754 = vsel %vm2209, %v3594, 0
        %v3757 = vsel %vm2209, %v3595, 0
        %v3760 = vsel %vm2209, %v3596, 0
        %3762 = vmatprep.subr.mxu0 0.0
        %3763 = vmatpush1.msra.mxu0 %v3605
        %3764 = vmatprep.subr.mxu0 0.0
        %3765 = vmatpush1.msra.mxu0 %v3606
        %3766 = vmatprep.subr.mxu0 0.0
        %3767 = vmatpush1.msra.mxu0 0.0
        %3768 = vmatprep.subr.mxu0 0.0
        %3769 = vmatpush1.msra.mxu0 0.0
        %3770 = vmatprep.subr.mxu0 0.0
        %3771 = vmatpush1.msra.mxu0 0.0
        %3772 = vmatprep.subr.mxu0 0.0
        %3773 = vmatpush1.msra.mxu0 0.0
        %3774 = vmatprep.subr.mxu0 0.0
        %3775 = vmatpush1.msra.mxu0 0.0
        %3776 = vmatprep.subr.mxu0 0.0
        %3777 = vmatpush1.msra.mxu0 0.0
        %3778 = vmatprep.subr.mxu0 0.0
        %3779 = vmatpush1.msra.mxu0 0.0
        %3780 = vmatprep.subr.mxu0 0.0
        %3781 = vmatpush1.msra.mxu0 0.0
        %3782 = vmatprep.subr.mxu0 0.0
        %3783 = vmatpush1.msra.mxu0 0.0
        %3784 = vmatprep.subr.mxu0 0.0
        %3785 = vmatpush1.msra.mxu0 0.0
        %3786 = vmatprep.subr.mxu0 0.0
        %3787 = vmatpush1.msra.mxu0 0.0
        %3788 = vmatprep.subr.mxu0 0.0
        %3789 = vmatpush1.msra.mxu0 0.0
        %3790 = vmatprep.subr.mxu0 0.0
        %3791 = vmatpush1.msra.mxu0 0.0
        %3792 = vmatprep.subr.mxu0 0.0
        %3793 = vmatpush1.msra.mxu0 0.0
        %3794 = vmatprep.subr.mxu0 0.0
        %3795 = vmatpush1.msra.mxu0 0.0
        %3796 = vmatprep.subr.mxu0 0.0
        %3797 = vmatpush1.msra.mxu0 0.0
        %3798 = vmatprep.subr.mxu0 0.0
        %3799 = vmatpush1.msra.mxu0 0.0
        %3800 = vmatprep.subr.mxu0 0.0
        %3801 = vmatpush1.msra.mxu0 0.0
        %3802 = vmatprep.subr.mxu0 0.0
        %3803 = vmatpush1.msra.mxu0 0.0
        %3804 = vmatprep.subr.mxu0 0.0
        %3805 = vmatpush1.msra.mxu0 0.0
        %3806 = vmatprep.subr.mxu0 0.0
        %3807 = vmatpush1.msra.mxu0 0.0
        %3808 = vmatprep.subr.mxu0 0.0
        %3809 = vmatpush1.msra.mxu0 0.0
        %3810 = vmatprep.subr.mxu0 0.0
        %3811 = vmatpush1.msra.mxu0 0.0
        %3812 = vmatprep.subr.mxu0 0.0
        %3813 = vmatpush1.msra.mxu0 0.0
        %3814 = vmatprep.subr.mxu0 0.0
        %3815 = vmatpush1.msra.mxu0 0.0
        %3816 = vmatprep.subr.mxu0 0.0
        %3817 = vmatpush1.msra.mxu0 0.0
        %3818 = vmatprep.subr.mxu0 0.0
        %3819 = vmatpush1.msra.mxu0 0.0
        %3820 = vmatprep.subr.mxu0 0.0
        %3821 = vmatpush1.msra.mxu0 0.0
        %3822 = vmatprep.subr.mxu0 0.0
        %3823 = vmatpush1.msra.mxu0 0.0
        %3824 = vmatprep.subr.mxu0 0.0
        %3825 = vmatpush1.msra.mxu0 0.0
        %3826 = vmatprep.mubr.f32.mxu0 0.0
        %3827 = vmatmul.mubr.f32.gmra.mrb[0].mxu0 %v3739
        %v3828 = vpop.f32.mrb[0].mxu0
        %v3829 = vadd.f32 %v3700, %v3828
        %v3830 = vpop.f32.mrb[0].mxu0
        %3831 = vmatprep.mubr.f32.mxu0 0.0
        %3832 = vmatmul.mubr.f32.gmra.mrb[0].mxu0 %v3742
        %v3833 = vpop.f32.mrb[0].mxu0
        %v3834 = vadd.f32 %v3705, %v3833
        %v3835 = vpop.f32.mrb[0].mxu0
        %3836 = vmatprep.mubr.f32.mxu0 0.0
        %3837 = vmatmul.mubr.f32.gmra.mrb[0].mxu0 %v3745
        %v3838 = vpop.f32.mrb[0].mxu0
        %v3839 = vadd.f32 %v3710, %v3838
        %v3840 = vpop.f32.mrb[0].mxu0
        %3841 = vmatprep.mubr.f32.mxu0 0.0
        %3842 = vmatmul.mubr.f32.gmra.mrb[0].mxu0 %v3748
        %v3843 = vpop.f32.mrb[0].mxu0
        %v3844 = vadd.f32 %v3715, %v3843
        %v3845 = vpop.f32.mrb[0].mxu0
        %3846 = vmatprep.mubr.f32.mxu0 0.0
        %3847 = vmatmul.mubr.f32.gmra.mrb[0].mxu0 %v3751
        %v3848 = vpop.f32.mrb[0].mxu0
        %v3849 = vadd.f32 %v3720, %v3848
        %v3850 = vpop.f32.mrb[0].mxu0
        %3851 = vmatprep.mubr.f32.mxu0 0.0
        %3852 = vmatmul.mubr.f32.gmra.mrb[0].mxu0 %v3754
        %v3853 = vpop.f32.mrb[0].mxu0
        %v3854 = vadd.f32 %v3725, %v3853
        %v3855 = vpop.f32.mrb[0].mxu0
        %3856 = vmatprep.mubr.f32.mxu0 0.0
        %3857 = vmatmul.mubr.f32.gmra.mrb[0].mxu0 %v3757
        %v3858 = vpop.f32.mrb[0].mxu0
        %v3859 = vadd.f32 %v3730, %v3858
        %v3860 = vpop.f32.mrb[0].mxu0
        %3861 = vmatprep.mubr.f32.mxu0 0.0
        %3862 = vmatmul.mubr.f32.gmra.mrb[0].mxu0 %v3760
        %v3863 = vpop.f32.mrb[0].mxu0
        %v3864 = vadd.f32 %v3735, %v3863
        %v3865 = vpop.f32.mrb[0].mxu0
        %3866 = vdwg.mxu0
        %v3867 = vld [vmem:[#allocation4] sm:$0xff]
        %v3868 = vld [vmem:[#allocation4 + $0x8] sm:$0xff]
        %v3869 = vld [vmem:[#allocation4 + $0x10] sm:$0xff]
        %v3870 = vld [vmem:[#allocation4 + $0x18] sm:$0xff]
        %v3871 = vld [vmem:[#allocation4 + $0x20] sm:$0xff]
        %v3872 = vld [vmem:[#allocation4 + $0x28] sm:$0xff]
        %v3873 = vld [vmem:[#allocation4 + $0x30] sm:$0xff]
        %v3874 = vld [vmem:[#allocation4 + $0x38] sm:$0xff]
        %v3875 = vadd.f32 %v3829, %v3867
        %v3876 = vadd.f32 %v3834, %v3868
        %v3877 = vadd.f32 %v3839, %v3869
        %v3878 = vadd.f32 %v3844, %v3870
        %v3879 = vadd.f32 %v3849, %v3871
        %v3880 = vadd.f32 %v3854, %v3872
        %v3881 = vadd.f32 %v3859, %v3873
        %v3882 = vadd.f32 %v3864, %v3874
        %v3883 = vmax.f32 %v3875, 0.0
        %v3884 = vmax.f32 %v3876, 0.0
        %v3885 = vmax.f32 %v3877, 0.0
        %v3886 = vmax.f32 %v3878, 0.0
        %v3887 = vmax.f32 %v3879, 0.0
        %v3888 = vmax.f32 %v3880, 0.0
        %v3889 = vmax.f32 %v3881, 0.0
        %v3890 = vmax.f32 %v3882, 0.0
        %s3891 = scalar_lea.vmem [#allocation3], 16
        %vm3892 = vcmask 523264
        %3893 = vst.msk [vmem:[%s3891 + $0x1] sm:$0xff] %vm3892, %v3883
        %3894 = vst.msk [vmem:[%s3891 + $0x11] sm:$0xff] %vm3892, %v3884
        %3895 = vst.msk [vmem:[%s3891 + $0x21] sm:$0xff] %vm3892, %v3885
        %3896 = vst.msk [vmem:[%s3891 + $0x31] sm:$0xff] %vm3892, %v3886
        %3897 = vst.msk [vmem:[%s3891 + $0x41] sm:$0xff] %vm3892, %v3887
        %3898 = vst.msk [vmem:[%s3891 + $0x51] sm:$0xff] %vm3892, %v3888
        %3899 = vst.msk [vmem:[%s3891 + $0x61] sm:$0xff] %vm3892, %v3889
        %3900 = vst.msk [vmem:[%s3891 + $0x71] sm:$0xff] %vm3892, %v3890
        %v3901 = vld [vmem:[#allocation3] sm:$0xff]
        %v3902 = vld [vmem:[#allocation3 + $0x10] sm:$0xff]
        %v3903 = vld [vmem:[#allocation3 + $0x20] sm:$0xff]
        %v3904 = vld [vmem:[#allocation3 + $0x30] sm:$0xff]
        %v3905 = vld [vmem:[#allocation3 + $0x40] sm:$0xff]
        %v3906 = vld [vmem:[#allocation3 + $0x50] sm:$0xff]
        %v3907 = vld [vmem:[#allocation3 + $0x60] sm:$0xff]
        %v3908 = vld [vmem:[#allocation3 + $0x70] sm:$0xff]
        %v3909 = vld [vmem:[%s9] sm:$0xff]
        %v3910 = vld [vmem:[%s9 + $0x8] sm:$0xff]
        %v3911 = vld [vmem:[%s9 + $0x10] sm:$0xff]
        %v3912 = vld [vmem:[%s9 + $0x18] sm:$0xff]
        %v3913 = vld [vmem:[%s9 + $0x20] sm:$0xff]
        %v3914 = vld [vmem:[%s9 + $0x28] sm:$0xff]
        %v3915 = vld [vmem:[%s9 + $0x30] sm:$0xff]
        %v3916 = vld [vmem:[%s9 + $0x38] sm:$0xff]
        %v3917 = vld [vmem:[#allocation3 + $0x1] sm:$0xff]
        %v3918 = vld [vmem:[#allocation3 + $0x11] sm:$0xff]
        %v3919 = vld [vmem:[#allocation3 + $0x21] sm:$0xff]
        %v3920 = vld [vmem:[#allocation3 + $0x31] sm:$0xff]
        %v3921 = vld [vmem:[#allocation3 + $0x41] sm:$0xff]
        %v3922 = vld [vmem:[#allocation3 + $0x51] sm:$0xff]
        %v3923 = vld [vmem:[#allocation3 + $0x61] sm:$0xff]
        %v3924 = vld [vmem:[#allocation3 + $0x71] sm:$0xff]
        %s3925 = scalar_lea.vmem %s9, 64
        %v3926 = vld [vmem:[%s3925] sm:$0xff]
        %v3927 = vld [vmem:[%s3925 + $0x8] sm:$0xff]
        %v3928 = vld [vmem:[%s3925 + $0x10] sm:$0xff]
        %v3929 = vld [vmem:[%s3925 + $0x18] sm:$0xff]
        %v3930 = vld [vmem:[%s3925 + $0x20] sm:$0xff]
        %v3931 = vld [vmem:[%s3925 + $0x28] sm:$0xff]
        %v3932 = vld [vmem:[%s3925 + $0x30] sm:$0xff]
        %v3933 = vld [vmem:[%s3925 + $0x38] sm:$0xff]
        %v3935 = vsel %vm3892, %v3917, 0
        %v3938 = vsel %vm3892, %v3918, 0
        %v3941 = vsel %vm3892, %v3919, 0
        %v3944 = vsel %vm3892, %v3920, 0
        %v3947 = vsel %vm3892, %v3921, 0
        %v3950 = vsel %vm3892, %v3922, 0
        %v3953 = vsel %vm3892, %v3923, 0
        %v3956 = vsel %vm3892, %v3924, 0
        %3958 = vmatprep.subr.mxu0 0.0
        %3959 = vmatpush1.msra.mxu0 %v3926
        %3960 = vmatprep.subr.mxu0 0.0
        %3961 = vmatpush1.msra.mxu0 %v3927
        %3962 = vmatprep.subr.mxu0 0.0
        %3963 = vmatpush1.msra.mxu0 %v3928
        %3964 = vmatprep.subr.mxu0 0.0
        %3965 = vmatpush1.msra.mxu0 %v3929
        %3966 = vmatprep.subr.mxu0 0.0
        %3967 = vmatpush1.msra.mxu0 %v3930
        %3968 = vmatprep.subr.mxu0 0.0
        %3969 = vmatpush1.msra.mxu0 %v3931
        %3970 = vmatprep.subr.mxu0 0.0
        %3971 = vmatpush1.msra.mxu0 %v3932
        %3972 = vmatprep.subr.mxu0 0.0
        %3973 = vmatpush1.msra.mxu0 %v3933
        %3974 = vmatprep.subr.mxu0 0.0
        %3975 = vmatpush1.msra.mxu0 0.0
        %3976 = vmatprep.subr.mxu0 0.0
        %3977 = vmatpush1.msra.mxu0 0.0
        %3978 = vmatprep.subr.mxu0 0.0
        %3979 = vmatpush1.msra.mxu0 0.0
        %3980 = vmatprep.subr.mxu0 0.0
        %3981 = vmatpush1.msra.mxu0 0.0
        %3982 = vmatprep.subr.mxu0 0.0
        %3983 = vmatpush1.msra.mxu0 0.0
        %3984 = vmatprep.subr.mxu0 0.0
        %3985 = vmatpush1.msra.mxu0 0.0
        %3986 = vmatprep.subr.mxu0 0.0
        %3987 = vmatpush1.msra.mxu0 0.0
        %3988 = vmatprep.subr.mxu0 0.0
        %3989 = vmatpush1.msra.mxu0 0.0
        %3990 = vmatprep.subr.mxu0 0.0
        %3991 = vmatpush1.msra.mxu0 0.0
        %3992 = vmatprep.subr.mxu0 0.0
        %3993 = vmatpush1.msra.mxu0 0.0
        %3994 = vmatprep.subr.mxu0 0.0
        %3995 = vmatpush1.msra.mxu0 0.0
        %3996 = vmatprep.subr.mxu0 0.0
        %3997 = vmatpush1.msra.mxu0 0.0
        %3998 = vmatprep.subr.mxu0 0.0
        %3999 = vmatpush1.msra.mxu0 0.0
        %4000 = vmatprep.subr.mxu0 0.0
        %4001 = vmatpush1.msra.mxu0 0.0
        %4002 = vmatprep.subr.mxu0 0.0
        %4003 = vmatpush1.msra.mxu0 0.0
        %4004 = vmatprep.subr.mxu0 0.0
        %4005 = vmatpush1.msra.mxu0 0.0
        %4006 = vmatprep.subr.mxu0 0.0
        %4007 = vmatpush1.msra.mxu0 0.0
        %4008 = vmatprep.subr.mxu0 0.0
        %4009 = vmatpush1.msra.mxu0 0.0
        %4010 = vmatprep.subr.mxu0 0.0
        %4011 = vmatpush1.msra.mxu0 0.0
        %4012 = vmatprep.subr.mxu0 0.0
        %4013 = vmatpush1.msra.mxu0 0.0
        %4014 = vmatprep.subr.mxu0 0.0
        %4015 = vmatpush1.msra.mxu0 0.0
        %4016 = vmatprep.subr.mxu0 0.0
        %4017 = vmatpush1.msra.mxu0 0.0
        %4018 = vmatprep.subr.mxu0 0.0
        %4019 = vmatpush1.msra.mxu0 0.0
        %4020 = vmatprep.subr.mxu0 0.0
        %4021 = vmatpush1.msra.mxu0 0.0
        %4022 = vmatprep.mubr.f32.mxu0 0.0
        %4023 = vmatmul.mubr.f32.gmra.mrb[0].mxu0 %v3935
        %v4024 = vpop.f32.mrb[0].mxu0
        %v4025 = vadd.f32 0.0, %v4024
        %v4026 = vpop.f32.mrb[0].mxu0
        %4027 = vmatprep.mubr.f32.mxu0 0.0
        %4028 = vmatmul.mubr.f32.gmra.mrb[0].mxu0 %v3938
        %v4029 = vpop.f32.mrb[0].mxu0
        %v4030 = vadd.f32 0.0, %v4029
        %v4031 = vpop.f32.mrb[0].mxu0
        %4032 = vmatprep.mubr.f32.mxu0 0.0
        %4033 = vmatmul.mubr.f32.gmra.mrb[0].mxu0 %v3941
        %v4034 = vpop.f32.mrb[0].mxu0
        %v4035 = vadd.f32 0.0, %v4034
        %v4036 = vpop.f32.mrb[0].mxu0
        %4037 = vmatprep.mubr.f32.mxu0 0.0
        %4038 = vmatmul.mubr.f32.gmra.mrb[0].mxu0 %v3944
        %v4039 = vpop.f32.mrb[0].mxu0
        %v4040 = vadd.f32 0.0, %v4039
        %v4041 = vpop.f32.mrb[0].mxu0
        %4042 = vmatprep.mubr.f32.mxu0 0.0
        %4043 = vmatmul.mubr.f32.gmra.mrb[0].mxu0 %v3947
        %v4044 = vpop.f32.mrb[0].mxu0
        %v4045 = vadd.f32 0.0, %v4044
        %v4046 = vpop.f32.mrb[0].mxu0
        %4047 = vmatprep.mubr.f32.mxu0 0.0
        %4048 = vmatmul.mubr.f32.gmra.mrb[0].mxu0 %v3950
        %v4049 = vpop.f32.mrb[0].mxu0
        %v4050 = vadd.f32 0.0, %v4049
        %v4051 = vpop.f32.mrb[0].mxu0
        %4052 = vmatprep.mubr.f32.mxu0 0.0
        %4053 = vmatmul.mubr.f32.gmra.mrb[0].mxu0 %v3953
        %v4054 = vpop.f32.mrb[0].mxu0
        %v4055 = vadd.f32 0.0, %v4054
        %v4056 = vpop.f32.mrb[0].mxu0
        %4057 = vmatprep.mubr.f32.mxu0 0.0
        %4058 = vmatmul.mubr.f32.gmra.mrb[0].mxu0 %v3956
        %v4059 = vpop.f32.mrb[0].mxu0
        %v4060 = vadd.f32 0.0, %v4059
        %v4061 = vpop.f32.mrb[0].mxu0
        %4062 = vdwg.mxu0
        %v4064 = vsel %vm3892, %v3901, 0
        %v4067 = vsel %vm3892, %v3902, 0
        %v4070 = vsel %vm3892, %v3903, 0
        %v4073 = vsel %vm3892, %v3904, 0
        %v4076 = vsel %vm3892, %v3905, 0
        %v4079 = vsel %vm3892, %v3906, 0
        %v4082 = vsel %vm3892, %v3907, 0
        %v4085 = vsel %vm3892, %v3908, 0
        %4087 = vmatprep.subr.mxu0 0.0
        %4088 = vmatpush1.msra.mxu0 %v3909
        %4089 = vmatprep.subr.mxu0 0.0
        %4090 = vmatpush1.msra.mxu0 %v3910
        %4091 = vmatprep.subr.mxu0 0.0
        %4092 = vmatpush1.msra.mxu0 %v3911
        %4093 = vmatprep.subr.mxu0 0.0
        %4094 = vmatpush1.msra.mxu0 %v3912
        %4095 = vmatprep.subr.mxu0 0.0
        %4096 = vmatpush1.msra.mxu0 %v3913
        %4097 = vmatprep.subr.mxu0 0.0
        %4098 = vmatpush1.msra.mxu0 %v3914
        %4099 = vmatprep.subr.mxu0 0.0
        %4100 = vmatpush1.msra.mxu0 %v3915
        %4101 = vmatprep.subr.mxu0 0.0
        %4102 = vmatpush1.msra.mxu0 %v3916
        %4103 = vmatprep.subr.mxu0 0.0
        %4104 = vmatpush1.msra.mxu0 0.0
        %4105 = vmatprep.subr.mxu0 0.0
        %4106 = vmatpush1.msra.mxu0 0.0
        %4107 = vmatprep.subr.mxu0 0.0
        %4108 = vmatpush1.msra.mxu0 0.0
        %4109 = vmatprep.subr.mxu0 0.0
        %4110 = vmatpush1.msra.mxu0 0.0
        %4111 = vmatprep.subr.mxu0 0.0
        %4112 = vmatpush1.msra.mxu0 0.0
        %4113 = vmatprep.subr.mxu0 0.0
        %4114 = vmatpush1.msra.mxu0 0.0
        %4115 = vmatprep.subr.mxu0 0.0
        %4116 = vmatpush1.msra.mxu0 0.0
        %4117 = vmatprep.subr.mxu0 0.0
        %4118 = vmatpush1.msra.mxu0 0.0
        %4119 = vmatprep.subr.mxu0 0.0
        %4120 = vmatpush1.msra.mxu0 0.0
        %4121 = vmatprep.subr.mxu0 0.0
        %4122 = vmatpush1.msra.mxu0 0.0
        %4123 = vmatprep.subr.mxu0 0.0
        %4124 = vmatpush1.msra.mxu0 0.0
        %4125 = vmatprep.subr.mxu0 0.0
        %4126 = vmatpush1.msra.mxu0 0.0
        %4127 = vmatprep.subr.mxu0 0.0
        %4128 = vmatpush1.msra.mxu0 0.0
        %4129 = vmatprep.subr.mxu0 0.0
        %4130 = vmatpush1.msra.mxu0 0.0
        %4131 = vmatprep.subr.mxu0 0.0
        %4132 = vmatpush1.msra.mxu0 0.0
        %4133 = vmatprep.subr.mxu0 0.0
        %4134 = vmatpush1.msra.mxu0 0.0
        %4135 = vmatprep.subr.mxu0 0.0
        %4136 = vmatpush1.msra.mxu0 0.0
        %4137 = vmatprep.subr.mxu0 0.0
        %4138 = vmatpush1.msra.mxu0 0.0
        %4139 = vmatprep.subr.mxu0 0.0
        %4140 = vmatpush1.msra.mxu0 0.0
        %4141 = vmatprep.subr.mxu0 0.0
        %4142 = vmatpush1.msra.mxu0 0.0
        %4143 = vmatprep.subr.mxu0 0.0
        %4144 = vmatpush1.msra.mxu0 0.0
        %4145 = vmatprep.subr.mxu0 0.0
        %4146 = vmatpush1.msra.mxu0 0.0
        %4147 = vmatprep.subr.mxu0 0.0
        %4148 = vmatpush1.msra.mxu0 0.0
        %4149 = vmatprep.subr.mxu0 0.0
        %4150 = vmatpush1.msra.mxu0 0.0
        %4151 = vmatprep.mubr.f32.mxu0 0.0
        %4152 = vmatmul.mubr.f32.gmra.mrb[0].mxu0 %v4064
        %v4153 = vpop.f32.mrb[0].mxu0
        %v4154 = vadd.f32 %v4025, %v4153
        %v4155 = vpop.f32.mrb[0].mxu0
        %4156 = vmatprep.mubr.f32.mxu0 0.0
        %4157 = vmatmul.mubr.f32.gmra.mrb[0].mxu0 %v4067
        %v4158 = vpop.f32.mrb[0].mxu0
        %v4159 = vadd.f32 %v4030, %v4158
        %v4160 = vpop.f32.mrb[0].mxu0
        %4161 = vmatprep.mubr.f32.mxu0 0.0
        %4162 = vmatmul.mubr.f32.gmra.mrb[0].mxu0 %v4070
        %v4163 = vpop.f32.mrb[0].mxu0
        %v4164 = vadd.f32 %v4035, %v4163
        %v4165 = vpop.f32.mrb[0].mxu0
        %4166 = vmatprep.mubr.f32.mxu0 0.0
        %4167 = vmatmul.mubr.f32.gmra.mrb[0].mxu0 %v4073
        %v4168 = vpop.f32.mrb[0].mxu0
        %v4169 = vadd.f32 %v4040, %v4168
        %v4170 = vpop.f32.mrb[0].mxu0
        %4171 = vmatprep.mubr.f32.mxu0 0.0
        %4172 = vmatmul.mubr.f32.gmra.mrb[0].mxu0 %v4076
        %v4173 = vpop.f32.mrb[0].mxu0
        %v4174 = vadd.f32 %v4045, %v4173
        %v4175 = vpop.f32.mrb[0].mxu0
        %4176 = vmatprep.mubr.f32.mxu0 0.0
        %4177 = vmatmul.mubr.f32.gmra.mrb[0].mxu0 %v4079
        %v4178 = vpop.f32.mrb[0].mxu0
        %v4179 = vadd.f32 %v4050, %v4178
        %v4180 = vpop.f32.mrb[0].mxu0
        %4181 = vmatprep.mubr.f32.mxu0 0.0
        %4182 = vmatmul.mubr.f32.gmra.mrb[0].mxu0 %v4082
        %v4183 = vpop.f32.mrb[0].mxu0
        %v4184 = vadd.f32 %v4055, %v4183
        %v4185 = vpop.f32.mrb[0].mxu0
        %4186 = vmatprep.mubr.f32.mxu0 0.0
        %4187 = vmatmul.mubr.f32.gmra.mrb[0].mxu0 %v4085
        %v4188 = vpop.f32.mrb[0].mxu0
        %v4189 = vadd.f32 %v4060, %v4188
        %v4190 = vpop.f32.mrb[0].mxu0
        %4191 = vdwg.mxu0
        %v4192 = vld [vmem:[#allocation3 + $0x2] sm:$0xff]
        %v4193 = vld [vmem:[#allocation3 + $0x12] sm:$0xff]
        %v4194 = vld [vmem:[#allocation3 + $0x22] sm:$0xff]
        %v4195 = vld [vmem:[#allocation3 + $0x32] sm:$0xff]
        %v4196 = vld [vmem:[#allocation3 + $0x42] sm:$0xff]
        %v4197 = vld [vmem:[#allocation3 + $0x52] sm:$0xff]
        %v4198 = vld [vmem:[#allocation3 + $0x62] sm:$0xff]
        %v4199 = vld [vmem:[#allocation3 + $0x72] sm:$0xff]
        %s4200 = scalar_lea.vmem %s9, 128
        %v4201 = vld [vmem:[%s4200] sm:$0xff]
        %v4202 = vld [vmem:[%s4200 + $0x8] sm:$0xff]
        %v4203 = vld [vmem:[%s4200 + $0x10] sm:$0xff]
        %v4204 = vld [vmem:[%s4200 + $0x18] sm:$0xff]
        %v4205 = vld [vmem:[%s4200 + $0x20] sm:$0xff]
        %v4206 = vld [vmem:[%s4200 + $0x28] sm:$0xff]
        %v4207 = vld [vmem:[%s4200 + $0x30] sm:$0xff]
        %v4208 = vld [vmem:[%s4200 + $0x38] sm:$0xff]
        %v4210 = vsel %vm3892, %v4192, 0
        %v4213 = vsel %vm3892, %v4193, 0
        %v4216 = vsel %vm3892, %v4194, 0
        %v4219 = vsel %vm3892, %v4195, 0
        %v4222 = vsel %vm3892, %v4196, 0
        %v4225 = vsel %vm3892, %v4197, 0
        %v4228 = vsel %vm3892, %v4198, 0
        %v4231 = vsel %vm3892, %v4199, 0
        %4233 = vmatprep.subr.mxu0 0.0
        %4234 = vmatpush1.msra.mxu0 %v4201
        %4235 = vmatprep.subr.mxu0 0.0
        %4236 = vmatpush1.msra.mxu0 %v4202
        %4237 = vmatprep.subr.mxu0 0.0
        %4238 = vmatpush1.msra.mxu0 %v4203
        %4239 = vmatprep.subr.mxu0 0.0
        %4240 = vmatpush1.msra.mxu0 %v4204
        %4241 = vmatprep.subr.mxu0 0.0
        %4242 = vmatpush1.msra.mxu0 %v4205
        %4243 = vmatprep.subr.mxu0 0.0
        %4244 = vmatpush1.msra.mxu0 %v4206
        %4245 = vmatprep.subr.mxu0 0.0
        %4246 = vmatpush1.msra.mxu0 %v4207
        %4247 = vmatprep.subr.mxu0 0.0
        %4248 = vmatpush1.msra.mxu0 %v4208
        %4249 = vmatprep.subr.mxu0 0.0
        %4250 = vmatpush1.msra.mxu0 0.0
        %4251 = vmatprep.subr.mxu0 0.0
        %4252 = vmatpush1.msra.mxu0 0.0
        %4253 = vmatprep.subr.mxu0 0.0
        %4254 = vmatpush1.msra.mxu0 0.0
        %4255 = vmatprep.subr.mxu0 0.0
        %4256 = vmatpush1.msra.mxu0 0.0
        %4257 = vmatprep.subr.mxu0 0.0
        %4258 = vmatpush1.msra.mxu0 0.0
        %4259 = vmatprep.subr.mxu0 0.0
        %4260 = vmatpush1.msra.mxu0 0.0
        %4261 = vmatprep.subr.mxu0 0.0
        %4262 = vmatpush1.msra.mxu0 0.0
        %4263 = vmatprep.subr.mxu0 0.0
        %4264 = vmatpush1.msra.mxu0 0.0
        %4265 = vmatprep.subr.mxu0 0.0
        %4266 = vmatpush1.msra.mxu0 0.0
        %4267 = vmatprep.subr.mxu0 0.0
        %4268 = vmatpush1.msra.mxu0 0.0
        %4269 = vmatprep.subr.mxu0 0.0
        %4270 = vmatpush1.msra.mxu0 0.0
        %4271 = vmatprep.subr.mxu0 0.0
        %4272 = vmatpush1.msra.mxu0 0.0
        %4273 = vmatprep.subr.mxu0 0.0
        %4274 = vmatpush1.msra.mxu0 0.0
        %4275 = vmatprep.subr.mxu0 0.0
        %4276 = vmatpush1.msra.mxu0 0.0
        %4277 = vmatprep.subr.mxu0 0.0
        %4278 = vmatpush1.msra.mxu0 0.0
        %4279 = vmatprep.subr.mxu0 0.0
        %4280 = vmatpush1.msra.mxu0 0.0
        %4281 = vmatprep.subr.mxu0 0.0
        %4282 = vmatpush1.msra.mxu0 0.0
        %4283 = vmatprep.subr.mxu0 0.0
        %4284 = vmatpush1.msra.mxu0 0.0
        %4285 = vmatprep.subr.mxu0 0.0
        %4286 = vmatpush1.msra.mxu0 0.0
        %4287 = vmatprep.subr.mxu0 0.0
        %4288 = vmatpush1.msra.mxu0 0.0
        %4289 = vmatprep.subr.mxu0 0.0
        %4290 = vmatpush1.msra.mxu0 0.0
        %4291 = vmatprep.subr.mxu0 0.0
        %4292 = vmatpush1.msra.mxu0 0.0
        %4293 = vmatprep.subr.mxu0 0.0
        %4294 = vmatpush1.msra.mxu0 0.0
        %4295 = vmatprep.subr.mxu0 0.0
        %4296 = vmatpush1.msra.mxu0 0.0
        %4297 = vmatprep.mubr.f32.mxu0 0.0
        %4298 = vmatmul.mubr.f32.gmra.mrb[0].mxu0 %v4210
        %v4299 = vpop.f32.mrb[0].mxu0
        %v4300 = vadd.f32 0.0, %v4299
        %v4301 = vpop.f32.mrb[0].mxu0
        %4302 = vmatprep.mubr.f32.mxu0 0.0
        %4303 = vmatmul.mubr.f32.gmra.mrb[0].mxu0 %v4213
        %v4304 = vpop.f32.mrb[0].mxu0
        %v4305 = vadd.f32 0.0, %v4304
        %v4306 = vpop.f32.mrb[0].mxu0
        %4307 = vmatprep.mubr.f32.mxu0 0.0
        %4308 = vmatmul.mubr.f32.gmra.mrb[0].mxu0 %v4216
        %v4309 = vpop.f32.mrb[0].mxu0
        %v4310 = vadd.f32 0.0, %v4309
        %v4311 = vpop.f32.mrb[0].mxu0
        %4312 = vmatprep.mubr.f32.mxu0 0.0
        %4313 = vmatmul.mubr.f32.gmra.mrb[0].mxu0 %v4219
        %v4314 = vpop.f32.mrb[0].mxu0
        %v4315 = vadd.f32 0.0, %v4314
        %v4316 = vpop.f32.mrb[0].mxu0
        %4317 = vmatprep.mubr.f32.mxu0 0.0
        %4318 = vmatmul.mubr.f32.gmra.mrb[0].mxu0 %v4222
        %v4319 = vpop.f32.mrb[0].mxu0
        %v4320 = vadd.f32 0.0, %v4319
        %v4321 = vpop.f32.mrb[0].mxu0
        %4322 = vmatprep.mubr.f32.mxu0 0.0
        %4323 = vmatmul.mubr.f32.gmra.mrb[0].mxu0 %v4225
        %v4324 = vpop.f32.mrb[0].mxu0
        %v4325 = vadd.f32 0.0, %v4324
        %v4326 = vpop.f32.mrb[0].mxu0
        %4327 = vmatprep.mubr.f32.mxu0 0.0
        %4328 = vmatmul.mubr.f32.gmra.mrb[0].mxu0 %v4228
        %v4329 = vpop.f32.mrb[0].mxu0
        %v4330 = vadd.f32 0.0, %v4329
        %v4331 = vpop.f32.mrb[0].mxu0
        %4332 = vmatprep.mubr.f32.mxu0 0.0
        %4333 = vmatmul.mubr.f32.gmra.mrb[0].mxu0 %v4231
        %v4334 = vpop.f32.mrb[0].mxu0
        %v4335 = vadd.f32 0.0, %v4334
        %v4336 = vpop.f32.mrb[0].mxu0
        %4337 = vdwg.mxu0
        %v4338 = vadd.f32 %v4154, %v4300
        %v4339 = vadd.f32 %v4159, %v4305
        %v4340 = vadd.f32 %v4164, %v4310
        %v4341 = vadd.f32 %v4169, %v4315
        %v4342 = vadd.f32 %v4174, %v4320
        %v4343 = vadd.f32 %v4179, %v4325
        %v4344 = vadd.f32 %v4184, %v4330
        %v4345 = vadd.f32 %v4189, %v4335
        %v4346 = vld [vmem:[%s3891] sm:$0xff]
        %v4347 = vld [vmem:[%s3891 + $0x10] sm:$0xff]
        %v4348 = vld [vmem:[%s3891 + $0x20] sm:$0xff]
        %v4349 = vld [vmem:[%s3891 + $0x30] sm:$0xff]
        %v4350 = vld [vmem:[%s3891 + $0x40] sm:$0xff]
        %v4351 = vld [vmem:[%s3891 + $0x50] sm:$0xff]
        %v4352 = vld [vmem:[%s3891 + $0x60] sm:$0xff]
        %v4353 = vld [vmem:[%s3891 + $0x70] sm:$0xff]
        %s4354 = scalar_lea.vmem %s9, 192
        %v4355 = vld [vmem:[%s4354] sm:$0xff]
        %v4356 = vld [vmem:[%s4354 + $0x8] sm:$0xff]
        %v4357 = vld [vmem:[%s4354 + $0x10] sm:$0xff]
        %v4358 = vld [vmem:[%s4354 + $0x18] sm:$0xff]
        %v4359 = vld [vmem:[%s4354 + $0x20] sm:$0xff]
        %v4360 = vld [vmem:[%s4354 + $0x28] sm:$0xff]
        %v4361 = vld [vmem:[%s4354 + $0x30] sm:$0xff]
        %v4362 = vld [vmem:[%s4354 + $0x38] sm:$0xff]
        %v4364 = vsel %vm3892, %v4346, 0
        %v4367 = vsel %vm3892, %v4347, 0
        %v4370 = vsel %vm3892, %v4348, 0
        %v4373 = vsel %vm3892, %v4349, 0
        %v4376 = vsel %vm3892, %v4350, 0
        %v4379 = vsel %vm3892, %v4351, 0
        %v4382 = vsel %vm3892, %v4352, 0
        %v4385 = vsel %vm3892, %v4353, 0
        %4387 = vmatprep.subr.mxu0 0.0
        %4388 = vmatpush1.msra.mxu0 %v4355
        %4389 = vmatprep.subr.mxu0 0.0
        %4390 = vmatpush1.msra.mxu0 %v4356
        %4391 = vmatprep.subr.mxu0 0.0
        %4392 = vmatpush1.msra.mxu0 %v4357
        %4393 = vmatprep.subr.mxu0 0.0
        %4394 = vmatpush1.msra.mxu0 %v4358
        %4395 = vmatprep.subr.mxu0 0.0
        %4396 = vmatpush1.msra.mxu0 %v4359
        %4397 = vmatprep.subr.mxu0 0.0
        %4398 = vmatpush1.msra.mxu0 %v4360
        %4399 = vmatprep.subr.mxu0 0.0
        %4400 = vmatpush1.msra.mxu0 %v4361
        %4401 = vmatprep.subr.mxu0 0.0
        %4402 = vmatpush1.msra.mxu0 %v4362
        %4403 = vmatprep.subr.mxu0 0.0
        %4404 = vmatpush1.msra.mxu0 0.0
        %4405 = vmatprep.subr.mxu0 0.0
        %4406 = vmatpush1.msra.mxu0 0.0
        %4407 = vmatprep.subr.mxu0 0.0
        %4408 = vmatpush1.msra.mxu0 0.0
        %4409 = vmatprep.subr.mxu0 0.0
        %4410 = vmatpush1.msra.mxu0 0.0
        %4411 = vmatprep.subr.mxu0 0.0
        %4412 = vmatpush1.msra.mxu0 0.0
        %4413 = vmatprep.subr.mxu0 0.0
        %4414 = vmatpush1.msra.mxu0 0.0
        %4415 = vmatprep.subr.mxu0 0.0
        %4416 = vmatpush1.msra.mxu0 0.0
        %4417 = vmatprep.subr.mxu0 0.0
        %4418 = vmatpush1.msra.mxu0 0.0
        %4419 = vmatprep.subr.mxu0 0.0
        %4420 = vmatpush1.msra.mxu0 0.0
        %4421 = vmatprep.subr.mxu0 0.0
        %4422 = vmatpush1.msra.mxu0 0.0
        %4423 = vmatprep.subr.mxu0 0.0
        %4424 = vmatpush1.msra.mxu0 0.0
        %4425 = vmatprep.subr.mxu0 0.0
        %4426 = vmatpush1.msra.mxu0 0.0
        %4427 = vmatprep.subr.mxu0 0.0
        %4428 = vmatpush1.msra.mxu0 0.0
        %4429 = vmatprep.subr.mxu0 0.0
        %4430 = vmatpush1.msra.mxu0 0.0
        %4431 = vmatprep.subr.mxu0 0.0
        %4432 = vmatpush1.msra.mxu0 0.0
        %4433 = vmatprep.subr.mxu0 0.0
        %4434 = vmatpush1.msra.mxu0 0.0
        %4435 = vmatprep.subr.mxu0 0.0
        %4436 = vmatpush1.msra.mxu0 0.0
        %4437 = vmatprep.subr.mxu0 0.0
        %4438 = vmatpush1.msra.mxu0 0.0
        %4439 = vmatprep.subr.mxu0 0.0
        %4440 = vmatpush1.msra.mxu0 0.0
        %4441 = vmatprep.subr.mxu0 0.0
        %4442 = vmatpush1.msra.mxu0 0.0
        %4443 = vmatprep.subr.mxu0 0.0
        %4444 = vmatpush1.msra.mxu0 0.0
        %4445 = vmatprep.subr.mxu0 0.0
        %4446 = vmatpush1.msra.mxu0 0.0
        %4447 = vmatprep.subr.mxu0 0.0
        %4448 = vmatpush1.msra.mxu0 0.0
        %4449 = vmatprep.subr.mxu0 0.0
        %4450 = vmatpush1.msra.mxu0 0.0
        %4451 = vmatprep.mubr.f32.mxu0 0.0
        %4452 = vmatmul.mubr.f32.gmra.mrb[0].mxu0 %v4364
        %v4453 = vpop.f32.mrb[0].mxu0
        %v4454 = vadd.f32 0.0, %v4453
        %v4455 = vpop.f32.mrb[0].mxu0
        %4456 = vmatprep.mubr.f32.mxu0 0.0
        %4457 = vmatmul.mubr.f32.gmra.mrb[0].mxu0 %v4367
        %v4458 = vpop.f32.mrb[0].mxu0
        %v4459 = vadd.f32 0.0, %v4458
        %v4460 = vpop.f32.mrb[0].mxu0
        %4461 = vmatprep.mubr.f32.mxu0 0.0
        %4462 = vmatmul.mubr.f32.gmra.mrb[0].mxu0 %v4370
        %v4463 = vpop.f32.mrb[0].mxu0
        %v4464 = vadd.f32 0.0, %v4463
        %v4465 = vpop.f32.mrb[0].mxu0
        %4466 = vmatprep.mubr.f32.mxu0 0.0
        %4467 = vmatmul.mubr.f32.gmra.mrb[0].mxu0 %v4373
        %v4468 = vpop.f32.mrb[0].mxu0
        %v4469 = vadd.f32 0.0, %v4468
        %v4470 = vpop.f32.mrb[0].mxu0
        %4471 = vmatprep.mubr.f32.mxu0 0.0
        %4472 = vmatmul.mubr.f32.gmra.mrb[0].mxu0 %v4376
        %v4473 = vpop.f32.mrb[0].mxu0
        %v4474 = vadd.f32 0.0, %v4473
        %v4475 = vpop.f32.mrb[0].mxu0
        %4476 = vmatprep.mubr.f32.mxu0 0.0
        %4477 = vmatmul.mubr.f32.gmra.mrb[0].mxu0 %v4379
        %v4478 = vpop.f32.mrb[0].mxu0
        %v4479 = vadd.f32 0.0, %v4478
        %v4480 = vpop.f32.mrb[0].mxu0
        %4481 = vmatprep.mubr.f32.mxu0 0.0
        %4482 = vmatmul.mubr.f32.gmra.mrb[0].mxu0 %v4382
        %v4483 = vpop.f32.mrb[0].mxu0
        %v4484 = vadd.f32 0.0, %v4483
        %v4485 = vpop.f32.mrb[0].mxu0
        %4486 = vmatprep.mubr.f32.mxu0 0.0
        %4487 = vmatmul.mubr.f32.gmra.mrb[0].mxu0 %v4385
        %v4488 = vpop.f32.mrb[0].mxu0
        %v4489 = vadd.f32 0.0, %v4488
        %v4490 = vpop.f32.mrb[0].mxu0
        %4491 = vdwg.mxu0
        %v4492 = vadd.f32 %v4338, %v4454
        %v4493 = vadd.f32 %v4339, %v4459
        %v4494 = vadd.f32 %v4340, %v4464
        %v4495 = vadd.f32 %v4341, %v4469
        %v4496 = vadd.f32 %v4342, %v4474
        %v4497 = vadd.f32 %v4343, %v4479
        %v4498 = vadd.f32 %v4344, %v4484
        %v4499 = vadd.f32 %v4345, %v4489
        %v4500 = vld [vmem:[%s3891 + $0x1] sm:$0xff]
        %v4501 = vld [vmem:[%s3891 + $0x11] sm:$0xff]
        %v4502 = vld [vmem:[%s3891 + $0x21] sm:$0xff]
        %v4503 = vld [vmem:[%s3891 + $0x31] sm:$0xff]
        %v4504 = vld [vmem:[%s3891 + $0x41] sm:$0xff]
        %v4505 = vld [vmem:[%s3891 + $0x51] sm:$0xff]
        %v4506 = vld [vmem:[%s3891 + $0x61] sm:$0xff]
        %v4507 = vld [vmem:[%s3891 + $0x71] sm:$0xff]
        %s4508 = scalar_lea.vmem %s9, 256
        %v4509 = vld [vmem:[%s4508] sm:$0xff]
        %v4510 = vld [vmem:[%s4508 + $0x8] sm:$0xff]
        %v4511 = vld [vmem:[%s4508 + $0x10] sm:$0xff]
        %v4512 = vld [vmem:[%s4508 + $0x18] sm:$0xff]
        %v4513 = vld [vmem:[%s4508 + $0x20] sm:$0xff]
        %v4514 = vld [vmem:[%s4508 + $0x28] sm:$0xff]
        %v4515 = vld [vmem:[%s4508 + $0x30] sm:$0xff]
        %v4516 = vld [vmem:[%s4508 + $0x38] sm:$0xff]
        %v4518 = vsel %vm3892, %v4500, 0
        %v4521 = vsel %vm3892, %v4501, 0
        %v4524 = vsel %vm3892, %v4502, 0
        %v4527 = vsel %vm3892, %v4503, 0
        %v4530 = vsel %vm3892, %v4504, 0
        %v4533 = vsel %vm3892, %v4505, 0
        %v4536 = vsel %vm3892, %v4506, 0
        %v4539 = vsel %vm3892, %v4507, 0
        %4541 = vmatprep.subr.mxu0 0.0
        %4542 = vmatpush1.msra.mxu0 %v4509
        %4543 = vmatprep.subr.mxu0 0.0
        %4544 = vmatpush1.msra.mxu0 %v4510
        %4545 = vmatprep.subr.mxu0 0.0
        %4546 = vmatpush1.msra.mxu0 %v4511
        %4547 = vmatprep.subr.mxu0 0.0
        %4548 = vmatpush1.msra.mxu0 %v4512
        %4549 = vmatprep.subr.mxu0 0.0
        %4550 = vmatpush1.msra.mxu0 %v4513
        %4551 = vmatprep.subr.mxu0 0.0
        %4552 = vmatpush1.msra.mxu0 %v4514
        %4553 = vmatprep.subr.mxu0 0.0
        %4554 = vmatpush1.msra.mxu0 %v4515
        %4555 = vmatprep.subr.mxu0 0.0
        %4556 = vmatpush1.msra.mxu0 %v4516
        %4557 = vmatprep.subr.mxu0 0.0
        %4558 = vmatpush1.msra.mxu0 0.0
        %4559 = vmatprep.subr.mxu0 0.0
        %4560 = vmatpush1.msra.mxu0 0.0
        %4561 = vmatprep.subr.mxu0 0.0
        %4562 = vmatpush1.msra.mxu0 0.0
        %4563 = vmatprep.subr.mxu0 0.0
        %4564 = vmatpush1.msra.mxu0 0.0
        %4565 = vmatprep.subr.mxu0 0.0
        %4566 = vmatpush1.msra.mxu0 0.0
        %4567 = vmatprep.subr.mxu0 0.0
        %4568 = vmatpush1.msra.mxu0 0.0
        %4569 = vmatprep.subr.mxu0 0.0
        %4570 = vmatpush1.msra.mxu0 0.0
        %4571 = vmatprep.subr.mxu0 0.0
        %4572 = vmatpush1.msra.mxu0 0.0
        %4573 = vmatprep.subr.mxu0 0.0
        %4574 = vmatpush1.msra.mxu0 0.0
        %4575 = vmatprep.subr.mxu0 0.0
        %4576 = vmatpush1.msra.mxu0 0.0
        %4577 = vmatprep.subr.mxu0 0.0
        %4578 = vmatpush1.msra.mxu0 0.0
        %4579 = vmatprep.subr.mxu0 0.0
        %4580 = vmatpush1.msra.mxu0 0.0
        %4581 = vmatprep.subr.mxu0 0.0
        %4582 = vmatpush1.msra.mxu0 0.0
        %4583 = vmatprep.subr.mxu0 0.0
        %4584 = vmatpush1.msra.mxu0 0.0
        %4585 = vmatprep.subr.mxu0 0.0
        %4586 = vmatpush1.msra.mxu0 0.0
        %4587 = vmatprep.subr.mxu0 0.0
        %4588 = vmatpush1.msra.mxu0 0.0
        %4589 = vmatprep.subr.mxu0 0.0
        %4590 = vmatpush1.msra.mxu0 0.0
        %4591 = vmatprep.subr.mxu0 0.0
        %4592 = vmatpush1.msra.mxu0 0.0
        %4593 = vmatprep.subr.mxu0 0.0
        %4594 = vmatpush1.msra.mxu0 0.0
        %4595 = vmatprep.subr.mxu0 0.0
        %4596 = vmatpush1.msra.mxu0 0.0
        %4597 = vmatprep.subr.mxu0 0.0
        %4598 = vmatpush1.msra.mxu0 0.0
        %4599 = vmatprep.subr.mxu0 0.0
        %4600 = vmatpush1.msra.mxu0 0.0
        %4601 = vmatprep.subr.mxu0 0.0
        %4602 = vmatpush1.msra.mxu0 0.0
        %4603 = vmatprep.subr.mxu0 0.0
        %4604 = vmatpush1.msra.mxu0 0.0
        %4605 = vmatprep.mubr.f32.mxu0 0.0
        %4606 = vmatmul.mubr.f32.gmra.mrb[0].mxu0 %v4518
        %v4607 = vpop.f32.mrb[0].mxu0
        %v4608 = vadd.f32 0.0, %v4607
        %v4609 = vpop.f32.mrb[0].mxu0
        %4610 = vmatprep.mubr.f32.mxu0 0.0
        %4611 = vmatmul.mubr.f32.gmra.mrb[0].mxu0 %v4521
        %v4612 = vpop.f32.mrb[0].mxu0
        %v4613 = vadd.f32 0.0, %v4612
        %v4614 = vpop.f32.mrb[0].mxu0
        %4615 = vmatprep.mubr.f32.mxu0 0.0
        %4616 = vmatmul.mubr.f32.gmra.mrb[0].mxu0 %v4524
        %v4617 = vpop.f32.mrb[0].mxu0
        %v4618 = vadd.f32 0.0, %v4617
        %v4619 = vpop.f32.mrb[0].mxu0
        %4620 = vmatprep.mubr.f32.mxu0 0.0
        %4621 = vmatmul.mubr.f32.gmra.mrb[0].mxu0 %v4527
        %v4622 = vpop.f32.mrb[0].mxu0
        %v4623 = vadd.f32 0.0, %v4622
        %v4624 = vpop.f32.mrb[0].mxu0
        %4625 = vmatprep.mubr.f32.mxu0 0.0
        %4626 = vmatmul.mubr.f32.gmra.mrb[0].mxu0 %v4530
        %v4627 = vpop.f32.mrb[0].mxu0
        %v4628 = vadd.f32 0.0, %v4627
        %v4629 = vpop.f32.mrb[0].mxu0
        %4630 = vmatprep.mubr.f32.mxu0 0.0
        %4631 = vmatmul.mubr.f32.gmra.mrb[0].mxu0 %v4533
        %v4632 = vpop.f32.mrb[0].mxu0
        %v4633 = vadd.f32 0.0, %v4632
        %v4634 = vpop.f32.mrb[0].mxu0
        %4635 = vmatprep.mubr.f32.mxu0 0.0
        %4636 = vmatmul.mubr.f32.gmra.mrb[0].mxu0 %v4536
        %v4637 = vpop.f32.mrb[0].mxu0
        %v4638 = vadd.f32 0.0, %v4637
        %v4639 = vpop.f32.mrb[0].mxu0
        %4640 = vmatprep.mubr.f32.mxu0 0.0
        %4641 = vmatmul.mubr.f32.gmra.mrb[0].mxu0 %v4539
        %v4642 = vpop.f32.mrb[0].mxu0
        %v4643 = vadd.f32 0.0, %v4642
        %v4644 = vpop.f32.mrb[0].mxu0
        %4645 = vdwg.mxu0
        %v4646 = vadd.f32 %v4492, %v4608
        %v4647 = vadd.f32 %v4493, %v4613
        %v4648 = vadd.f32 %v4494, %v4618
        %v4649 = vadd.f32 %v4495, %v4623
        %v4650 = vadd.f32 %v4496, %v4628
        %v4651 = vadd.f32 %v4497, %v4633
        %v4652 = vadd.f32 %v4498, %v4638
        %v4653 = vadd.f32 %v4499, %v4643
        %v4654 = vld [vmem:[%s3891 + $0x2] sm:$0xff]
        %v4655 = vld [vmem:[%s3891 + $0x12] sm:$0xff]
        %v4656 = vld [vmem:[%s3891 + $0x22] sm:$0xff]
        %v4657 = vld [vmem:[%s3891 + $0x32] sm:$0xff]
        %v4658 = vld [vmem:[%s3891 + $0x42] sm:$0xff]
        %v4659 = vld [vmem:[%s3891 + $0x52] sm:$0xff]
        %v4660 = vld [vmem:[%s3891 + $0x62] sm:$0xff]
        %v4661 = vld [vmem:[%s3891 + $0x72] sm:$0xff]
        %s4662 = scalar_lea.vmem %s9, 320
        %v4663 = vld [vmem:[%s4662] sm:$0xff]
        %v4664 = vld [vmem:[%s4662 + $0x8] sm:$0xff]
        %v4665 = vld [vmem:[%s4662 + $0x10] sm:$0xff]
        %v4666 = vld [vmem:[%s4662 + $0x18] sm:$0xff]
        %v4667 = vld [vmem:[%s4662 + $0x20] sm:$0xff]
        %v4668 = vld [vmem:[%s4662 + $0x28] sm:$0xff]
        %v4669 = vld [vmem:[%s4662 + $0x30] sm:$0xff]
        %v4670 = vld [vmem:[%s4662 + $0x38] sm:$0xff]
        %v4672 = vsel %vm3892, %v4654, 0
        %v4675 = vsel %vm3892, %v4655, 0
        %v4678 = vsel %vm3892, %v4656, 0
        %v4681 = vsel %vm3892, %v4657, 0
        %v4684 = vsel %vm3892, %v4658, 0
        %v4687 = vsel %vm3892, %v4659, 0
        %v4690 = vsel %vm3892, %v4660, 0
        %v4693 = vsel %vm3892, %v4661, 0
        %4695 = vmatprep.subr.mxu0 0.0
        %4696 = vmatpush1.msra.mxu0 %v4663
        %4697 = vmatprep.subr.mxu0 0.0
        %4698 = vmatpush1.msra.mxu0 %v4664
        %4699 = vmatprep.subr.mxu0 0.0
        %4700 = vmatpush1.msra.mxu0 %v4665
        %4701 = vmatprep.subr.mxu0 0.0
        %4702 = vmatpush1.msra.mxu0 %v4666
        %4703 = vmatprep.subr.mxu0 0.0
        %4704 = vmatpush1.msra.mxu0 %v4667
        %4705 = vmatprep.subr.mxu0 0.0
        %4706 = vmatpush1.msra.mxu0 %v4668
        %4707 = vmatprep.subr.mxu0 0.0
        %4708 = vmatpush1.msra.mxu0 %v4669
        %4709 = vmatprep.subr.mxu0 0.0
        %4710 = vmatpush1.msra.mxu0 %v4670
        %4711 = vmatprep.subr.mxu0 0.0
        %4712 = vmatpush1.msra.mxu0 0.0
        %4713 = vmatprep.subr.mxu0 0.0
        %4714 = vmatpush1.msra.mxu0 0.0
        %4715 = vmatprep.subr.mxu0 0.0
        %4716 = vmatpush1.msra.mxu0 0.0
        %4717 = vmatprep.subr.mxu0 0.0
        %4718 = vmatpush1.msra.mxu0 0.0
        %4719 = vmatprep.subr.mxu0 0.0
        %4720 = vmatpush1.msra.mxu0 0.0
        %4721 = vmatprep.subr.mxu0 0.0
        %4722 = vmatpush1.msra.mxu0 0.0
        %4723 = vmatprep.subr.mxu0 0.0
        %4724 = vmatpush1.msra.mxu0 0.0
        %4725 = vmatprep.subr.mxu0 0.0
        %4726 = vmatpush1.msra.mxu0 0.0
        %4727 = vmatprep.subr.mxu0 0.0
        %4728 = vmatpush1.msra.mxu0 0.0
        %4729 = vmatprep.subr.mxu0 0.0
        %4730 = vmatpush1.msra.mxu0 0.0
        %4731 = vmatprep.subr.mxu0 0.0
        %4732 = vmatpush1.msra.mxu0 0.0
        %4733 = vmatprep.subr.mxu0 0.0
        %4734 = vmatpush1.msra.mxu0 0.0
        %4735 = vmatprep.subr.mxu0 0.0
        %4736 = vmatpush1.msra.mxu0 0.0
        %4737 = vmatprep.subr.mxu0 0.0
        %4738 = vmatpush1.msra.mxu0 0.0
        %4739 = vmatprep.subr.mxu0 0.0
        %4740 = vmatpush1.msra.mxu0 0.0
        %4741 = vmatprep.subr.mxu0 0.0
        %4742 = vmatpush1.msra.mxu0 0.0
        %4743 = vmatprep.subr.mxu0 0.0
        %4744 = vmatpush1.msra.mxu0 0.0
        %4745 = vmatprep.subr.mxu0 0.0
        %4746 = vmatpush1.msra.mxu0 0.0
        %4747 = vmatprep.subr.mxu0 0.0
        %4748 = vmatpush1.msra.mxu0 0.0
        %4749 = vmatprep.subr.mxu0 0.0
        %4750 = vmatpush1.msra.mxu0 0.0
        %4751 = vmatprep.subr.mxu0 0.0
        %4752 = vmatpush1.msra.mxu0 0.0
        %4753 = vmatprep.subr.mxu0 0.0
        %4754 = vmatpush1.msra.mxu0 0.0
        %4755 = vmatprep.subr.mxu0 0.0
        %4756 = vmatpush1.msra.mxu0 0.0
        %4757 = vmatprep.subr.mxu0 0.0
        %4758 = vmatpush1.msra.mxu0 0.0
        %4759 = vmatprep.mubr.f32.mxu0 0.0
        %4760 = vmatmul.mubr.f32.gmra.mrb[0].mxu0 %v4672
        %v4761 = vpop.f32.mrb[0].mxu0
        %v4762 = vadd.f32 0.0, %v4761
        %v4763 = vpop.f32.mrb[0].mxu0
        %4764 = vmatprep.mubr.f32.mxu0 0.0
        %4765 = vmatmul.mubr.f32.gmra.mrb[0].mxu0 %v4675
        %v4766 = vpop.f32.mrb[0].mxu0
        %v4767 = vadd.f32 0.0, %v4766
        %v4768 = vpop.f32.mrb[0].mxu0
        %4769 = vmatprep.mubr.f32.mxu0 0.0
        %4770 = vmatmul.mubr.f32.gmra.mrb[0].mxu0 %v4678
        %v4771 = vpop.f32.mrb[0].mxu0
        %v4772 = vadd.f32 0.0, %v4771
        %v4773 = vpop.f32.mrb[0].mxu0
        %4774 = vmatprep.mubr.f32.mxu0 0.0
        %4775 = vmatmul.mubr.f32.gmra.mrb[0].mxu0 %v4681
        %v4776 = vpop.f32.mrb[0].mxu0
        %v4777 = vadd.f32 0.0, %v4776
        %v4778 = vpop.f32.mrb[0].mxu0
        %4779 = vmatprep.mubr.f32.mxu0 0.0
        %4780 = vmatmul.mubr.f32.gmra.mrb[0].mxu0 %v4684
        %v4781 = vpop.f32.mrb[0].mxu0
        %v4782 = vadd.f32 0.0, %v4781
        %v4783 = vpop.f32.mrb[0].mxu0
        %4784 = vmatprep.mubr.f32.mxu0 0.0
        %4785 = vmatmul.mubr.f32.gmra.mrb[0].mxu0 %v4687
        %v4786 = vpop.f32.mrb[0].mxu0
        %v4787 = vadd.f32 0.0, %v4786
        %v4788 = vpop.f32.mrb[0].mxu0
        %4789 = vmatprep.mubr.f32.mxu0 0.0
        %4790 = vmatmul.mubr.f32.gmra.mrb[0].mxu0 %v4690
        %v4791 = vpop.f32.mrb[0].mxu0
        %v4792 = vadd.f32 0.0, %v4791
        %v4793 = vpop.f32.mrb[0].mxu0
        %4794 = vmatprep.mubr.f32.mxu0 0.0
        %4795 = vmatmul.mubr.f32.gmra.mrb[0].mxu0 %v4693
        %v4796 = vpop.f32.mrb[0].mxu0
        %v4797 = vadd.f32 0.0, %v4796
        %v4798 = vpop.f32.mrb[0].mxu0
        %4799 = vdwg.mxu0
        %v4800 = vadd.f32 %v4646, %v4762
        %v4801 = vadd.f32 %v4647, %v4767
        %v4802 = vadd.f32 %v4648, %v4772
        %v4803 = vadd.f32 %v4649, %v4777
        %v4804 = vadd.f32 %v4650, %v4782
        %v4805 = vadd.f32 %v4651, %v4787
        %v4806 = vadd.f32 %v4652, %v4792
        %v4807 = vadd.f32 %v4653, %v4797
        %s4808 = scalar_lea.vmem [#allocation3], 32
        %v4809 = vld [vmem:[%s4808] sm:$0xff]
        %v4810 = vld [vmem:[%s4808 + $0x10] sm:$0xff]
        %v4811 = vld [vmem:[%s4808 + $0x20] sm:$0xff]
        %v4812 = vld [vmem:[%s4808 + $0x30] sm:$0xff]
        %v4813 = vld [vmem:[%s4808 + $0x40] sm:$0xff]
        %v4814 = vld [vmem:[%s4808 + $0x50] sm:$0xff]
        %v4815 = vld [vmem:[%s4808 + $0x60] sm:$0xff]
        %v4816 = vld [vmem:[%s4808 + $0x70] sm:$0xff]
        %s4817 = scalar_lea.vmem %s9, 384
        %v4818 = vld [vmem:[%s4817] sm:$0xff]
        %v4819 = vld [vmem:[%s4817 + $0x8] sm:$0xff]
        %v4820 = vld [vmem:[%s4817 + $0x10] sm:$0xff]
        %v4821 = vld [vmem:[%s4817 + $0x18] sm:$0xff]
        %v4822 = vld [vmem:[%s4817 + $0x20] sm:$0xff]
        %v4823 = vld [vmem:[%s4817 + $0x28] sm:$0xff]
        %v4824 = vld [vmem:[%s4817 + $0x30] sm:$0xff]
        %v4825 = vld [vmem:[%s4817 + $0x38] sm:$0xff]
        %v4827 = vsel %vm3892, %v4809, 0
        %v4830 = vsel %vm3892, %v4810, 0
        %v4833 = vsel %vm3892, %v4811, 0
        %v4836 = vsel %vm3892, %v4812, 0
        %v4839 = vsel %vm3892, %v4813, 0
        %v4842 = vsel %vm3892, %v4814, 0
        %v4845 = vsel %vm3892, %v4815, 0
        %v4848 = vsel %vm3892, %v4816, 0
        %4850 = vmatprep.subr.mxu0 0.0
        %4851 = vmatpush1.msra.mxu0 %v4818
        %4852 = vmatprep.subr.mxu0 0.0
        %4853 = vmatpush1.msra.mxu0 %v4819
        %4854 = vmatprep.subr.mxu0 0.0
        %4855 = vmatpush1.msra.mxu0 %v4820
        %4856 = vmatprep.subr.mxu0 0.0
        %4857 = vmatpush1.msra.mxu0 %v4821
        %4858 = vmatprep.subr.mxu0 0.0
        %4859 = vmatpush1.msra.mxu0 %v4822
        %4860 = vmatprep.subr.mxu0 0.0
        %4861 = vmatpush1.msra.mxu0 %v4823
        %4862 = vmatprep.subr.mxu0 0.0
        %4863 = vmatpush1.msra.mxu0 %v4824
        %4864 = vmatprep.subr.mxu0 0.0
        %4865 = vmatpush1.msra.mxu0 %v4825
        %4866 = vmatprep.subr.mxu0 0.0
        %4867 = vmatpush1.msra.mxu0 0.0
        %4868 = vmatprep.subr.mxu0 0.0
        %4869 = vmatpush1.msra.mxu0 0.0
        %4870 = vmatprep.subr.mxu0 0.0
        %4871 = vmatpush1.msra.mxu0 0.0
        %4872 = vmatprep.subr.mxu0 0.0
        %4873 = vmatpush1.msra.mxu0 0.0
        %4874 = vmatprep.subr.mxu0 0.0
        %4875 = vmatpush1.msra.mxu0 0.0
        %4876 = vmatprep.subr.mxu0 0.0
        %4877 = vmatpush1.msra.mxu0 0.0
        %4878 = vmatprep.subr.mxu0 0.0
        %4879 = vmatpush1.msra.mxu0 0.0
        %4880 = vmatprep.subr.mxu0 0.0
        %4881 = vmatpush1.msra.mxu0 0.0
        %4882 = vmatprep.subr.mxu0 0.0
        %4883 = vmatpush1.msra.mxu0 0.0
        %4884 = vmatprep.subr.mxu0 0.0
        %4885 = vmatpush1.msra.mxu0 0.0
        %4886 = vmatprep.subr.mxu0 0.0
        %4887 = vmatpush1.msra.mxu0 0.0
        %4888 = vmatprep.subr.mxu0 0.0
        %4889 = vmatpush1.msra.mxu0 0.0
        %4890 = vmatprep.subr.mxu0 0.0
        %4891 = vmatpush1.msra.mxu0 0.0
        %4892 = vmatprep.subr.mxu0 0.0
        %4893 = vmatpush1.msra.mxu0 0.0
        %4894 = vmatprep.subr.mxu0 0.0
        %4895 = vmatpush1.msra.mxu0 0.0
        %4896 = vmatprep.subr.mxu0 0.0
        %4897 = vmatpush1.msra.mxu0 0.0
        %4898 = vmatprep.subr.mxu0 0.0
        %4899 = vmatpush1.msra.mxu0 0.0
        %4900 = vmatprep.subr.mxu0 0.0
        %4901 = vmatpush1.msra.mxu0 0.0
        %4902 = vmatprep.subr.mxu0 0.0
        %4903 = vmatpush1.msra.mxu0 0.0
        %4904 = vmatprep.subr.mxu0 0.0
        %4905 = vmatpush1.msra.mxu0 0.0
        %4906 = vmatprep.subr.mxu0 0.0
        %4907 = vmatpush1.msra.mxu0 0.0
        %4908 = vmatprep.subr.mxu0 0.0
        %4909 = vmatpush1.msra.mxu0 0.0
        %4910 = vmatprep.subr.mxu0 0.0
        %4911 = vmatpush1.msra.mxu0 0.0
        %4912 = vmatprep.subr.mxu0 0.0
        %4913 = vmatpush1.msra.mxu0 0.0
        %4914 = vmatprep.mubr.f32.mxu0 0.0
        %4915 = vmatmul.mubr.f32.gmra.mrb[0].mxu0 %v4827
        %v4916 = vpop.f32.mrb[0].mxu0
        %v4917 = vadd.f32 0.0, %v4916
        %v4918 = vpop.f32.mrb[0].mxu0
        %4919 = vmatprep.mubr.f32.mxu0 0.0
        %4920 = vmatmul.mubr.f32.gmra.mrb[0].mxu0 %v4830
        %v4921 = vpop.f32.mrb[0].mxu0
        %v4922 = vadd.f32 0.0, %v4921
        %v4923 = vpop.f32.mrb[0].mxu0
        %4924 = vmatprep.mubr.f32.mxu0 0.0
        %4925 = vmatmul.mubr.f32.gmra.mrb[0].mxu0 %v4833
        %v4926 = vpop.f32.mrb[0].mxu0
        %v4927 = vadd.f32 0.0, %v4926
        %v4928 = vpop.f32.mrb[0].mxu0
        %4929 = vmatprep.mubr.f32.mxu0 0.0
        %4930 = vmatmul.mubr.f32.gmra.mrb[0].mxu0 %v4836
        %v4931 = vpop.f32.mrb[0].mxu0
        %v4932 = vadd.f32 0.0, %v4931
        %v4933 = vpop.f32.mrb[0].mxu0
        %4934 = vmatprep.mubr.f32.mxu0 0.0
        %4935 = vmatmul.mubr.f32.gmra.mrb[0].mxu0 %v4839
        %v4936 = vpop.f32.mrb[0].mxu0
        %v4937 = vadd.f32 0.0, %v4936
        %v4938 = vpop.f32.mrb[0].mxu0
        %4939 = vmatprep.mubr.f32.mxu0 0.0
        %4940 = vmatmul.mubr.f32.gmra.mrb[0].mxu0 %v4842
        %v4941 = vpop.f32.mrb[0].mxu0
        %v4942 = vadd.f32 0.0, %v4941
        %v4943 = vpop.f32.mrb[0].mxu0
        %4944 = vmatprep.mubr.f32.mxu0 0.0
        %4945 = vmatmul.mubr.f32.gmra.mrb[0].mxu0 %v4845
        %v4946 = vpop.f32.mrb[0].mxu0
        %v4947 = vadd.f32 0.0, %v4946
        %v4948 = vpop.f32.mrb[0].mxu0
        %4949 = vmatprep.mubr.f32.mxu0 0.0
        %4950 = vmatmul.mubr.f32.gmra.mrb[0].mxu0 %v4848
        %v4951 = vpop.f32.mrb[0].mxu0
        %v4952 = vadd.f32 0.0, %v4951
        %v4953 = vpop.f32.mrb[0].mxu0
        %4954 = vdwg.mxu0
        %v4955 = vadd.f32 %v4800, %v4917
        %v4956 = vadd.f32 %v4801, %v4922
        %v4957 = vadd.f32 %v4802, %v4927
        %v4958 = vadd.f32 %v4803, %v4932
        %v4959 = vadd.f32 %v4804, %v4937
        %v4960 = vadd.f32 %v4805, %v4942
        %v4961 = vadd.f32 %v4806, %v4947
        %v4962 = vadd.f32 %v4807, %v4952
        %v4963 = vld [vmem:[%s4808 + $0x1] sm:$0xff]
        %v4964 = vld [vmem:[%s4808 + $0x11] sm:$0xff]
        %v4965 = vld [vmem:[%s4808 + $0x21] sm:$0xff]
        %v4966 = vld [vmem:[%s4808 + $0x31] sm:$0xff]
        %v4967 = vld [vmem:[%s4808 + $0x41] sm:$0xff]
        %v4968 = vld [vmem:[%s4808 + $0x51] sm:$0xff]
        %v4969 = vld [vmem:[%s4808 + $0x61] sm:$0xff]
        %v4970 = vld [vmem:[%s4808 + $0x71] sm:$0xff]
        %s4971 = scalar_lea.vmem %s9, 448
        %v4972 = vld [vmem:[%s4971] sm:$0xff]
        %v4973 = vld [vmem:[%s4971 + $0x8] sm:$0xff]
        %v4974 = vld [vmem:[%s4971 + $0x10] sm:$0xff]
        %v4975 = vld [vmem:[%s4971 + $0x18] sm:$0xff]
        %v4976 = vld [vmem:[%s4971 + $0x20] sm:$0xff]
        %v4977 = vld [vmem:[%s4971 + $0x28] sm:$0xff]
        %v4978 = vld [vmem:[%s4971 + $0x30] sm:$0xff]
        %v4979 = vld [vmem:[%s4971 + $0x38] sm:$0xff]
        %v4981 = vsel %vm3892, %v4963, 0
        %v4984 = vsel %vm3892, %v4964, 0
        %v4987 = vsel %vm3892, %v4965, 0
        %v4990 = vsel %vm3892, %v4966, 0
        %v4993 = vsel %vm3892, %v4967, 0
        %v4996 = vsel %vm3892, %v4968, 0
        %v4999 = vsel %vm3892, %v4969, 0
        %v5002 = vsel %vm3892, %v4970, 0
        %5004 = vmatprep.subr.mxu0 0.0
        %5005 = vmatpush1.msra.mxu0 %v4972
        %5006 = vmatprep.subr.mxu0 0.0
        %5007 = vmatpush1.msra.mxu0 %v4973
        %5008 = vmatprep.subr.mxu0 0.0
        %5009 = vmatpush1.msra.mxu0 %v4974
        %5010 = vmatprep.subr.mxu0 0.0
        %5011 = vmatpush1.msra.mxu0 %v4975
        %5012 = vmatprep.subr.mxu0 0.0
        %5013 = vmatpush1.msra.mxu0 %v4976
        %5014 = vmatprep.subr.mxu0 0.0
        %5015 = vmatpush1.msra.mxu0 %v4977
        %5016 = vmatprep.subr.mxu0 0.0
        %5017 = vmatpush1.msra.mxu0 %v4978
        %5018 = vmatprep.subr.mxu0 0.0
        %5019 = vmatpush1.msra.mxu0 %v4979
        %5020 = vmatprep.subr.mxu0 0.0
        %5021 = vmatpush1.msra.mxu0 0.0
        %5022 = vmatprep.subr.mxu0 0.0
        %5023 = vmatpush1.msra.mxu0 0.0
        %5024 = vmatprep.subr.mxu0 0.0
        %5025 = vmatpush1.msra.mxu0 0.0
        %5026 = vmatprep.subr.mxu0 0.0
        %5027 = vmatpush1.msra.mxu0 0.0
        %5028 = vmatprep.subr.mxu0 0.0
        %5029 = vmatpush1.msra.mxu0 0.0
        %5030 = vmatprep.subr.mxu0 0.0
        %5031 = vmatpush1.msra.mxu0 0.0
        %5032 = vmatprep.subr.mxu0 0.0
        %5033 = vmatpush1.msra.mxu0 0.0
        %5034 = vmatprep.subr.mxu0 0.0
        %5035 = vmatpush1.msra.mxu0 0.0
        %5036 = vmatprep.subr.mxu0 0.0
        %5037 = vmatpush1.msra.mxu0 0.0
        %5038 = vmatprep.subr.mxu0 0.0
        %5039 = vmatpush1.msra.mxu0 0.0
        %5040 = vmatprep.subr.mxu0 0.0
        %5041 = vmatpush1.msra.mxu0 0.0
        %5042 = vmatprep.subr.mxu0 0.0
        %5043 = vmatpush1.msra.mxu0 0.0
        %5044 = vmatprep.subr.mxu0 0.0
        %5045 = vmatpush1.msra.mxu0 0.0
        %5046 = vmatprep.subr.mxu0 0.0
        %5047 = vmatpush1.msra.mxu0 0.0
        %5048 = vmatprep.subr.mxu0 0.0
        %5049 = vmatpush1.msra.mxu0 0.0
        %5050 = vmatprep.subr.mxu0 0.0
        %5051 = vmatpush1.msra.mxu0 0.0
        %5052 = vmatprep.subr.mxu0 0.0
        %5053 = vmatpush1.msra.mxu0 0.0
        %5054 = vmatprep.subr.mxu0 0.0
        %5055 = vmatpush1.msra.mxu0 0.0
        %5056 = vmatprep.subr.mxu0 0.0
        %5057 = vmatpush1.msra.mxu0 0.0
        %5058 = vmatprep.subr.mxu0 0.0
        %5059 = vmatpush1.msra.mxu0 0.0
        %5060 = vmatprep.subr.mxu0 0.0
        %5061 = vmatpush1.msra.mxu0 0.0
        %5062 = vmatprep.subr.mxu0 0.0
        %5063 = vmatpush1.msra.mxu0 0.0
        %5064 = vmatprep.subr.mxu0 0.0
        %5065 = vmatpush1.msra.mxu0 0.0
        %5066 = vmatprep.subr.mxu0 0.0
        %5067 = vmatpush1.msra.mxu0 0.0
        %5068 = vmatprep.mubr.f32.mxu0 0.0
        %5069 = vmatmul.mubr.f32.gmra.mrb[0].mxu0 %v4981
        %v5070 = vpop.f32.mrb[0].mxu0
        %v5071 = vadd.f32 0.0, %v5070
        %v5072 = vpop.f32.mrb[0].mxu0
        %5073 = vmatprep.mubr.f32.mxu0 0.0
        %5074 = vmatmul.mubr.f32.gmra.mrb[0].mxu0 %v4984
        %v5075 = vpop.f32.mrb[0].mxu0
        %v5076 = vadd.f32 0.0, %v5075
        %v5077 = vpop.f32.mrb[0].mxu0
        %5078 = vmatprep.mubr.f32.mxu0 0.0
        %5079 = vmatmul.mubr.f32.gmra.mrb[0].mxu0 %v4987
        %v5080 = vpop.f32.mrb[0].mxu0
        %v5081 = vadd.f32 0.0, %v5080
        %v5082 = vpop.f32.mrb[0].mxu0
        %5083 = vmatprep.mubr.f32.mxu0 0.0
        %5084 = vmatmul.mubr.f32.gmra.mrb[0].mxu0 %v4990
        %v5085 = vpop.f32.mrb[0].mxu0
        %v5086 = vadd.f32 0.0, %v5085
        %v5087 = vpop.f32.mrb[0].mxu0
        %5088 = vmatprep.mubr.f32.mxu0 0.0
        %5089 = vmatmul.mubr.f32.gmra.mrb[0].mxu0 %v4993
        %v5090 = vpop.f32.mrb[0].mxu0
        %v5091 = vadd.f32 0.0, %v5090
        %v5092 = vpop.f32.mrb[0].mxu0
        %5093 = vmatprep.mubr.f32.mxu0 0.0
        %5094 = vmatmul.mubr.f32.gmra.mrb[0].mxu0 %v4996
        %v5095 = vpop.f32.mrb[0].mxu0
        %v5096 = vadd.f32 0.0, %v5095
        %v5097 = vpop.f32.mrb[0].mxu0
        %5098 = vmatprep.mubr.f32.mxu0 0.0
        %5099 = vmatmul.mubr.f32.gmra.mrb[0].mxu0 %v4999
        %v5100 = vpop.f32.mrb[0].mxu0
        %v5101 = vadd.f32 0.0, %v5100
        %v5102 = vpop.f32.mrb[0].mxu0
        %5103 = vmatprep.mubr.f32.mxu0 0.0
        %5104 = vmatmul.mubr.f32.gmra.mrb[0].mxu0 %v5002
        %v5105 = vpop.f32.mrb[0].mxu0
        %v5106 = vadd.f32 0.0, %v5105
        %v5107 = vpop.f32.mrb[0].mxu0
        %5108 = vdwg.mxu0
        %v5109 = vadd.f32 %v4955, %v5071
        %v5110 = vadd.f32 %v4956, %v5076
        %v5111 = vadd.f32 %v4957, %v5081
        %v5112 = vadd.f32 %v4958, %v5086
        %v5113 = vadd.f32 %v4959, %v5091
        %v5114 = vadd.f32 %v4960, %v5096
        %v5115 = vadd.f32 %v4961, %v5101
        %v5116 = vadd.f32 %v4962, %v5106
        %v5117 = vld [vmem:[%s4808 + $0x2] sm:$0xff]
        %v5118 = vld [vmem:[%s4808 + $0x12] sm:$0xff]
        %v5119 = vld [vmem:[%s4808 + $0x22] sm:$0xff]
        %v5120 = vld [vmem:[%s4808 + $0x32] sm:$0xff]
        %v5121 = vld [vmem:[%s4808 + $0x42] sm:$0xff]
        %v5122 = vld [vmem:[%s4808 + $0x52] sm:$0xff]
        %v5123 = vld [vmem:[%s4808 + $0x62] sm:$0xff]
        %v5124 = vld [vmem:[%s4808 + $0x72] sm:$0xff]
        %s5125 = scalar_lea.vmem %s9, 512
        %v5126 = vld [vmem:[%s5125] sm:$0xff]
        %v5127 = vld [vmem:[%s5125 + $0x8] sm:$0xff]
        %v5128 = vld [vmem:[%s5125 + $0x10] sm:$0xff]
        %v5129 = vld [vmem:[%s5125 + $0x18] sm:$0xff]
        %v5130 = vld [vmem:[%s5125 + $0x20] sm:$0xff]
        %v5131 = vld [vmem:[%s5125 + $0x28] sm:$0xff]
        %v5132 = vld [vmem:[%s5125 + $0x30] sm:$0xff]
        %v5133 = vld [vmem:[%s5125 + $0x38] sm:$0xff]
        %v5135 = vsel %vm3892, %v5117, 0
        %v5138 = vsel %vm3892, %v5118, 0
        %v5141 = vsel %vm3892, %v5119, 0
        %v5144 = vsel %vm3892, %v5120, 0
        %v5147 = vsel %vm3892, %v5121, 0
        %v5150 = vsel %vm3892, %v5122, 0
        %v5153 = vsel %vm3892, %v5123, 0
        %v5156 = vsel %vm3892, %v5124, 0
        %5158 = vmatprep.subr.mxu0 0.0
        %5159 = vmatpush1.msra.mxu0 %v5126
        %5160 = vmatprep.subr.mxu0 0.0
        %5161 = vmatpush1.msra.mxu0 %v5127
        %5162 = vmatprep.subr.mxu0 0.0
        %5163 = vmatpush1.msra.mxu0 %v5128
        %5164 = vmatprep.subr.mxu0 0.0
        %5165 = vmatpush1.msra.mxu0 %v5129
        %5166 = vmatprep.subr.mxu0 0.0
        %5167 = vmatpush1.msra.mxu0 %v5130
        %5168 = vmatprep.subr.mxu0 0.0
        %5169 = vmatpush1.msra.mxu0 %v5131
        %5170 = vmatprep.subr.mxu0 0.0
        %5171 = vmatpush1.msra.mxu0 %v5132
        %5172 = vmatprep.subr.mxu0 0.0
        %5173 = vmatpush1.msra.mxu0 %v5133
        %5174 = vmatprep.subr.mxu0 0.0
        %5175 = vmatpush1.msra.mxu0 0.0
        %5176 = vmatprep.subr.mxu0 0.0
        %5177 = vmatpush1.msra.mxu0 0.0
        %5178 = vmatprep.subr.mxu0 0.0
        %5179 = vmatpush1.msra.mxu0 0.0
        %5180 = vmatprep.subr.mxu0 0.0
        %5181 = vmatpush1.msra.mxu0 0.0
        %5182 = vmatprep.subr.mxu0 0.0
        %5183 = vmatpush1.msra.mxu0 0.0
        %5184 = vmatprep.subr.mxu0 0.0
        %5185 = vmatpush1.msra.mxu0 0.0
        %5186 = vmatprep.subr.mxu0 0.0
        %5187 = vmatpush1.msra.mxu0 0.0
        %5188 = vmatprep.subr.mxu0 0.0
        %5189 = vmatpush1.msra.mxu0 0.0
        %5190 = vmatprep.subr.mxu0 0.0
        %5191 = vmatpush1.msra.mxu0 0.0
        %5192 = vmatprep.subr.mxu0 0.0
        %5193 = vmatpush1.msra.mxu0 0.0
        %5194 = vmatprep.subr.mxu0 0.0
        %5195 = vmatpush1.msra.mxu0 0.0
        %5196 = vmatprep.subr.mxu0 0.0
        %5197 = vmatpush1.msra.mxu0 0.0
        %5198 = vmatprep.subr.mxu0 0.0
        %5199 = vmatpush1.msra.mxu0 0.0
        %5200 = vmatprep.subr.mxu0 0.0
        %5201 = vmatpush1.msra.mxu0 0.0
        %5202 = vmatprep.subr.mxu0 0.0
        %5203 = vmatpush1.msra.mxu0 0.0
        %5204 = vmatprep.subr.mxu0 0.0
        %5205 = vmatpush1.msra.mxu0 0.0
        %5206 = vmatprep.subr.mxu0 0.0
        %5207 = vmatpush1.msra.mxu0 0.0
        %5208 = vmatprep.subr.mxu0 0.0
        %5209 = vmatpush1.msra.mxu0 0.0
        %5210 = vmatprep.subr.mxu0 0.0
        %5211 = vmatpush1.msra.mxu0 0.0
        %5212 = vmatprep.subr.mxu0 0.0
        %5213 = vmatpush1.msra.mxu0 0.0
        %5214 = vmatprep.subr.mxu0 0.0
        %5215 = vmatpush1.msra.mxu0 0.0
        %5216 = vmatprep.subr.mxu0 0.0
        %5217 = vmatpush1.msra.mxu0 0.0
        %5218 = vmatprep.subr.mxu0 0.0
        %5219 = vmatpush1.msra.mxu0 0.0
        %5220 = vmatprep.subr.mxu0 0.0
        %5221 = vmatpush1.msra.mxu0 0.0
        %5222 = vmatprep.mubr.f32.mxu0 0.0
        %5223 = vmatmul.mubr.f32.gmra.mrb[0].mxu0 %v5135
        %v5224 = vpop.f32.mrb[0].mxu0
        %v5225 = vadd.f32 0.0, %v5224
        %v5226 = vpop.f32.mrb[0].mxu0
        %5227 = vmatprep.mubr.f32.mxu0 0.0
        %5228 = vmatmul.mubr.f32.gmra.mrb[0].mxu0 %v5138
        %v5229 = vpop.f32.mrb[0].mxu0
        %v5230 = vadd.f32 0.0, %v5229
        %v5231 = vpop.f32.mrb[0].mxu0
        %5232 = vmatprep.mubr.f32.mxu0 0.0
        %5233 = vmatmul.mubr.f32.gmra.mrb[0].mxu0 %v5141
        %v5234 = vpop.f32.mrb[0].mxu0
        %v5235 = vadd.f32 0.0, %v5234
        %v5236 = vpop.f32.mrb[0].mxu0
        %5237 = vmatprep.mubr.f32.mxu0 0.0
        %5238 = vmatmul.mubr.f32.gmra.mrb[0].mxu0 %v5144
        %v5239 = vpop.f32.mrb[0].mxu0
        %v5240 = vadd.f32 0.0, %v5239
        %v5241 = vpop.f32.mrb[0].mxu0
        %5242 = vmatprep.mubr.f32.mxu0 0.0
        %5243 = vmatmul.mubr.f32.gmra.mrb[0].mxu0 %v5147
        %v5244 = vpop.f32.mrb[0].mxu0
        %v5245 = vadd.f32 0.0, %v5244
        %v5246 = vpop.f32.mrb[0].mxu0
        %5247 = vmatprep.mubr.f32.mxu0 0.0
        %5248 = vmatmul.mubr.f32.gmra.mrb[0].mxu0 %v5150
        %v5249 = vpop.f32.mrb[0].mxu0
        %v5250 = vadd.f32 0.0, %v5249
        %v5251 = vpop.f32.mrb[0].mxu0
        %5252 = vmatprep.mubr.f32.mxu0 0.0
        %5253 = vmatmul.mubr.f32.gmra.mrb[0].mxu0 %v5153
        %v5254 = vpop.f32.mrb[0].mxu0
        %v5255 = vadd.f32 0.0, %v5254
        %v5256 = vpop.f32.mrb[0].mxu0
        %5257 = vmatprep.mubr.f32.mxu0 0.0
        %5258 = vmatmul.mubr.f32.gmra.mrb[0].mxu0 %v5156
        %v5259 = vpop.f32.mrb[0].mxu0
        %v5260 = vadd.f32 0.0, %v5259
        %v5261 = vpop.f32.mrb[0].mxu0
        %5262 = vdwg.mxu0
        %v5263 = vadd.f32 %v5109, %v5225
        %v5264 = vadd.f32 %v5110, %v5230
        %v5265 = vadd.f32 %v5111, %v5235
        %v5266 = vadd.f32 %v5112, %v5240
        %v5267 = vadd.f32 %v5113, %v5245
        %v5268 = vadd.f32 %v5114, %v5250
        %v5269 = vadd.f32 %v5115, %v5255
        %v5270 = vadd.f32 %v5116, %v5260
        %v5271 = vld [vmem:[%s10] sm:$0x1]
        %v5273 = vlaneseq
        %v5274 = vshrl.u32 %v5273, 7
        %v5275 = vsub.s32 0, %v5274
        %v5276 = vrot.slane %v5271, %v5275
        %v5278 = vadd.f32 %v5263, %v5276
        %v5279 = vadd.f32 %v5264, %v5276
        %v5280 = vadd.f32 %v5265, %v5276
        %v5281 = vadd.f32 %v5266, %v5276
        %v5282 = vadd.f32 %v5267, %v5276
        %v5283 = vadd.f32 %v5268, %v5276
        %v5284 = vadd.f32 %v5269, %v5276
        %v5285 = vadd.f32 %v5270, %v5276
        %v5286 = vmax.f32 %v5278, 0.0
        %v5287 = vmax.f32 %v5279, 0.0
        %v5288 = vmax.f32 %v5280, 0.0
        %v5289 = vmax.f32 %v5281, 0.0
        %v5290 = vmax.f32 %v5282, 0.0
        %v5291 = vmax.f32 %v5283, 0.0
        %v5292 = vmax.f32 %v5284, 0.0
        %v5293 = vmax.f32 %v5285, 0.0
        %v5294 = vld [vmem:[%s11] sm:$0xff]
        %v5295 = vld [vmem:[%s11 + $0x8] sm:$0xff]
        %v5296 = vld [vmem:[%s11 + $0x10] sm:$0xff]
        %v5297 = vld [vmem:[%s11 + $0x18] sm:$0xff]
        %v5298 = vld [vmem:[%s12] sm:$0x1]
        %v5300 = vlaneseq
        %v5301 = vshrl.u32 %v5300, 7
        %v5302 = vsub.s32 0, %v5301
        %v5303 = vrot.slane %v5298, %v5302
        %vm5305 = vcmask 261120
        %v5307 = vsel %vm5305, %v5286, 0
        %v5310 = vsel %vm5305, %v5287, 0
        %v5313 = vsel %vm5305, %v5288, 0
        %v5316 = vsel %vm5305, %v5289, 0
        %v5319 = vsel %vm5305, %v5290, 0
        %v5322 = vsel %vm5305, %v5291, 0
        %v5325 = vsel %vm5305, %v5292, 0
        %v5328 = vsel %vm5305, %v5293, 0
        %5330 = vmatprep.subr.mxu0 0.0
        %5331 = vmatpush1.msra.mxu0 %v5294
        %5332 = vmatprep.subr.mxu0 0.0
        %5333 = vmatpush1.msra.mxu0 %v5295
        %5334 = vmatprep.subr.mxu0 0.0
        %5335 = vmatpush1.msra.mxu0 %v5296
        %5336 = vmatprep.subr.mxu0 0.0
        %5337 = vmatpush1.msra.mxu0 %v5297
        %5338 = vmatprep.subr.mxu0 0.0
        %5339 = vmatpush1.msra.mxu0 0.0
        %5340 = vmatprep.subr.mxu0 0.0
        %5341 = vmatpush1.msra.mxu0 0.0
        %5342 = vmatprep.subr.mxu0 0.0
        %5343 = vmatpush1.msra.mxu0 0.0
        %5344 = vmatprep.subr.mxu0 0.0
        %5345 = vmatpush1.msra.mxu0 0.0
        %5346 = vmatprep.subr.mxu0 0.0
        %5347 = vmatpush1.msra.mxu0 0.0
        %5348 = vmatprep.subr.mxu0 0.0
        %5349 = vmatpush1.msra.mxu0 0.0
        %5350 = vmatprep.subr.mxu0 0.0
        %5351 = vmatpush1.msra.mxu0 0.0
        %5352 = vmatprep.subr.mxu0 0.0
        %5353 = vmatpush1.msra.mxu0 0.0
        %5354 = vmatprep.subr.mxu0 0.0
        %5355 = vmatpush1.msra.mxu0 0.0
        %5356 = vmatprep.subr.mxu0 0.0
        %5357 = vmatpush1.msra.mxu0 0.0
        %5358 = vmatprep.subr.mxu0 0.0
        %5359 = vmatpush1.msra.mxu0 0.0
        %5360 = vmatprep.subr.mxu0 0.0
        %5361 = vmatpush1.msra.mxu0 0.0
        %5362 = vmatprep.subr.mxu0 0.0
        %5363 = vmatpush1.msra.mxu0 0.0
        %5364 = vmatprep.subr.mxu0 0.0
        %5365 = vmatpush1.msra.mxu0 0.0
        %5366 = vmatprep.subr.mxu0 0.0
        %5367 = vmatpush1.msra.mxu0 0.0
        %5368 = vmatprep.subr.mxu0 0.0
        %5369 = vmatpush1.msra.mxu0 0.0
        %5370 = vmatprep.subr.mxu0 0.0
        %5371 = vmatpush1.msra.mxu0 0.0
        %5372 = vmatprep.subr.mxu0 0.0
        %5373 = vmatpush1.msra.mxu0 0.0
        %5374 = vmatprep.subr.mxu0 0.0
        %5375 = vmatpush1.msra.mxu0 0.0
        %5376 = vmatprep.subr.mxu0 0.0
        %5377 = vmatpush1.msra.mxu0 0.0
        %5378 = vmatprep.subr.mxu0 0.0
        %5379 = vmatpush1.msra.mxu0 0.0
        %5380 = vmatprep.subr.mxu0 0.0
        %5381 = vmatpush1.msra.mxu0 0.0
        %5382 = vmatprep.subr.mxu0 0.0
        %5383 = vmatpush1.msra.mxu0 0.0
        %5384 = vmatprep.subr.mxu0 0.0
        %5385 = vmatpush1.msra.mxu0 0.0
        %5386 = vmatprep.subr.mxu0 0.0
        %5387 = vmatpush1.msra.mxu0 0.0
        %5388 = vmatprep.subr.mxu0 0.0
        %5389 = vmatpush1.msra.mxu0 0.0
        %5390 = vmatprep.subr.mxu0 0.0
        %5391 = vmatpush1.msra.mxu0 0.0
        %5392 = vmatprep.subr.mxu0 0.0
        %5393 = vmatpush1.msra.mxu0 0.0
        %5394 = vmatprep.mubr.f32.mxu0 0.0
        %5395 = vmatmul.mubr.f32.gmra.mrb[0].mxu0 %v5307
        %v5396 = vpop.f32.mrb[0].mxu0
        %v5397 = vadd.f32 %v5303, %v5396
        %v5398 = vpop.f32.mrb[0].mxu0
        %5399 = vmatprep.mubr.f32.mxu0 0.0
        %5400 = vmatmul.mubr.f32.gmra.mrb[0].mxu0 %v5310
        %v5401 = vpop.f32.mrb[0].mxu0
        %v5402 = vadd.f32 %v5303, %v5401
        %v5403 = vpop.f32.mrb[0].mxu0
        %5404 = vmatprep.mubr.f32.mxu0 0.0
        %5405 = vmatmul.mubr.f32.gmra.mrb[0].mxu0 %v5313
        %v5406 = vpop.f32.mrb[0].mxu0
        %v5407 = vadd.f32 %v5303, %v5406
        %v5408 = vpop.f32.mrb[0].mxu0
        %5409 = vmatprep.mubr.f32.mxu0 0.0
        %5410 = vmatmul.mubr.f32.gmra.mrb[0].mxu0 %v5316
        %v5411 = vpop.f32.mrb[0].mxu0
        %v5412 = vadd.f32 %v5303, %v5411
        %v5413 = vpop.f32.mrb[0].mxu0
        %5414 = vmatprep.mubr.f32.mxu0 0.0
        %5415 = vmatmul.mubr.f32.gmra.mrb[0].mxu0 %v5319
        %v5416 = vpop.f32.mrb[0].mxu0
        %v5417 = vadd.f32 %v5303, %v5416
        %v5418 = vpop.f32.mrb[0].mxu0
        %5419 = vmatprep.mubr.f32.mxu0 0.0
        %5420 = vmatmul.mubr.f32.gmra.mrb[0].mxu0 %v5322
        %v5421 = vpop.f32.mrb[0].mxu0
        %v5422 = vadd.f32 %v5303, %v5421
        %v5423 = vpop.f32.mrb[0].mxu0
        %5424 = vmatprep.mubr.f32.mxu0 0.0
        %5425 = vmatmul.mubr.f32.gmra.mrb[0].mxu0 %v5325
        %v5426 = vpop.f32.mrb[0].mxu0
        %v5427 = vadd.f32 %v5303, %v5426
        %v5428 = vpop.f32.mrb[0].mxu0
        %5429 = vmatprep.mubr.f32.mxu0 0.0
        %5430 = vmatmul.mubr.f32.gmra.mrb[0].mxu0 %v5328
        %v5431 = vpop.f32.mrb[0].mxu0
        %v5432 = vadd.f32 %v5303, %v5431
        %v5433 = vpop.f32.mrb[0].mxu0
        %5434 = vdwg.mxu0
        %v5435 = vld [vmem:[#allocation5] sm:$0xff]
        %v5436 = vld [vmem:[#allocation5 + $0x8] sm:$0xff]
        %v5437 = vld [vmem:[#allocation5 + $0x10] sm:$0xff]
        %v5438 = vld [vmem:[#allocation5 + $0x18] sm:$0xff]
        %v5439 = vld [vmem:[#allocation5 + $0x20] sm:$0xff]
        %v5440 = vld [vmem:[#allocation5 + $0x28] sm:$0xff]
        %v5441 = vld [vmem:[#allocation5 + $0x30] sm:$0xff]
        %v5442 = vld [vmem:[#allocation5 + $0x38] sm:$0xff]
        %v5443 = vmax.f32 %v5435, %v5397
        %v5444 = vmax.f32 %v5436, %v5402
        %v5445 = vmax.f32 %v5437, %v5407
        %v5446 = vmax.f32 %v5438, %v5412
        %v5447 = vmax.f32 %v5439, %v5417
        %v5448 = vmax.f32 %v5440, %v5422
        %v5449 = vmax.f32 %v5441, %v5427
        %v5450 = vmax.f32 %v5442, %v5432
        %v5451 = vsub.f32 %v5435, %v5443
        %v5452 = vsub.f32 %v5436, %v5444
        %v5453 = vsub.f32 %v5437, %v5445
        %v5454 = vsub.f32 %v5438, %v5446
        %v5455 = vsub.f32 %v5439, %v5447
        %v5456 = vsub.f32 %v5440, %v5448
        %v5457 = vsub.f32 %v5441, %v5449
        %v5458 = vsub.f32 %v5442, %v5450
        %v5459 = vmul.f32 %v5451, 1.442695
        %v5460 = vpow.pop %v5459
        %v5461 = vmul.f32 %v5452, 1.442695
        %v5462 = vpow.pop %v5461
        %v5463 = vmul.f32 %v5453, 1.442695
        %v5464 = vpow.pop %v5463
        %v5465 = vmul.f32 %v5454, 1.442695
        %v5466 = vpow.pop %v5465
        %v5467 = vmul.f32 %v5455, 1.442695
        %v5468 = vpow.pop %v5467
        %v5469 = vmul.f32 %v5456, 1.442695
        %v5470 = vpow.pop %v5469
        %v5471 = vmul.f32 %v5457, 1.442695
        %v5472 = vpow.pop %v5471
        %v5473 = vmul.f32 %v5458, 1.442695
        %v5474 = vpow.pop %v5473
        %v5475 = vsub.f32 %v5397, %v5443
        %v5476 = vsub.f32 %v5402, %v5444
        %v5477 = vsub.f32 %v5407, %v5445
        %v5478 = vsub.f32 %v5412, %v5446
        %v5479 = vsub.f32 %v5417, %v5447
        %v5480 = vsub.f32 %v5422, %v5448
        %v5481 = vsub.f32 %v5427, %v5449
        %v5482 = vsub.f32 %v5432, %v5450
        %v5483 = vmul.f32 %v5475, 1.442695
        %v5484 = vpow.pop %v5483
        %v5485 = vmul.f32 %v5476, 1.442695
        %v5486 = vpow.pop %v5485
        %v5487 = vmul.f32 %v5477, 1.442695
        %v5488 = vpow.pop %v5487
        %v5489 = vmul.f32 %v5478, 1.442695
        %v5490 = vpow.pop %v5489
        %v5491 = vmul.f32 %v5479, 1.442695
        %v5492 = vpow.pop %v5491
        %v5493 = vmul.f32 %v5480, 1.442695
        %v5494 = vpow.pop %v5493
        %v5495 = vmul.f32 %v5481, 1.442695
        %v5496 = vpow.pop %v5495
        %v5497 = vmul.f32 %v5482, 1.442695
        %v5498 = vpow.pop %v5497
        %v5499 = vld [vmem:[#allocation6] sm:$0xff]
        %v5500 = vld [vmem:[#allocation6 + $0x8] sm:$0xff]
        %v5501 = vld [vmem:[#allocation6 + $0x10] sm:$0xff]
        %v5502 = vld [vmem:[#allocation6 + $0x18] sm:$0xff]
        %v5503 = vld [vmem:[#allocation6 + $0x20] sm:$0xff]
        %v5504 = vld [vmem:[#allocation6 + $0x28] sm:$0xff]
        %v5505 = vld [vmem:[#allocation6 + $0x30] sm:$0xff]
        %v5506 = vld [vmem:[#allocation6 + $0x38] sm:$0xff]
        %v5507 = vmul.f32 %v5460, %v5499
        %v5508 = vmul.f32 %v5462, %v5500
        %v5509 = vmul.f32 %v5464, %v5501
        %v5510 = vmul.f32 %v5466, %v5502
        %v5511 = vmul.f32 %v5468, %v5503
        %v5512 = vmul.f32 %v5470, %v5504
        %v5513 = vmul.f32 %v5472, %v5505
        %v5514 = vmul.f32 %v5474, %v5506
        %v5515 = vadd.f32 %v5507, %v5484
        %v5516 = vadd.f32 %v5508, %v5486
        %v5517 = vadd.f32 %v5509, %v5488
        %v5518 = vadd.f32 %v5510, %v5490
        %v5519 = vadd.f32 %v5511, %v5492
        %v5520 = vadd.f32 %v5512, %v5494
        %v5521 = vadd.f32 %v5513, %v5496
        %v5522 = vadd.f32 %v5514, %v5498
        %5523 = vst.msk [vmem:[#allocation6] sm:$0xff] %vm2209, %v5515
        %5524 = vst.msk [vmem:[#allocation6 + $0x8] sm:$0xff] %vm2209, %v5516
        %5525 = vst.msk [vmem:[#allocation6 + $0x10] sm:$0xff] %vm2209, %v5517
        %5526 = vst.msk [vmem:[#allocation6 + $0x18] sm:$0xff] %vm2209, %v5518
        %5527 = vst.msk [vmem:[#allocation6 + $0x20] sm:$0xff] %vm2209, %v5519
        %5528 = vst.msk [vmem:[#allocation6 + $0x28] sm:$0xff] %vm2209, %v5520
        %5529 = vst.msk [vmem:[#allocation6 + $0x30] sm:$0xff] %vm2209, %v5521
        %5530 = vst.msk [vmem:[#allocation6 + $0x38] sm:$0xff] %vm2209, %v5522
        %v5531 = vld [vmem:[#allocation7] sm:$0xff]
        %v5532 = vld [vmem:[#allocation7 + $0x8] sm:$0xff]
        %v5533 = vld [vmem:[#allocation7 + $0x10] sm:$0xff]
        %v5534 = vld [vmem:[#allocation7 + $0x18] sm:$0xff]
        %v5535 = vld [vmem:[#allocation7 + $0x20] sm:$0xff]
        %v5536 = vld [vmem:[#allocation7 + $0x28] sm:$0xff]
        %v5537 = vld [vmem:[#allocation7 + $0x30] sm:$0xff]
        %v5538 = vld [vmem:[#allocation7 + $0x38] sm:$0xff]
        %v5539 = vmul.f32 %v5460, %v5531
        %v5540 = vmul.f32 %v5462, %v5532
        %v5541 = vmul.f32 %v5464, %v5533
        %v5542 = vmul.f32 %v5466, %v5534
        %v5543 = vmul.f32 %v5468, %v5535
        %v5544 = vmul.f32 %v5470, %v5536
        %v5545 = vmul.f32 %v5472, %v5537
        %v5546 = vmul.f32 %v5474, %v5538
        %v5547 = vmul.f32 %v3597, %v5484
        %v5548 = vmul.f32 %v3598, %v5486
        %v5549 = vmul.f32 %v3599, %v5488
        %v5550 = vmul.f32 %v3600, %v5490
        %v5551 = vmul.f32 %v3601, %v5492
        %v5552 = vmul.f32 %v3602, %v5494
        %v5553 = vmul.f32 %v3603, %v5496
        %v5554 = vmul.f32 %v3604, %v5498
        %v5555 = vadd.f32 %v5539, %v5547
        %v5556 = vadd.f32 %v5540, %v5548
        %v5557 = vadd.f32 %v5541, %v5549
        %v5558 = vadd.f32 %v5542, %v5550
        %v5559 = vadd.f32 %v5543, %v5551
        %v5560 = vadd.f32 %v5544, %v5552
        %v5561 = vadd.f32 %v5545, %v5553
        %v5562 = vadd.f32 %v5546, %v5554
        %5563 = vst.msk [vmem:[#allocation7] sm:$0xff] %vm2209, %v5555
        %5564 = vst.msk [vmem:[#allocation7 + $0x8] sm:$0xff] %vm2209, %v5556
        %5565 = vst.msk [vmem:[#allocation7 + $0x10] sm:$0xff] %vm2209, %v5557
        %5566 = vst.msk [vmem:[#allocation7 + $0x18] sm:$0xff] %vm2209, %v5558
        %5567 = vst.msk [vmem:[#allocation7 + $0x20] sm:$0xff] %vm2209, %v5559
        %5568 = vst.msk [vmem:[#allocation7 + $0x28] sm:$0xff] %vm2209, %v5560
        %5569 = vst.msk [vmem:[#allocation7 + $0x30] sm:$0xff] %vm2209, %v5561
        %5570 = vst.msk [vmem:[#allocation7 + $0x38] sm:$0xff] %vm2209, %v5562
        %5571 = vst.msk [vmem:[#allocation5] sm:$0xff] %vm2209, %v5443
        %5572 = vst.msk [vmem:[#allocation5 + $0x8] sm:$0xff] %vm2209, %v5444
        %5573 = vst.msk [vmem:[#allocation5 + $0x10] sm:$0xff] %vm2209, %v5445
        %5574 = vst.msk [vmem:[#allocation5 + $0x18] sm:$0xff] %vm2209, %v5446
        %5575 = vst.msk [vmem:[#allocation5 + $0x20] sm:$0xff] %vm2209, %v5447
        %5576 = vst.msk [vmem:[#allocation5 + $0x28] sm:$0xff] %vm2209, %v5448
        %5577 = vst.msk [vmem:[#allocation5 + $0x30] sm:$0xff] %vm2209, %v5449
        %5578 = vst.msk [vmem:[#allocation5 + $0x38] sm:$0xff] %vm2209, %v5450
        %p5579 = scmp.eq.s32.totalorder %s25, 3
        // Predicated region
        $region77: #{tf_blender_aggregator.1} parent=71 // pred_check
          %p5580 = pneg %p5579
        $region78: #{tf_blender_aggregator.1} parent=71 // pred_check_branch
          %5582 = sbr.rel (%p5580) target = $region80
        $region79: #{tf_blender_aggregator.1} parent=71 // pred_region
          %v5583 = vld [vmem:[#allocation7] sm:$0xff]
          %v5584 = vld [vmem:[#allocation7 + $0x8] sm:$0xff]
          %v5585 = vld [vmem:[#allocation7 + $0x10] sm:$0xff]
          %v5586 = vld [vmem:[#allocation7 + $0x18] sm:$0xff]
          %v5587 = vld [vmem:[#allocation7 + $0x20] sm:$0xff]
          %v5588 = vld [vmem:[#allocation7 + $0x28] sm:$0xff]
          %v5589 = vld [vmem:[#allocation7 + $0x30] sm:$0xff]
          %v5590 = vld [vmem:[#allocation7 + $0x38] sm:$0xff]
          %v5591 = vld [vmem:[#allocation6] sm:$0xff]
          %v5592 = vld [vmem:[#allocation6 + $0x8] sm:$0xff]
          %v5593 = vld [vmem:[#allocation6 + $0x10] sm:$0xff]
          %v5594 = vld [vmem:[#allocation6 + $0x18] sm:$0xff]
          %v5595 = vld [vmem:[#allocation6 + $0x20] sm:$0xff]
          %v5596 = vld [vmem:[#allocation6 + $0x28] sm:$0xff]
          %v5597 = vld [vmem:[#allocation6 + $0x30] sm:$0xff]
          %v5598 = vld [vmem:[#allocation6 + $0x38] sm:$0xff]
          %v5599 = vrcp.pop %v5591
          %v5600 = vmul.f32 %v5583, %v5599
          %v5601 = vrcp.pop %v5592
          %v5602 = vmul.f32 %v5584, %v5601
          %v5603 = vrcp.pop %v5593
          %v5604 = vmul.f32 %v5585, %v5603
          %v5605 = vrcp.pop %v5594
          %v5606 = vmul.f32 %v5586, %v5605
          %v5607 = vrcp.pop %v5595
          %v5608 = vmul.f32 %v5587, %v5607
          %v5609 = vrcp.pop %v5596
          %v5610 = vmul.f32 %v5588, %v5609
          %v5611 = vrcp.pop %v5597
          %v5612 = vmul.f32 %v5589, %v5611
          %v5613 = vrcp.pop %v5598
          %v5614 = vmul.f32 %v5590, %v5613
          %5615 = vst.msk [vmem:[#allocation8] sm:$0xff] %vm2209, %v5600
          %5616 = vst.msk [vmem:[#allocation8 + $0x8] sm:$0xff] %vm2209, %v5602
          %5617 = vst.msk [vmem:[#allocation8 + $0x10] sm:$0xff] %vm2209, %v5604
          %5618 = vst.msk [vmem:[#allocation8 + $0x18] sm:$0xff] %vm2209, %v5606
          %5619 = vst.msk [vmem:[#allocation8 + $0x20] sm:$0xff] %vm2209, %v5608
          %5620 = vst.msk [vmem:[#allocation8 + $0x28] sm:$0xff] %vm2209, %v5610
          %5621 = vst.msk [vmem:[#allocation8 + $0x30] sm:$0xff] %vm2209, %v5612
          %5622 = vst.msk [vmem:[#allocation8 + $0x38] sm:$0xff] %vm2209, %v5614
        $region80: #{tf_blender_aggregator.1} parent=71 // pred_fallthru
          _
        // Predicated region
        $region81: #{tf_blender_aggregator.1} parent=71 // pred_check
          %p5623 = pneg %p316
        $region82: #{tf_blender_aggregator.1} parent=71 // pred_check_branch
          %5625 = sbr.rel (%p5623) target = $region84
        $region83: #{tf_blender_aggregator.1} parent=71 // pred_region
          %s5627 = ssub.s32 1024, 1024
          %5628 = vsyncadd [#allocation9], %s5627
          %s5629 = sshll.u32 [#allocation8], 4
          %s5630 = int_to_ptr.vmem [resolvable:$true] %s5629
          %5635 = dma.vmem_to_hbm [thread:$0]  %s5630, 1024, %s13, [#allocation9], 128, 128, 8
        $region84: #{tf_blender_aggregator.1} parent=71 // pred_fallthru
          _
        // Predicated region
        $region85: #{tf_blender_aggregator.1} parent=71 // pred_check
          %p5636 = pneg %p316
        $region86: #{tf_blender_aggregator.1} parent=71 // pred_check_branch
          %5638 = sbr.rel (%p5636) target = $region88
        $region87: #{tf_blender_aggregator.1} parent=71 // pred_region
          %5639 = dma.done [#allocation9], 1024
        $region88: #{tf_blender_aggregator.1} parent=71 // pred_fallthru
          _
      $region72: #{tf_blender_aggregator.1} parent=5 // pred_fallthru
        _
      %p5640 = scmp.le.s32.totalorder 2, %s20
      // Predicated region
      $region89: #{tf_blender_aggregator.1} parent=5 // pred_check
        %p5641 = pneg %p5640
      $region90: #{tf_blender_aggregator.1} parent=5 // pred_check_branch
        %5643 = sbr.rel (%p5641) target = $region92
      $region91: #{tf_blender_aggregator.1} parent=5 // pred_region
        %s5644 = ssub.s32 %s20, 2
      $region92: #{tf_blender_aggregator.1} parent=5 // pred_fallthru
        _
    $region6: #{tf_blender_aggregator.1} parent=1 // loop_footer
      %s24 = sadd.s32 1, %s20
    $region7: #{tf_blender_aggregator.1} parent=1 // loop_footer_branch
      %19 = sbr.rel target = $region3
    $region8: #{tf_blender_aggregator.1} parent=1 // loop_exit
      _
    %5645 = vsyncpa [#allocation9], 1
    %s5646 = scalar_lea.sflag [#allocation9], 1
    %5647 = vsyncpa %s5646, 1

</llo_original>
